<compile_context>
chip_gen: v7x
topology: tpu7x:2x2x1
jax: 0.10.0
libtpu: 0.0.40
codegen_flags: <defaults>
</compile_context>

<pallas_src>
import functools

import jax
import jax.numpy as jnp
from jax.experimental import pallas as pl
from jax.experimental.pallas import tpu as pltpu

# ---------------------------------------------------------------------------
# model hyper-parameters (args of the PyTorch module)
# ---------------------------------------------------------------------------
N_FEATS = 8           # args.n_feats
N_RESBLOCKS = 2       # args.n_resblocks
RES_SCALE = 0.1       # args.res_scale
RGB_RANGE = 1.0       # args.rgb_range
N_COLORS = 3          # args.n_colors
RGB_MEAN = jnp.array([0.4488, 0.4371, 0.404], jnp.float32)   # rgb_std == 1.0

_HIGH = jax.lax.Precision.HIGHEST   # reference path only


def _round_up(x, m):
    return ((x + m - 1) // m) * m


# ---------------------------------------------------------------------------
# in-kernel helper (traced inside the kernel bodies)
# ---------------------------------------------------------------------------
def _conv_q(src, wt, b, W, LPAD):
    """3x3 SAME conv as one im2col MXU matmul.

    `src` is a (Cin, HPWP_PAD) ref or value holding the zero-padded input in
    flattened "padded" coordinates.  Returns (Cout, LPAD) in "q" coordinates
    (q = y*(W+2)+x); columns with x >= W (and q >= L) are junk and must be
    masked by the caller.
    """
    WP = W + 2
    cols = [src[:, dy * WP + dx: dy * WP + dx + LPAD]
            for dy in range(3) for dx in range(3)]
    col = jnp.concatenate(cols, axis=0)                       # (9*Cin, LPAD)
    return jnp.dot(wt, col, preferred_element_type=jnp.float32) + b


# ---------------------------------------------------------------------------
# kernel 1: fused conv trunk (head -> ResBlocks -> body-final+skip -> tail)
# ---------------------------------------------------------------------------
def _trunk_kernel(x_ref, qmask_ref, w_ref, b_ref, wt_ref, bt_ref, o_ref,
                  ph_ref, pa_ref, pt_ref, *, W, LPAD, n_res, res_scale):
    WP = W + 2
    sl = slice(WP + 1, WP + 1 + LPAD)     # interior of a padded-flat buffer
    qmask = qmask_ref[...]                # (1, LPAD): zero on junk columns

    # zero padded scratch buffers once per image (guarantees clean zero border
    # even when the grid is sharded across TensorCores)
    ph_ref[...] = jnp.zeros_like(ph_ref)
    pa_ref[...] = jnp.zeros_like(pa_ref)
    pt_ref[...] = jnp.zeros_like(pt_ref)

    xpad = x_ref[0]                       # (nf, HPWP_PAD), pre-padded input

    # head (sub_mean already applied by the wrapper before padding)
    hq = _conv_q(xpad, w_ref[0], b_ref[0], W, LPAD) * qmask
    ph_ref[:, sl] = hq                    # keep head output for the global skip
    pa_ref[:, sl] = hq                    # running residual state

    # ResBlocks: res = res + res_scale * conv2(relu(conv1(res)))
    for i in range(n_res):
        t = jnp.maximum(
            _conv_q(pa_ref, w_ref[2 * i + 1], b_ref[2 * i + 1], W, LPAD), 0.0)
        pt_ref[:, sl] = t * qmask
        c2 = _conv_q(pt_ref, w_ref[2 * i + 2], b_ref[2 * i + 2], W, LPAD) * qmask
        pa_ref[:, sl] = pa_ref[:, sl] + res_scale * c2

    # body-final conv, then global skip: res = body(x) + x
    bf = _conv_q(pa_ref, w_ref[2 * n_res + 1], b_ref[2 * n_res + 1],
                 W, LPAD) * qmask
    pa_ref[:, sl] = ph_ref[:, sl] + bf

    # tail: SuperConv2d restricted to the first s^2*n_feats output channels
    o_ref[0] = _conv_q(pa_ref, wt_ref[...], bt_ref[...], W, LPAD) * qmask


def _trunk_call(xin, qmask, wstack, bstack, wt, bt, *, W, LPAD):
    n, nf, hpwp_pad = xin.shape
    nconv = wstack.shape[0]
    cout = wt.shape[0]
    kernel = functools.partial(_trunk_kernel, W=W, LPAD=LPAD,
                               n_res=N_RESBLOCKS, res_scale=RES_SCALE)
    return pl.pallas_call(
        kernel,
        out_shape=jax.ShapeDtypeStruct((n, cout, LPAD), jnp.float32),
        grid=(n,),
        in_specs=[
            pl.BlockSpec((1, nf, hpwp_pad), lambda i: (i, 0, 0)),
            pl.BlockSpec((1, LPAD), lambda i: (0, 0)),
            pl.BlockSpec((nconv, nf, 9 * nf), lambda i: (0, 0, 0)),
            pl.BlockSpec((nconv, nf, 1), lambda i: (0, 0, 0)),
            pl.BlockSpec((cout, 9 * nf), lambda i: (0, 0)),
            pl.BlockSpec((cout, 1), lambda i: (0, 0)),
        ],
        out_specs=pl.BlockSpec((1, cout, LPAD), lambda i: (i, 0, 0)),
        scratch_shapes=[pltpu.VMEM((nf, hpwp_pad), jnp.float32)
                        for _ in range(3)],
        compiler_params=pltpu.CompilerParams(dimension_semantics=("parallel",)),
    )(xin, qmask, wstack, bstack, wt, bt)


# ---------------------------------------------------------------------------
# kernel 2: Pos2Weight MLP (transposed: sH*sW on the lane axis)
# ---------------------------------------------------------------------------
def _p2w_kernel(pos_ref, w1_ref, b1_ref, w2_ref, b2_ref, o_ref):
    pos = pos_ref[...]                       # (3, TM)
    w1 = w1_ref[...]                         # (hid, 3)
    # K=3 first layer as 3 broadcast FMAs on the VPU (MXU would waste K=3)
    h = b1_ref[...] + w1[:, 0:1] * pos[0:1, :]
    h = h + w1[:, 1:2] * pos[1:2, :]
    h = h + w1[:, 2:3] * pos[2:3, :]
    h = jnp.maximum(h, 0.0)                  # (hid, TM)
    o_ref[...] = (jnp.dot(w2_ref[...], h, preferred_element_type=jnp.float32)
                  + b2_ref[...])             # (s2, TM)


def _p2w_call(posT, w1T, b1c, w2sT, b2sc):
    s2, hid = w2sT.shape
    mp = posT.shape[1]                       # padded to a multiple of 128
    tm = mp
    for cand in (2048, 1024, 512, 256, 128):
        if mp % cand == 0:
            tm = cand
            break
    return pl.pallas_call(
        _p2w_kernel,
        out_shape=jax.ShapeDtypeStruct((s2, mp), jnp.float32),
        grid=(mp // tm,),
        in_specs=[
            pl.BlockSpec((3, tm), lambda i: (0, i)),
            pl.BlockSpec((hid, 3), lambda i: (0, 0)),
            pl.BlockSpec((hid, 1), lambda i: (0, 0)),
            pl.BlockSpec((s2, hid), lambda i: (0, 0)),
            pl.BlockSpec((s2, 1), lambda i: (0, 0)),
        ],
        out_specs=pl.BlockSpec((s2, tm), lambda i: (0, i)),
        compiler_params=pltpu.CompilerParams(dimension_semantics=("parallel",)),
    )(posT, w1T, b1c, w2sT, b2sc)


# ---------------------------------------------------------------------------
# kernel 3: metashuffle + polyphase out_conv + add_mean (fused)
# ---------------------------------------------------------------------------
def _upscale_kernel(feat_ref, lw_ref, wo_ref, bo_ref, o_ref, pv_ref, *,
                    nf, s, W, LPAD):
    s2 = s * s
    WP = W + 2
    sl = slice(WP + 1, WP + 1 + LPAD)

    pv_ref[...] = jnp.zeros_like(pv_ref)

    featr = feat_ref[0].reshape(nf, s2, LPAD)   # tail channel c = f*s2 + k
    lw = lw_ref[...]                            # (s2, s2, LPAD)
    wo = wo_ref[...]                            # (3, 9*nf)
    bo = bo_ref[...]                            # (3, 1), add_mean folded in

    # meta pixel-wise contraction: vals[r] = sum_k feat[:, k, :] * lw[r, k, :]
    # (pure VPU FMAs, spatial axis lane-dense).  featr is zero on junk/pad
    # columns so the stored phases keep a clean zero border.
    for r in range(s2):
        acc = featr[:, 0, :] * lw[r, 0:1, :]
        for k in range(1, s2):
            acc = acc + featr[:, k, :] * lw[r, k:k + 1, :]
        pv_ref[r, :, sl] = acc

    # polyphase 3x3 out_conv over the (virtual) pixel-shuffled sH x sW image:
    # output phase (sy,sx), tap (dy,dx) reads input phase
    # ((sy+dy-1)%s, (sx+dx-1)%s) shifted by ((sy+dy-1)//s, (sx+dx-1)//s),
    # which is a plain slice of that phase's padded buffer.
    for sy in range(s):
        for sx in range(s):
            cols = []
            for dy in range(3):
                ty = sy + dy - 1
                py, qy = ty % s, ty // s
                for dx in range(3):
                    tx = sx + dx - 1
                    px, qx = tx % s, tx // s
                    off = (qy + 1) * WP + (qx + 1)
                    cols.append(pv_ref[py * s + px, :, off:off + LPAD])
            col = jnp.concatenate(cols, axis=0)               # (9*nf, LPAD)
            o_ref[0, sy * s + sx] = (
                jnp.dot(wo, col, preferred_element_type=jnp.float32) + bo)


def _upscale_call(feat_q, lw_q, wo, bo, *, nf, s, W, LPAD, hpwp_pad):
    n = feat_q.shape[0]
    s2 = s * s
    kernel = functools.partial(_upscale_kernel, nf=nf, s=s, W=W, LPAD=LPAD)
    return pl.pallas_call(
        kernel,
        out_shape=jax.ShapeDtypeStruct((n, s2, 3, LPAD), jnp.float32),
        grid=(n,),
        in_specs=[
            pl.BlockSpec((1, s2 * nf, LPAD), lambda i: (i, 0, 0)),
            pl.BlockSpec((s2, s2, LPAD), lambda i: (0, 0, 0)),
            pl.BlockSpec((3, 9 * nf), lambda i: (0, 0)),
            pl.BlockSpec((3, 1), lambda i: (0, 0)),
        ],
        out_specs=pl.BlockSpec((1, s2, 3, LPAD), lambda i: (i, 0, 0, 0)),
        scratch_shapes=[pltpu.VMEM((s2, nf, hpwp_pad), jnp.float32)],
        compiler_params=pltpu.CompilerParams(dimension_semantics=("parallel",)),
    )(feat_q, lw_q, wo, bo)


# ---------------------------------------------------------------------------
# full forward pass (mirrors MultiEDSR_MetaShuffle.forward)
# ---------------------------------------------------------------------------
def forward_pallas(params, x_nchw, scale_int, pos_mat):
    s = int(scale_int)
    s2 = s * s
    nf = N_FEATS
    n, c, H, W = x_nchw.shape
    HP, WP = H + 2, W + 2
    L = (H - 1) * WP + W                 # valid flattened-q extent
    LPAD = _round_up(L, 128)             # lane-dense q extent
    HPWP_PAD = 2 * WP + 2 + LPAD         # padded-flat buffer length (>= HP*WP)
    mean = (RGB_RANGE * RGB_MEAN).astype(jnp.float32)

    # ---- trace-time weight prep: HWIO (3,3,Cin,Cout) -> (Cout, 9*Cin) ----
    def prep(w):
        return jnp.transpose(w, (3, 0, 1, 2)).reshape(w.shape[-1], -1)

    head_w8 = jnp.pad(params["head_w"], ((0, 0), (0, 0), (0, nf - c), (0, 0)))
    ws = [prep(head_w8)]
    bs = [params["head_b"]]
    for i in range(N_RESBLOCKS):
        ws += [prep(params[f"rb{i}_w1"]), prep(params[f"rb{i}_w2"])]
        bs += [params[f"rb{i}_b1"], params[f"rb{i}_b2"]]
    ws.append(prep(params["bodyf_w"]))
    bs.append(params["bodyf_b"])
    wstack = jnp.stack(ws)                       # (2*n_res+2, nf, 9*nf)
    bstack = jnp.stack(bs)[..., None]            # (2*n_res+2, nf, 1)

    cout = s2 * nf
    wt = prep(params["tail_w"][..., :cout])      # SuperConv2d channel slice
    bt = params["tail_b"][:cout][:, None]
    wo = prep(params["out_w"])                   # (3, 9*nf)
    bo = (params["out_b"] + mean)[:, None]       # add_mean folded into bias

    w1T = params["p2w_w1"].T                     # (256, 3)
    b1c = params["p2w_b1"][:, None]
    w2sT = params["p2w_w2"][:, :s2].T            # (s2, 256): slice before call
    b2sc = params["p2w_b2"][:s2][:, None]

    # ---- input prep: sub_mean, SAME-pad, pad channels 3->nf, flatten ----
    xin = x_nchw.astype(jnp.float32) - mean.reshape(1, c, 1, 1)
    xin = jnp.pad(xin, ((0, 0), (0, nf - c), (1, 1), (1, 1)))
    xin = xin.reshape(n, nf, HP * WP)
    xin = jnp.pad(xin, ((0, 0), (0, 0), (0, HPWP_PAD - HP * WP)))

    # mask zeroing the 2 junk lanes per row (and the LPAD-L tail) of q coords
    row = jnp.concatenate([jnp.ones((W,), jnp.float32),
                           jnp.zeros((2,), jnp.float32)])
    qmask = jnp.tile(row, H)[:L]
    qmask = jnp.pad(qmask, (0, LPAD - L)).reshape(1, LPAD)

    feat_q = _trunk_call(xin, qmask, wstack, bstack, wt, bt, W=W, LPAD=LPAD)

    # ---- Pos2Weight -> local weights, re-laid out into padded-flat coords ----
    m = pos_mat.shape[1]                         # == (s*H)*(s*W)
    mp = _round_up(m, 128)                       # lane-dense M
    posT = pos_mat.reshape(m, 3).T               # (3, M)
    posT = jnp.pad(posT, ((0, 0), (0, mp - m)))
    lvT = _p2w_call(posT, w1T, b1c, w2sT, b2sc)[:, :m]   # (s2, M)
    lw = lvT.reshape(s2, H, s, W, s).transpose(2, 4, 0, 1, 3)
    lw = lw.reshape(s2, s2, H, W)
    lw_q = jnp.pad(lw, ((0, 0), (0, 0), (0, 0), (0, 2)))
    lw_q = lw_q.reshape(s2, s2, H * WP)[:, :, :L]
    lw_q = jnp.pad(lw_q, ((0, 0), (0, 0), (0, LPAD - L)))

    # ---- metashuffle + polyphase out_conv + add_mean ----
    out_q = _upscale_call(feat_q, lw_q, wo, bo, nf=nf, s=s, W=W,
                          LPAD=LPAD, hpwp_pad=HPWP_PAD)

    # un-flatten padded coordinates and interleave the s^2 output phases
    # (tiny 3-channel tensor; pure layout glue -> final NCHW)
    o = out_q[..., :L]
    o = jnp.pad(o, ((0, 0), (0, 0), (0, 0), (0, H * WP - L)))
    o = o.reshape(n, s, s, 3, H, WP)[..., :W]
    o = jnp.transpose(o, (0, 3, 4, 1, 5, 2)).reshape(n, 3, s * H, s * W)
    return o


# ---------------------------------------------------------------------------
# pure-JAX reference (HIGHEST precision) for the self-check
# ---------------------------------------------------------------------------
def _conv_ref(x, w, b, relu=False):
    y = jax.lax.conv_general_dilated(
        x, w, (1, 1), "SAME",
        dimension_numbers=("NHWC", "HWIO", "NHWC"), precision=_HIGH) + b
    return jnp.maximum(y, 0.0) if relu else y


def forward_ref(params, x_nchw, scale_int, pos_mat):
    s = int(scale_int)
    s2 = s * s
    nf = N_FEATS
    x = jnp.transpose(x_nchw, (0, 2, 3, 1)).astype(jnp.float32)
    x1 = x - RGB_RANGE * RGB_MEAN
    xh = _conv_ref(x1, params["head_w"], params["head_b"])
    res = xh
    for i in range(N_RESBLOCKS):
        t = _conv_ref(res, params[f"rb{i}_w1"], params[f"rb{i}_b1"], relu=True)
        res = res + RES_SCALE * _conv_ref(t, params[f"rb{i}_w2"], params[f"rb{i}_b2"])
    res = xh + _conv_ref(res, params["bodyf_w"], params["bodyf_b"])
    cout = s2 * nf
    feat = _conv_ref(res, params["tail_w"][..., :cout], params["tail_b"][:cout])
    n, h, w, _ = feat.shape
    m = pos_mat.shape[1]
    hdn = jnp.maximum(jnp.dot(pos_mat.reshape(m, 3), params["p2w_w1"],
                              precision=_HIGH) + params["p2w_b1"], 0.0)
    lv = (jnp.dot(hdn, params["p2w_w2"], precision=_HIGH)
          + params["p2w_b2"])[:, :s2]
    lw = lv.reshape(h, s, w, s, s2).transpose(1, 3, 0, 2, 4).reshape(s2, h * w, s2)
    feat_r = feat.reshape(n, h * w, nf, s2)
    out = jnp.einsum("nhfk,rhk->rnhf", feat_r, lw, precision=_HIGH)
    out = out.transpose(1, 0, 2, 3).reshape(n, s, s, h, w, nf)
    out = out.transpose(0, 3, 1, 4, 2, 5).reshape(n, s * h, s * w, nf)
    out = _conv_ref(out, params["out_w"], params["out_b"])
    out = out + RGB_RANGE * RGB_MEAN
    return jnp.transpose(out, (0, 3, 1, 2))


# ---------------------------------------------------------------------------
# deterministic parameter init (weights in HWIO layout)
# ---------------------------------------------------------------------------
def init_params(key):
    keys = iter(jax.random.split(key, 64))

    def nrm(shape, scale=0.1):
        return scale * jax.random.normal(next(keys), shape, jnp.float32)

    nf = N_FEATS
    p = {
        "head_w": nrm((3, 3, N_COLORS, nf)), "head_b": nrm((nf,), 0.01),
        "bodyf_w": nrm((3, 3, nf, nf)), "bodyf_b": nrm((nf,), 0.01),
        "tail_w": nrm((3, 3, nf, nf * 16)), "tail_b": nrm((nf * 16,), 0.01),
        "out_w": nrm((3, 3, nf, 3)), "out_b": nrm((3,), 0.01),
        "p2w_w1": nrm((3, 256)), "p2w_b1": nrm((256,), 0.01),
        "p2w_w2": nrm((256, 16)), "p2w_b2": nrm((16,), 0.01),
    }
    for i in range(N_RESBLOCKS):
        p[f"rb{i}_w1"] = nrm((3, 3, nf, nf))
        p[f"rb{i}_b1"] = nrm((nf,), 0.01)
        p[f"rb{i}_w2"] = nrm((3, 3, nf, nf))
        p[f"rb{i}_b2"] = nrm((nf,), 0.01)
    return p


# ---------------------------------------------------------------------------
if __name__ == "__main__":
    key = jax.random.PRNGKey(0)
    k_param, k_x, k_pos = jax.random.split(key, 3)

    N, H, W = 2, 16, 16
    SCALE = 2
    OUT_SIZE = (SCALE * H, SCALE * W)

    params = init_params(k_param)
    x = RGB_RANGE * jax.random.uniform(k_x, (N, N_COLORS, H, W), jnp.float32)
    pos_mat = jax.random.normal(k_pos, (1, OUT_SIZE[0] * OUT_SIZE[1], 3),
                                jnp.float32)

    fwd = jax.jit(forward_pallas, static_argnums=(2,))
    out = jax.block_until_ready(fwd(params, x, SCALE, pos_mat))

    ref = jax.block_until_ready(forward_ref(params, x, SCALE, pos_mat))

    assert out.shape == (N, 3, OUT_SIZE[0], OUT_SIZE[1]), out.shape
    err = float(jnp.max(jnp.abs(out - ref)))
    assert err < 2e-2, f"max abs error vs pure-JAX reference: {err}"

    print("KERNEL_OK")
</pallas_src>

<mosaic_0001>
module attributes {stable_mosaic.version = 11 : i64} {
  func.func @_p2w_kernel(%arg0: i32, %arg1: memref<3x1024xf32, #tpu.memory_space<vmem>>, %arg2: memref<256x3xf32, #tpu.memory_space<vmem>>, %arg3: memref<256x1xf32, #tpu.memory_space<vmem>>, %arg4: memref<4x256xf32, #tpu.memory_space<vmem>>, %arg5: memref<4x1xf32, #tpu.memory_space<vmem>>, %arg6: memref<4x1024xf32, #tpu.memory_space<vmem>>) attributes {dimension_semantics = [#tpu.dimension_semantics<parallel>], iteration_bounds = array<i64: 1>, scalar_prefetch = 0 : i64, scratch_operands = 0 : i64, tpu.core_type = #tpu.core_type<tc>, window_params = [{transform_indices = @transform_0, window_bounds = array<i64: 3, 1024>}, {pipeline_mode = #tpu.pipeline_mode<synchronous>, transform_indices = @transform_1, window_bounds = array<i64: 256, 3>}, {pipeline_mode = #tpu.pipeline_mode<synchronous>, transform_indices = @transform_2, window_bounds = array<i64: 256, 1>}, {pipeline_mode = #tpu.pipeline_mode<synchronous>, transform_indices = @transform_3, window_bounds = array<i64: 4, 256>}, {pipeline_mode = #tpu.pipeline_mode<synchronous>, transform_indices = @transform_4, window_bounds = array<i64: 4, 1>}, {transform_indices = @transform_5, window_bounds = array<i64: 4, 1024>}]} {
    %c0 = arith.constant 0 : index
    %c0_0 = arith.constant 0 : index
    %0 = vector.load %arg1[%c0, %c0_0] : memref<3x1024xf32, #tpu.memory_space<vmem>>, vector<3x1024xf32>
    %c0_1 = arith.constant 0 : index
    %c0_2 = arith.constant 0 : index
    %1 = vector.load %arg2[%c0_1, %c0_2] : memref<256x3xf32, #tpu.memory_space<vmem>>, vector<256x3xf32>
    %c0_3 = arith.constant 0 : index
    %c0_4 = arith.constant 0 : index
    %2 = vector.load %arg3[%c0_3, %c0_4] : memref<256x1xf32, #tpu.memory_space<vmem>>, vector<256x1xf32>
    %3 = vector.extract_strided_slice %1 {offsets = [0, 0], sizes = [256, 1], strides = [1, 1]} : vector<256x3xf32> to vector<256x1xf32>
    %4 = vector.extract_strided_slice %0 {offsets = [0, 0], sizes = [1, 1024], strides = [1, 1]} : vector<3x1024xf32> to vector<1x1024xf32>
    %5 = vector.broadcast %3 : vector<256x1xf32> to vector<256x1024xf32>
    %6 = vector.broadcast %4 : vector<1x1024xf32> to vector<256x1024xf32>
    %7 = arith.mulf %5, %6 : vector<256x1024xf32>
    %8 = vector.broadcast %2 : vector<256x1xf32> to vector<256x1024xf32>
    %9 = arith.addf %8, %7 : vector<256x1024xf32>
    %10 = vector.extract_strided_slice %1 {offsets = [0, 1], sizes = [256, 1], strides = [1, 1]} : vector<256x3xf32> to vector<256x1xf32>
    %11 = vector.extract_strided_slice %0 {offsets = [1, 0], sizes = [1, 1024], strides = [1, 1]} : vector<3x1024xf32> to vector<1x1024xf32>
    %12 = vector.broadcast %10 : vector<256x1xf32> to vector<256x1024xf32>
    %13 = vector.broadcast %11 : vector<1x1024xf32> to vector<256x1024xf32>
    %14 = arith.mulf %12, %13 : vector<256x1024xf32>
    %15 = arith.addf %9, %14 : vector<256x1024xf32>
    %16 = vector.extract_strided_slice %1 {offsets = [0, 2], sizes = [256, 1], strides = [1, 1]} : vector<256x3xf32> to vector<256x1xf32>
    %17 = vector.extract_strided_slice %0 {offsets = [2, 0], sizes = [1, 1024], strides = [1, 1]} : vector<3x1024xf32> to vector<1x1024xf32>
    %18 = vector.broadcast %16 : vector<256x1xf32> to vector<256x1024xf32>
    %19 = vector.broadcast %17 : vector<1x1024xf32> to vector<256x1024xf32>
    %20 = arith.mulf %18, %19 : vector<256x1024xf32>
    %21 = arith.addf %15, %20 : vector<256x1024xf32>
    %cst = arith.constant 0.000000e+00 : f32
    %22 = vector.broadcast %cst : f32 to vector<256x1024xf32>
    %23 = arith.maximumf %21, %22 : vector<256x1024xf32>
    %c0_5 = arith.constant 0 : index
    %c0_6 = arith.constant 0 : index
    %24 = vector.load %arg4[%c0_5, %c0_6] : memref<4x256xf32, #tpu.memory_space<vmem>>, vector<4x256xf32>
    %cst_7 = arith.constant dense<0.000000e+00> : vector<4x1024xf32>
    %25 = tpu.matmul %24, %23, %cst_7 {dimension_numbers = #tpu.dot_dimension_numbers<[1], [0], [0], [1], [0, 0, 1, 1], [], []>} : vector<4x256xf32>, vector<256x1024xf32>, vector<4x1024xf32> -> vector<4x1024xf32>
    %c0_8 = arith.constant 0 : index
    %c0_9 = arith.constant 0 : index
    %26 = vector.load %arg5[%c0_8, %c0_9] : memref<4x1xf32, #tpu.memory_space<vmem>>, vector<4x1xf32>
    %27 = vector.broadcast %26 : vector<4x1xf32> to vector<4x1024xf32>
    %28 = arith.addf %25, %27 : vector<4x1024xf32>
    %c0_10 = arith.constant 0 : index
    %c0_11 = arith.constant 0 : index
    %29 = vector.load %arg6[%c0_10, %c0_11] : memref<4x1024xf32, #tpu.memory_space<vmem>>, vector<4x1024xf32>
    tpu.vector_store %arg6[%c0_10, %c0_11], %28 {strides = array<i32>} : memref<4x1024xf32, #tpu.memory_space<vmem>>, vector<4x1024xf32>,
    return
  }
  func.func @transform_0(%arg0: i32) -> (i32, i32) {
    %c0_i32 = arith.constant 0 : i32
    %c0_i32_0 = arith.constant 0 : i32
    return %c0_i32, %arg0 : i32, i32
  }
  func.func @transform_1(%arg0: i32) -> (i32, i32) {
    %c0_i32 = arith.constant 0 : i32
    %c0_i32_0 = arith.constant 0 : i32
    %c0_i32_1 = arith.constant 0 : i32
    return %c0_i32, %c0_i32_0 : i32, i32
  }
  func.func @transform_2(%arg0: i32) -> (i32, i32) {
    %c0_i32 = arith.constant 0 : i32
    %c0_i32_0 = arith.constant 0 : i32
    %c0_i32_1 = arith.constant 0 : i32
    return %c0_i32, %c0_i32_0 : i32, i32
  }
  func.func @transform_3(%arg0: i32) -> (i32, i32) {
    %c0_i32 = arith.constant 0 : i32
    %c0_i32_0 = arith.constant 0 : i32
    %c0_i32_1 = arith.constant 0 : i32
    return %c0_i32, %c0_i32_0 : i32, i32
  }
  func.func @transform_4(%arg0: i32) -> (i32, i32) {
    %c0_i32 = arith.constant 0 : i32
    %c0_i32_0 = arith.constant 0 : i32
    %c0_i32_1 = arith.constant 0 : i32
    return %c0_i32, %c0_i32_0 : i32, i32
  }
  func.func @transform_5(%arg0: i32) -> (i32, i32) {
    %c0_i32 = arith.constant 0 : i32
    %c0_i32_0 = arith.constant 0 : i32
    return %c0_i32, %arg0 : i32, i32
  }
}

module attributes {stable_mosaic.version = 11 : i64} {
  func.func @_trunk_kernel(%arg0: i32, %arg1: memref<1x8x422xf32, #tpu.memory_space<vmem>>, %arg2: memref<1x384xf32, #tpu.memory_space<vmem>>, %arg3: memref<6x8x72xf32, #tpu.memory_space<vmem>>, %arg4: memref<6x8x1xf32, #tpu.memory_space<vmem>>, %arg5: memref<32x72xf32, #tpu.memory_space<vmem>>, %arg6: memref<32x1xf32, #tpu.memory_space<vmem>>, %arg7: memref<1x32x384xf32, #tpu.memory_space<vmem>>, %arg8: memref<8x422xf32, #tpu.memory_space<vmem>>, %arg9: memref<8x422xf32, #tpu.memory_space<vmem>>, %arg10: memref<8x422xf32, #tpu.memory_space<vmem>>) attributes {dimension_semantics = [#tpu.dimension_semantics<parallel>], iteration_bounds = array<i64: 2>, scalar_prefetch = 0 : i64, scratch_operands = 3 : i64, tpu.core_type = #tpu.core_type<tc>, window_params = [{transform_indices = @transform_0, window_bounds = array<i64: 1, 8, 422>}, {pipeline_mode = #tpu.pipeline_mode<synchronous>, transform_indices = @transform_1, window_bounds = array<i64: 1, 384>}, {pipeline_mode = #tpu.pipeline_mode<synchronous>, transform_indices = @transform_2, window_bounds = array<i64: 6, 8, 72>}, {pipeline_mode = #tpu.pipeline_mode<synchronous>, transform_indices = @transform_3, window_bounds = array<i64: 6, 8, 1>}, {pipeline_mode = #tpu.pipeline_mode<synchronous>, transform_indices = @transform_4, window_bounds = array<i64: 32, 72>}, {pipeline_mode = #tpu.pipeline_mode<synchronous>, transform_indices = @transform_5, window_bounds = array<i64: 32, 1>}, {transform_indices = @transform_6, window_bounds = array<i64: 1, 32, 384>}]} {
    %c0 = arith.constant 0 : index
    %c0_0 = arith.constant 0 : index
    %0 = vector.load %arg2[%c0, %c0_0] : memref<1x384xf32, #tpu.memory_space<vmem>>, vector<1x384xf32>
    %cst = arith.constant 0.000000e+00 : f32
    %1 = vector.broadcast %cst : f32 to vector<8x422xf32>
    %c0_1 = arith.constant 0 : index
    %c0_2 = arith.constant 0 : index
    %2 = vector.load %arg8[%c0_1, %c0_2] : memref<8x422xf32, #tpu.memory_space<vmem>>, vector<8x422xf32>
    tpu.vector_store %arg8[%c0_1, %c0_2], %1 {strides = array<i32>} : memref<8x422xf32, #tpu.memory_space<vmem>>, vector<8x422xf32>,
    %cst_3 = arith.constant 0.000000e+00 : f32
    %3 = vector.broadcast %cst_3 : f32 to vector<8x422xf32>
    %c0_4 = arith.constant 0 : index
    %c0_5 = arith.constant 0 : index
    %4 = vector.load %arg9[%c0_4, %c0_5] : memref<8x422xf32, #tpu.memory_space<vmem>>, vector<8x422xf32>
    tpu.vector_store %arg9[%c0_4, %c0_5], %3 {strides = array<i32>} : memref<8x422xf32, #tpu.memory_space<vmem>>, vector<8x422xf32>,
    %cst_6 = arith.constant 0.000000e+00 : f32
    %5 = vector.broadcast %cst_6 : f32 to vector<8x422xf32>
    %c0_7 = arith.constant 0 : index
    %c0_8 = arith.constant 0 : index
    %6 = vector.load %arg10[%c0_7, %c0_8] : memref<8x422xf32, #tpu.memory_space<vmem>>, vector<8x422xf32>
    tpu.vector_store %arg10[%c0_7, %c0_8], %5 {strides = array<i32>} : memref<8x422xf32, #tpu.memory_space<vmem>>, vector<8x422xf32>,
    %c0_9 = arith.constant 0 : index
    %c0_10 = arith.constant 0 : index
    %c0_11 = arith.constant 0 : index
    %7 = vector.load %arg1[%c0_9, %c0_10, %c0_11] : memref<1x8x422xf32, #tpu.memory_space<vmem>>, vector<1x8x422xf32>
    %8 = vector.shape_cast %7 : vector<1x8x422xf32> to vector<8x422xf32>
    %c0_12 = arith.constant 0 : index
    %c0_13 = arith.constant 0 : index
    %c0_14 = arith.constant 0 : index
    %9 = vector.load %arg3[%c0_12, %c0_13, %c0_14] : memref<6x8x72xf32, #tpu.memory_space<vmem>>, vector<1x8x72xf32>
    %10 = vector.shape_cast %9 : vector<1x8x72xf32> to vector<8x72xf32>
    %c0_15 = arith.constant 0 : index
    %c0_16 = arith.constant 0 : index
    %c0_17 = arith.constant 0 : index
    %11 = vector.load %arg4[%c0_15, %c0_16, %c0_17] : memref<6x8x1xf32, #tpu.memory_space<vmem>>, vector<1x8x1xf32>
    %12 = vector.shape_cast %11 : vector<1x8x1xf32> to vector<8x1xf32>
    %13 = vector.extract_strided_slice %8 {offsets = [0, 0], sizes = [8, 384], strides = [1, 1]} : vector<8x422xf32> to vector<8x384xf32>
    %14 = vector.extract_strided_slice %8 {offsets = [0, 1], sizes = [8, 384], strides = [1, 1]} : vector<8x422xf32> to vector<8x384xf32>
    %15 = vector.extract_strided_slice %8 {offsets = [0, 2], sizes = [8, 384], strides = [1, 1]} : vector<8x422xf32> to vector<8x384xf32>
    %16 = vector.extract_strided_slice %8 {offsets = [0, 18], sizes = [8, 384], strides = [1, 1]} : vector<8x422xf32> to vector<8x384xf32>
    %17 = vector.extract_strided_slice %8 {offsets = [0, 19], sizes = [8, 384], strides = [1, 1]} : vector<8x422xf32> to vector<8x384xf32>
    %18 = vector.extract_strided_slice %8 {offsets = [0, 20], sizes = [8, 384], strides = [1, 1]} : vector<8x422xf32> to vector<8x384xf32>
    %19 = vector.extract_strided_slice %8 {offsets = [0, 36], sizes = [8, 384], strides = [1, 1]} : vector<8x422xf32> to vector<8x384xf32>
    %20 = vector.extract_strided_slice %8 {offsets = [0, 37], sizes = [8, 384], strides = [1, 1]} : vector<8x422xf32> to vector<8x384xf32>
    %21 = vector.extract_strided_slice %8 {offsets = [0, 38], sizes = [8, 384], strides = [1, 1]} : vector<8x422xf32> to vector<8x384xf32>
    %22 = tpu.concatenate %13, %14, %15, %16, %17, %18, %19, %20, %21 in 0 : vector<8x384xf32>, vector<8x384xf32>, vector<8x384xf32>, vector<8x384xf32>, vector<8x384xf32>, vector<8x384xf32>, vector<8x384xf32>, vector<8x384xf32>, vector<8x384xf32> -> vector<72x384xf32>
    %cst_18 = arith.constant dense<0.000000e+00> : vector<8x384xf32>
    %23 = tpu.matmul %10, %22, %cst_18 {dimension_numbers = #tpu.dot_dimension_numbers<[1], [0], [0], [1], [0, 0, 1, 1], [], []>} : vector<8x72xf32>, vector<72x384xf32>, vector<8x384xf32> -> vector<8x384xf32>
    %24 = vector.broadcast %12 : vector<8x1xf32> to vector<8x384xf32>
    %25 = arith.addf %23, %24 : vector<8x384xf32>
    %26 = vector.broadcast %0 : vector<1x384xf32> to vector<8x384xf32>
    %27 = arith.mulf %25, %26 : vector<8x384xf32>
    %c0_19 = arith.constant 0 : index
    %c19 = arith.constant 19 : index
    %28 = vector.load %arg8[%c0_19, %c19] : memref<8x422xf32, #tpu.memory_space<vmem>>, vector<8x384xf32>
    tpu.vector_store %arg8[%c0_19, %c19], %27 {strides = array<i32>} : memref<8x422xf32, #tpu.memory_space<vmem>>, vector<8x384xf32>,
    %c0_20 = arith.constant 0 : index
    %c19_21 = arith.constant 19 : index
    %29 = vector.load %arg9[%c0_20, %c19_21] : memref<8x422xf32, #tpu.memory_space<vmem>>, vector<8x384xf32>
    tpu.vector_store %arg9[%c0_20, %c19_21], %27 {strides = array<i32>} : memref<8x422xf32, #tpu.memory_space<vmem>>, vector<8x384xf32>,
    %c1 = arith.constant 1 : index
    %c0_22 = arith.constant 0 : index
    %c0_23 = arith.constant 0 : index
    %30 = vector.load %arg3[%c1, %c0_22, %c0_23] : memref<6x8x72xf32, #tpu.memory_space<vmem>>, vector<1x8x72xf32>
    %31 = vector.shape_cast %30 : vector<1x8x72xf32> to vector<8x72xf32>
    %c1_24 = arith.constant 1 : index
    %c0_25 = arith.constant 0 : index
    %c0_26 = arith.constant 0 : index
    %32 = vector.load %arg4[%c1_24, %c0_25, %c0_26] : memref<6x8x1xf32, #tpu.memory_space<vmem>>, vector<1x8x1xf32>
    %33 = vector.shape_cast %32 : vector<1x8x1xf32> to vector<8x1xf32>
    %c0_27 = arith.constant 0 : index
    %c0_28 = arith.constant 0 : index
    %34 = vector.load %arg9[%c0_27, %c0_28] : memref<8x422xf32, #tpu.memory_space<vmem>>, vector<8x384xf32>
    %c0_29 = arith.constant 0 : index
    %c1_30 = arith.constant 1 : index
    %35 = vector.load %arg9[%c0_29, %c1_30] : memref<8x422xf32, #tpu.memory_space<vmem>>, vector<8x384xf32>
    %c0_31 = arith.constant 0 : index
    %c2 = arith.constant 2 : index
    %36 = vector.load %arg9[%c0_31, %c2] : memref<8x422xf32, #tpu.memory_space<vmem>>, vector<8x384xf32>
    %c0_32 = arith.constant 0 : index
    %c18 = arith.constant 18 : index
    %37 = vector.load %arg9[%c0_32, %c18] : memref<8x422xf32, #tpu.memory_space<vmem>>, vector<8x384xf32>
    %c0_33 = arith.constant 0 : index
    %c19_34 = arith.constant 19 : index
    %38 = vector.load %arg9[%c0_33, %c19_34] : memref<8x422xf32, #tpu.memory_space<vmem>>, vector<8x384xf32>
    %c0_35 = arith.constant 0 : index
    %c20 = arith.constant 20 : index
    %39 = vector.load %arg9[%c0_35, %c20] : memref<8x422xf32, #tpu.memory_space<vmem>>, vector<8x384xf32>
    %c0_36 = arith.constant 0 : index
    %c36 = arith.constant 36 : index
    %40 = vector.load %arg9[%c0_36, %c36] : memref<8x422xf32, #tpu.memory_space<vmem>>, vector<8x384xf32>
    %c0_37 = arith.constant 0 : index
    %c37 = arith.constant 37 : index
    %41 = vector.load %arg9[%c0_37, %c37] : memref<8x422xf32, #tpu.memory_space<vmem>>, vector<8x384xf32>
    %c0_38 = arith.constant 0 : index
    %c38 = arith.constant 38 : index
    %42 = vector.load %arg9[%c0_38, %c38] : memref<8x422xf32, #tpu.memory_space<vmem>>, vector<8x384xf32>
    %43 = tpu.concatenate %34, %35, %36, %37, %38, %39, %40, %41, %42 in 0 : vector<8x384xf32>, vector<8x384xf32>, vector<8x384xf32>, vector<8x384xf32>, vector<8x384xf32>, vector<8x384xf32>, vector<8x384xf32>, vector<8x384xf32>, vector<8x384xf32> -> vector<72x384xf32>
    %cst_39 = arith.constant dense<0.000000e+00> : vector<8x384xf32>
    %44 = tpu.matmul %31, %43, %cst_39 {dimension_numbers = #tpu.dot_dimension_numbers<[1], [0], [0], [1], [0, 0, 1, 1], [], []>} : vector<8x72xf32>, vector<72x384xf32>, vector<8x384xf32> -> vector<8x384xf32>
    %45 = vector.broadcast %33 : vector<8x1xf32> to vector<8x384xf32>
    %46 = arith.addf %44, %45 : vector<8x384xf32>
    %cst_40 = arith.constant 0.000000e+00 : f32
    %47 = vector.broadcast %cst_40 : f32 to vector<8x384xf32>
    %48 = arith.maximumf %46, %47 : vector<8x384xf32>
    %49 = vector.broadcast %0 : vector<1x384xf32> to vector<8x384xf32>
    %50 = arith.mulf %48, %49 : vector<8x384xf32>
    %c0_41 = arith.constant 0 : index
    %c19_42 = arith.constant 19 : index
    %51 = vector.load %arg10[%c0_41, %c19_42] : memref<8x422xf32, #tpu.memory_space<vmem>>, vector<8x384xf32>
    tpu.vector_store %arg10[%c0_41, %c19_42], %50 {strides = array<i32>} : memref<8x422xf32, #tpu.memory_space<vmem>>, vector<8x384xf32>,
    %c2_43 = arith.constant 2 : index
    %c0_44 = arith.constant 0 : index
    %c0_45 = arith.constant 0 : index
    %52 = vector.load %arg3[%c2_43, %c0_44, %c0_45] : memref<6x8x72xf32, #tpu.memory_space<vmem>>, vector<1x8x72xf32>
    %53 = vector.shape_cast %52 : vector<1x8x72xf32> to vector<8x72xf32>
    %c2_46 = arith.constant 2 : index
    %c0_47 = arith.constant 0 : index
    %c0_48 = arith.constant 0 : index
    %54 = vector.load %arg4[%c2_46, %c0_47, %c0_48] : memref<6x8x1xf32, #tpu.memory_space<vmem>>, vector<1x8x1xf32>
    %55 = vector.shape_cast %54 : vector<1x8x1xf32> to vector<8x1xf32>
    %c0_49 = arith.constant 0 : index
    %c0_50 = arith.constant 0 : index
    %56 = vector.load %arg10[%c0_49, %c0_50] : memref<8x422xf32, #tpu.memory_space<vmem>>, vector<8x384xf32>
    %c0_51 = arith.constant 0 : index
    %c1_52 = arith.constant 1 : index
    %57 = vector.load %arg10[%c0_51, %c1_52] : memref<8x422xf32, #tpu.memory_space<vmem>>, vector<8x384xf32>
    %c0_53 = arith.constant 0 : index
    %c2_54 = arith.constant 2 : index
    %58 = vector.load %arg10[%c0_53, %c2_54] : memref<8x422xf32, #tpu.memory_space<vmem>>, vector<8x384xf32>
    %c0_55 = arith.constant 0 : index
    %c18_56 = arith.constant 18 : index
    %59 = vector.load %arg10[%c0_55, %c18_56] : memref<8x422xf32, #tpu.memory_space<vmem>>, vector<8x384xf32>
    %c0_57 = arith.constant 0 : index
    %c19_58 = arith.constant 19 : index
    %60 = vector.load %arg10[%c0_57, %c19_58] : memref<8x422xf32, #tpu.memory_space<vmem>>, vector<8x384xf32>
    %c0_59 = arith.constant 0 : index
    %c20_60 = arith.constant 20 : index
    %61 = vector.load %arg10[%c0_59, %c20_60] : memref<8x422xf32, #tpu.memory_space<vmem>>, vector<8x384xf32>
    %c0_61 = arith.constant 0 : index
    %c36_62 = arith.constant 36 : index
    %62 = vector.load %arg10[%c0_61, %c36_62] : memref<8x422xf32, #tpu.memory_space<vmem>>, vector<8x384xf32>
    %c0_63 = arith.constant 0 : index
    %c37_64 = arith.constant 37 : index
    %63 = vector.load %arg10[%c0_63, %c37_64] : memref<8x422xf32, #tpu.memory_space<vmem>>, vector<8x384xf32>
    %c0_65 = arith.constant 0 : index
    %c38_66 = arith.constant 38 : index
    %64 = vector.load %arg10[%c0_65, %c38_66] : memref<8x422xf32, #tpu.memory_space<vmem>>, vector<8x384xf32>
    %65 = tpu.concatenate %56, %57, %58, %59, %60, %61, %62, %63, %64 in 0 : vector<8x384xf32>, vector<8x384xf32>, vector<8x384xf32>, vector<8x384xf32>, vector<8x384xf32>, vector<8x384xf32>, vector<8x384xf32>, vector<8x384xf32>, vector<8x384xf32> -> vector<72x384xf32>
    %cst_67 = arith.constant dense<0.000000e+00> : vector<8x384xf32>
    %66 = tpu.matmul %53, %65, %cst_67 {dimension_numbers = #tpu.dot_dimension_numbers<[1], [0], [0], [1], [0, 0, 1, 1], [], []>} : vector<8x72xf32>, vector<72x384xf32>, vector<8x384xf32> -> vector<8x384xf32>
    %67 = vector.broadcast %55 : vector<8x1xf32> to vector<8x384xf32>
    %68 = arith.addf %66, %67 : vector<8x384xf32>
    %69 = vector.broadcast %0 : vector<1x384xf32> to vector<8x384xf32>
    %70 = arith.mulf %68, %69 : vector<8x384xf32>
    %c0_68 = arith.constant 0 : index
    %c19_69 = arith.constant 19 : index
    %71 = vector.load %arg9[%c0_68, %c19_69] : memref<8x422xf32, #tpu.memory_space<vmem>>, vector<8x384xf32>
    %cst_70 = arith.constant 1.000000e-01 : f32
    %72 = vector.broadcast %cst_70 : f32 to vector<8x384xf32>
    %73 = arith.mulf %72, %70 : vector<8x384xf32>
    %74 = arith.addf %71, %73 : vector<8x384xf32>
    %c0_71 = arith.constant 0 : index
    %c19_72 = arith.constant 19 : index
    %75 = vector.load %arg9[%c0_71, %c19_72] : memref<8x422xf32, #tpu.memory_space<vmem>>, vector<8x384xf32>
    tpu.vector_store %arg9[%c0_71, %c19_72], %74 {strides = array<i32>} : memref<8x422xf32, #tpu.memory_space<vmem>>, vector<8x384xf32>,
    %c3 = arith.constant 3 : index
    %c0_73 = arith.constant 0 : index
    %c0_74 = arith.constant 0 : index
    %76 = vector.load %arg3[%c3, %c0_73, %c0_74] : memref<6x8x72xf32, #tpu.memory_space<vmem>>, vector<1x8x72xf32>
    %77 = vector.shape_cast %76 : vector<1x8x72xf32> to vector<8x72xf32>
    %c3_75 = arith.constant 3 : index
    %c0_76 = arith.constant 0 : index
    %c0_77 = arith.constant 0 : index
    %78 = vector.load %arg4[%c3_75, %c0_76, %c0_77] : memref<6x8x1xf32, #tpu.memory_space<vmem>>, vector<1x8x1xf32>
    %79 = vector.shape_cast %78 : vector<1x8x1xf32> to vector<8x1xf32>
    %c0_78 = arith.constant 0 : index
    %c0_79 = arith.constant 0 : index
    %80 = vector.load %arg9[%c0_78, %c0_79] : memref<8x422xf32, #tpu.memory_space<vmem>>, vector<8x384xf32>
    %c0_80 = arith.constant 0 : index
    %c1_81 = arith.constant 1 : index
    %81 = vector.load %arg9[%c0_80, %c1_81] : memref<8x422xf32, #tpu.memory_space<vmem>>, vector<8x384xf32>
    %c0_82 = arith.constant 0 : index
    %c2_83 = arith.constant 2 : index
    %82 = vector.load %arg9[%c0_82, %c2_83] : memref<8x422xf32, #tpu.memory_space<vmem>>, vector<8x384xf32>
    %c0_84 = arith.constant 0 : index
    %c18_85 = arith.constant 18 : index
    %83 = vector.load %arg9[%c0_84, %c18_85] : memref<8x422xf32, #tpu.memory_space<vmem>>, vector<8x384xf32>
    %c0_86 = arith.constant 0 : index
    %c19_87 = arith.constant 19 : index
    %84 = vector.load %arg9[%c0_86, %c19_87] : memref<8x422xf32, #tpu.memory_space<vmem>>, vector<8x384xf32>
    %c0_88 = arith.constant 0 : index
    %c20_89 = arith.constant 20 : index
    %85 = vector.load %arg9[%c0_88, %c20_89] : memref<8x422xf32, #tpu.memory_space<vmem>>, vector<8x384xf32>
    %c0_90 = arith.constant 0 : index
    %c36_91 = arith.constant 36 : index
    %86 = vector.load %arg9[%c0_90, %c36_91] : memref<8x422xf32, #tpu.memory_space<vmem>>, vector<8x384xf32>
    %c0_92 = arith.constant 0 : index
    %c37_93 = arith.constant 37 : index
    %87 = vector.load %arg9[%c0_92, %c37_93] : memref<8x422xf32, #tpu.memory_space<vmem>>, vector<8x384xf32>
    %c0_94 = arith.constant 0 : index
    %c38_95 = arith.constant 38 : index
    %88 = vector.load %arg9[%c0_94, %c38_95] : memref<8x422xf32, #tpu.memory_space<vmem>>, vector<8x384xf32>
    %89 = tpu.concatenate %80, %81, %82, %83, %84, %85, %86, %87, %88 in 0 : vector<8x384xf32>, vector<8x384xf32>, vector<8x384xf32>, vector<8x384xf32>, vector<8x384xf32>, vector<8x384xf32>, vector<8x384xf32>, vector<8x384xf32>, vector<8x384xf32> -> vector<72x384xf32>
    %cst_96 = arith.constant dense<0.000000e+00> : vector<8x384xf32>
    %90 = tpu.matmul %77, %89, %cst_96 {dimension_numbers = #tpu.dot_dimension_numbers<[1], [0], [0], [1], [0, 0, 1, 1], [], []>} : vector<8x72xf32>, vector<72x384xf32>, vector<8x384xf32> -> vector<8x384xf32>
    %91 = vector.broadcast %79 : vector<8x1xf32> to vector<8x384xf32>
    %92 = arith.addf %90, %91 : vector<8x384xf32>
    %cst_97 = arith.constant 0.000000e+00 : f32
    %93 = vector.broadcast %cst_97 : f32 to vector<8x384xf32>
    %94 = arith.maximumf %92, %93 : vector<8x384xf32>
    %95 = vector.broadcast %0 : vector<1x384xf32> to vector<8x384xf32>
    %96 = arith.mulf %94, %95 : vector<8x384xf32>
    %c0_98 = arith.constant 0 : index
    %c19_99 = arith.constant 19 : index
    %97 = vector.load %arg10[%c0_98, %c19_99] : memref<8x422xf32, #tpu.memory_space<vmem>>, vector<8x384xf32>
    tpu.vector_store %arg10[%c0_98, %c19_99], %96 {strides = array<i32>} : memref<8x422xf32, #tpu.memory_space<vmem>>, vector<8x384xf32>,
    %c4 = arith.constant 4 : index
    %c0_100 = arith.constant 0 : index
    %c0_101 = arith.constant 0 : index
    %98 = vector.load %arg3[%c4, %c0_100, %c0_101] : memref<6x8x72xf32, #tpu.memory_space<vmem>>, vector<1x8x72xf32>
    %99 = vector.shape_cast %98 : vector<1x8x72xf32> to vector<8x72xf32>
    %c4_102 = arith.constant 4 : index
    %c0_103 = arith.constant 0 : index
    %c0_104 = arith.constant 0 : index
    %100 = vector.load %arg4[%c4_102, %c0_103, %c0_104] : memref<6x8x1xf32, #tpu.memory_space<vmem>>, vector<1x8x1xf32>
    %101 = vector.shape_cast %100 : vector<1x8x1xf32> to vector<8x1xf32>
    %c0_105 = arith.constant 0 : index
    %c0_106 = arith.constant 0 : index
    %102 = vector.load %arg10[%c0_105, %c0_106] : memref<8x422xf32, #tpu.memory_space<vmem>>, vector<8x384xf32>
    %c0_107 = arith.constant 0 : index
    %c1_108 = arith.constant 1 : index
    %103 = vector.load %arg10[%c0_107, %c1_108] : memref<8x422xf32, #tpu.memory_space<vmem>>, vector<8x384xf32>
    %c0_109 = arith.constant 0 : index
    %c2_110 = arith.constant 2 : index
    %104 = vector.load %arg10[%c0_109, %c2_110] : memref<8x422xf32, #tpu.memory_space<vmem>>, vector<8x384xf32>
    %c0_111 = arith.constant 0 : index
    %c18_112 = arith.constant 18 : index
    %105 = vector.load %arg10[%c0_111, %c18_112] : memref<8x422xf32, #tpu.memory_space<vmem>>, vector<8x384xf32>
    %c0_113 = arith.constant 0 : index
    %c19_114 = arith.constant 19 : index
    %106 = vector.load %arg10[%c0_113, %c19_114] : memref<8x422xf32, #tpu.memory_space<vmem>>, vector<8x384xf32>
    %c0_115 = arith.constant 0 : index
    %c20_116 = arith.constant 20 : index
    %107 = vector.load %arg10[%c0_115, %c20_116] : memref<8x422xf32, #tpu.memory_space<vmem>>, vector<8x384xf32>
    %c0_117 = arith.constant 0 : index
    %c36_118 = arith.constant 36 : index
    %108 = vector.load %arg10[%c0_117, %c36_118] : memref<8x422xf32, #tpu.memory_space<vmem>>, vector<8x384xf32>
    %c0_119 = arith.constant 0 : index
    %c37_120 = arith.constant 37 : index
    %109 = vector.load %arg10[%c0_119, %c37_120] : memref<8x422xf32, #tpu.memory_space<vmem>>, vector<8x384xf32>
    %c0_121 = arith.constant 0 : index
    %c38_122 = arith.constant 38 : index
    %110 = vector.load %arg10[%c0_121, %c38_122] : memref<8x422xf32, #tpu.memory_space<vmem>>, vector<8x384xf32>
    %111 = tpu.concatenate %102, %103, %104, %105, %106, %107, %108, %109, %110 in 0 : vector<8x384xf32>, vector<8x384xf32>, vector<8x384xf32>, vector<8x384xf32>, vector<8x384xf32>, vector<8x384xf32>, vector<8x384xf32>, vector<8x384xf32>, vector<8x384xf32> -> vector<72x384xf32>
    %cst_123 = arith.constant dense<0.000000e+00> : vector<8x384xf32>
    %112 = tpu.matmul %99, %111, %cst_123 {dimension_numbers = #tpu.dot_dimension_numbers<[1], [0], [0], [1], [0, 0, 1, 1], [], []>} : vector<8x72xf32>, vector<72x384xf32>, vector<8x384xf32> -> vector<8x384xf32>
    %113 = vector.broadcast %101 : vector<8x1xf32> to vector<8x384xf32>
    %114 = arith.addf %112, %113 : vector<8x384xf32>
    %115 = vector.broadcast %0 : vector<1x384xf32> to vector<8x384xf32>
    %116 = arith.mulf %114, %115 : vector<8x384xf32>
    %c0_124 = arith.constant 0 : index
    %c19_125 = arith.constant 19 : index
    %117 = vector.load %arg9[%c0_124, %c19_125] : memref<8x422xf32, #tpu.memory_space<vmem>>, vector<8x384xf32>
    %cst_126 = arith.constant 1.000000e-01 : f32
    %118 = vector.broadcast %cst_126 : f32 to vector<8x384xf32>
    %119 = arith.mulf %118, %116 : vector<8x384xf32>
    %120 = arith.addf %117, %119 : vector<8x384xf32>
    %c0_127 = arith.constant 0 : index
    %c19_128 = arith.constant 19 : index
    %121 = vector.load %arg9[%c0_127, %c19_128] : memref<8x422xf32, #tpu.memory_space<vmem>>, vector<8x384xf32>
    tpu.vector_store %arg9[%c0_127, %c19_128], %120 {strides = array<i32>} : memref<8x422xf32, #tpu.memory_space<vmem>>, vector<8x384xf32>,
    %c5 = arith.constant 5 : index
    %c0_129 = arith.constant 0 : index
    %c0_130 = arith.constant 0 : index
    %122 = vector.load %arg3[%c5, %c0_129, %c0_130] : memref<6x8x72xf32, #tpu.memory_space<vmem>>, vector<1x8x72xf32>
    %123 = vector.shape_cast %122 : vector<1x8x72xf32> to vector<8x72xf32>
    %c5_131 = arith.constant 5 : index
    %c0_132 = arith.constant 0 : index
    %c0_133 = arith.constant 0 : index
    %124 = vector.load %arg4[%c5_131, %c0_132, %c0_133] : memref<6x8x1xf32, #tpu.memory_space<vmem>>, vector<1x8x1xf32>
    %125 = vector.shape_cast %124 : vector<1x8x1xf32> to vector<8x1xf32>
    %c0_134 = arith.constant 0 : index
    %c0_135 = arith.constant 0 : index
    %126 = vector.load %arg9[%c0_134, %c0_135] : memref<8x422xf32, #tpu.memory_space<vmem>>, vector<8x384xf32>
    %c0_136 = arith.constant 0 : index
    %c1_137 = arith.constant 1 : index
    %127 = vector.load %arg9[%c0_136, %c1_137] : memref<8x422xf32, #tpu.memory_space<vmem>>, vector<8x384xf32>
    %c0_138 = arith.constant 0 : index
    %c2_139 = arith.constant 2 : index
    %128 = vector.load %arg9[%c0_138, %c2_139] : memref<8x422xf32, #tpu.memory_space<vmem>>, vector<8x384xf32>
    %c0_140 = arith.constant 0 : index
    %c18_141 = arith.constant 18 : index
    %129 = vector.load %arg9[%c0_140, %c18_141] : memref<8x422xf32, #tpu.memory_space<vmem>>, vector<8x384xf32>
    %c0_142 = arith.constant 0 : index
    %c19_143 = arith.constant 19 : index
    %130 = vector.load %arg9[%c0_142, %c19_143] : memref<8x422xf32, #tpu.memory_space<vmem>>, vector<8x384xf32>
    %c0_144 = arith.constant 0 : index
    %c20_145 = arith.constant 20 : index
    %131 = vector.load %arg9[%c0_144, %c20_145] : memref<8x422xf32, #tpu.memory_space<vmem>>, vector<8x384xf32>
    %c0_146 = arith.constant 0 : index
    %c36_147 = arith.constant 36 : index
    %132 = vector.load %arg9[%c0_146, %c36_147] : memref<8x422xf32, #tpu.memory_space<vmem>>, vector<8x384xf32>
    %c0_148 = arith.constant 0 : index
    %c37_149 = arith.constant 37 : index
    %133 = vector.load %arg9[%c0_148, %c37_149] : memref<8x422xf32, #tpu.memory_space<vmem>>, vector<8x384xf32>
    %c0_150 = arith.constant 0 : index
    %c38_151 = arith.constant 38 : index
    %134 = vector.load %arg9[%c0_150, %c38_151] : memref<8x422xf32, #tpu.memory_space<vmem>>, vector<8x384xf32>
    %135 = tpu.concatenate %126, %127, %128, %129, %130, %131, %132, %133, %134 in 0 : vector<8x384xf32>, vector<8x384xf32>, vector<8x384xf32>, vector<8x384xf32>, vector<8x384xf32>, vector<8x384xf32>, vector<8x384xf32>, vector<8x384xf32>, vector<8x384xf32> -> vector<72x384xf32>
    %cst_152 = arith.constant dense<0.000000e+00> : vector<8x384xf32>
    %136 = tpu.matmul %123, %135, %cst_152 {dimension_numbers = #tpu.dot_dimension_numbers<[1], [0], [0], [1], [0, 0, 1, 1], [], []>} : vector<8x72xf32>, vector<72x384xf32>, vector<8x384xf32> -> vector<8x384xf32>
    %137 = vector.broadcast %125 : vector<8x1xf32> to vector<8x384xf32>
    %138 = arith.addf %136, %137 : vector<8x384xf32>
    %139 = vector.broadcast %0 : vector<1x384xf32> to vector<8x384xf32>
    %140 = arith.mulf %138, %139 : vector<8x384xf32>
    %c0_153 = arith.constant 0 : index
    %c19_154 = arith.constant 19 : index
    %141 = vector.load %arg8[%c0_153, %c19_154] : memref<8x422xf32, #tpu.memory_space<vmem>>, vector<8x384xf32>
    %142 = arith.addf %141, %140 : vector<8x384xf32>
    %c0_155 = arith.constant 0 : index
    %c19_156 = arith.constant 19 : index
    %143 = vector.load %arg9[%c0_155, %c19_156] : memref<8x422xf32, #tpu.memory_space<vmem>>, vector<8x384xf32>
    tpu.vector_store %arg9[%c0_155, %c19_156], %142 {strides = array<i32>} : memref<8x422xf32, #tpu.memory_space<vmem>>, vector<8x384xf32>,
    %c0_157 = arith.constant 0 : index
    %c0_158 = arith.constant 0 : index
    %144 = vector.load %arg5[%c0_157, %c0_158] : memref<32x72xf32, #tpu.memory_space<vmem>>, vector<32x72xf32>
    %c0_159 = arith.constant 0 : index
    %c0_160 = arith.constant 0 : index
    %145 = vector.load %arg6[%c0_159, %c0_160] : memref<32x1xf32, #tpu.memory_space<vmem>>, vector<32x1xf32>
    %c0_161 = arith.constant 0 : index
    %c0_162 = arith.constant 0 : index
    %146 = vector.load %arg9[%c0_161, %c0_162] : memref<8x422xf32, #tpu.memory_space<vmem>>, vector<8x384xf32>
    %c0_163 = arith.constant 0 : index
    %c1_164 = arith.constant 1 : index
    %147 = vector.load %arg9[%c0_163, %c1_164] : memref<8x422xf32, #tpu.memory_space<vmem>>, vector<8x384xf32>
    %c0_165 = arith.constant 0 : index
    %c2_166 = arith.constant 2 : index
    %148 = vector.load %arg9[%c0_165, %c2_166] : memref<8x422xf32, #tpu.memory_space<vmem>>, vector<8x384xf32>
    %c0_167 = arith.constant 0 : index
    %c18_168 = arith.constant 18 : index
    %149 = vector.load %arg9[%c0_167, %c18_168] : memref<8x422xf32, #tpu.memory_space<vmem>>, vector<8x384xf32>
    %c0_169 = arith.constant 0 : index
    %c19_170 = arith.constant 19 : index
    %150 = vector.load %arg9[%c0_169, %c19_170] : memref<8x422xf32, #tpu.memory_space<vmem>>, vector<8x384xf32>
    %c0_171 = arith.constant 0 : index
    %c20_172 = arith.constant 20 : index
    %151 = vector.load %arg9[%c0_171, %c20_172] : memref<8x422xf32, #tpu.memory_space<vmem>>, vector<8x384xf32>
    %c0_173 = arith.constant 0 : index
    %c36_174 = arith.constant 36 : index
    %152 = vector.load %arg9[%c0_173, %c36_174] : memref<8x422xf32, #tpu.memory_space<vmem>>, vector<8x384xf32>
    %c0_175 = arith.constant 0 : index
    %c37_176 = arith.constant 37 : index
    %153 = vector.load %arg9[%c0_175, %c37_176] : memref<8x422xf32, #tpu.memory_space<vmem>>, vector<8x384xf32>
    %c0_177 = arith.constant 0 : index
    %c38_178 = arith.constant 38 : index
    %154 = vector.load %arg9[%c0_177, %c38_178] : memref<8x422xf32, #tpu.memory_space<vmem>>, vector<8x384xf32>
    %155 = tpu.concatenate %146, %147, %148, %149, %150, %151, %152, %153, %154 in 0 : vector<8x384xf32>, vector<8x384xf32>, vector<8x384xf32>, vector<8x384xf32>, vector<8x384xf32>, vector<8x384xf32>, vector<8x384xf32>, vector<8x384xf32>, vector<8x384xf32> -> vector<72x384xf32>
    %cst_179 = arith.constant dense<0.000000e+00> : vector<32x384xf32>
    %156 = tpu.matmul %144, %155, %cst_179 {dimension_numbers = #tpu.dot_dimension_numbers<[1], [0], [0], [1], [0, 0, 1, 1], [], []>} : vector<32x72xf32>, vector<72x384xf32>, vector<32x384xf32> -> vector<32x384xf32>
    %157 = vector.broadcast %145 : vector<32x1xf32> to vector<32x384xf32>
    %158 = arith.addf %156, %157 : vector<32x384xf32>
    %159 = vector.broadcast %0 : vector<1x384xf32> to vector<32x384xf32>
    %160 = arith.mulf %158, %159 : vector<32x384xf32>
    %c0_180 = arith.constant 0 : index
    %c0_181 = arith.constant 0 : index
    %c0_182 = arith.constant 0 : index
    %161 = vector.load %arg7[%c0_180, %c0_181, %c0_182] : memref<1x32x384xf32, #tpu.memory_space<vmem>>, vector<1x32x384xf32>
    %162 = vector.shape_cast %161 : vector<1x32x384xf32> to vector<32x384xf32>
    %163 = vector.shape_cast %160 : vector<32x384xf32> to vector<1x32x384xf32>
    tpu.vector_store %arg7[%c0_180, %c0_181, %c0_182], %163 {strides = array<i32>} : memref<1x32x384xf32, #tpu.memory_space<vmem>>, vector<1x32x384xf32>,
    return
  }
  func.func @transform_0(%arg0: i32) -> (i32, i32, i32) {
    %c0_i32 = arith.constant 0 : i32
    %c0_i32_0 = arith.constant 0 : i32
    %c0_i32_1 = arith.constant 0 : i32
    return %arg0, %c0_i32, %c0_i32_0 : i32, i32, i32
  }
  func.func @transform_1(%arg0: i32) -> (i32, i32) {
    %c0_i32 = arith.constant 0 : i32
    %c0_i32_0 = arith.constant 0 : i32
    %c0_i32_1 = arith.constant 0 : i32
    return %c0_i32, %c0_i32_0 : i32, i32
  }
  func.func @transform_2(%arg0: i32) -> (i32, i32, i32) {
    %c0_i32 = arith.constant 0 : i32
    %c0_i32_0 = arith.constant 0 : i32
    %c0_i32_1 = arith.constant 0 : i32
    %c0_i32_2 = arith.constant 0 : i32
    return %c0_i32, %c0_i32_0, %c0_i32_1 : i32, i32, i32
  }
  func.func @transform_3(%arg0: i32) -> (i32, i32, i32) {
    %c0_i32 = arith.constant 0 : i32
    %c0_i32_0 = arith.constant 0 : i32
    %c0_i32_1 = arith.constant 0 : i32
    %c0_i32_2 = arith.constant 0 : i32
    return %c0_i32, %c0_i32_0, %c0_i32_1 : i32, i32, i32
  }
  func.func @transform_4(%arg0: i32) -> (i32, i32) {
    %c0_i32 = arith.constant 0 : i32
    %c0_i32_0 = arith.constant 0 : i32
    %c0_i32_1 = arith.constant 0 : i32
    return %c0_i32, %c0_i32_0 : i32, i32
  }
  func.func @transform_5(%arg0: i32) -> (i32, i32) {
    %c0_i32 = arith.constant 0 : i32
    %c0_i32_0 = arith.constant 0 : i32
    %c0_i32_1 = arith.constant 0 : i32
    return %c0_i32, %c0_i32_0 : i32, i32
  }
  func.func @transform_6(%arg0: i32) -> (i32, i32, i32) {
    %c0_i32 = arith.constant 0 : i32
    %c0_i32_0 = arith.constant 0 : i32
    %c0_i32_1 = arith.constant 0 : i32
    return %arg0, %c0_i32, %c0_i32_0 : i32, i32, i32
  }
}

module attributes {stable_mosaic.version = 11 : i64} {
  func.func @_upscale_kernel(%arg0: i32, %arg1: memref<1x32x384xf32, #tpu.memory_space<vmem>>, %arg2: memref<4x4x384xf32, #tpu.memory_space<vmem>>, %arg3: memref<3x72xf32, #tpu.memory_space<vmem>>, %arg4: memref<3x1xf32, #tpu.memory_space<vmem>>, %arg5: memref<1x4x3x384xf32, #tpu.memory_space<vmem>>, %arg6: memref<4x8x422xf32, #tpu.memory_space<vmem>>) attributes {dimension_semantics = [#tpu.dimension_semantics<parallel>], iteration_bounds = array<i64: 2>, scalar_prefetch = 0 : i64, scratch_operands = 1 : i64, tpu.core_type = #tpu.core_type<tc>, window_params = [{transform_indices = @transform_0, window_bounds = array<i64: 1, 32, 384>}, {pipeline_mode = #tpu.pipeline_mode<synchronous>, transform_indices = @transform_1, window_bounds = array<i64: 4, 4, 384>}, {pipeline_mode = #tpu.pipeline_mode<synchronous>, transform_indices = @transform_2, window_bounds = array<i64: 3, 72>}, {pipeline_mode = #tpu.pipeline_mode<synchronous>, transform_indices = @transform_3, window_bounds = array<i64: 3, 1>}, {transform_indices = @transform_4, window_bounds = array<i64: 1, 4, 3, 384>}]} {
    %cst = arith.constant 0.000000e+00 : f32
    %0 = vector.broadcast %cst : f32 to vector<4x8x422xf32>
    %c0 = arith.constant 0 : index
    %c0_0 = arith.constant 0 : index
    %c0_1 = arith.constant 0 : index
    %1 = vector.load %arg6[%c0, %c0_0, %c0_1] : memref<4x8x422xf32, #tpu.memory_space<vmem>>, vector<4x8x422xf32>
    tpu.vector_store %arg6[%c0, %c0_0, %c0_1], %0 {strides = array<i32>} : memref<4x8x422xf32, #tpu.memory_space<vmem>>, vector<4x8x422xf32>,
    %c0_2 = arith.constant 0 : index
    %c0_3 = arith.constant 0 : index
    %c0_4 = arith.constant 0 : index
    %2 = vector.load %arg1[%c0_2, %c0_3, %c0_4] : memref<1x32x384xf32, #tpu.memory_space<vmem>>, vector<1x32x384xf32>
    %3 = vector.shape_cast %2 : vector<1x32x384xf32> to vector<32x384xf32>
    %4 = vector.shape_cast %3 : vector<32x384xf32> to vector<8x4x384xf32>
    %c0_5 = arith.constant 0 : index
    %c0_6 = arith.constant 0 : index
    %c0_7 = arith.constant 0 : index
    %5 = vector.load %arg2[%c0_5, %c0_6, %c0_7] : memref<4x4x384xf32, #tpu.memory_space<vmem>>, vector<4x4x384xf32>
    %c0_8 = arith.constant 0 : index
    %c0_9 = arith.constant 0 : index
    %6 = vector.load %arg3[%c0_8, %c0_9] : memref<3x72xf32, #tpu.memory_space<vmem>>, vector<3x72xf32>
    %c0_10 = arith.constant 0 : index
    %c0_11 = arith.constant 0 : index
    %7 = vector.load %arg4[%c0_10, %c0_11] : memref<3x1xf32, #tpu.memory_space<vmem>>, vector<3x1xf32>
    %8 = vector.extract_strided_slice %4 {offsets = [0, 0, 0], sizes = [8, 1, 384], strides = [1, 1, 1]} : vector<8x4x384xf32> to vector<8x1x384xf32>
    %9 = vector.shape_cast %8 : vector<8x1x384xf32> to vector<8x384xf32>
    %10 = vector.extract_strided_slice %5 {offsets = [0, 0, 0], sizes = [1, 1, 384], strides = [1, 1, 1]} : vector<4x4x384xf32> to vector<1x1x384xf32>
    %11 = vector.shape_cast %10 : vector<1x1x384xf32> to vector<1x384xf32>
    %12 = vector.broadcast %11 : vector<1x384xf32> to vector<8x384xf32>
    %13 = arith.mulf %9, %12 : vector<8x384xf32>
    %14 = vector.extract_strided_slice %4 {offsets = [0, 1, 0], sizes = [8, 1, 384], strides = [1, 1, 1]} : vector<8x4x384xf32> to vector<8x1x384xf32>
    %15 = vector.shape_cast %14 : vector<8x1x384xf32> to vector<8x384xf32>
    %16 = vector.extract_strided_slice %5 {offsets = [0, 1, 0], sizes = [1, 1, 384], strides = [1, 1, 1]} : vector<4x4x384xf32> to vector<1x1x384xf32>
    %17 = vector.shape_cast %16 : vector<1x1x384xf32> to vector<1x384xf32>
    %18 = vector.broadcast %17 : vector<1x384xf32> to vector<8x384xf32>
    %19 = arith.mulf %15, %18 : vector<8x384xf32>
    %20 = arith.addf %13, %19 : vector<8x384xf32>
    %21 = vector.extract_strided_slice %4 {offsets = [0, 2, 0], sizes = [8, 1, 384], strides = [1, 1, 1]} : vector<8x4x384xf32> to vector<8x1x384xf32>
    %22 = vector.shape_cast %21 : vector<8x1x384xf32> to vector<8x384xf32>
    %23 = vector.extract_strided_slice %5 {offsets = [0, 2, 0], sizes = [1, 1, 384], strides = [1, 1, 1]} : vector<4x4x384xf32> to vector<1x1x384xf32>
    %24 = vector.shape_cast %23 : vector<1x1x384xf32> to vector<1x384xf32>
    %25 = vector.broadcast %24 : vector<1x384xf32> to vector<8x384xf32>
    %26 = arith.mulf %22, %25 : vector<8x384xf32>
    %27 = arith.addf %20, %26 : vector<8x384xf32>
    %28 = vector.extract_strided_slice %4 {offsets = [0, 3, 0], sizes = [8, 1, 384], strides = [1, 1, 1]} : vector<8x4x384xf32> to vector<8x1x384xf32>
    %29 = vector.shape_cast %28 : vector<8x1x384xf32> to vector<8x384xf32>
    %30 = vector.extract_strided_slice %5 {offsets = [0, 3, 0], sizes = [1, 1, 384], strides = [1, 1, 1]} : vector<4x4x384xf32> to vector<1x1x384xf32>
    %31 = vector.shape_cast %30 : vector<1x1x384xf32> to vector<1x384xf32>
    %32 = vector.broadcast %31 : vector<1x384xf32> to vector<8x384xf32>
    %33 = arith.mulf %29, %32 : vector<8x384xf32>
    %34 = arith.addf %27, %33 : vector<8x384xf32>
    %c0_12 = arith.constant 0 : index
    %c0_13 = arith.constant 0 : index
    %c19 = arith.constant 19 : index
    %35 = vector.load %arg6[%c0_12, %c0_13, %c19] : memref<4x8x422xf32, #tpu.memory_space<vmem>>, vector<1x8x384xf32>
    %36 = vector.shape_cast %35 : vector<1x8x384xf32> to vector<8x384xf32>
    %37 = vector.shape_cast %34 : vector<8x384xf32> to vector<1x8x384xf32>
    tpu.vector_store %arg6[%c0_12, %c0_13, %c19], %37 {strides = array<i32>} : memref<4x8x422xf32, #tpu.memory_space<vmem>>, vector<1x8x384xf32>,
    %38 = vector.extract_strided_slice %4 {offsets = [0, 0, 0], sizes = [8, 1, 384], strides = [1, 1, 1]} : vector<8x4x384xf32> to vector<8x1x384xf32>
    %39 = vector.shape_cast %38 : vector<8x1x384xf32> to vector<8x384xf32>
    %40 = vector.extract_strided_slice %5 {offsets = [1, 0, 0], sizes = [1, 1, 384], strides = [1, 1, 1]} : vector<4x4x384xf32> to vector<1x1x384xf32>
    %41 = vector.shape_cast %40 : vector<1x1x384xf32> to vector<1x384xf32>
    %42 = vector.broadcast %41 : vector<1x384xf32> to vector<8x384xf32>
    %43 = arith.mulf %39, %42 : vector<8x384xf32>
    %44 = vector.extract_strided_slice %4 {offsets = [0, 1, 0], sizes = [8, 1, 384], strides = [1, 1, 1]} : vector<8x4x384xf32> to vector<8x1x384xf32>
    %45 = vector.shape_cast %44 : vector<8x1x384xf32> to vector<8x384xf32>
    %46 = vector.extract_strided_slice %5 {offsets = [1, 1, 0], sizes = [1, 1, 384], strides = [1, 1, 1]} : vector<4x4x384xf32> to vector<1x1x384xf32>
    %47 = vector.shape_cast %46 : vector<1x1x384xf32> to vector<1x384xf32>
    %48 = vector.broadcast %47 : vector<1x384xf32> to vector<8x384xf32>
    %49 = arith.mulf %45, %48 : vector<8x384xf32>
    %50 = arith.addf %43, %49 : vector<8x384xf32>
    %51 = vector.extract_strided_slice %4 {offsets = [0, 2, 0], sizes = [8, 1, 384], strides = [1, 1, 1]} : vector<8x4x384xf32> to vector<8x1x384xf32>
    %52 = vector.shape_cast %51 : vector<8x1x384xf32> to vector<8x384xf32>
    %53 = vector.extract_strided_slice %5 {offsets = [1, 2, 0], sizes = [1, 1, 384], strides = [1, 1, 1]} : vector<4x4x384xf32> to vector<1x1x384xf32>
    %54 = vector.shape_cast %53 : vector<1x1x384xf32> to vector<1x384xf32>
    %55 = vector.broadcast %54 : vector<1x384xf32> to vector<8x384xf32>
    %56 = arith.mulf %52, %55 : vector<8x384xf32>
    %57 = arith.addf %50, %56 : vector<8x384xf32>
    %58 = vector.extract_strided_slice %4 {offsets = [0, 3, 0], sizes = [8, 1, 384], strides = [1, 1, 1]} : vector<8x4x384xf32> to vector<8x1x384xf32>
    %59 = vector.shape_cast %58 : vector<8x1x384xf32> to vector<8x384xf32>
    %60 = vector.extract_strided_slice %5 {offsets = [1, 3, 0], sizes = [1, 1, 384], strides = [1, 1, 1]} : vector<4x4x384xf32> to vector<1x1x384xf32>
    %61 = vector.shape_cast %60 : vector<1x1x384xf32> to vector<1x384xf32>
    %62 = vector.broadcast %61 : vector<1x384xf32> to vector<8x384xf32>
    %63 = arith.mulf %59, %62 : vector<8x384xf32>
    %64 = arith.addf %57, %63 : vector<8x384xf32>
    %c1 = arith.constant 1 : index
    %c0_14 = arith.constant 0 : index
    %c19_15 = arith.constant 19 : index
    %65 = vector.load %arg6[%c1, %c0_14, %c19_15] : memref<4x8x422xf32, #tpu.memory_space<vmem>>, vector<1x8x384xf32>
    %66 = vector.shape_cast %65 : vector<1x8x384xf32> to vector<8x384xf32>
    %67 = vector.shape_cast %64 : vector<8x384xf32> to vector<1x8x384xf32>
    tpu.vector_store %arg6[%c1, %c0_14, %c19_15], %67 {strides = array<i32>} : memref<4x8x422xf32, #tpu.memory_space<vmem>>, vector<1x8x384xf32>,
    %68 = vector.extract_strided_slice %4 {offsets = [0, 0, 0], sizes = [8, 1, 384], strides = [1, 1, 1]} : vector<8x4x384xf32> to vector<8x1x384xf32>
    %69 = vector.shape_cast %68 : vector<8x1x384xf32> to vector<8x384xf32>
    %70 = vector.extract_strided_slice %5 {offsets = [2, 0, 0], sizes = [1, 1, 384], strides = [1, 1, 1]} : vector<4x4x384xf32> to vector<1x1x384xf32>
    %71 = vector.shape_cast %70 : vector<1x1x384xf32> to vector<1x384xf32>
    %72 = vector.broadcast %71 : vector<1x384xf32> to vector<8x384xf32>
    %73 = arith.mulf %69, %72 : vector<8x384xf32>
    %74 = vector.extract_strided_slice %4 {offsets = [0, 1, 0], sizes = [8, 1, 384], strides = [1, 1, 1]} : vector<8x4x384xf32> to vector<8x1x384xf32>
    %75 = vector.shape_cast %74 : vector<8x1x384xf32> to vector<8x384xf32>
    %76 = vector.extract_strided_slice %5 {offsets = [2, 1, 0], sizes = [1, 1, 384], strides = [1, 1, 1]} : vector<4x4x384xf32> to vector<1x1x384xf32>
    %77 = vector.shape_cast %76 : vector<1x1x384xf32> to vector<1x384xf32>
    %78 = vector.broadcast %77 : vector<1x384xf32> to vector<8x384xf32>
    %79 = arith.mulf %75, %78 : vector<8x384xf32>
    %80 = arith.addf %73, %79 : vector<8x384xf32>
    %81 = vector.extract_strided_slice %4 {offsets = [0, 2, 0], sizes = [8, 1, 384], strides = [1, 1, 1]} : vector<8x4x384xf32> to vector<8x1x384xf32>
    %82 = vector.shape_cast %81 : vector<8x1x384xf32> to vector<8x384xf32>
    %83 = vector.extract_strided_slice %5 {offsets = [2, 2, 0], sizes = [1, 1, 384], strides = [1, 1, 1]} : vector<4x4x384xf32> to vector<1x1x384xf32>
    %84 = vector.shape_cast %83 : vector<1x1x384xf32> to vector<1x384xf32>
    %85 = vector.broadcast %84 : vector<1x384xf32> to vector<8x384xf32>
    %86 = arith.mulf %82, %85 : vector<8x384xf32>
    %87 = arith.addf %80, %86 : vector<8x384xf32>
    %88 = vector.extract_strided_slice %4 {offsets = [0, 3, 0], sizes = [8, 1, 384], strides = [1, 1, 1]} : vector<8x4x384xf32> to vector<8x1x384xf32>
    %89 = vector.shape_cast %88 : vector<8x1x384xf32> to vector<8x384xf32>
    %90 = vector.extract_strided_slice %5 {offsets = [2, 3, 0], sizes = [1, 1, 384], strides = [1, 1, 1]} : vector<4x4x384xf32> to vector<1x1x384xf32>
    %91 = vector.shape_cast %90 : vector<1x1x384xf32> to vector<1x384xf32>
    %92 = vector.broadcast %91 : vector<1x384xf32> to vector<8x384xf32>
    %93 = arith.mulf %89, %92 : vector<8x384xf32>
    %94 = arith.addf %87, %93 : vector<8x384xf32>
    %c2 = arith.constant 2 : index
    %c0_16 = arith.constant 0 : index
    %c19_17 = arith.constant 19 : index
    %95 = vector.load %arg6[%c2, %c0_16, %c19_17] : memref<4x8x422xf32, #tpu.memory_space<vmem>>, vector<1x8x384xf32>
    %96 = vector.shape_cast %95 : vector<1x8x384xf32> to vector<8x384xf32>
    %97 = vector.shape_cast %94 : vector<8x384xf32> to vector<1x8x384xf32>
    tpu.vector_store %arg6[%c2, %c0_16, %c19_17], %97 {strides = array<i32>} : memref<4x8x422xf32, #tpu.memory_space<vmem>>, vector<1x8x384xf32>,
    %98 = vector.extract_strided_slice %4 {offsets = [0, 0, 0], sizes = [8, 1, 384], strides = [1, 1, 1]} : vector<8x4x384xf32> to vector<8x1x384xf32>
    %99 = vector.shape_cast %98 : vector<8x1x384xf32> to vector<8x384xf32>
    %100 = vector.extract_strided_slice %5 {offsets = [3, 0, 0], sizes = [1, 1, 384], strides = [1, 1, 1]} : vector<4x4x384xf32> to vector<1x1x384xf32>
    %101 = vector.shape_cast %100 : vector<1x1x384xf32> to vector<1x384xf32>
    %102 = vector.broadcast %101 : vector<1x384xf32> to vector<8x384xf32>
    %103 = arith.mulf %99, %102 : vector<8x384xf32>
    %104 = vector.extract_strided_slice %4 {offsets = [0, 1, 0], sizes = [8, 1, 384], strides = [1, 1, 1]} : vector<8x4x384xf32> to vector<8x1x384xf32>
    %105 = vector.shape_cast %104 : vector<8x1x384xf32> to vector<8x384xf32>
    %106 = vector.extract_strided_slice %5 {offsets = [3, 1, 0], sizes = [1, 1, 384], strides = [1, 1, 1]} : vector<4x4x384xf32> to vector<1x1x384xf32>
    %107 = vector.shape_cast %106 : vector<1x1x384xf32> to vector<1x384xf32>
    %108 = vector.broadcast %107 : vector<1x384xf32> to vector<8x384xf32>
    %109 = arith.mulf %105, %108 : vector<8x384xf32>
    %110 = arith.addf %103, %109 : vector<8x384xf32>
    %111 = vector.extract_strided_slice %4 {offsets = [0, 2, 0], sizes = [8, 1, 384], strides = [1, 1, 1]} : vector<8x4x384xf32> to vector<8x1x384xf32>
    %112 = vector.shape_cast %111 : vector<8x1x384xf32> to vector<8x384xf32>
    %113 = vector.extract_strided_slice %5 {offsets = [3, 2, 0], sizes = [1, 1, 384], strides = [1, 1, 1]} : vector<4x4x384xf32> to vector<1x1x384xf32>
    %114 = vector.shape_cast %113 : vector<1x1x384xf32> to vector<1x384xf32>
    %115 = vector.broadcast %114 : vector<1x384xf32> to vector<8x384xf32>
    %116 = arith.mulf %112, %115 : vector<8x384xf32>
    %117 = arith.addf %110, %116 : vector<8x384xf32>
    %118 = vector.extract_strided_slice %4 {offsets = [0, 3, 0], sizes = [8, 1, 384], strides = [1, 1, 1]} : vector<8x4x384xf32> to vector<8x1x384xf32>
    %119 = vector.shape_cast %118 : vector<8x1x384xf32> to vector<8x384xf32>
    %120 = vector.extract_strided_slice %5 {offsets = [3, 3, 0], sizes = [1, 1, 384], strides = [1, 1, 1]} : vector<4x4x384xf32> to vector<1x1x384xf32>
    %121 = vector.shape_cast %120 : vector<1x1x384xf32> to vector<1x384xf32>
    %122 = vector.broadcast %121 : vector<1x384xf32> to vector<8x384xf32>
    %123 = arith.mulf %119, %122 : vector<8x384xf32>
    %124 = arith.addf %117, %123 : vector<8x384xf32>
    %c3 = arith.constant 3 : index
    %c0_18 = arith.constant 0 : index
    %c19_19 = arith.constant 19 : index
    %125 = vector.load %arg6[%c3, %c0_18, %c19_19] : memref<4x8x422xf32, #tpu.memory_space<vmem>>, vector<1x8x384xf32>
    %126 = vector.shape_cast %125 : vector<1x8x384xf32> to vector<8x384xf32>
    %127 = vector.shape_cast %124 : vector<8x384xf32> to vector<1x8x384xf32>
    tpu.vector_store %arg6[%c3, %c0_18, %c19_19], %127 {strides = array<i32>} : memref<4x8x422xf32, #tpu.memory_space<vmem>>, vector<1x8x384xf32>,
    %c3_20 = arith.constant 3 : index
    %c0_21 = arith.constant 0 : index
    %c0_22 = arith.constant 0 : index
    %128 = vector.load %arg6[%c3_20, %c0_21, %c0_22] : memref<4x8x422xf32, #tpu.memory_space<vmem>>, vector<1x8x384xf32>
    %129 = vector.shape_cast %128 : vector<1x8x384xf32> to vector<8x384xf32>
    %c2_23 = arith.constant 2 : index
    %c0_24 = arith.constant 0 : index
    %c1_25 = arith.constant 1 : index
    %130 = vector.load %arg6[%c2_23, %c0_24, %c1_25] : memref<4x8x422xf32, #tpu.memory_space<vmem>>, vector<1x8x384xf32>
    %131 = vector.shape_cast %130 : vector<1x8x384xf32> to vector<8x384xf32>
    %c3_26 = arith.constant 3 : index
    %c0_27 = arith.constant 0 : index
    %c1_28 = arith.constant 1 : index
    %132 = vector.load %arg6[%c3_26, %c0_27, %c1_28] : memref<4x8x422xf32, #tpu.memory_space<vmem>>, vector<1x8x384xf32>
    %133 = vector.shape_cast %132 : vector<1x8x384xf32> to vector<8x384xf32>
    %c1_29 = arith.constant 1 : index
    %c0_30 = arith.constant 0 : index
    %c18 = arith.constant 18 : index
    %134 = vector.load %arg6[%c1_29, %c0_30, %c18] : memref<4x8x422xf32, #tpu.memory_space<vmem>>, vector<1x8x384xf32>
    %135 = vector.shape_cast %134 : vector<1x8x384xf32> to vector<8x384xf32>
    %c0_31 = arith.constant 0 : index
    %c0_32 = arith.constant 0 : index
    %c19_33 = arith.constant 19 : index
    %136 = vector.load %arg6[%c0_31, %c0_32, %c19_33] : memref<4x8x422xf32, #tpu.memory_space<vmem>>, vector<1x8x384xf32>
    %137 = vector.shape_cast %136 : vector<1x8x384xf32> to vector<8x384xf32>
    %c1_34 = arith.constant 1 : index
    %c0_35 = arith.constant 0 : index
    %c19_36 = arith.constant 19 : index
    %138 = vector.load %arg6[%c1_34, %c0_35, %c19_36] : memref<4x8x422xf32, #tpu.memory_space<vmem>>, vector<1x8x384xf32>
    %139 = vector.shape_cast %138 : vector<1x8x384xf32> to vector<8x384xf32>
    %c3_37 = arith.constant 3 : index
    %c0_38 = arith.constant 0 : index
    %c18_39 = arith.constant 18 : index
    %140 = vector.load %arg6[%c3_37, %c0_38, %c18_39] : memref<4x8x422xf32, #tpu.memory_space<vmem>>, vector<1x8x384xf32>
    %141 = vector.shape_cast %140 : vector<1x8x384xf32> to vector<8x384xf32>
    %c2_40 = arith.constant 2 : index
    %c0_41 = arith.constant 0 : index
    %c19_42 = arith.constant 19 : index
    %142 = vector.load %arg6[%c2_40, %c0_41, %c19_42] : memref<4x8x422xf32, #tpu.memory_space<vmem>>, vector<1x8x384xf32>
    %143 = vector.shape_cast %142 : vector<1x8x384xf32> to vector<8x384xf32>
    %c3_43 = arith.constant 3 : index
    %c0_44 = arith.constant 0 : index
    %c19_45 = arith.constant 19 : index
    %144 = vector.load %arg6[%c3_43, %c0_44, %c19_45] : memref<4x8x422xf32, #tpu.memory_space<vmem>>, vector<1x8x384xf32>
    %145 = vector.shape_cast %144 : vector<1x8x384xf32> to vector<8x384xf32>
    %146 = tpu.concatenate %129, %131, %133, %135, %137, %139, %141, %143, %145 in 0 : vector<8x384xf32>, vector<8x384xf32>, vector<8x384xf32>, vector<8x384xf32>, vector<8x384xf32>, vector<8x384xf32>, vector<8x384xf32>, vector<8x384xf32>, vector<8x384xf32> -> vector<72x384xf32>
    %cst_46 = arith.constant dense<0.000000e+00> : vector<3x384xf32>
    %147 = tpu.matmul %6, %146, %cst_46 {dimension_numbers = #tpu.dot_dimension_numbers<[1], [0], [0], [1], [0, 0, 1, 1], [], []>} : vector<3x72xf32>, vector<72x384xf32>, vector<3x384xf32> -> vector<3x384xf32>
    %148 = vector.broadcast %7 : vector<3x1xf32> to vector<3x384xf32>
    %149 = arith.addf %147, %148 : vector<3x384xf32>
    %c0_47 = arith.constant 0 : index
    %c0_48 = arith.constant 0 : index
    %c0_49 = arith.constant 0 : index
    %c0_50 = arith.constant 0 : index
    %150 = vector.load %arg5[%c0_47, %c0_48, %c0_49, %c0_50] : memref<1x4x3x384xf32, #tpu.memory_space<vmem>>, vector<1x1x3x384xf32>
    %151 = vector.shape_cast %150 : vector<1x1x3x384xf32> to vector<3x384xf32>
    %152 = vector.shape_cast %149 : vector<3x384xf32> to vector<1x1x3x384xf32>
    tpu.vector_store %arg5[%c0_47, %c0_48, %c0_49, %c0_50], %152 {strides = array<i32>} : memref<1x4x3x384xf32, #tpu.memory_space<vmem>>, vector<1x1x3x384xf32>,
    %c2_51 = arith.constant 2 : index
    %c0_52 = arith.constant 0 : index
    %c1_53 = arith.constant 1 : index
    %153 = vector.load %arg6[%c2_51, %c0_52, %c1_53] : memref<4x8x422xf32, #tpu.memory_space<vmem>>, vector<1x8x384xf32>
    %154 = vector.shape_cast %153 : vector<1x8x384xf32> to vector<8x384xf32>
    %c3_54 = arith.constant 3 : index
    %c0_55 = arith.constant 0 : index
    %c1_56 = arith.constant 1 : index
    %155 = vector.load %arg6[%c3_54, %c0_55, %c1_56] : memref<4x8x422xf32, #tpu.memory_space<vmem>>, vector<1x8x384xf32>
    %156 = vector.shape_cast %155 : vector<1x8x384xf32> to vector<8x384xf32>
    %c2_57 = arith.constant 2 : index
    %c0_58 = arith.constant 0 : index
    %c2_59 = arith.constant 2 : index
    %157 = vector.load %arg6[%c2_57, %c0_58, %c2_59] : memref<4x8x422xf32, #tpu.memory_space<vmem>>, vector<1x8x384xf32>
    %158 = vector.shape_cast %157 : vector<1x8x384xf32> to vector<8x384xf32>
    %c0_60 = arith.constant 0 : index
    %c0_61 = arith.constant 0 : index
    %c19_62 = arith.constant 19 : index
    %159 = vector.load %arg6[%c0_60, %c0_61, %c19_62] : memref<4x8x422xf32, #tpu.memory_space<vmem>>, vector<1x8x384xf32>
    %160 = vector.shape_cast %159 : vector<1x8x384xf32> to vector<8x384xf32>
    %c1_63 = arith.constant 1 : index
    %c0_64 = arith.constant 0 : index
    %c19_65 = arith.constant 19 : index
    %161 = vector.load %arg6[%c1_63, %c0_64, %c19_65] : memref<4x8x422xf32, #tpu.memory_space<vmem>>, vector<1x8x384xf32>
    %162 = vector.shape_cast %161 : vector<1x8x384xf32> to vector<8x384xf32>
    %c0_66 = arith.constant 0 : index
    %c0_67 = arith.constant 0 : index
    %c20 = arith.constant 20 : index
    %163 = vector.load %arg6[%c0_66, %c0_67, %c20] : memref<4x8x422xf32, #tpu.memory_space<vmem>>, vector<1x8x384xf32>
    %164 = vector.shape_cast %163 : vector<1x8x384xf32> to vector<8x384xf32>
    %c2_68 = arith.constant 2 : index
    %c0_69 = arith.constant 0 : index
    %c19_70 = arith.constant 19 : index
    %165 = vector.load %arg6[%c2_68, %c0_69, %c19_70] : memref<4x8x422xf32, #tpu.memory_space<vmem>>, vector<1x8x384xf32>
    %166 = vector.shape_cast %165 : vector<1x8x384xf32> to vector<8x384xf32>
    %c3_71 = arith.constant 3 : index
    %c0_72 = arith.constant 0 : index
    %c19_73 = arith.constant 19 : index
    %167 = vector.load %arg6[%c3_71, %c0_72, %c19_73] : memref<4x8x422xf32, #tpu.memory_space<vmem>>, vector<1x8x384xf32>
    %168 = vector.shape_cast %167 : vector<1x8x384xf32> to vector<8x384xf32>
    %c2_74 = arith.constant 2 : index
    %c0_75 = arith.constant 0 : index
    %c20_76 = arith.constant 20 : index
    %169 = vector.load %arg6[%c2_74, %c0_75, %c20_76] : memref<4x8x422xf32, #tpu.memory_space<vmem>>, vector<1x8x384xf32>
    %170 = vector.shape_cast %169 : vector<1x8x384xf32> to vector<8x384xf32>
    %171 = tpu.concatenate %154, %156, %158, %160, %162, %164, %166, %168, %170 in 0 : vector<8x384xf32>, vector<8x384xf32>, vector<8x384xf32>, vector<8x384xf32>, vector<8x384xf32>, vector<8x384xf32>, vector<8x384xf32>, vector<8x384xf32>, vector<8x384xf32> -> vector<72x384xf32>
    %cst_77 = arith.constant dense<0.000000e+00> : vector<3x384xf32>
    %172 = tpu.matmul %6, %171, %cst_77 {dimension_numbers = #tpu.dot_dimension_numbers<[1], [0], [0], [1], [0, 0, 1, 1], [], []>} : vector<3x72xf32>, vector<72x384xf32>, vector<3x384xf32> -> vector<3x384xf32>
    %173 = vector.broadcast %7 : vector<3x1xf32> to vector<3x384xf32>
    %174 = arith.addf %172, %173 : vector<3x384xf32>
    %c0_78 = arith.constant 0 : index
    %c1_79 = arith.constant 1 : index
    %c0_80 = arith.constant 0 : index
    %c0_81 = arith.constant 0 : index
    %175 = vector.load %arg5[%c0_78, %c1_79, %c0_80, %c0_81] : memref<1x4x3x384xf32, #tpu.memory_space<vmem>>, vector<1x1x3x384xf32>
    %176 = vector.shape_cast %175 : vector<1x1x3x384xf32> to vector<3x384xf32>
    %177 = vector.shape_cast %174 : vector<3x384xf32> to vector<1x1x3x384xf32>
    tpu.vector_store %arg5[%c0_78, %c1_79, %c0_80, %c0_81], %177 {strides = array<i32>} : memref<1x4x3x384xf32, #tpu.memory_space<vmem>>, vector<1x1x3x384xf32>,
    %c1_82 = arith.constant 1 : index
    %c0_83 = arith.constant 0 : index
    %c18_84 = arith.constant 18 : index
    %178 = vector.load %arg6[%c1_82, %c0_83, %c18_84] : memref<4x8x422xf32, #tpu.memory_space<vmem>>, vector<1x8x384xf32>
    %179 = vector.shape_cast %178 : vector<1x8x384xf32> to vector<8x384xf32>
    %c0_85 = arith.constant 0 : index
    %c0_86 = arith.constant 0 : index
    %c19_87 = arith.constant 19 : index
    %180 = vector.load %arg6[%c0_85, %c0_86, %c19_87] : memref<4x8x422xf32, #tpu.memory_space<vmem>>, vector<1x8x384xf32>
    %181 = vector.shape_cast %180 : vector<1x8x384xf32> to vector<8x384xf32>
    %c1_88 = arith.constant 1 : index
    %c0_89 = arith.constant 0 : index
    %c19_90 = arith.constant 19 : index
    %182 = vector.load %arg6[%c1_88, %c0_89, %c19_90] : memref<4x8x422xf32, #tpu.memory_space<vmem>>, vector<1x8x384xf32>
    %183 = vector.shape_cast %182 : vector<1x8x384xf32> to vector<8x384xf32>
    %c3_91 = arith.constant 3 : index
    %c0_92 = arith.constant 0 : index
    %c18_93 = arith.constant 18 : index
    %184 = vector.load %arg6[%c3_91, %c0_92, %c18_93] : memref<4x8x422xf32, #tpu.memory_space<vmem>>, vector<1x8x384xf32>
    %185 = vector.shape_cast %184 : vector<1x8x384xf32> to vector<8x384xf32>
    %c2_94 = arith.constant 2 : index
    %c0_95 = arith.constant 0 : index
    %c19_96 = arith.constant 19 : index
    %186 = vector.load %arg6[%c2_94, %c0_95, %c19_96] : memref<4x8x422xf32, #tpu.memory_space<vmem>>, vector<1x8x384xf32>
    %187 = vector.shape_cast %186 : vector<1x8x384xf32> to vector<8x384xf32>
    %c3_97 = arith.constant 3 : index
    %c0_98 = arith.constant 0 : index
    %c19_99 = arith.constant 19 : index
    %188 = vector.load %arg6[%c3_97, %c0_98, %c19_99] : memref<4x8x422xf32, #tpu.memory_space<vmem>>, vector<1x8x384xf32>
    %189 = vector.shape_cast %188 : vector<1x8x384xf32> to vector<8x384xf32>
    %c1_100 = arith.constant 1 : index
    %c0_101 = arith.constant 0 : index
    %c36 = arith.constant 36 : index
    %190 = vector.load %arg6[%c1_100, %c0_101, %c36] : memref<4x8x422xf32, #tpu.memory_space<vmem>>, vector<1x8x384xf32>
    %191 = vector.shape_cast %190 : vector<1x8x384xf32> to vector<8x384xf32>
    %c0_102 = arith.constant 0 : index
    %c0_103 = arith.constant 0 : index
    %c37 = arith.constant 37 : index
    %192 = vector.load %arg6[%c0_102, %c0_103, %c37] : memref<4x8x422xf32, #tpu.memory_space<vmem>>, vector<1x8x384xf32>
    %193 = vector.shape_cast %192 : vector<1x8x384xf32> to vector<8x384xf32>
    %c1_104 = arith.constant 1 : index
    %c0_105 = arith.constant 0 : index
    %c37_106 = arith.constant 37 : index
    %194 = vector.load %arg6[%c1_104, %c0_105, %c37_106] : memref<4x8x422xf32, #tpu.memory_space<vmem>>, vector<1x8x384xf32>
    %195 = vector.shape_cast %194 : vector<1x8x384xf32> to vector<8x384xf32>
    %196 = tpu.concatenate %179, %181, %183, %185, %187, %189, %191, %193, %195 in 0 : vector<8x384xf32>, vector<8x384xf32>, vector<8x384xf32>, vector<8x384xf32>, vector<8x384xf32>, vector<8x384xf32>, vector<8x384xf32>, vector<8x384xf32>, vector<8x384xf32> -> vector<72x384xf32>
    %cst_107 = arith.constant dense<0.000000e+00> : vector<3x384xf32>
    %197 = tpu.matmul %6, %196, %cst_107 {dimension_numbers = #tpu.dot_dimension_numbers<[1], [0], [0], [1], [0, 0, 1, 1], [], []>} : vector<3x72xf32>, vector<72x384xf32>, vector<3x384xf32> -> vector<3x384xf32>
    %198 = vector.broadcast %7 : vector<3x1xf32> to vector<3x384xf32>
    %199 = arith.addf %197, %198 : vector<3x384xf32>
    %c0_108 = arith.constant 0 : index
    %c2_109 = arith.constant 2 : index
    %c0_110 = arith.constant 0 : index
    %c0_111 = arith.constant 0 : index
    %200 = vector.load %arg5[%c0_108, %c2_109, %c0_110, %c0_111] : memref<1x4x3x384xf32, #tpu.memory_space<vmem>>, vector<1x1x3x384xf32>
    %201 = vector.shape_cast %200 : vector<1x1x3x384xf32> to vector<3x384xf32>
    %202 = vector.shape_cast %199 : vector<3x384xf32> to vector<1x1x3x384xf32>
    tpu.vector_store %arg5[%c0_108, %c2_109, %c0_110, %c0_111], %202 {strides = array<i32>} : memref<1x4x3x384xf32, #tpu.memory_space<vmem>>, vector<1x1x3x384xf32>,
    %c0_112 = arith.constant 0 : index
    %c0_113 = arith.constant 0 : index
    %c19_114 = arith.constant 19 : index
    %203 = vector.load %arg6[%c0_112, %c0_113, %c19_114] : memref<4x8x422xf32, #tpu.memory_space<vmem>>, vector<1x8x384xf32>
    %204 = vector.shape_cast %203 : vector<1x8x384xf32> to vector<8x384xf32>
    %c1_115 = arith.constant 1 : index
    %c0_116 = arith.constant 0 : index
    %c19_117 = arith.constant 19 : index
    %205 = vector.load %arg6[%c1_115, %c0_116, %c19_117] : memref<4x8x422xf32, #tpu.memory_space<vmem>>, vector<1x8x384xf32>
    %206 = vector.shape_cast %205 : vector<1x8x384xf32> to vector<8x384xf32>
    %c0_118 = arith.constant 0 : index
    %c0_119 = arith.constant 0 : index
    %c20_120 = arith.constant 20 : index
    %207 = vector.load %arg6[%c0_118, %c0_119, %c20_120] : memref<4x8x422xf32, #tpu.memory_space<vmem>>, vector<1x8x384xf32>
    %208 = vector.shape_cast %207 : vector<1x8x384xf32> to vector<8x384xf32>
    %c2_121 = arith.constant 2 : index
    %c0_122 = arith.constant 0 : index
    %c19_123 = arith.constant 19 : index
    %209 = vector.load %arg6[%c2_121, %c0_122, %c19_123] : memref<4x8x422xf32, #tpu.memory_space<vmem>>, vector<1x8x384xf32>
    %210 = vector.shape_cast %209 : vector<1x8x384xf32> to vector<8x384xf32>
    %c3_124 = arith.constant 3 : index
    %c0_125 = arith.constant 0 : index
    %c19_126 = arith.constant 19 : index
    %211 = vector.load %arg6[%c3_124, %c0_125, %c19_126] : memref<4x8x422xf32, #tpu.memory_space<vmem>>, vector<1x8x384xf32>
    %212 = vector.shape_cast %211 : vector<1x8x384xf32> to vector<8x384xf32>
    %c2_127 = arith.constant 2 : index
    %c0_128 = arith.constant 0 : index
    %c20_129 = arith.constant 20 : index
    %213 = vector.load %arg6[%c2_127, %c0_128, %c20_129] : memref<4x8x422xf32, #tpu.memory_space<vmem>>, vector<1x8x384xf32>
    %214 = vector.shape_cast %213 : vector<1x8x384xf32> to vector<8x384xf32>
    %c0_130 = arith.constant 0 : index
    %c0_131 = arith.constant 0 : index
    %c37_132 = arith.constant 37 : index
    %215 = vector.load %arg6[%c0_130, %c0_131, %c37_132] : memref<4x8x422xf32, #tpu.memory_space<vmem>>, vector<1x8x384xf32>
    %216 = vector.shape_cast %215 : vector<1x8x384xf32> to vector<8x384xf32>
    %c1_133 = arith.constant 1 : index
    %c0_134 = arith.constant 0 : index
    %c37_135 = arith.constant 37 : index
    %217 = vector.load %arg6[%c1_133, %c0_134, %c37_135] : memref<4x8x422xf32, #tpu.memory_space<vmem>>, vector<1x8x384xf32>
    %218 = vector.shape_cast %217 : vector<1x8x384xf32> to vector<8x384xf32>
    %c0_136 = arith.constant 0 : index
    %c0_137 = arith.constant 0 : index
    %c38 = arith.constant 38 : index
    %219 = vector.load %arg6[%c0_136, %c0_137, %c38] : memref<4x8x422xf32, #tpu.memory_space<vmem>>, vector<1x8x384xf32>
    %220 = vector.shape_cast %219 : vector<1x8x384xf32> to vector<8x384xf32>
    %221 = tpu.concatenate %204, %206, %208, %210, %212, %214, %216, %218, %220 in 0 : vector<8x384xf32>, vector<8x384xf32>, vector<8x384xf32>, vector<8x384xf32>, vector<8x384xf32>, vector<8x384xf32>, vector<8x384xf32>, vector<8x384xf32>, vector<8x384xf32> -> vector<72x384xf32>
    %cst_138 = arith.constant dense<0.000000e+00> : vector<3x384xf32>
    %222 = tpu.matmul %6, %221, %cst_138 {dimension_numbers = #tpu.dot_dimension_numbers<[1], [0], [0], [1], [0, 0, 1, 1], [], []>} : vector<3x72xf32>, vector<72x384xf32>, vector<3x384xf32> -> vector<3x384xf32>
    %223 = vector.broadcast %7 : vector<3x1xf32> to vector<3x384xf32>
    %224 = arith.addf %222, %223 : vector<3x384xf32>
    %c0_139 = arith.constant 0 : index
    %c3_140 = arith.constant 3 : index
    %c0_141 = arith.constant 0 : index
    %c0_142 = arith.constant 0 : index
    %225 = vector.load %arg5[%c0_139, %c3_140, %c0_141, %c0_142] : memref<1x4x3x384xf32, #tpu.memory_space<vmem>>, vector<1x1x3x384xf32>
    %226 = vector.shape_cast %225 : vector<1x1x3x384xf32> to vector<3x384xf32>
    %227 = vector.shape_cast %224 : vector<3x384xf32> to vector<1x1x3x384xf32>
    tpu.vector_store %arg5[%c0_139, %c3_140, %c0_141, %c0_142], %227 {strides = array<i32>} : memref<1x4x3x384xf32, #tpu.memory_space<vmem>>, vector<1x1x3x384xf32>,
    return
  }
  func.func @transform_0(%arg0: i32) -> (i32, i32, i32) {
    %c0_i32 = arith.constant 0 : i32
    %c0_i32_0 = arith.constant 0 : i32
    %c0_i32_1 = arith.constant 0 : i32
    return %arg0, %c0_i32, %c0_i32_0 : i32, i32, i32
  }
  func.func @transform_1(%arg0: i32) -> (i32, i32, i32) {
    %c0_i32 = arith.constant 0 : i32
    %c0_i32_0 = arith.constant 0 : i32
    %c0_i32_1 = arith.constant 0 : i32
    %c0_i32_2 = arith.constant 0 : i32
    return %c0_i32, %c0_i32_0, %c0_i32_1 : i32, i32, i32
  }
  func.func @transform_2(%arg0: i32) -> (i32, i32) {
    %c0_i32 = arith.constant 0 : i32
    %c0_i32_0 = arith.constant 0 : i32
    %c0_i32_1 = arith.constant 0 : i32
    return %c0_i32, %c0_i32_0 : i32, i32
  }
  func.func @transform_3(%arg0: i32) -> (i32, i32) {
    %c0_i32 = arith.constant 0 : i32
    %c0_i32_0 = arith.constant 0 : i32
    %c0_i32_1 = arith.constant 0 : i32
    return %c0_i32, %c0_i32_0 : i32, i32
  }
  func.func @transform_4(%arg0: i32) -> (i32, i32, i32, i32) {
    %c0_i32 = arith.constant 0 : i32
    %c0_i32_0 = arith.constant 0 : i32
    %c0_i32_1 = arith.constant 0 : i32
    %c0_i32_2 = arith.constant 0 : i32
    return %arg0, %c0_i32, %c0_i32_0, %c0_i32_1 : i32, i32, i32, i32
  }
}

</mosaic_0001>

<llo_original>
// kernel: tile.6
$region0: #{tile.6}
  #allocation2 [shape = 's32[1]{0}', space=sflag, size = 0x4, scoped, tag = 'scoped memory for tile.6']
  %s0 = inlined_call_operand.hbm [shape: f32[18], index: 0, kind: input, shape index: {}]
  %s1 = inlined_call_operand.vmem [shape: f32[16,18], index: 1, kind: output, shape index: {}]
  $region1: #{tile.6} parent=0
    #allocation0 [shape = 'u8[512]{0}', space=vmem, size = 0x400, scoped, tag = 'operand span for operand 0']
    #allocation1 [shape = 's32[1]{0}', space=sflag, size = 0x4, scoped, tag = 'scoped memory for tile.6']
    %2 = vsyncpa [#allocation1], 0
    // Predicated region
    $region2: #{tile.6} parent=1 // pred_check
      _
    $region3: #{tile.6} parent=1 // pred_check_branch
      %4 = sbr.rel (0) target = $region5
    $region4: #{tile.6} parent=1 // pred_region
      %s6 = ssub.s32 16, 16
      %7 = vsyncadd [#allocation1], %s6
      %s9 = sshll.u32 [#allocation0], 4
      %s10 = int_to_ptr.vmem [resolvable:$true] %s9
      %12 = dma.hbm_to_vmem [thread:$0]  %s0, 16, %s10, [#allocation1]
    $region5: #{tile.6} parent=1 // pred_fallthru
      _
    // Predicated region
    $region6: #{tile.6} parent=1 // pred_check
      _
    $region7: #{tile.6} parent=1 // pred_check_branch
      %14 = sbr.rel (0) target = $region9
    $region8: #{tile.6} parent=1 // pred_region
      %15 = dma.done [#allocation1], 16
    $region9: #{tile.6} parent=1 // pred_fallthru
      _
    %v16 = vld [vmem:[#allocation0] ss:$0 sm:$0xff]
    %17 = vst [vmem:[%s1] sm:$0xff] %v16
    %s18 = scalar_lea.vmem %s1, 8
    %19 = vst [vmem:[%s18] sm:$0xff] %v16
    %20 = vsyncpa [#allocation1], 1

// kernel: tile.7
$region0: #{tile.7}
  %s0 = inlined_call_operand.vmem [shape: f32[16,18], index: 0, kind: input, shape index: {}]
  %s1 = inlined_call_operand.vmem [shape: f32[288], index: 1, kind: output, shape index: {}]
  $region1: #{tile.7} parent=0
    #allocation0 [shape = 'u8[4096]{0}', space=vmem, size = 0x1000, scoped, tag = 'scoped mem for output reshape']
    %v2 = vld [vmem:[%s0] sm:$0x1]
    %vm3 = vcmask 146432
    %4 = vst.msk [vmem:[#allocation0] sm:$0x1] %vm3, %v2
    %s5 = scalar_lea.vmem %s0, 7
    %v6 = vld [vmem:[%s5] sm:$0x1]
    %s7 = scalar_lea.vmem %s0, 7
    %v8 = vld [vmem:[%s7] sm:$0x1]
    %vm9 = vcmask 15360
    %v10 = vsel %vm9, %v8, %v6
    %11 = vrot.lane.b32.xlu0 %v10, 126
    %v12 = vpop.permute.xlu0 %11
    %vm13 = vcmask 130048
    %s14 = scalar_lea.vmem [#allocation0], 1
    %15 = vst.msk [vmem:[%s14] sm:$0x1] %vm13, %v12
    %vm16 = vcmask 1048560
    %17 = vst.msk [vmem:[#allocation0] sm:$0x1] %vm16, %v12
    %s18 = scalar_lea.vmem %s0, 14
    %v19 = vld [vmem:[%s18] sm:$0x1]
    %s20 = scalar_lea.vmem %s0, 14
    %v21 = vld [vmem:[%s20] sm:$0x1]
    %vm22 = vcmask 31744
    %v23 = vsel %vm22, %v21, %v19
    %24 = vrot.lane.b32.xlu0 %v23, 124
    %v25 = vpop.permute.xlu0 %24
    %vm26 = vcmask 113664
    %s27 = scalar_lea.vmem [#allocation0], 2
    %28 = vst.msk [vmem:[%s27] sm:$0x1] %vm26, %v25
    %vm29 = vcmask 1048544
    %s30 = scalar_lea.vmem [#allocation0], 1
    %31 = vst.msk [vmem:[%s30] sm:$0x1] %vm29, %v25
    %s32 = scalar_lea.vmem %s0, 6
    %v33 = vld [vmem:[%s32] sm:$0x1]
    %34 = vrot.lane.b32.xlu0 %v33, 108
    %v35 = vpop.permute.xlu0 %34
    %vm36 = vcmask 1032032
    %37 = vst.msk [vmem:[#allocation0] sm:$0x1] %vm36, %v35
    %s38 = scalar_lea.vmem %s0, 13
    %v39 = vld [vmem:[%s38] sm:$0x1]
    %40 = vrot.lane.b32.xlu0 %v39, 106
    %v41 = vpop.permute.xlu0 %40
    %vm42 = vcmask 1015632
    %s43 = scalar_lea.vmem [#allocation0], 1
    %44 = vst.msk [vmem:[%s43] sm:$0x1] %vm42, %v41
    %s45 = scalar_lea.vmem %s0, 5
    %v46 = vld [vmem:[%s45] sm:$0x1]
    %47 = vrot.lane.b32.xlu0 %v46, 90
    %v48 = vpop.permute.xlu0 %47
    %vm49 = vcmask 884432
    %50 = vst.msk [vmem:[#allocation0] sm:$0x1] %vm49, %v48
    %s51 = scalar_lea.vmem %s0, 12
    %v52 = vld [vmem:[%s51] sm:$0x1]
    %53 = vrot.lane.b32.xlu0 %v52, 88
    %v54 = vpop.permute.xlu0 %53
    %vm55 = vcmask 868032
    %s56 = scalar_lea.vmem [#allocation0], 1
    %57 = vst.msk [vmem:[%s56] sm:$0x1] %vm55, %v54
    %s58 = scalar_lea.vmem %s0, 4
    %v59 = vld [vmem:[%s58] sm:$0x1]
    %60 = vrot.lane.b32.xlu0 %v59, 72
    %v61 = vpop.permute.xlu0 %60
    %vm62 = vcmask 736832
    %63 = vst.msk [vmem:[#allocation0] sm:$0x1] %vm62, %v61
    %s64 = scalar_lea.vmem %s0, 11
    %v65 = vld [vmem:[%s64] sm:$0x1]
    %66 = vrot.lane.b32.xlu0 %v65, 70
    %v67 = vpop.permute.xlu0 %66
    %vm68 = vcmask 720432
    %s69 = scalar_lea.vmem [#allocation0], 1
    %70 = vst.msk [vmem:[%s69] sm:$0x1] %vm68, %v67
    %s71 = scalar_lea.vmem %s0, 3
    %v72 = vld [vmem:[%s71] sm:$0x1]
    %73 = vrot.lane.b32.xlu0 %v72, 54
    %v74 = vpop.permute.xlu0 %73
    %vm75 = vcmask 589232
    %76 = vst.msk [vmem:[#allocation0] sm:$0x1] %vm75, %v74
    %s77 = scalar_lea.vmem %s0, 10
    %v78 = vld [vmem:[%s77] sm:$0x1]
    %79 = vrot.lane.b32.xlu0 %v78, 52
    %v80 = vpop.permute.xlu0 %79
    %vm81 = vcmask 572832
    %s82 = scalar_lea.vmem [#allocation0], 1
    %83 = vst.msk [vmem:[%s82] sm:$0x1] %vm81, %v80
    %s84 = scalar_lea.vmem %s0, 2
    %v85 = vld [vmem:[%s84] sm:$0x1]
    %86 = vrot.lane.b32.xlu0 %v85, 36
    %v87 = vpop.permute.xlu0 %86
    %vm88 = vcmask 441632
    %89 = vst.msk [vmem:[#allocation0] sm:$0x1] %vm88, %v87
    %s90 = scalar_lea.vmem %s0, 9
    %v91 = vld [vmem:[%s90] sm:$0x1]
    %92 = vrot.lane.b32.xlu0 %v91, 34
    %v93 = vpop.permute.xlu0 %92
    %vm94 = vcmask 425232
    %s95 = scalar_lea.vmem [#allocation0], 1
    %96 = vst.msk [vmem:[%s95] sm:$0x1] %vm94, %v93
    %s97 = scalar_lea.vmem %s0, 1
    %v98 = vld [vmem:[%s97] sm:$0x1]
    %99 = vrot.lane.b32.xlu0 %v98, 18
    %v100 = vpop.permute.xlu0 %99
    %vm101 = vcmask 294032
    %102 = vst.msk [vmem:[#allocation0] sm:$0x1] %vm101, %v100
    %s103 = scalar_lea.vmem %s0, 8
    %v104 = vld [vmem:[%s103] sm:$0x1]
    %105 = vrot.lane.b32.xlu0 %v104, 16
    %v106 = vpop.permute.xlu0 %105
    %vm107 = vcmask 277632
    %s108 = scalar_lea.vmem [#allocation0], 1
    %109 = vst.msk [vmem:[%s108] sm:$0x1] %vm107, %v106
    %s110 = scalar_lea.vmem %s0, 15
    %v111 = vld [vmem:[%s110] sm:$0x1]
    %112 = vrot.lane.b32.xlu0 %v111, 14
    %v113 = vpop.permute.xlu0 %112
    %vm114 = vcmask 261232
    %s115 = scalar_lea.vmem [#allocation0], 2
    %116 = vst.msk [vmem:[%s115] sm:$0x1] %vm114, %v113
    %s118 = sshllo.u32 0, 4
    %v120 = vld [vmem:[#allocation0] sm:%s118]
    %s121 = sshllo.u32 0, 4
    %122 = vst [vmem:[%s1] sm:%s121] %v120

// kernel: forward_pallas.4
$region0: #{forward_pallas.4}
  #allocation0 [shape = 'u32[]', space=smem, size = 0x4, offset = 0x4, fixed_abs, tag = 'smem constant byte address 0x4 - core index']
  #allocation1 [shape = 'u32[144,128]{1,0:T(1,128)}', space=vmem, size = 0x12000, scoped, tag = 'internal scratch']
  %s0 = inlined_call_operand.vmem [shape: f32[3,1024], index: 0, kind: input, shape index: {}]
  %s1 = inlined_call_operand.vmem [shape: f32[256,3], index: 1, kind: input, shape index: {}]
  %s2 = inlined_call_operand.vmem [shape: f32[256,1], index: 2, kind: input, shape index: {}]
  %s3 = inlined_call_operand.vmem [shape: f32[4,256], index: 3, kind: input, shape index: {}]
  %s4 = inlined_call_operand.vmem [shape: f32[4,1], index: 4, kind: input, shape index: {}]
  %s5 = inlined_call_operand.vmem [shape: f32[4,1024], index: 5, kind: output, shape index: {}]
  %s6 = sld [smem:[#allocation0]]
  $region30: #{forward_pallas.4} parent=0
    _
  %s8 = ssub.s32 1, %s6
  %s9 = scalar_select 0, %s8, %s6
  // Predicated region
  $region2: #{forward_pallas.4} parent=0 // pred_check
    _
  $region3: #{forward_pallas.4} parent=0 // pred_check_branch
    %11 = sbr.rel (0) target = $region5
  $region4: #{forward_pallas.4} parent=0 // pred_region
    _
  $region5: #{forward_pallas.4} parent=0 // pred_fallthru
    _
  // Predicated region
  $region6: #{forward_pallas.4} parent=0 // pred_check
    _
  $region7: #{forward_pallas.4} parent=0 // pred_check_branch
    %13 = sbr.rel (0) target = $region9
  $region8: #{forward_pallas.4} parent=0 // pred_region
    _
  $region9: #{forward_pallas.4} parent=0 // pred_fallthru
    _
  // Predicated region
  $region10: #{forward_pallas.4} parent=0 // pred_check
    _
  $region11: #{forward_pallas.4} parent=0 // pred_check_branch
    %15 = sbr.rel (0) target = $region13
  $region12: #{forward_pallas.4} parent=0 // pred_region
    _
  $region13: #{forward_pallas.4} parent=0 // pred_fallthru
    _
  // Predicated region
  $region14: #{forward_pallas.4} parent=0 // pred_check
    _
  $region15: #{forward_pallas.4} parent=0 // pred_check_branch
    %17 = sbr.rel (0) target = $region17
  $region16: #{forward_pallas.4} parent=0 // pred_region
    _
  $region17: #{forward_pallas.4} parent=0 // pred_fallthru
    _
  // Predicated region
  $region18: #{forward_pallas.4} parent=0 // pred_check
    _
  $region19: #{forward_pallas.4} parent=0 // pred_check_branch
    %19 = sbr.rel (0) target = $region21
  $region20: #{forward_pallas.4} parent=0 // pred_region
    _
  $region21: #{forward_pallas.4} parent=0 // pred_fallthru
    _
  %v20 = vld [vmem:[%s0] sm:$0x77]
  %v21 = vld [vmem:[%s0 + $0x8] sm:$0x77]
  %v22 = vld [vmem:[%s0 + $0x10] sm:$0x77]
  %v23 = vld [vmem:[%s0 + $0x18] sm:$0x77]
  %v24 = vld [vmem:[%s1] sm:$0xff]
  %v25 = vld [vmem:[%s1 + $0x8] sm:$0xff]
  %v26 = vld [vmem:[%s1 + $0x10] sm:$0xff]
  %v27 = vld [vmem:[%s1 + $0x18] sm:$0xff]
  %v28 = vld [vmem:[%s1 + $0x20] sm:$0xff]
  %v29 = vld [vmem:[%s1 + $0x28] sm:$0xff]
  %v30 = vld [vmem:[%s1 + $0x30] sm:$0xff]
  %v31 = vld [vmem:[%s1 + $0x38] sm:$0xff]
  %v32 = vld [vmem:[%s1 + $0x40] sm:$0xff]
  %v33 = vld [vmem:[%s1 + $0x48] sm:$0xff]
  %v34 = vld [vmem:[%s1 + $0x50] sm:$0xff]
  %v35 = vld [vmem:[%s1 + $0x58] sm:$0xff]
  %v36 = vld [vmem:[%s1 + $0x60] sm:$0xff]
  %v37 = vld [vmem:[%s1 + $0x68] sm:$0xff]
  %v38 = vld [vmem:[%s1 + $0x70] sm:$0xff]
  %v39 = vld [vmem:[%s1 + $0x78] sm:$0xff]
  %v40 = vld [vmem:[%s1 + $0x80] sm:$0xff]
  %v41 = vld [vmem:[%s1 + $0x88] sm:$0xff]
  %v42 = vld [vmem:[%s1 + $0x90] sm:$0xff]
  %v43 = vld [vmem:[%s1 + $0x98] sm:$0xff]
  %v44 = vld [vmem:[%s1 + $0xa0] sm:$0xff]
  %v45 = vld [vmem:[%s1 + $0xa8] sm:$0xff]
  %v46 = vld [vmem:[%s1 + $0xb0] sm:$0xff]
  %v47 = vld [vmem:[%s1 + $0xb8] sm:$0xff]
  %v48 = vld [vmem:[%s1 + $0xc0] sm:$0xff]
  %v49 = vld [vmem:[%s1 + $0xc8] sm:$0xff]
  %v50 = vld [vmem:[%s1 + $0xd0] sm:$0xff]
  %v51 = vld [vmem:[%s1 + $0xd8] sm:$0xff]
  %v52 = vld [vmem:[%s1 + $0xe0] sm:$0xff]
  %v53 = vld [vmem:[%s1 + $0xe8] sm:$0xff]
  %v54 = vld [vmem:[%s1 + $0xf0] sm:$0xff]
  %v55 = vld [vmem:[%s1 + $0xf8] sm:$0xff]
  %v56 = vld [vmem:[%s2] sm:$0xff]
  %v57 = vld [vmem:[%s2 + $0x8] sm:$0xff]
  %v58 = vld [vmem:[%s2 + $0x10] sm:$0xff]
  %v59 = vld [vmem:[%s2 + $0x18] sm:$0xff]
  %v60 = vld [vmem:[%s2 + $0x20] sm:$0xff]
  %v61 = vld [vmem:[%s2 + $0x28] sm:$0xff]
  %v62 = vld [vmem:[%s2 + $0x30] sm:$0xff]
  %v63 = vld [vmem:[%s2 + $0x38] sm:$0xff]
  %v64 = vld [vmem:[%s2 + $0x40] sm:$0xff]
  %v65 = vld [vmem:[%s2 + $0x48] sm:$0xff]
  %v66 = vld [vmem:[%s2 + $0x50] sm:$0xff]
  %v67 = vld [vmem:[%s2 + $0x58] sm:$0xff]
  %v68 = vld [vmem:[%s2 + $0x60] sm:$0xff]
  %v69 = vld [vmem:[%s2 + $0x68] sm:$0xff]
  %v70 = vld [vmem:[%s2 + $0x70] sm:$0xff]
  %v71 = vld [vmem:[%s2 + $0x78] sm:$0xff]
  %v72 = vld [vmem:[%s2 + $0x80] sm:$0xff]
  %v73 = vld [vmem:[%s2 + $0x88] sm:$0xff]
  %v74 = vld [vmem:[%s2 + $0x90] sm:$0xff]
  %v75 = vld [vmem:[%s2 + $0x98] sm:$0xff]
  %v76 = vld [vmem:[%s2 + $0xa0] sm:$0xff]
  %v77 = vld [vmem:[%s2 + $0xa8] sm:$0xff]
  %v78 = vld [vmem:[%s2 + $0xb0] sm:$0xff]
  %v79 = vld [vmem:[%s2 + $0xb8] sm:$0xff]
  %v80 = vld [vmem:[%s2 + $0xc0] sm:$0xff]
  %v81 = vld [vmem:[%s2 + $0xc8] sm:$0xff]
  %v82 = vld [vmem:[%s2 + $0xd0] sm:$0xff]
  %v83 = vld [vmem:[%s2 + $0xd8] sm:$0xff]
  %v84 = vld [vmem:[%s2 + $0xe0] sm:$0xff]
  %v85 = vld [vmem:[%s2 + $0xe8] sm:$0xff]
  %v86 = vld [vmem:[%s2 + $0xf0] sm:$0xff]
  %v87 = vld [vmem:[%s2 + $0xf8] sm:$0xff]
  %89 = vset.pattern.permute.xlu0 0
  %90 = vperm.xlu0 %89, %v24
  %v91 = vpop.permute.xlu0 %90
  %94 = vset.pattern.permute.xlu0 0
  %95 = vperm.xlu0 %94, %v25
  %v96 = vpop.permute.xlu0 %95
  %99 = vset.pattern.permute.xlu0 0
  %100 = vperm.xlu0 %99, %v26
  %v101 = vpop.permute.xlu0 %100
  %104 = vset.pattern.permute.xlu0 0
  %105 = vperm.xlu0 %104, %v27
  %v106 = vpop.permute.xlu0 %105
  %109 = vset.pattern.permute.xlu0 0
  %110 = vperm.xlu0 %109, %v28
  %v111 = vpop.permute.xlu0 %110
  %114 = vset.pattern.permute.xlu0 0
  %115 = vperm.xlu0 %114, %v29
  %v116 = vpop.permute.xlu0 %115
  %119 = vset.pattern.permute.xlu0 0
  %120 = vperm.xlu0 %119, %v30
  %v121 = vpop.permute.xlu0 %120
  %124 = vset.pattern.permute.xlu0 0
  %125 = vperm.xlu0 %124, %v31
  %v126 = vpop.permute.xlu0 %125
  %129 = vset.pattern.permute.xlu0 0
  %130 = vperm.xlu0 %129, %v32
  %v131 = vpop.permute.xlu0 %130
  %134 = vset.pattern.permute.xlu0 0
  %135 = vperm.xlu0 %134, %v33
  %v136 = vpop.permute.xlu0 %135
  %139 = vset.pattern.permute.xlu0 0
  %140 = vperm.xlu0 %139, %v34
  %v141 = vpop.permute.xlu0 %140
  %144 = vset.pattern.permute.xlu0 0
  %145 = vperm.xlu0 %144, %v35
  %v146 = vpop.permute.xlu0 %145
  %149 = vset.pattern.permute.xlu0 0
  %150 = vperm.xlu0 %149, %v36
  %v151 = vpop.permute.xlu0 %150
  %154 = vset.pattern.permute.xlu0 0
  %155 = vperm.xlu0 %154, %v37
  %v156 = vpop.permute.xlu0 %155
  %159 = vset.pattern.permute.xlu0 0
  %160 = vperm.xlu0 %159, %v38
  %v161 = vpop.permute.xlu0 %160
  %164 = vset.pattern.permute.xlu0 0
  %165 = vperm.xlu0 %164, %v39
  %v166 = vpop.permute.xlu0 %165
  %169 = vset.pattern.permute.xlu0 0
  %170 = vperm.xlu0 %169, %v40
  %v171 = vpop.permute.xlu0 %170
  %174 = vset.pattern.permute.xlu0 0
  %175 = vperm.xlu0 %174, %v41
  %v176 = vpop.permute.xlu0 %175
  %179 = vset.pattern.permute.xlu0 0
  %180 = vperm.xlu0 %179, %v42
  %v181 = vpop.permute.xlu0 %180
  %184 = vset.pattern.permute.xlu0 0
  %185 = vperm.xlu0 %184, %v43
  %v186 = vpop.permute.xlu0 %185
  %189 = vset.pattern.permute.xlu0 0
  %190 = vperm.xlu0 %189, %v44
  %v191 = vpop.permute.xlu0 %190
  %194 = vset.pattern.permute.xlu0 0
  %195 = vperm.xlu0 %194, %v45
  %v196 = vpop.permute.xlu0 %195
  %199 = vset.pattern.permute.xlu0 0
  %200 = vperm.xlu0 %199, %v46
  %v201 = vpop.permute.xlu0 %200
  %204 = vset.pattern.permute.xlu0 0
  %205 = vperm.xlu0 %204, %v47
  %v206 = vpop.permute.xlu0 %205
  %209 = vset.pattern.permute.xlu0 0
  %210 = vperm.xlu0 %209, %v48
  %v211 = vpop.permute.xlu0 %210
  %214 = vset.pattern.permute.xlu0 0
  %215 = vperm.xlu0 %214, %v49
  %v216 = vpop.permute.xlu0 %215
  %219 = vset.pattern.permute.xlu0 0
  %220 = vperm.xlu0 %219, %v50
  %v221 = vpop.permute.xlu0 %220
  %224 = vset.pattern.permute.xlu0 0
  %225 = vperm.xlu0 %224, %v51
  %v226 = vpop.permute.xlu0 %225
  %229 = vset.pattern.permute.xlu0 0
  %230 = vperm.xlu0 %229, %v52
  %v231 = vpop.permute.xlu0 %230
  %234 = vset.pattern.permute.xlu0 0
  %235 = vperm.xlu0 %234, %v53
  %v236 = vpop.permute.xlu0 %235
  %239 = vset.pattern.permute.xlu0 0
  %240 = vperm.xlu0 %239, %v54
  %v241 = vpop.permute.xlu0 %240
  %244 = vset.pattern.permute.xlu0 0
  %245 = vperm.xlu0 %244, %v55
  %v246 = vpop.permute.xlu0 %245
  %v252 = vlaneseq
  %v253 = vshrl.u32 %v252, 7
  %v254 = vsub.s32 0, %v253
  %v255 = vrot.slane %v20, %v254
  %v256 = vlaneseq
  %v257 = vshrl.u32 %v256, 7
  %v258 = vsub.s32 4, %v257
  %v259 = vrot.slane %v20, %v258
  %v260 = vlaneseq
  %v261 = vshrl.u32 %v260, 7
  %v262 = vsub.s32 0, %v261
  %v263 = vrot.slane %v21, %v262
  %v264 = vlaneseq
  %v265 = vshrl.u32 %v264, 7
  %v266 = vsub.s32 4, %v265
  %v267 = vrot.slane %v21, %v266
  %v268 = vlaneseq
  %v269 = vshrl.u32 %v268, 7
  %v270 = vsub.s32 0, %v269
  %v271 = vrot.slane %v22, %v270
  %v272 = vlaneseq
  %v273 = vshrl.u32 %v272, 7
  %v274 = vsub.s32 4, %v273
  %v275 = vrot.slane %v22, %v274
  %v276 = vlaneseq
  %v277 = vshrl.u32 %v276, 7
  %v278 = vsub.s32 0, %v277
  %v279 = vrot.slane %v23, %v278
  %v280 = vlaneseq
  %v281 = vshrl.u32 %v280, 7
  %v282 = vsub.s32 4, %v281
  %v283 = vrot.slane %v23, %v282
  %v292 = vlaneseq
  %v293 = vshrl.u32 %v292, 7
  %v294 = vsub.s32 0, %v293
  %v295 = vrot.slane %v255, %v294
  %v296 = vlaneseq
  %v297 = vshrl.u32 %v296, 7
  %v298 = vsub.s32 0, %v297
  %v299 = vrot.slane %v259, %v298
  %v300 = vlaneseq
  %v301 = vshrl.u32 %v300, 7
  %v302 = vsub.s32 0, %v301
  %v303 = vrot.slane %v263, %v302
  %v304 = vlaneseq
  %v305 = vshrl.u32 %v304, 7
  %v306 = vsub.s32 0, %v305
  %v307 = vrot.slane %v267, %v306
  %v308 = vlaneseq
  %v309 = vshrl.u32 %v308, 7
  %v310 = vsub.s32 0, %v309
  %v311 = vrot.slane %v271, %v310
  %v312 = vlaneseq
  %v313 = vshrl.u32 %v312, 7
  %v314 = vsub.s32 0, %v313
  %v315 = vrot.slane %v275, %v314
  %v316 = vlaneseq
  %v317 = vshrl.u32 %v316, 7
  %v318 = vsub.s32 0, %v317
  %v319 = vrot.slane %v279, %v318
  %v320 = vlaneseq
  %v321 = vshrl.u32 %v320, 7
  %v322 = vsub.s32 0, %v321
  %v323 = vrot.slane %v283, %v322
  %v324 = vmul.f32 %v91, %v295
  %v325 = vmul.f32 %v91, %v299
  %v326 = vmul.f32 %v91, %v303
  %v327 = vmul.f32 %v91, %v307
  %v328 = vmul.f32 %v91, %v311
  %v329 = vmul.f32 %v91, %v315
  %v330 = vmul.f32 %v91, %v319
  %v331 = vmul.f32 %v91, %v323
  %v332 = vmul.f32 %v96, %v295
  %v333 = vmul.f32 %v96, %v299
  %v334 = vmul.f32 %v96, %v303
  %v335 = vmul.f32 %v96, %v307
  %v336 = vmul.f32 %v96, %v311
  %v337 = vmul.f32 %v96, %v315
  %v338 = vmul.f32 %v96, %v319
  %v339 = vmul.f32 %v96, %v323
  %v340 = vmul.f32 %v101, %v295
  %v341 = vmul.f32 %v101, %v299
  %v342 = vmul.f32 %v101, %v303
  %v343 = vmul.f32 %v101, %v307
  %v344 = vmul.f32 %v101, %v311
  %v345 = vmul.f32 %v101, %v315
  %v346 = vmul.f32 %v101, %v319
  %v347 = vmul.f32 %v101, %v323
  %v348 = vmul.f32 %v106, %v295
  %v349 = vmul.f32 %v106, %v299
  %v350 = vmul.f32 %v106, %v303
  %v351 = vmul.f32 %v106, %v307
  %v352 = vmul.f32 %v106, %v311
  %v353 = vmul.f32 %v106, %v315
  %v354 = vmul.f32 %v106, %v319
  %v355 = vmul.f32 %v106, %v323
  %v356 = vmul.f32 %v111, %v295
  %v357 = vmul.f32 %v111, %v299
  %v358 = vmul.f32 %v111, %v303
  %v359 = vmul.f32 %v111, %v307
  %v360 = vmul.f32 %v111, %v311
  %v361 = vmul.f32 %v111, %v315
  %v362 = vmul.f32 %v111, %v319
  %v363 = vmul.f32 %v111, %v323
  %v364 = vmul.f32 %v116, %v295
  %v365 = vmul.f32 %v116, %v299
  %v366 = vmul.f32 %v116, %v303
  %v367 = vmul.f32 %v116, %v307
  %v368 = vmul.f32 %v116, %v311
  %v369 = vmul.f32 %v116, %v315
  %v370 = vmul.f32 %v116, %v319
  %v371 = vmul.f32 %v116, %v323
  %v372 = vmul.f32 %v121, %v295
  %v373 = vmul.f32 %v121, %v299
  %v374 = vmul.f32 %v121, %v303
  %v375 = vmul.f32 %v121, %v307
  %v376 = vmul.f32 %v121, %v311
  %v377 = vmul.f32 %v121, %v315
  %v378 = vmul.f32 %v121, %v319
  %v379 = vmul.f32 %v121, %v323
  %v380 = vmul.f32 %v126, %v295
  %v381 = vmul.f32 %v126, %v299
  %v382 = vmul.f32 %v126, %v303
  %v383 = vmul.f32 %v126, %v307
  %v384 = vmul.f32 %v126, %v311
  %v385 = vmul.f32 %v126, %v315
  %v386 = vmul.f32 %v126, %v319
  %v387 = vmul.f32 %v126, %v323
  %v388 = vmul.f32 %v131, %v295
  %v389 = vmul.f32 %v131, %v299
  %v390 = vmul.f32 %v131, %v303
  %v391 = vmul.f32 %v131, %v307
  %v392 = vmul.f32 %v131, %v311
  %v393 = vmul.f32 %v131, %v315
  %v394 = vmul.f32 %v131, %v319
  %v395 = vmul.f32 %v131, %v323
  %v396 = vmul.f32 %v136, %v295
  %v397 = vmul.f32 %v136, %v299
  %v398 = vmul.f32 %v136, %v303
  %v399 = vmul.f32 %v136, %v307
  %v400 = vmul.f32 %v136, %v311
  %v401 = vmul.f32 %v136, %v315
  %v402 = vmul.f32 %v136, %v319
  %v403 = vmul.f32 %v136, %v323
  %v404 = vmul.f32 %v141, %v295
  %v405 = vmul.f32 %v141, %v299
  %v406 = vmul.f32 %v141, %v303
  %v407 = vmul.f32 %v141, %v307
  %v408 = vmul.f32 %v141, %v311
  %v409 = vmul.f32 %v141, %v315
  %v410 = vmul.f32 %v141, %v319
  %v411 = vmul.f32 %v141, %v323
  %v412 = vmul.f32 %v146, %v295
  %v413 = vmul.f32 %v146, %v299
  %v414 = vmul.f32 %v146, %v303
  %v415 = vmul.f32 %v146, %v307
  %v416 = vmul.f32 %v146, %v311
  %v417 = vmul.f32 %v146, %v315
  %v418 = vmul.f32 %v146, %v319
  %v419 = vmul.f32 %v146, %v323
  %v420 = vmul.f32 %v151, %v295
  %v421 = vmul.f32 %v151, %v299
  %v422 = vmul.f32 %v151, %v303
  %v423 = vmul.f32 %v151, %v307
  %v424 = vmul.f32 %v151, %v311
  %v425 = vmul.f32 %v151, %v315
  %v426 = vmul.f32 %v151, %v319
  %v427 = vmul.f32 %v151, %v323
  %v428 = vmul.f32 %v156, %v295
  %v429 = vmul.f32 %v156, %v299
  %v430 = vmul.f32 %v156, %v303
  %v431 = vmul.f32 %v156, %v307
  %v432 = vmul.f32 %v156, %v311
  %v433 = vmul.f32 %v156, %v315
  %v434 = vmul.f32 %v156, %v319
  %v435 = vmul.f32 %v156, %v323
  %v436 = vmul.f32 %v161, %v295
  %v437 = vmul.f32 %v161, %v299
  %v438 = vmul.f32 %v161, %v303
  %v439 = vmul.f32 %v161, %v307
  %v440 = vmul.f32 %v161, %v311
  %v441 = vmul.f32 %v161, %v315
  %v442 = vmul.f32 %v161, %v319
  %v443 = vmul.f32 %v161, %v323
  %v444 = vmul.f32 %v166, %v295
  %v445 = vmul.f32 %v166, %v299
  %v446 = vmul.f32 %v166, %v303
  %v447 = vmul.f32 %v166, %v307
  %v448 = vmul.f32 %v166, %v311
  %v449 = vmul.f32 %v166, %v315
  %v450 = vmul.f32 %v166, %v319
  %v451 = vmul.f32 %v166, %v323
  %v452 = vmul.f32 %v171, %v295
  %v453 = vmul.f32 %v171, %v299
  %v454 = vmul.f32 %v171, %v303
  %v455 = vmul.f32 %v171, %v307
  %v456 = vmul.f32 %v171, %v311
  %v457 = vmul.f32 %v171, %v315
  %v458 = vmul.f32 %v171, %v319
  %v459 = vmul.f32 %v171, %v323
  %v460 = vmul.f32 %v176, %v295
  %v461 = vmul.f32 %v176, %v299
  %v462 = vmul.f32 %v176, %v303
  %v463 = vmul.f32 %v176, %v307
  %v464 = vmul.f32 %v176, %v311
  %v465 = vmul.f32 %v176, %v315
  %v466 = vmul.f32 %v176, %v319
  %v467 = vmul.f32 %v176, %v323
  %v468 = vmul.f32 %v181, %v295
  %v469 = vmul.f32 %v181, %v299
  %v470 = vmul.f32 %v181, %v303
  %v471 = vmul.f32 %v181, %v307
  %v472 = vmul.f32 %v181, %v311
  %v473 = vmul.f32 %v181, %v315
  %v474 = vmul.f32 %v181, %v319
  %v475 = vmul.f32 %v181, %v323
  %v476 = vmul.f32 %v186, %v295
  %v477 = vmul.f32 %v186, %v299
  %v478 = vmul.f32 %v186, %v303
  %v479 = vmul.f32 %v186, %v307
  %v480 = vmul.f32 %v186, %v311
  %v481 = vmul.f32 %v186, %v315
  %v482 = vmul.f32 %v186, %v319
  %v483 = vmul.f32 %v186, %v323
  %v484 = vmul.f32 %v191, %v295
  %v485 = vmul.f32 %v191, %v299
  %v486 = vmul.f32 %v191, %v303
  %v487 = vmul.f32 %v191, %v307
  %v488 = vmul.f32 %v191, %v311
  %v489 = vmul.f32 %v191, %v315
  %v490 = vmul.f32 %v191, %v319
  %v491 = vmul.f32 %v191, %v323
  %v492 = vmul.f32 %v196, %v295
  %v493 = vmul.f32 %v196, %v299
  %v494 = vmul.f32 %v196, %v303
  %v495 = vmul.f32 %v196, %v307
  %v496 = vmul.f32 %v196, %v311
  %v497 = vmul.f32 %v196, %v315
  %v498 = vmul.f32 %v196, %v319
  %v499 = vmul.f32 %v196, %v323
  %v500 = vmul.f32 %v201, %v295
  %v501 = vmul.f32 %v201, %v299
  %v502 = vmul.f32 %v201, %v303
  %v503 = vmul.f32 %v201, %v307
  %v504 = vmul.f32 %v201, %v311
  %v505 = vmul.f32 %v201, %v315
  %v506 = vmul.f32 %v201, %v319
  %v507 = vmul.f32 %v201, %v323
  %v508 = vmul.f32 %v206, %v295
  %v509 = vmul.f32 %v206, %v299
  %v510 = vmul.f32 %v206, %v303
  %v511 = vmul.f32 %v206, %v307
  %v512 = vmul.f32 %v206, %v311
  %v513 = vmul.f32 %v206, %v315
  %v514 = vmul.f32 %v206, %v319
  %v515 = vmul.f32 %v206, %v323
  %v516 = vmul.f32 %v211, %v295
  %v517 = vmul.f32 %v211, %v299
  %v518 = vmul.f32 %v211, %v303
  %v519 = vmul.f32 %v211, %v307
  %v520 = vmul.f32 %v211, %v311
  %v521 = vmul.f32 %v211, %v315
  %v522 = vmul.f32 %v211, %v319
  %v523 = vmul.f32 %v211, %v323
  %v524 = vmul.f32 %v216, %v295
  %v525 = vmul.f32 %v216, %v299
  %v526 = vmul.f32 %v216, %v303
  %v527 = vmul.f32 %v216, %v307
  %v528 = vmul.f32 %v216, %v311
  %v529 = vmul.f32 %v216, %v315
  %v530 = vmul.f32 %v216, %v319
  %v531 = vmul.f32 %v216, %v323
  %v532 = vmul.f32 %v221, %v295
  %v533 = vmul.f32 %v221, %v299
  %v534 = vmul.f32 %v221, %v303
  %v535 = vmul.f32 %v221, %v307
  %v536 = vmul.f32 %v221, %v311
  %v537 = vmul.f32 %v221, %v315
  %v538 = vmul.f32 %v221, %v319
  %v539 = vmul.f32 %v221, %v323
  %v540 = vmul.f32 %v226, %v295
  %v541 = vmul.f32 %v226, %v299
  %v542 = vmul.f32 %v226, %v303
  %v543 = vmul.f32 %v226, %v307
  %v544 = vmul.f32 %v226, %v311
  %v545 = vmul.f32 %v226, %v315
  %v546 = vmul.f32 %v226, %v319
  %v547 = vmul.f32 %v226, %v323
  %v548 = vmul.f32 %v231, %v295
  %v549 = vmul.f32 %v231, %v299
  %v550 = vmul.f32 %v231, %v303
  %v551 = vmul.f32 %v231, %v307
  %v552 = vmul.f32 %v231, %v311
  %v553 = vmul.f32 %v231, %v315
  %v554 = vmul.f32 %v231, %v319
  %v555 = vmul.f32 %v231, %v323
  %v556 = vmul.f32 %v236, %v295
  %v557 = vmul.f32 %v236, %v299
  %v558 = vmul.f32 %v236, %v303
  %v559 = vmul.f32 %v236, %v307
  %v560 = vmul.f32 %v236, %v311
  %v561 = vmul.f32 %v236, %v315
  %v562 = vmul.f32 %v236, %v319
  %v563 = vmul.f32 %v236, %v323
  %v564 = vmul.f32 %v241, %v295
  %v565 = vmul.f32 %v241, %v299
  %v566 = vmul.f32 %v241, %v303
  %v567 = vmul.f32 %v241, %v307
  %v568 = vmul.f32 %v241, %v311
  %v569 = vmul.f32 %v241, %v315
  %v570 = vmul.f32 %v241, %v319
  %v571 = vmul.f32 %v241, %v323
  %v572 = vmul.f32 %v246, %v295
  %v573 = vmul.f32 %v246, %v299
  %v574 = vmul.f32 %v246, %v303
  %v575 = vmul.f32 %v246, %v307
  %v576 = vmul.f32 %v246, %v311
  %v577 = vmul.f32 %v246, %v315
  %v578 = vmul.f32 %v246, %v319
  %v579 = vmul.f32 %v246, %v323
  %581 = vset.pattern.permute.xlu0 0
  %582 = vperm.xlu0 %581, %v56
  %v583 = vpop.permute.xlu0 %582
  %586 = vset.pattern.permute.xlu0 0
  %587 = vperm.xlu0 %586, %v57
  %v588 = vpop.permute.xlu0 %587
  %591 = vset.pattern.permute.xlu0 0
  %592 = vperm.xlu0 %591, %v58
  %v593 = vpop.permute.xlu0 %592
  %596 = vset.pattern.permute.xlu0 0
  %597 = vperm.xlu0 %596, %v59
  %v598 = vpop.permute.xlu0 %597
  %601 = vset.pattern.permute.xlu0 0
  %602 = vperm.xlu0 %601, %v60
  %v603 = vpop.permute.xlu0 %602
  %606 = vset.pattern.permute.xlu0 0
  %607 = vperm.xlu0 %606, %v61
  %v608 = vpop.permute.xlu0 %607
  %611 = vset.pattern.permute.xlu0 0
  %612 = vperm.xlu0 %611, %v62
  %v613 = vpop.permute.xlu0 %612
  %616 = vset.pattern.permute.xlu0 0
  %617 = vperm.xlu0 %616, %v63
  %v618 = vpop.permute.xlu0 %617
  %621 = vset.pattern.permute.xlu0 0
  %622 = vperm.xlu0 %621, %v64
  %v623 = vpop.permute.xlu0 %622
  %626 = vset.pattern.permute.xlu0 0
  %627 = vperm.xlu0 %626, %v65
  %v628 = vpop.permute.xlu0 %627
  %631 = vset.pattern.permute.xlu0 0
  %632 = vperm.xlu0 %631, %v66
  %v633 = vpop.permute.xlu0 %632
  %636 = vset.pattern.permute.xlu0 0
  %637 = vperm.xlu0 %636, %v67
  %v638 = vpop.permute.xlu0 %637
  %641 = vset.pattern.permute.xlu0 0
  %642 = vperm.xlu0 %641, %v68
  %v643 = vpop.permute.xlu0 %642
  %646 = vset.pattern.permute.xlu0 0
  %647 = vperm.xlu0 %646, %v69
  %v648 = vpop.permute.xlu0 %647
  %651 = vset.pattern.permute.xlu0 0
  %652 = vperm.xlu0 %651, %v70
  %v653 = vpop.permute.xlu0 %652
  %656 = vset.pattern.permute.xlu0 0
  %657 = vperm.xlu0 %656, %v71
  %v658 = vpop.permute.xlu0 %657
  %661 = vset.pattern.permute.xlu0 0
  %662 = vperm.xlu0 %661, %v72
  %v663 = vpop.permute.xlu0 %662
  %666 = vset.pattern.permute.xlu0 0
  %667 = vperm.xlu0 %666, %v73
  %v668 = vpop.permute.xlu0 %667
  %671 = vset.pattern.permute.xlu0 0
  %672 = vperm.xlu0 %671, %v74
  %v673 = vpop.permute.xlu0 %672
  %676 = vset.pattern.permute.xlu0 0
  %677 = vperm.xlu0 %676, %v75
  %v678 = vpop.permute.xlu0 %677
  %681 = vset.pattern.permute.xlu0 0
  %682 = vperm.xlu0 %681, %v76
  %v683 = vpop.permute.xlu0 %682
  %686 = vset.pattern.permute.xlu0 0
  %687 = vperm.xlu0 %686, %v77
  %v688 = vpop.permute.xlu0 %687
  %691 = vset.pattern.permute.xlu0 0
  %692 = vperm.xlu0 %691, %v78
  %v693 = vpop.permute.xlu0 %692
  %696 = vset.pattern.permute.xlu0 0
  %697 = vperm.xlu0 %696, %v79
  %v698 = vpop.permute.xlu0 %697
  %701 = vset.pattern.permute.xlu0 0
  %702 = vperm.xlu0 %701, %v80
  %v703 = vpop.permute.xlu0 %702
  %706 = vset.pattern.permute.xlu0 0
  %707 = vperm.xlu0 %706, %v81
  %v708 = vpop.permute.xlu0 %707
  %711 = vset.pattern.permute.xlu0 0
  %712 = vperm.xlu0 %711, %v82
  %v713 = vpop.permute.xlu0 %712
  %716 = vset.pattern.permute.xlu0 0
  %717 = vperm.xlu0 %716, %v83
  %v718 = vpop.permute.xlu0 %717
  %721 = vset.pattern.permute.xlu0 0
  %722 = vperm.xlu0 %721, %v84
  %v723 = vpop.permute.xlu0 %722
  %726 = vset.pattern.permute.xlu0 0
  %727 = vperm.xlu0 %726, %v85
  %v728 = vpop.permute.xlu0 %727
  %731 = vset.pattern.permute.xlu0 0
  %732 = vperm.xlu0 %731, %v86
  %v733 = vpop.permute.xlu0 %732
  %736 = vset.pattern.permute.xlu0 0
  %737 = vperm.xlu0 %736, %v87
  %v738 = vpop.permute.xlu0 %737
  %v740 = vadd.f32 %v583, %v324
  %v741 = vadd.f32 %v583, %v325
  %v742 = vadd.f32 %v583, %v326
  %v743 = vadd.f32 %v583, %v327
  %v744 = vadd.f32 %v583, %v328
  %v745 = vadd.f32 %v583, %v329
  %v746 = vadd.f32 %v583, %v330
  %v747 = vadd.f32 %v583, %v331
  %v748 = vadd.f32 %v588, %v332
  %v749 = vadd.f32 %v588, %v333
  %v750 = vadd.f32 %v588, %v334
  %v751 = vadd.f32 %v588, %v335
  %v752 = vadd.f32 %v588, %v336
  %v753 = vadd.f32 %v588, %v337
  %v754 = vadd.f32 %v588, %v338
  %v755 = vadd.f32 %v588, %v339
  %v756 = vadd.f32 %v593, %v340
  %v757 = vadd.f32 %v593, %v341
  %v758 = vadd.f32 %v593, %v342
  %v759 = vadd.f32 %v593, %v343
  %v760 = vadd.f32 %v593, %v344
  %v761 = vadd.f32 %v593, %v345
  %v762 = vadd.f32 %v593, %v346
  %v763 = vadd.f32 %v593, %v347
  %v764 = vadd.f32 %v598, %v348
  %v765 = vadd.f32 %v598, %v349
  %v766 = vadd.f32 %v598, %v350
  %v767 = vadd.f32 %v598, %v351
  %v768 = vadd.f32 %v598, %v352
  %v769 = vadd.f32 %v598, %v353
  %v770 = vadd.f32 %v598, %v354
  %v771 = vadd.f32 %v598, %v355
  %v772 = vadd.f32 %v603, %v356
  %v773 = vadd.f32 %v603, %v357
  %v774 = vadd.f32 %v603, %v358
  %v775 = vadd.f32 %v603, %v359
  %v776 = vadd.f32 %v603, %v360
  %v777 = vadd.f32 %v603, %v361
  %v778 = vadd.f32 %v603, %v362
  %v779 = vadd.f32 %v603, %v363
  %v780 = vadd.f32 %v608, %v364
  %v781 = vadd.f32 %v608, %v365
  %v782 = vadd.f32 %v608, %v366
  %v783 = vadd.f32 %v608, %v367
  %v784 = vadd.f32 %v608, %v368
  %v785 = vadd.f32 %v608, %v369
  %v786 = vadd.f32 %v608, %v370
  %v787 = vadd.f32 %v608, %v371
  %v788 = vadd.f32 %v613, %v372
  %v789 = vadd.f32 %v613, %v373
  %v790 = vadd.f32 %v613, %v374
  %v791 = vadd.f32 %v613, %v375
  %v792 = vadd.f32 %v613, %v376
  %v793 = vadd.f32 %v613, %v377
  %v794 = vadd.f32 %v613, %v378
  %v795 = vadd.f32 %v613, %v379
  %v796 = vadd.f32 %v618, %v380
  %v797 = vadd.f32 %v618, %v381
  %v798 = vadd.f32 %v618, %v382
  %v799 = vadd.f32 %v618, %v383
  %v800 = vadd.f32 %v618, %v384
  %v801 = vadd.f32 %v618, %v385
  %v802 = vadd.f32 %v618, %v386
  %v803 = vadd.f32 %v618, %v387
  %v804 = vadd.f32 %v623, %v388
  %v805 = vadd.f32 %v623, %v389
  %v806 = vadd.f32 %v623, %v390
  %v807 = vadd.f32 %v623, %v391
  %v808 = vadd.f32 %v623, %v392
  %v809 = vadd.f32 %v623, %v393
  %v810 = vadd.f32 %v623, %v394
  %v811 = vadd.f32 %v623, %v395
  %v812 = vadd.f32 %v628, %v396
  %v813 = vadd.f32 %v628, %v397
  %v814 = vadd.f32 %v628, %v398
  %v815 = vadd.f32 %v628, %v399
  %v816 = vadd.f32 %v628, %v400
  %v817 = vadd.f32 %v628, %v401
  %v818 = vadd.f32 %v628, %v402
  %v819 = vadd.f32 %v628, %v403
  %v820 = vadd.f32 %v633, %v404
  %v821 = vadd.f32 %v633, %v405
  %v822 = vadd.f32 %v633, %v406
  %v823 = vadd.f32 %v633, %v407
  %v824 = vadd.f32 %v633, %v408
  %v825 = vadd.f32 %v633, %v409
  %v826 = vadd.f32 %v633, %v410
  %v827 = vadd.f32 %v633, %v411
  %v828 = vadd.f32 %v638, %v412
  %v829 = vadd.f32 %v638, %v413
  %v830 = vadd.f32 %v638, %v414
  %v831 = vadd.f32 %v638, %v415
  %v832 = vadd.f32 %v638, %v416
  %v833 = vadd.f32 %v638, %v417
  %v834 = vadd.f32 %v638, %v418
  %v835 = vadd.f32 %v638, %v419
  %v836 = vadd.f32 %v643, %v420
  %v837 = vadd.f32 %v643, %v421
  %v838 = vadd.f32 %v643, %v422
  %v839 = vadd.f32 %v643, %v423
  %v840 = vadd.f32 %v643, %v424
  %v841 = vadd.f32 %v643, %v425
  %v842 = vadd.f32 %v643, %v426
  %v843 = vadd.f32 %v643, %v427
  %v844 = vadd.f32 %v648, %v428
  %v845 = vadd.f32 %v648, %v429
  %v846 = vadd.f32 %v648, %v430
  %v847 = vadd.f32 %v648, %v431
  %v848 = vadd.f32 %v648, %v432
  %v849 = vadd.f32 %v648, %v433
  %v850 = vadd.f32 %v648, %v434
  %v851 = vadd.f32 %v648, %v435
  %v852 = vadd.f32 %v653, %v436
  %v853 = vadd.f32 %v653, %v437
  %v854 = vadd.f32 %v653, %v438
  %v855 = vadd.f32 %v653, %v439
  %v856 = vadd.f32 %v653, %v440
  %v857 = vadd.f32 %v653, %v441
  %v858 = vadd.f32 %v653, %v442
  %v859 = vadd.f32 %v653, %v443
  %v860 = vadd.f32 %v658, %v444
  %v861 = vadd.f32 %v658, %v445
  %v862 = vadd.f32 %v658, %v446
  %v863 = vadd.f32 %v658, %v447
  %v864 = vadd.f32 %v658, %v448
  %v865 = vadd.f32 %v658, %v449
  %v866 = vadd.f32 %v658, %v450
  %v867 = vadd.f32 %v658, %v451
  %v868 = vadd.f32 %v663, %v452
  %v869 = vadd.f32 %v663, %v453
  %v870 = vadd.f32 %v663, %v454
  %v871 = vadd.f32 %v663, %v455
  %v872 = vadd.f32 %v663, %v456
  %v873 = vadd.f32 %v663, %v457
  %v874 = vadd.f32 %v663, %v458
  %v875 = vadd.f32 %v663, %v459
  %v876 = vadd.f32 %v668, %v460
  %v877 = vadd.f32 %v668, %v461
  %v878 = vadd.f32 %v668, %v462
  %v879 = vadd.f32 %v668, %v463
  %v880 = vadd.f32 %v668, %v464
  %v881 = vadd.f32 %v668, %v465
  %v882 = vadd.f32 %v668, %v466
  %v883 = vadd.f32 %v668, %v467
  %v884 = vadd.f32 %v673, %v468
  %v885 = vadd.f32 %v673, %v469
  %v886 = vadd.f32 %v673, %v470
  %v887 = vadd.f32 %v673, %v471
  %v888 = vadd.f32 %v673, %v472
  %v889 = vadd.f32 %v673, %v473
  %v890 = vadd.f32 %v673, %v474
  %v891 = vadd.f32 %v673, %v475
  %v892 = vadd.f32 %v678, %v476
  %v893 = vadd.f32 %v678, %v477
  %v894 = vadd.f32 %v678, %v478
  %v895 = vadd.f32 %v678, %v479
  %v896 = vadd.f32 %v678, %v480
  %v897 = vadd.f32 %v678, %v481
  %v898 = vadd.f32 %v678, %v482
  %v899 = vadd.f32 %v678, %v483
  %v900 = vadd.f32 %v683, %v484
  %v901 = vadd.f32 %v683, %v485
  %v902 = vadd.f32 %v683, %v486
  %v903 = vadd.f32 %v683, %v487
  %v904 = vadd.f32 %v683, %v488
  %v905 = vadd.f32 %v683, %v489
  %v906 = vadd.f32 %v683, %v490
  %v907 = vadd.f32 %v683, %v491
  %v908 = vadd.f32 %v688, %v492
  %v909 = vadd.f32 %v688, %v493
  %v910 = vadd.f32 %v688, %v494
  %v911 = vadd.f32 %v688, %v495
  %v912 = vadd.f32 %v688, %v496
  %v913 = vadd.f32 %v688, %v497
  %v914 = vadd.f32 %v688, %v498
  %v915 = vadd.f32 %v688, %v499
  %v916 = vadd.f32 %v693, %v500
  %v917 = vadd.f32 %v693, %v501
  %v918 = vadd.f32 %v693, %v502
  %v919 = vadd.f32 %v693, %v503
  %v920 = vadd.f32 %v693, %v504
  %v921 = vadd.f32 %v693, %v505
  %v922 = vadd.f32 %v693, %v506
  %v923 = vadd.f32 %v693, %v507
  %v924 = vadd.f32 %v698, %v508
  %v925 = vadd.f32 %v698, %v509
  %v926 = vadd.f32 %v698, %v510
  %v927 = vadd.f32 %v698, %v511
  %v928 = vadd.f32 %v698, %v512
  %v929 = vadd.f32 %v698, %v513
  %v930 = vadd.f32 %v698, %v514
  %v931 = vadd.f32 %v698, %v515
  %v932 = vadd.f32 %v703, %v516
  %v933 = vadd.f32 %v703, %v517
  %v934 = vadd.f32 %v703, %v518
  %v935 = vadd.f32 %v703, %v519
  %v936 = vadd.f32 %v703, %v520
  %v937 = vadd.f32 %v703, %v521
  %v938 = vadd.f32 %v703, %v522
  %v939 = vadd.f32 %v703, %v523
  %v940 = vadd.f32 %v708, %v524
  %v941 = vadd.f32 %v708, %v525
  %v942 = vadd.f32 %v708, %v526
  %v943 = vadd.f32 %v708, %v527
  %v944 = vadd.f32 %v708, %v528
  %v945 = vadd.f32 %v708, %v529
  %v946 = vadd.f32 %v708, %v530
  %v947 = vadd.f32 %v708, %v531
  %v948 = vadd.f32 %v713, %v532
  %v949 = vadd.f32 %v713, %v533
  %v950 = vadd.f32 %v713, %v534
  %v951 = vadd.f32 %v713, %v535
  %v952 = vadd.f32 %v713, %v536
  %v953 = vadd.f32 %v713, %v537
  %v954 = vadd.f32 %v713, %v538
  %v955 = vadd.f32 %v713, %v539
  %v956 = vadd.f32 %v718, %v540
  %v957 = vadd.f32 %v718, %v541
  %v958 = vadd.f32 %v718, %v542
  %v959 = vadd.f32 %v718, %v543
  %v960 = vadd.f32 %v718, %v544
  %v961 = vadd.f32 %v718, %v545
  %v962 = vadd.f32 %v718, %v546
  %v963 = vadd.f32 %v718, %v547
  %v964 = vadd.f32 %v723, %v548
  %v965 = vadd.f32 %v723, %v549
  %v966 = vadd.f32 %v723, %v550
  %v967 = vadd.f32 %v723, %v551
  %v968 = vadd.f32 %v723, %v552
  %v969 = vadd.f32 %v723, %v553
  %v970 = vadd.f32 %v723, %v554
  %v971 = vadd.f32 %v723, %v555
  %v972 = vadd.f32 %v728, %v556
  %v973 = vadd.f32 %v728, %v557
  %v974 = vadd.f32 %v728, %v558
  %v975 = vadd.f32 %v728, %v559
  %v976 = vadd.f32 %v728, %v560
  %v977 = vadd.f32 %v728, %v561
  %v978 = vadd.f32 %v728, %v562
  %v979 = vadd.f32 %v728, %v563
  %v980 = vadd.f32 %v733, %v564
  %v981 = vadd.f32 %v733, %v565
  %v982 = vadd.f32 %v733, %v566
  %v983 = vadd.f32 %v733, %v567
  %v984 = vadd.f32 %v733, %v568
  %v985 = vadd.f32 %v733, %v569
  %v986 = vadd.f32 %v733, %v570
  %v987 = vadd.f32 %v733, %v571
  %v988 = vadd.f32 %v738, %v572
  %v989 = vadd.f32 %v738, %v573
  %v990 = vadd.f32 %v738, %v574
  %v991 = vadd.f32 %v738, %v575
  %v992 = vadd.f32 %v738, %v576
  %v993 = vadd.f32 %v738, %v577
  %v994 = vadd.f32 %v738, %v578
  %v995 = vadd.f32 %v738, %v579
  %996 = vset.pattern.permute.xlu0 1
  %997 = vperm.xlu0 %996, %v24
  %v998 = vpop.permute.xlu0 %997
  %1000 = vset.pattern.permute.xlu0 1
  %1001 = vperm.xlu0 %1000, %v25
  %v1002 = vpop.permute.xlu0 %1001
  %1004 = vset.pattern.permute.xlu0 1
  %1005 = vperm.xlu0 %1004, %v26
  %v1006 = vpop.permute.xlu0 %1005
  %1008 = vset.pattern.permute.xlu0 1
  %1009 = vperm.xlu0 %1008, %v27
  %v1010 = vpop.permute.xlu0 %1009
  %1012 = vset.pattern.permute.xlu0 1
  %1013 = vperm.xlu0 %1012, %v28
  %v1014 = vpop.permute.xlu0 %1013
  %1016 = vset.pattern.permute.xlu0 1
  %1017 = vperm.xlu0 %1016, %v29
  %v1018 = vpop.permute.xlu0 %1017
  %1020 = vset.pattern.permute.xlu0 1
  %1021 = vperm.xlu0 %1020, %v30
  %v1022 = vpop.permute.xlu0 %1021
  %1024 = vset.pattern.permute.xlu0 1
  %1025 = vperm.xlu0 %1024, %v31
  %v1026 = vpop.permute.xlu0 %1025
  %1028 = vset.pattern.permute.xlu0 1
  %1029 = vperm.xlu0 %1028, %v32
  %v1030 = vpop.permute.xlu0 %1029
  %1032 = vset.pattern.permute.xlu0 1
  %1033 = vperm.xlu0 %1032, %v33
  %v1034 = vpop.permute.xlu0 %1033
  %1036 = vset.pattern.permute.xlu0 1
  %1037 = vperm.xlu0 %1036, %v34
  %v1038 = vpop.permute.xlu0 %1037
  %1040 = vset.pattern.permute.xlu0 1
  %1041 = vperm.xlu0 %1040, %v35
  %v1042 = vpop.permute.xlu0 %1041
  %1044 = vset.pattern.permute.xlu0 1
  %1045 = vperm.xlu0 %1044, %v36
  %v1046 = vpop.permute.xlu0 %1045
  %1048 = vset.pattern.permute.xlu0 1
  %1049 = vperm.xlu0 %1048, %v37
  %v1050 = vpop.permute.xlu0 %1049
  %1052 = vset.pattern.permute.xlu0 1
  %1053 = vperm.xlu0 %1052, %v38
  %v1054 = vpop.permute.xlu0 %1053
  %1056 = vset.pattern.permute.xlu0 1
  %1057 = vperm.xlu0 %1056, %v39
  %v1058 = vpop.permute.xlu0 %1057
  %1060 = vset.pattern.permute.xlu0 1
  %1061 = vperm.xlu0 %1060, %v40
  %v1062 = vpop.permute.xlu0 %1061
  %1064 = vset.pattern.permute.xlu0 1
  %1065 = vperm.xlu0 %1064, %v41
  %v1066 = vpop.permute.xlu0 %1065
  %1068 = vset.pattern.permute.xlu0 1
  %1069 = vperm.xlu0 %1068, %v42
  %v1070 = vpop.permute.xlu0 %1069
  %1072 = vset.pattern.permute.xlu0 1
  %1073 = vperm.xlu0 %1072, %v43
  %v1074 = vpop.permute.xlu0 %1073
  %1076 = vset.pattern.permute.xlu0 1
  %1077 = vperm.xlu0 %1076, %v44
  %v1078 = vpop.permute.xlu0 %1077
  %1080 = vset.pattern.permute.xlu0 1
  %1081 = vperm.xlu0 %1080, %v45
  %v1082 = vpop.permute.xlu0 %1081
  %1084 = vset.pattern.permute.xlu0 1
  %1085 = vperm.xlu0 %1084, %v46
  %v1086 = vpop.permute.xlu0 %1085
  %1088 = vset.pattern.permute.xlu0 1
  %1089 = vperm.xlu0 %1088, %v47
  %v1090 = vpop.permute.xlu0 %1089
  %1092 = vset.pattern.permute.xlu0 1
  %1093 = vperm.xlu0 %1092, %v48
  %v1094 = vpop.permute.xlu0 %1093
  %1096 = vset.pattern.permute.xlu0 1
  %1097 = vperm.xlu0 %1096, %v49
  %v1098 = vpop.permute.xlu0 %1097
  %1100 = vset.pattern.permute.xlu0 1
  %1101 = vperm.xlu0 %1100, %v50
  %v1102 = vpop.permute.xlu0 %1101
  %1104 = vset.pattern.permute.xlu0 1
  %1105 = vperm.xlu0 %1104, %v51
  %v1106 = vpop.permute.xlu0 %1105
  %1108 = vset.pattern.permute.xlu0 1
  %1109 = vperm.xlu0 %1108, %v52
  %v1110 = vpop.permute.xlu0 %1109
  %1112 = vset.pattern.permute.xlu0 1
  %1113 = vperm.xlu0 %1112, %v53
  %v1114 = vpop.permute.xlu0 %1113
  %1116 = vset.pattern.permute.xlu0 1
  %1117 = vperm.xlu0 %1116, %v54
  %v1118 = vpop.permute.xlu0 %1117
  %1120 = vset.pattern.permute.xlu0 1
  %1121 = vperm.xlu0 %1120, %v55
  %v1122 = vpop.permute.xlu0 %1121
  %v1124 = vlaneseq
  %v1125 = vshrl.u32 %v1124, 7
  %v1126 = vsub.s32 1, %v1125
  %v1127 = vrot.slane %v20, %v1126
  %v1128 = vlaneseq
  %v1129 = vshrl.u32 %v1128, 7
  %v1130 = vsub.s32 5, %v1129
  %v1131 = vrot.slane %v20, %v1130
  %v1132 = vlaneseq
  %v1133 = vshrl.u32 %v1132, 7
  %v1134 = vsub.s32 1, %v1133
  %v1135 = vrot.slane %v21, %v1134
  %v1136 = vlaneseq
  %v1137 = vshrl.u32 %v1136, 7
  %v1138 = vsub.s32 5, %v1137
  %v1139 = vrot.slane %v21, %v1138
  %v1140 = vlaneseq
  %v1141 = vshrl.u32 %v1140, 7
  %v1142 = vsub.s32 1, %v1141
  %v1143 = vrot.slane %v22, %v1142
  %v1144 = vlaneseq
  %v1145 = vshrl.u32 %v1144, 7
  %v1146 = vsub.s32 5, %v1145
  %v1147 = vrot.slane %v22, %v1146
  %v1148 = vlaneseq
  %v1149 = vshrl.u32 %v1148, 7
  %v1150 = vsub.s32 1, %v1149
  %v1151 = vrot.slane %v23, %v1150
  %v1152 = vlaneseq
  %v1153 = vshrl.u32 %v1152, 7
  %v1154 = vsub.s32 5, %v1153
  %v1155 = vrot.slane %v23, %v1154
  %v1164 = vlaneseq
  %v1165 = vshrl.u32 %v1164, 7
  %v1166 = vsub.s32 1, %v1165
  %v1167 = vrot.slane %v1127, %v1166
  %v1168 = vlaneseq
  %v1169 = vshrl.u32 %v1168, 7
  %v1170 = vsub.s32 1, %v1169
  %v1171 = vrot.slane %v1131, %v1170
  %v1172 = vlaneseq
  %v1173 = vshrl.u32 %v1172, 7
  %v1174 = vsub.s32 1, %v1173
  %v1175 = vrot.slane %v1135, %v1174
  %v1176 = vlaneseq
  %v1177 = vshrl.u32 %v1176, 7
  %v1178 = vsub.s32 1, %v1177
  %v1179 = vrot.slane %v1139, %v1178
  %v1180 = vlaneseq
  %v1181 = vshrl.u32 %v1180, 7
  %v1182 = vsub.s32 1, %v1181
  %v1183 = vrot.slane %v1143, %v1182
  %v1184 = vlaneseq
  %v1185 = vshrl.u32 %v1184, 7
  %v1186 = vsub.s32 1, %v1185
  %v1187 = vrot.slane %v1147, %v1186
  %v1188 = vlaneseq
  %v1189 = vshrl.u32 %v1188, 7
  %v1190 = vsub.s32 1, %v1189
  %v1191 = vrot.slane %v1151, %v1190
  %v1192 = vlaneseq
  %v1193 = vshrl.u32 %v1192, 7
  %v1194 = vsub.s32 1, %v1193
  %v1195 = vrot.slane %v1155, %v1194
  %v1196 = vmul.f32 %v998, %v1167
  %v1197 = vmul.f32 %v998, %v1171
  %v1198 = vmul.f32 %v998, %v1175
  %v1199 = vmul.f32 %v998, %v1179
  %v1200 = vmul.f32 %v998, %v1183
  %v1201 = vmul.f32 %v998, %v1187
  %v1202 = vmul.f32 %v998, %v1191
  %v1203 = vmul.f32 %v998, %v1195
  %v1204 = vmul.f32 %v1002, %v1167
  %v1205 = vmul.f32 %v1002, %v1171
  %v1206 = vmul.f32 %v1002, %v1175
  %v1207 = vmul.f32 %v1002, %v1179
  %v1208 = vmul.f32 %v1002, %v1183
  %v1209 = vmul.f32 %v1002, %v1187
  %v1210 = vmul.f32 %v1002, %v1191
  %v1211 = vmul.f32 %v1002, %v1195
  %v1212 = vmul.f32 %v1006, %v1167
  %v1213 = vmul.f32 %v1006, %v1171
  %v1214 = vmul.f32 %v1006, %v1175
  %v1215 = vmul.f32 %v1006, %v1179
  %v1216 = vmul.f32 %v1006, %v1183
  %v1217 = vmul.f32 %v1006, %v1187
  %v1218 = vmul.f32 %v1006, %v1191
  %v1219 = vmul.f32 %v1006, %v1195
  %v1220 = vmul.f32 %v1010, %v1167
  %v1221 = vmul.f32 %v1010, %v1171
  %v1222 = vmul.f32 %v1010, %v1175
  %v1223 = vmul.f32 %v1010, %v1179
  %v1224 = vmul.f32 %v1010, %v1183
  %v1225 = vmul.f32 %v1010, %v1187
  %v1226 = vmul.f32 %v1010, %v1191
  %v1227 = vmul.f32 %v1010, %v1195
  %v1228 = vmul.f32 %v1014, %v1167
  %v1229 = vmul.f32 %v1014, %v1171
  %v1230 = vmul.f32 %v1014, %v1175
  %v1231 = vmul.f32 %v1014, %v1179
  %v1232 = vmul.f32 %v1014, %v1183
  %v1233 = vmul.f32 %v1014, %v1187
  %v1234 = vmul.f32 %v1014, %v1191
  %v1235 = vmul.f32 %v1014, %v1195
  %v1236 = vmul.f32 %v1018, %v1167
  %v1237 = vmul.f32 %v1018, %v1171
  %v1238 = vmul.f32 %v1018, %v1175
  %v1239 = vmul.f32 %v1018, %v1179
  %v1240 = vmul.f32 %v1018, %v1183
  %v1241 = vmul.f32 %v1018, %v1187
  %v1242 = vmul.f32 %v1018, %v1191
  %v1243 = vmul.f32 %v1018, %v1195
  %v1244 = vmul.f32 %v1022, %v1167
  %v1245 = vmul.f32 %v1022, %v1171
  %v1246 = vmul.f32 %v1022, %v1175
  %v1247 = vmul.f32 %v1022, %v1179
  %v1248 = vmul.f32 %v1022, %v1183
  %v1249 = vmul.f32 %v1022, %v1187
  %v1250 = vmul.f32 %v1022, %v1191
  %v1251 = vmul.f32 %v1022, %v1195
  %v1252 = vmul.f32 %v1026, %v1167
  %v1253 = vmul.f32 %v1026, %v1171
  %v1254 = vmul.f32 %v1026, %v1175
  %v1255 = vmul.f32 %v1026, %v1179
  %v1256 = vmul.f32 %v1026, %v1183
  %v1257 = vmul.f32 %v1026, %v1187
  %v1258 = vmul.f32 %v1026, %v1191
  %v1259 = vmul.f32 %v1026, %v1195
  %v1260 = vmul.f32 %v1030, %v1167
  %v1261 = vmul.f32 %v1030, %v1171
  %v1262 = vmul.f32 %v1030, %v1175
  %v1263 = vmul.f32 %v1030, %v1179
  %v1264 = vmul.f32 %v1030, %v1183
  %v1265 = vmul.f32 %v1030, %v1187
  %v1266 = vmul.f32 %v1030, %v1191
  %v1267 = vmul.f32 %v1030, %v1195
  %v1268 = vmul.f32 %v1034, %v1167
  %v1269 = vmul.f32 %v1034, %v1171
  %v1270 = vmul.f32 %v1034, %v1175
  %v1271 = vmul.f32 %v1034, %v1179
  %v1272 = vmul.f32 %v1034, %v1183
  %v1273 = vmul.f32 %v1034, %v1187
  %v1274 = vmul.f32 %v1034, %v1191
  %v1275 = vmul.f32 %v1034, %v1195
  %v1276 = vmul.f32 %v1038, %v1167
  %v1277 = vmul.f32 %v1038, %v1171
  %v1278 = vmul.f32 %v1038, %v1175
  %v1279 = vmul.f32 %v1038, %v1179
  %v1280 = vmul.f32 %v1038, %v1183
  %v1281 = vmul.f32 %v1038, %v1187
  %v1282 = vmul.f32 %v1038, %v1191
  %v1283 = vmul.f32 %v1038, %v1195
  %v1284 = vmul.f32 %v1042, %v1167
  %v1285 = vmul.f32 %v1042, %v1171
  %v1286 = vmul.f32 %v1042, %v1175
  %v1287 = vmul.f32 %v1042, %v1179
  %v1288 = vmul.f32 %v1042, %v1183
  %v1289 = vmul.f32 %v1042, %v1187
  %v1290 = vmul.f32 %v1042, %v1191
  %v1291 = vmul.f32 %v1042, %v1195
  %v1292 = vmul.f32 %v1046, %v1167
  %v1293 = vmul.f32 %v1046, %v1171
  %v1294 = vmul.f32 %v1046, %v1175
  %v1295 = vmul.f32 %v1046, %v1179
  %v1296 = vmul.f32 %v1046, %v1183
  %v1297 = vmul.f32 %v1046, %v1187
  %v1298 = vmul.f32 %v1046, %v1191
  %v1299 = vmul.f32 %v1046, %v1195
  %v1300 = vmul.f32 %v1050, %v1167
  %v1301 = vmul.f32 %v1050, %v1171
  %v1302 = vmul.f32 %v1050, %v1175
  %v1303 = vmul.f32 %v1050, %v1179
  %v1304 = vmul.f32 %v1050, %v1183
  %v1305 = vmul.f32 %v1050, %v1187
  %v1306 = vmul.f32 %v1050, %v1191
  %v1307 = vmul.f32 %v1050, %v1195
  %v1308 = vmul.f32 %v1054, %v1167
  %v1309 = vmul.f32 %v1054, %v1171
  %v1310 = vmul.f32 %v1054, %v1175
  %v1311 = vmul.f32 %v1054, %v1179
  %v1312 = vmul.f32 %v1054, %v1183
  %v1313 = vmul.f32 %v1054, %v1187
  %v1314 = vmul.f32 %v1054, %v1191
  %v1315 = vmul.f32 %v1054, %v1195
  %v1316 = vmul.f32 %v1058, %v1167
  %v1317 = vmul.f32 %v1058, %v1171
  %v1318 = vmul.f32 %v1058, %v1175
  %v1319 = vmul.f32 %v1058, %v1179
  %v1320 = vmul.f32 %v1058, %v1183
  %v1321 = vmul.f32 %v1058, %v1187
  %v1322 = vmul.f32 %v1058, %v1191
  %v1323 = vmul.f32 %v1058, %v1195
  %v1324 = vmul.f32 %v1062, %v1167
  %v1325 = vmul.f32 %v1062, %v1171
  %v1326 = vmul.f32 %v1062, %v1175
  %v1327 = vmul.f32 %v1062, %v1179
  %v1328 = vmul.f32 %v1062, %v1183
  %v1329 = vmul.f32 %v1062, %v1187
  %v1330 = vmul.f32 %v1062, %v1191
  %v1331 = vmul.f32 %v1062, %v1195
  %v1332 = vmul.f32 %v1066, %v1167
  %v1333 = vmul.f32 %v1066, %v1171
  %v1334 = vmul.f32 %v1066, %v1175
  %v1335 = vmul.f32 %v1066, %v1179
  %v1336 = vmul.f32 %v1066, %v1183
  %v1337 = vmul.f32 %v1066, %v1187
  %v1338 = vmul.f32 %v1066, %v1191
  %v1339 = vmul.f32 %v1066, %v1195
  %v1340 = vmul.f32 %v1070, %v1167
  %v1341 = vmul.f32 %v1070, %v1171
  %v1342 = vmul.f32 %v1070, %v1175
  %v1343 = vmul.f32 %v1070, %v1179
  %v1344 = vmul.f32 %v1070, %v1183
  %v1345 = vmul.f32 %v1070, %v1187
  %v1346 = vmul.f32 %v1070, %v1191
  %v1347 = vmul.f32 %v1070, %v1195
  %v1348 = vmul.f32 %v1074, %v1167
  %v1349 = vmul.f32 %v1074, %v1171
  %v1350 = vmul.f32 %v1074, %v1175
  %v1351 = vmul.f32 %v1074, %v1179
  %v1352 = vmul.f32 %v1074, %v1183
  %v1353 = vmul.f32 %v1074, %v1187
  %v1354 = vmul.f32 %v1074, %v1191
  %v1355 = vmul.f32 %v1074, %v1195
  %v1356 = vmul.f32 %v1078, %v1167
  %v1357 = vmul.f32 %v1078, %v1171
  %v1358 = vmul.f32 %v1078, %v1175
  %v1359 = vmul.f32 %v1078, %v1179
  %v1360 = vmul.f32 %v1078, %v1183
  %v1361 = vmul.f32 %v1078, %v1187
  %v1362 = vmul.f32 %v1078, %v1191
  %v1363 = vmul.f32 %v1078, %v1195
  %v1364 = vmul.f32 %v1082, %v1167
  %v1365 = vmul.f32 %v1082, %v1171
  %v1366 = vmul.f32 %v1082, %v1175
  %v1367 = vmul.f32 %v1082, %v1179
  %v1368 = vmul.f32 %v1082, %v1183
  %v1369 = vmul.f32 %v1082, %v1187
  %v1370 = vmul.f32 %v1082, %v1191
  %v1371 = vmul.f32 %v1082, %v1195
  %v1372 = vmul.f32 %v1086, %v1167
  %v1373 = vmul.f32 %v1086, %v1171
  %v1374 = vmul.f32 %v1086, %v1175
  %v1375 = vmul.f32 %v1086, %v1179
  %v1376 = vmul.f32 %v1086, %v1183
  %v1377 = vmul.f32 %v1086, %v1187
  %v1378 = vmul.f32 %v1086, %v1191
  %v1379 = vmul.f32 %v1086, %v1195
  %v1380 = vmul.f32 %v1090, %v1167
  %v1381 = vmul.f32 %v1090, %v1171
  %v1382 = vmul.f32 %v1090, %v1175
  %v1383 = vmul.f32 %v1090, %v1179
  %v1384 = vmul.f32 %v1090, %v1183
  %v1385 = vmul.f32 %v1090, %v1187
  %v1386 = vmul.f32 %v1090, %v1191
  %v1387 = vmul.f32 %v1090, %v1195
  %v1388 = vmul.f32 %v1094, %v1167
  %v1389 = vmul.f32 %v1094, %v1171
  %v1390 = vmul.f32 %v1094, %v1175
  %v1391 = vmul.f32 %v1094, %v1179
  %v1392 = vmul.f32 %v1094, %v1183
  %v1393 = vmul.f32 %v1094, %v1187
  %v1394 = vmul.f32 %v1094, %v1191
  %v1395 = vmul.f32 %v1094, %v1195
  %v1396 = vmul.f32 %v1098, %v1167
  %v1397 = vmul.f32 %v1098, %v1171
  %v1398 = vmul.f32 %v1098, %v1175
  %v1399 = vmul.f32 %v1098, %v1179
  %v1400 = vmul.f32 %v1098, %v1183
  %v1401 = vmul.f32 %v1098, %v1187
  %v1402 = vmul.f32 %v1098, %v1191
  %v1403 = vmul.f32 %v1098, %v1195
  %v1404 = vmul.f32 %v1102, %v1167
  %v1405 = vmul.f32 %v1102, %v1171
  %v1406 = vmul.f32 %v1102, %v1175
  %v1407 = vmul.f32 %v1102, %v1179
  %v1408 = vmul.f32 %v1102, %v1183
  %v1409 = vmul.f32 %v1102, %v1187
  %v1410 = vmul.f32 %v1102, %v1191
  %v1411 = vmul.f32 %v1102, %v1195
  %v1412 = vmul.f32 %v1106, %v1167
  %v1413 = vmul.f32 %v1106, %v1171
  %v1414 = vmul.f32 %v1106, %v1175
  %v1415 = vmul.f32 %v1106, %v1179
  %v1416 = vmul.f32 %v1106, %v1183
  %v1417 = vmul.f32 %v1106, %v1187
  %v1418 = vmul.f32 %v1106, %v1191
  %v1419 = vmul.f32 %v1106, %v1195
  %v1420 = vmul.f32 %v1110, %v1167
  %v1421 = vmul.f32 %v1110, %v1171
  %v1422 = vmul.f32 %v1110, %v1175
  %v1423 = vmul.f32 %v1110, %v1179
  %v1424 = vmul.f32 %v1110, %v1183
  %v1425 = vmul.f32 %v1110, %v1187
  %v1426 = vmul.f32 %v1110, %v1191
  %v1427 = vmul.f32 %v1110, %v1195
  %v1428 = vmul.f32 %v1114, %v1167
  %v1429 = vmul.f32 %v1114, %v1171
  %v1430 = vmul.f32 %v1114, %v1175
  %v1431 = vmul.f32 %v1114, %v1179
  %v1432 = vmul.f32 %v1114, %v1183
  %v1433 = vmul.f32 %v1114, %v1187
  %v1434 = vmul.f32 %v1114, %v1191
  %v1435 = vmul.f32 %v1114, %v1195
  %v1436 = vmul.f32 %v1118, %v1167
  %v1437 = vmul.f32 %v1118, %v1171
  %v1438 = vmul.f32 %v1118, %v1175
  %v1439 = vmul.f32 %v1118, %v1179
  %v1440 = vmul.f32 %v1118, %v1183
  %v1441 = vmul.f32 %v1118, %v1187
  %v1442 = vmul.f32 %v1118, %v1191
  %v1443 = vmul.f32 %v1118, %v1195
  %v1444 = vmul.f32 %v1122, %v1167
  %v1445 = vmul.f32 %v1122, %v1171
  %v1446 = vmul.f32 %v1122, %v1175
  %v1447 = vmul.f32 %v1122, %v1179
  %v1448 = vmul.f32 %v1122, %v1183
  %v1449 = vmul.f32 %v1122, %v1187
  %v1450 = vmul.f32 %v1122, %v1191
  %v1451 = vmul.f32 %v1122, %v1195
  %v1452 = vadd.f32 %v740, %v1196
  %v1453 = vadd.f32 %v741, %v1197
  %v1454 = vadd.f32 %v742, %v1198
  %v1455 = vadd.f32 %v743, %v1199
  %v1456 = vadd.f32 %v744, %v1200
  %v1457 = vadd.f32 %v745, %v1201
  %v1458 = vadd.f32 %v746, %v1202
  %v1459 = vadd.f32 %v747, %v1203
  %v1460 = vadd.f32 %v748, %v1204
  %v1461 = vadd.f32 %v749, %v1205
  %v1462 = vadd.f32 %v750, %v1206
  %v1463 = vadd.f32 %v751, %v1207
  %v1464 = vadd.f32 %v752, %v1208
  %v1465 = vadd.f32 %v753, %v1209
  %v1466 = vadd.f32 %v754, %v1210
  %v1467 = vadd.f32 %v755, %v1211
  %v1468 = vadd.f32 %v756, %v1212
  %v1469 = vadd.f32 %v757, %v1213
  %v1470 = vadd.f32 %v758, %v1214
  %v1471 = vadd.f32 %v759, %v1215
  %v1472 = vadd.f32 %v760, %v1216
  %v1473 = vadd.f32 %v761, %v1217
  %v1474 = vadd.f32 %v762, %v1218
  %v1475 = vadd.f32 %v763, %v1219
  %v1476 = vadd.f32 %v764, %v1220
  %v1477 = vadd.f32 %v765, %v1221
  %v1478 = vadd.f32 %v766, %v1222
  %v1479 = vadd.f32 %v767, %v1223
  %v1480 = vadd.f32 %v768, %v1224
  %v1481 = vadd.f32 %v769, %v1225
  %v1482 = vadd.f32 %v770, %v1226
  %v1483 = vadd.f32 %v771, %v1227
  %v1484 = vadd.f32 %v772, %v1228
  %v1485 = vadd.f32 %v773, %v1229
  %v1486 = vadd.f32 %v774, %v1230
  %v1487 = vadd.f32 %v775, %v1231
  %v1488 = vadd.f32 %v776, %v1232
  %v1489 = vadd.f32 %v777, %v1233
  %v1490 = vadd.f32 %v778, %v1234
  %v1491 = vadd.f32 %v779, %v1235
  %v1492 = vadd.f32 %v780, %v1236
  %v1493 = vadd.f32 %v781, %v1237
  %v1494 = vadd.f32 %v782, %v1238
  %v1495 = vadd.f32 %v783, %v1239
  %v1496 = vadd.f32 %v784, %v1240
  %v1497 = vadd.f32 %v785, %v1241
  %v1498 = vadd.f32 %v786, %v1242
  %v1499 = vadd.f32 %v787, %v1243
  %v1500 = vadd.f32 %v788, %v1244
  %v1501 = vadd.f32 %v789, %v1245
  %v1502 = vadd.f32 %v790, %v1246
  %v1503 = vadd.f32 %v791, %v1247
  %v1504 = vadd.f32 %v792, %v1248
  %v1505 = vadd.f32 %v793, %v1249
  %v1506 = vadd.f32 %v794, %v1250
  %v1507 = vadd.f32 %v795, %v1251
  %v1508 = vadd.f32 %v796, %v1252
  %v1509 = vadd.f32 %v797, %v1253
  %v1510 = vadd.f32 %v798, %v1254
  %v1511 = vadd.f32 %v799, %v1255
  %v1512 = vadd.f32 %v800, %v1256
  %v1513 = vadd.f32 %v801, %v1257
  %v1514 = vadd.f32 %v802, %v1258
  %v1515 = vadd.f32 %v803, %v1259
  %v1516 = vadd.f32 %v804, %v1260
  %v1517 = vadd.f32 %v805, %v1261
  %v1518 = vadd.f32 %v806, %v1262
  %v1519 = vadd.f32 %v807, %v1263
  %v1520 = vadd.f32 %v808, %v1264
  %v1521 = vadd.f32 %v809, %v1265
  %v1522 = vadd.f32 %v810, %v1266
  %v1523 = vadd.f32 %v811, %v1267
  %v1524 = vadd.f32 %v812, %v1268
  %v1525 = vadd.f32 %v813, %v1269
  %v1526 = vadd.f32 %v814, %v1270
  %v1527 = vadd.f32 %v815, %v1271
  %v1528 = vadd.f32 %v816, %v1272
  %v1529 = vadd.f32 %v817, %v1273
  %v1530 = vadd.f32 %v818, %v1274
  %v1531 = vadd.f32 %v819, %v1275
  %v1532 = vadd.f32 %v820, %v1276
  %v1533 = vadd.f32 %v821, %v1277
  %v1534 = vadd.f32 %v822, %v1278
  %v1535 = vadd.f32 %v823, %v1279
  %v1536 = vadd.f32 %v824, %v1280
  %v1537 = vadd.f32 %v825, %v1281
  %v1538 = vadd.f32 %v826, %v1282
  %v1539 = vadd.f32 %v827, %v1283
  %v1540 = vadd.f32 %v828, %v1284
  %v1541 = vadd.f32 %v829, %v1285
  %v1542 = vadd.f32 %v830, %v1286
  %v1543 = vadd.f32 %v831, %v1287
  %v1544 = vadd.f32 %v832, %v1288
  %v1545 = vadd.f32 %v833, %v1289
  %v1546 = vadd.f32 %v834, %v1290
  %v1547 = vadd.f32 %v835, %v1291
  %v1548 = vadd.f32 %v836, %v1292
  %v1549 = vadd.f32 %v837, %v1293
  %v1550 = vadd.f32 %v838, %v1294
  %v1551 = vadd.f32 %v839, %v1295
  %v1552 = vadd.f32 %v840, %v1296
  %v1553 = vadd.f32 %v841, %v1297
  %v1554 = vadd.f32 %v842, %v1298
  %v1555 = vadd.f32 %v843, %v1299
  %v1556 = vadd.f32 %v844, %v1300
  %v1557 = vadd.f32 %v845, %v1301
  %v1558 = vadd.f32 %v846, %v1302
  %v1559 = vadd.f32 %v847, %v1303
  %v1560 = vadd.f32 %v848, %v1304
  %v1561 = vadd.f32 %v849, %v1305
  %v1562 = vadd.f32 %v850, %v1306
  %v1563 = vadd.f32 %v851, %v1307
  %v1564 = vadd.f32 %v852, %v1308
  %v1565 = vadd.f32 %v853, %v1309
  %v1566 = vadd.f32 %v854, %v1310
  %v1567 = vadd.f32 %v855, %v1311
  %v1568 = vadd.f32 %v856, %v1312
  %v1569 = vadd.f32 %v857, %v1313
  %v1570 = vadd.f32 %v858, %v1314
  %v1571 = vadd.f32 %v859, %v1315
  %v1572 = vadd.f32 %v860, %v1316
  %v1573 = vadd.f32 %v861, %v1317
  %v1574 = vadd.f32 %v862, %v1318
  %v1575 = vadd.f32 %v863, %v1319
  %v1576 = vadd.f32 %v864, %v1320
  %v1577 = vadd.f32 %v865, %v1321
  %v1578 = vadd.f32 %v866, %v1322
  %v1579 = vadd.f32 %v867, %v1323
  %v1580 = vadd.f32 %v868, %v1324
  %v1581 = vadd.f32 %v869, %v1325
  %v1582 = vadd.f32 %v870, %v1326
  %v1583 = vadd.f32 %v871, %v1327
  %v1584 = vadd.f32 %v872, %v1328
  %v1585 = vadd.f32 %v873, %v1329
  %v1586 = vadd.f32 %v874, %v1330
  %v1587 = vadd.f32 %v875, %v1331
  %v1588 = vadd.f32 %v876, %v1332
  %v1589 = vadd.f32 %v877, %v1333
  %v1590 = vadd.f32 %v878, %v1334
  %v1591 = vadd.f32 %v879, %v1335
  %v1592 = vadd.f32 %v880, %v1336
  %v1593 = vadd.f32 %v881, %v1337
  %v1594 = vadd.f32 %v882, %v1338
  %v1595 = vadd.f32 %v883, %v1339
  %v1596 = vadd.f32 %v884, %v1340
  %v1597 = vadd.f32 %v885, %v1341
  %v1598 = vadd.f32 %v886, %v1342
  %v1599 = vadd.f32 %v887, %v1343
  %v1600 = vadd.f32 %v888, %v1344
  %v1601 = vadd.f32 %v889, %v1345
  %v1602 = vadd.f32 %v890, %v1346
  %v1603 = vadd.f32 %v891, %v1347
  %v1604 = vadd.f32 %v892, %v1348
  %v1605 = vadd.f32 %v893, %v1349
  %v1606 = vadd.f32 %v894, %v1350
  %v1607 = vadd.f32 %v895, %v1351
  %v1608 = vadd.f32 %v896, %v1352
  %v1609 = vadd.f32 %v897, %v1353
  %v1610 = vadd.f32 %v898, %v1354
  %v1611 = vadd.f32 %v899, %v1355
  %v1612 = vadd.f32 %v900, %v1356
  %v1613 = vadd.f32 %v901, %v1357
  %v1614 = vadd.f32 %v902, %v1358
  %v1615 = vadd.f32 %v903, %v1359
  %v1616 = vadd.f32 %v904, %v1360
  %v1617 = vadd.f32 %v905, %v1361
  %v1618 = vadd.f32 %v906, %v1362
  %v1619 = vadd.f32 %v907, %v1363
  %v1620 = vadd.f32 %v908, %v1364
  %v1621 = vadd.f32 %v909, %v1365
  %v1622 = vadd.f32 %v910, %v1366
  %v1623 = vadd.f32 %v911, %v1367
  %v1624 = vadd.f32 %v912, %v1368
  %v1625 = vadd.f32 %v913, %v1369
  %v1626 = vadd.f32 %v914, %v1370
  %v1627 = vadd.f32 %v915, %v1371
  %v1628 = vadd.f32 %v916, %v1372
  %v1629 = vadd.f32 %v917, %v1373
  %v1630 = vadd.f32 %v918, %v1374
  %v1631 = vadd.f32 %v919, %v1375
  %v1632 = vadd.f32 %v920, %v1376
  %v1633 = vadd.f32 %v921, %v1377
  %v1634 = vadd.f32 %v922, %v1378
  %v1635 = vadd.f32 %v923, %v1379
  %v1636 = vadd.f32 %v924, %v1380
  %v1637 = vadd.f32 %v925, %v1381
  %v1638 = vadd.f32 %v926, %v1382
  %v1639 = vadd.f32 %v927, %v1383
  %v1640 = vadd.f32 %v928, %v1384
  %v1641 = vadd.f32 %v929, %v1385
  %v1642 = vadd.f32 %v930, %v1386
  %v1643 = vadd.f32 %v931, %v1387
  %v1644 = vadd.f32 %v932, %v1388
  %v1645 = vadd.f32 %v933, %v1389
  %v1646 = vadd.f32 %v934, %v1390
  %v1647 = vadd.f32 %v935, %v1391
  %v1648 = vadd.f32 %v936, %v1392
  %v1649 = vadd.f32 %v937, %v1393
  %v1650 = vadd.f32 %v938, %v1394
  %v1651 = vadd.f32 %v939, %v1395
  %v1652 = vadd.f32 %v940, %v1396
  %v1653 = vadd.f32 %v941, %v1397
  %v1654 = vadd.f32 %v942, %v1398
  %v1655 = vadd.f32 %v943, %v1399
  %v1656 = vadd.f32 %v944, %v1400
  %v1657 = vadd.f32 %v945, %v1401
  %v1658 = vadd.f32 %v946, %v1402
  %v1659 = vadd.f32 %v947, %v1403
  %v1660 = vadd.f32 %v948, %v1404
  %v1661 = vadd.f32 %v949, %v1405
  %v1662 = vadd.f32 %v950, %v1406
  %v1663 = vadd.f32 %v951, %v1407
  %v1664 = vadd.f32 %v952, %v1408
  %v1665 = vadd.f32 %v953, %v1409
  %v1666 = vadd.f32 %v954, %v1410
  %v1667 = vadd.f32 %v955, %v1411
  %v1668 = vadd.f32 %v956, %v1412
  %v1669 = vadd.f32 %v957, %v1413
  %v1670 = vadd.f32 %v958, %v1414
  %v1671 = vadd.f32 %v959, %v1415
  %v1672 = vadd.f32 %v960, %v1416
  %v1673 = vadd.f32 %v961, %v1417
  %v1674 = vadd.f32 %v962, %v1418
  %v1675 = vadd.f32 %v963, %v1419
  %v1676 = vadd.f32 %v964, %v1420
  %v1677 = vadd.f32 %v965, %v1421
  %v1678 = vadd.f32 %v966, %v1422
  %v1679 = vadd.f32 %v967, %v1423
  %v1680 = vadd.f32 %v968, %v1424
  %v1681 = vadd.f32 %v969, %v1425
  %v1682 = vadd.f32 %v970, %v1426
  %v1683 = vadd.f32 %v971, %v1427
  %v1684 = vadd.f32 %v972, %v1428
  %v1685 = vadd.f32 %v973, %v1429
  %v1686 = vadd.f32 %v974, %v1430
  %v1687 = vadd.f32 %v975, %v1431
  %v1688 = vadd.f32 %v976, %v1432
  %v1689 = vadd.f32 %v977, %v1433
  %v1690 = vadd.f32 %v978, %v1434
  %v1691 = vadd.f32 %v979, %v1435
  %v1692 = vadd.f32 %v980, %v1436
  %v1693 = vadd.f32 %v981, %v1437
  %v1694 = vadd.f32 %v982, %v1438
  %v1695 = vadd.f32 %v983, %v1439
  %v1696 = vadd.f32 %v984, %v1440
  %v1697 = vadd.f32 %v985, %v1441
  %v1698 = vadd.f32 %v986, %v1442
  %v1699 = vadd.f32 %v987, %v1443
  %v1700 = vadd.f32 %v988, %v1444
  %v1701 = vadd.f32 %v989, %v1445
  %v1702 = vadd.f32 %v990, %v1446
  %v1703 = vadd.f32 %v991, %v1447
  %v1704 = vadd.f32 %v992, %v1448
  %v1705 = vadd.f32 %v993, %v1449
  %v1706 = vadd.f32 %v994, %v1450
  %v1707 = vadd.f32 %v995, %v1451
  %1708 = vset.pattern.permute.xlu0 2
  %1709 = vperm.xlu0 %1708, %v24
  %v1710 = vpop.permute.xlu0 %1709
  %1712 = vset.pattern.permute.xlu0 2
  %1713 = vperm.xlu0 %1712, %v25
  %v1714 = vpop.permute.xlu0 %1713
  %1716 = vset.pattern.permute.xlu0 2
  %1717 = vperm.xlu0 %1716, %v26
  %v1718 = vpop.permute.xlu0 %1717
  %1720 = vset.pattern.permute.xlu0 2
  %1721 = vperm.xlu0 %1720, %v27
  %v1722 = vpop.permute.xlu0 %1721
  %1724 = vset.pattern.permute.xlu0 2
  %1725 = vperm.xlu0 %1724, %v28
  %v1726 = vpop.permute.xlu0 %1725
  %1728 = vset.pattern.permute.xlu0 2
  %1729 = vperm.xlu0 %1728, %v29
  %v1730 = vpop.permute.xlu0 %1729
  %1732 = vset.pattern.permute.xlu0 2
  %1733 = vperm.xlu0 %1732, %v30
  %v1734 = vpop.permute.xlu0 %1733
  %1736 = vset.pattern.permute.xlu0 2
  %1737 = vperm.xlu0 %1736, %v31
  %v1738 = vpop.permute.xlu0 %1737
  %1740 = vset.pattern.permute.xlu0 2
  %1741 = vperm.xlu0 %1740, %v32
  %v1742 = vpop.permute.xlu0 %1741
  %1744 = vset.pattern.permute.xlu0 2
  %1745 = vperm.xlu0 %1744, %v33
  %v1746 = vpop.permute.xlu0 %1745
  %1748 = vset.pattern.permute.xlu0 2
  %1749 = vperm.xlu0 %1748, %v34
  %v1750 = vpop.permute.xlu0 %1749
  %1752 = vset.pattern.permute.xlu0 2
  %1753 = vperm.xlu0 %1752, %v35
  %v1754 = vpop.permute.xlu0 %1753
  %1756 = vset.pattern.permute.xlu0 2
  %1757 = vperm.xlu0 %1756, %v36
  %v1758 = vpop.permute.xlu0 %1757
  %1760 = vset.pattern.permute.xlu0 2
  %1761 = vperm.xlu0 %1760, %v37
  %v1762 = vpop.permute.xlu0 %1761
  %1764 = vset.pattern.permute.xlu0 2
  %1765 = vperm.xlu0 %1764, %v38
  %v1766 = vpop.permute.xlu0 %1765
  %1768 = vset.pattern.permute.xlu0 2
  %1769 = vperm.xlu0 %1768, %v39
  %v1770 = vpop.permute.xlu0 %1769
  %1772 = vset.pattern.permute.xlu0 2
  %1773 = vperm.xlu0 %1772, %v40
  %v1774 = vpop.permute.xlu0 %1773
  %1776 = vset.pattern.permute.xlu0 2
  %1777 = vperm.xlu0 %1776, %v41
  %v1778 = vpop.permute.xlu0 %1777
  %1780 = vset.pattern.permute.xlu0 2
  %1781 = vperm.xlu0 %1780, %v42
  %v1782 = vpop.permute.xlu0 %1781
  %1784 = vset.pattern.permute.xlu0 2
  %1785 = vperm.xlu0 %1784, %v43
  %v1786 = vpop.permute.xlu0 %1785
  %1788 = vset.pattern.permute.xlu0 2
  %1789 = vperm.xlu0 %1788, %v44
  %v1790 = vpop.permute.xlu0 %1789
  %1792 = vset.pattern.permute.xlu0 2
  %1793 = vperm.xlu0 %1792, %v45
  %v1794 = vpop.permute.xlu0 %1793
  %1796 = vset.pattern.permute.xlu0 2
  %1797 = vperm.xlu0 %1796, %v46
  %v1798 = vpop.permute.xlu0 %1797
  %1800 = vset.pattern.permute.xlu0 2
  %1801 = vperm.xlu0 %1800, %v47
  %v1802 = vpop.permute.xlu0 %1801
  %1804 = vset.pattern.permute.xlu0 2
  %1805 = vperm.xlu0 %1804, %v48
  %v1806 = vpop.permute.xlu0 %1805
  %1808 = vset.pattern.permute.xlu0 2
  %1809 = vperm.xlu0 %1808, %v49
  %v1810 = vpop.permute.xlu0 %1809
  %1812 = vset.pattern.permute.xlu0 2
  %1813 = vperm.xlu0 %1812, %v50
  %v1814 = vpop.permute.xlu0 %1813
  %1816 = vset.pattern.permute.xlu0 2
  %1817 = vperm.xlu0 %1816, %v51
  %v1818 = vpop.permute.xlu0 %1817
  %1820 = vset.pattern.permute.xlu0 2
  %1821 = vperm.xlu0 %1820, %v52
  %v1822 = vpop.permute.xlu0 %1821
  %1824 = vset.pattern.permute.xlu0 2
  %1825 = vperm.xlu0 %1824, %v53
  %v1826 = vpop.permute.xlu0 %1825
  %1828 = vset.pattern.permute.xlu0 2
  %1829 = vperm.xlu0 %1828, %v54
  %v1830 = vpop.permute.xlu0 %1829
  %1832 = vset.pattern.permute.xlu0 2
  %1833 = vperm.xlu0 %1832, %v55
  %v1834 = vpop.permute.xlu0 %1833
  %v1836 = vlaneseq
  %v1837 = vshrl.u32 %v1836, 7
  %v1838 = vsub.s32 2, %v1837
  %v1839 = vrot.slane %v20, %v1838
  %v1840 = vlaneseq
  %v1841 = vshrl.u32 %v1840, 7
  %v1842 = vsub.s32 6, %v1841
  %v1843 = vrot.slane %v20, %v1842
  %v1844 = vlaneseq
  %v1845 = vshrl.u32 %v1844, 7
  %v1846 = vsub.s32 2, %v1845
  %v1847 = vrot.slane %v21, %v1846
  %v1848 = vlaneseq
  %v1849 = vshrl.u32 %v1848, 7
  %v1850 = vsub.s32 6, %v1849
  %v1851 = vrot.slane %v21, %v1850
  %v1852 = vlaneseq
  %v1853 = vshrl.u32 %v1852, 7
  %v1854 = vsub.s32 2, %v1853
  %v1855 = vrot.slane %v22, %v1854
  %v1856 = vlaneseq
  %v1857 = vshrl.u32 %v1856, 7
  %v1858 = vsub.s32 6, %v1857
  %v1859 = vrot.slane %v22, %v1858
  %v1860 = vlaneseq
  %v1861 = vshrl.u32 %v1860, 7
  %v1862 = vsub.s32 2, %v1861
  %v1863 = vrot.slane %v23, %v1862
  %v1864 = vlaneseq
  %v1865 = vshrl.u32 %v1864, 7
  %v1866 = vsub.s32 6, %v1865
  %v1867 = vrot.slane %v23, %v1866
  %v1876 = vlaneseq
  %v1877 = vshrl.u32 %v1876, 7
  %v1878 = vsub.s32 2, %v1877
  %v1879 = vrot.slane %v1839, %v1878
  %v1880 = vlaneseq
  %v1881 = vshrl.u32 %v1880, 7
  %v1882 = vsub.s32 2, %v1881
  %v1883 = vrot.slane %v1843, %v1882
  %v1884 = vlaneseq
  %v1885 = vshrl.u32 %v1884, 7
  %v1886 = vsub.s32 2, %v1885
  %v1887 = vrot.slane %v1847, %v1886
  %v1888 = vlaneseq
  %v1889 = vshrl.u32 %v1888, 7
  %v1890 = vsub.s32 2, %v1889
  %v1891 = vrot.slane %v1851, %v1890
  %v1892 = vlaneseq
  %v1893 = vshrl.u32 %v1892, 7
  %v1894 = vsub.s32 2, %v1893
  %v1895 = vrot.slane %v1855, %v1894
  %v1896 = vlaneseq
  %v1897 = vshrl.u32 %v1896, 7
  %v1898 = vsub.s32 2, %v1897
  %v1899 = vrot.slane %v1859, %v1898
  %v1900 = vlaneseq
  %v1901 = vshrl.u32 %v1900, 7
  %v1902 = vsub.s32 2, %v1901
  %v1903 = vrot.slane %v1863, %v1902
  %v1904 = vlaneseq
  %v1905 = vshrl.u32 %v1904, 7
  %v1906 = vsub.s32 2, %v1905
  %v1907 = vrot.slane %v1867, %v1906
  %v1908 = vmul.f32 %v1710, %v1879
  %v1909 = vmul.f32 %v1710, %v1883
  %v1910 = vmul.f32 %v1710, %v1887
  %v1911 = vmul.f32 %v1710, %v1891
  %v1912 = vmul.f32 %v1710, %v1895
  %v1913 = vmul.f32 %v1710, %v1899
  %v1914 = vmul.f32 %v1710, %v1903
  %v1915 = vmul.f32 %v1710, %v1907
  %v1916 = vmul.f32 %v1714, %v1879
  %v1917 = vmul.f32 %v1714, %v1883
  %v1918 = vmul.f32 %v1714, %v1887
  %v1919 = vmul.f32 %v1714, %v1891
  %v1920 = vmul.f32 %v1714, %v1895
  %v1921 = vmul.f32 %v1714, %v1899
  %v1922 = vmul.f32 %v1714, %v1903
  %v1923 = vmul.f32 %v1714, %v1907
  %v1924 = vmul.f32 %v1718, %v1879
  %v1925 = vmul.f32 %v1718, %v1883
  %v1926 = vmul.f32 %v1718, %v1887
  %v1927 = vmul.f32 %v1718, %v1891
  %v1928 = vmul.f32 %v1718, %v1895
  %v1929 = vmul.f32 %v1718, %v1899
  %v1930 = vmul.f32 %v1718, %v1903
  %v1931 = vmul.f32 %v1718, %v1907
  %v1932 = vmul.f32 %v1722, %v1879
  %v1933 = vmul.f32 %v1722, %v1883
  %v1934 = vmul.f32 %v1722, %v1887
  %v1935 = vmul.f32 %v1722, %v1891
  %v1936 = vmul.f32 %v1722, %v1895
  %v1937 = vmul.f32 %v1722, %v1899
  %v1938 = vmul.f32 %v1722, %v1903
  %v1939 = vmul.f32 %v1722, %v1907
  %v1940 = vmul.f32 %v1726, %v1879
  %v1941 = vmul.f32 %v1726, %v1883
  %v1942 = vmul.f32 %v1726, %v1887
  %v1943 = vmul.f32 %v1726, %v1891
  %v1944 = vmul.f32 %v1726, %v1895
  %v1945 = vmul.f32 %v1726, %v1899
  %v1946 = vmul.f32 %v1726, %v1903
  %v1947 = vmul.f32 %v1726, %v1907
  %v1948 = vmul.f32 %v1730, %v1879
  %v1949 = vmul.f32 %v1730, %v1883
  %v1950 = vmul.f32 %v1730, %v1887
  %v1951 = vmul.f32 %v1730, %v1891
  %v1952 = vmul.f32 %v1730, %v1895
  %v1953 = vmul.f32 %v1730, %v1899
  %v1954 = vmul.f32 %v1730, %v1903
  %v1955 = vmul.f32 %v1730, %v1907
  %v1956 = vmul.f32 %v1734, %v1879
  %v1957 = vmul.f32 %v1734, %v1883
  %v1958 = vmul.f32 %v1734, %v1887
  %v1959 = vmul.f32 %v1734, %v1891
  %v1960 = vmul.f32 %v1734, %v1895
  %v1961 = vmul.f32 %v1734, %v1899
  %v1962 = vmul.f32 %v1734, %v1903
  %v1963 = vmul.f32 %v1734, %v1907
  %v1964 = vmul.f32 %v1738, %v1879
  %v1965 = vmul.f32 %v1738, %v1883
  %v1966 = vmul.f32 %v1738, %v1887
  %v1967 = vmul.f32 %v1738, %v1891
  %v1968 = vmul.f32 %v1738, %v1895
  %v1969 = vmul.f32 %v1738, %v1899
  %v1970 = vmul.f32 %v1738, %v1903
  %v1971 = vmul.f32 %v1738, %v1907
  %v1972 = vmul.f32 %v1742, %v1879
  %v1973 = vmul.f32 %v1742, %v1883
  %v1974 = vmul.f32 %v1742, %v1887
  %v1975 = vmul.f32 %v1742, %v1891
  %v1976 = vmul.f32 %v1742, %v1895
  %v1977 = vmul.f32 %v1742, %v1899
  %v1978 = vmul.f32 %v1742, %v1903
  %v1979 = vmul.f32 %v1742, %v1907
  %v1980 = vmul.f32 %v1746, %v1879
  %v1981 = vmul.f32 %v1746, %v1883
  %v1982 = vmul.f32 %v1746, %v1887
  %v1983 = vmul.f32 %v1746, %v1891
  %v1984 = vmul.f32 %v1746, %v1895
  %v1985 = vmul.f32 %v1746, %v1899
  %v1986 = vmul.f32 %v1746, %v1903
  %v1987 = vmul.f32 %v1746, %v1907
  %v1988 = vmul.f32 %v1750, %v1879
  %v1989 = vmul.f32 %v1750, %v1883
  %v1990 = vmul.f32 %v1750, %v1887
  %v1991 = vmul.f32 %v1750, %v1891
  %v1992 = vmul.f32 %v1750, %v1895
  %v1993 = vmul.f32 %v1750, %v1899
  %v1994 = vmul.f32 %v1750, %v1903
  %v1995 = vmul.f32 %v1750, %v1907
  %v1996 = vmul.f32 %v1754, %v1879
  %v1997 = vmul.f32 %v1754, %v1883
  %v1998 = vmul.f32 %v1754, %v1887
  %v1999 = vmul.f32 %v1754, %v1891
  %v2000 = vmul.f32 %v1754, %v1895
  %v2001 = vmul.f32 %v1754, %v1899
  %v2002 = vmul.f32 %v1754, %v1903
  %v2003 = vmul.f32 %v1754, %v1907
  %v2004 = vmul.f32 %v1758, %v1879
  %v2005 = vmul.f32 %v1758, %v1883
  %v2006 = vmul.f32 %v1758, %v1887
  %v2007 = vmul.f32 %v1758, %v1891
  %v2008 = vmul.f32 %v1758, %v1895
  %v2009 = vmul.f32 %v1758, %v1899
  %v2010 = vmul.f32 %v1758, %v1903
  %v2011 = vmul.f32 %v1758, %v1907
  %v2012 = vmul.f32 %v1762, %v1879
  %v2013 = vmul.f32 %v1762, %v1883
  %v2014 = vmul.f32 %v1762, %v1887
  %v2015 = vmul.f32 %v1762, %v1891
  %v2016 = vmul.f32 %v1762, %v1895
  %v2017 = vmul.f32 %v1762, %v1899
  %v2018 = vmul.f32 %v1762, %v1903
  %v2019 = vmul.f32 %v1762, %v1907
  %v2020 = vmul.f32 %v1766, %v1879
  %v2021 = vmul.f32 %v1766, %v1883
  %v2022 = vmul.f32 %v1766, %v1887
  %v2023 = vmul.f32 %v1766, %v1891
  %v2024 = vmul.f32 %v1766, %v1895
  %v2025 = vmul.f32 %v1766, %v1899
  %v2026 = vmul.f32 %v1766, %v1903
  %v2027 = vmul.f32 %v1766, %v1907
  %v2028 = vmul.f32 %v1770, %v1879
  %v2029 = vmul.f32 %v1770, %v1883
  %v2030 = vmul.f32 %v1770, %v1887
  %v2031 = vmul.f32 %v1770, %v1891
  %v2032 = vmul.f32 %v1770, %v1895
  %v2033 = vmul.f32 %v1770, %v1899
  %v2034 = vmul.f32 %v1770, %v1903
  %v2035 = vmul.f32 %v1770, %v1907
  %v2036 = vmul.f32 %v1774, %v1879
  %v2037 = vmul.f32 %v1774, %v1883
  %v2038 = vmul.f32 %v1774, %v1887
  %v2039 = vmul.f32 %v1774, %v1891
  %v2040 = vmul.f32 %v1774, %v1895
  %v2041 = vmul.f32 %v1774, %v1899
  %v2042 = vmul.f32 %v1774, %v1903
  %v2043 = vmul.f32 %v1774, %v1907
  %v2044 = vmul.f32 %v1778, %v1879
  %v2045 = vmul.f32 %v1778, %v1883
  %v2046 = vmul.f32 %v1778, %v1887
  %v2047 = vmul.f32 %v1778, %v1891
  %v2048 = vmul.f32 %v1778, %v1895
  %v2049 = vmul.f32 %v1778, %v1899
  %v2050 = vmul.f32 %v1778, %v1903
  %v2051 = vmul.f32 %v1778, %v1907
  %v2052 = vmul.f32 %v1782, %v1879
  %v2053 = vmul.f32 %v1782, %v1883
  %v2054 = vmul.f32 %v1782, %v1887
  %v2055 = vmul.f32 %v1782, %v1891
  %v2056 = vmul.f32 %v1782, %v1895
  %v2057 = vmul.f32 %v1782, %v1899
  %v2058 = vmul.f32 %v1782, %v1903
  %v2059 = vmul.f32 %v1782, %v1907
  %v2060 = vmul.f32 %v1786, %v1879
  %v2061 = vmul.f32 %v1786, %v1883
  %v2062 = vmul.f32 %v1786, %v1887
  %v2063 = vmul.f32 %v1786, %v1891
  %v2064 = vmul.f32 %v1786, %v1895
  %v2065 = vmul.f32 %v1786, %v1899
  %v2066 = vmul.f32 %v1786, %v1903
  %v2067 = vmul.f32 %v1786, %v1907
  %v2068 = vmul.f32 %v1790, %v1879
  %v2069 = vmul.f32 %v1790, %v1883
  %v2070 = vmul.f32 %v1790, %v1887
  %v2071 = vmul.f32 %v1790, %v1891
  %v2072 = vmul.f32 %v1790, %v1895
  %v2073 = vmul.f32 %v1790, %v1899
  %v2074 = vmul.f32 %v1790, %v1903
  %v2075 = vmul.f32 %v1790, %v1907
  %v2076 = vmul.f32 %v1794, %v1879
  %v2077 = vmul.f32 %v1794, %v1883
  %v2078 = vmul.f32 %v1794, %v1887
  %v2079 = vmul.f32 %v1794, %v1891
  %v2080 = vmul.f32 %v1794, %v1895
  %v2081 = vmul.f32 %v1794, %v1899
  %v2082 = vmul.f32 %v1794, %v1903
  %v2083 = vmul.f32 %v1794, %v1907
  %v2084 = vmul.f32 %v1798, %v1879
  %v2085 = vmul.f32 %v1798, %v1883
  %v2086 = vmul.f32 %v1798, %v1887
  %v2087 = vmul.f32 %v1798, %v1891
  %v2088 = vmul.f32 %v1798, %v1895
  %v2089 = vmul.f32 %v1798, %v1899
  %v2090 = vmul.f32 %v1798, %v1903
  %v2091 = vmul.f32 %v1798, %v1907
  %v2092 = vmul.f32 %v1802, %v1879
  %v2093 = vmul.f32 %v1802, %v1883
  %v2094 = vmul.f32 %v1802, %v1887
  %v2095 = vmul.f32 %v1802, %v1891
  %v2096 = vmul.f32 %v1802, %v1895
  %v2097 = vmul.f32 %v1802, %v1899
  %v2098 = vmul.f32 %v1802, %v1903
  %v2099 = vmul.f32 %v1802, %v1907
  %v2100 = vmul.f32 %v1806, %v1879
  %v2101 = vmul.f32 %v1806, %v1883
  %v2102 = vmul.f32 %v1806, %v1887
  %v2103 = vmul.f32 %v1806, %v1891
  %v2104 = vmul.f32 %v1806, %v1895
  %v2105 = vmul.f32 %v1806, %v1899
  %v2106 = vmul.f32 %v1806, %v1903
  %v2107 = vmul.f32 %v1806, %v1907
  %v2108 = vmul.f32 %v1810, %v1879
  %v2109 = vmul.f32 %v1810, %v1883
  %v2110 = vmul.f32 %v1810, %v1887
  %v2111 = vmul.f32 %v1810, %v1891
  %v2112 = vmul.f32 %v1810, %v1895
  %v2113 = vmul.f32 %v1810, %v1899
  %v2114 = vmul.f32 %v1810, %v1903
  %v2115 = vmul.f32 %v1810, %v1907
  %v2116 = vmul.f32 %v1814, %v1879
  %v2117 = vmul.f32 %v1814, %v1883
  %v2118 = vmul.f32 %v1814, %v1887
  %v2119 = vmul.f32 %v1814, %v1891
  %v2120 = vmul.f32 %v1814, %v1895
  %v2121 = vmul.f32 %v1814, %v1899
  %v2122 = vmul.f32 %v1814, %v1903
  %v2123 = vmul.f32 %v1814, %v1907
  %v2124 = vmul.f32 %v1818, %v1879
  %v2125 = vmul.f32 %v1818, %v1883
  %v2126 = vmul.f32 %v1818, %v1887
  %v2127 = vmul.f32 %v1818, %v1891
  %v2128 = vmul.f32 %v1818, %v1895
  %v2129 = vmul.f32 %v1818, %v1899
  %v2130 = vmul.f32 %v1818, %v1903
  %v2131 = vmul.f32 %v1818, %v1907
  %v2132 = vmul.f32 %v1822, %v1879
  %v2133 = vmul.f32 %v1822, %v1883
  %v2134 = vmul.f32 %v1822, %v1887
  %v2135 = vmul.f32 %v1822, %v1891
  %v2136 = vmul.f32 %v1822, %v1895
  %v2137 = vmul.f32 %v1822, %v1899
  %v2138 = vmul.f32 %v1822, %v1903
  %v2139 = vmul.f32 %v1822, %v1907
  %v2140 = vmul.f32 %v1826, %v1879
  %v2141 = vmul.f32 %v1826, %v1883
  %v2142 = vmul.f32 %v1826, %v1887
  %v2143 = vmul.f32 %v1826, %v1891
  %v2144 = vmul.f32 %v1826, %v1895
  %v2145 = vmul.f32 %v1826, %v1899
  %v2146 = vmul.f32 %v1826, %v1903
  %v2147 = vmul.f32 %v1826, %v1907
  %v2148 = vmul.f32 %v1830, %v1879
  %v2149 = vmul.f32 %v1830, %v1883
  %v2150 = vmul.f32 %v1830, %v1887
  %v2151 = vmul.f32 %v1830, %v1891
  %v2152 = vmul.f32 %v1830, %v1895
  %v2153 = vmul.f32 %v1830, %v1899
  %v2154 = vmul.f32 %v1830, %v1903
  %v2155 = vmul.f32 %v1830, %v1907
  %v2156 = vmul.f32 %v1834, %v1879
  %v2157 = vmul.f32 %v1834, %v1883
  %v2158 = vmul.f32 %v1834, %v1887
  %v2159 = vmul.f32 %v1834, %v1891
  %v2160 = vmul.f32 %v1834, %v1895
  %v2161 = vmul.f32 %v1834, %v1899
  %v2162 = vmul.f32 %v1834, %v1903
  %v2163 = vmul.f32 %v1834, %v1907
  %v2164 = vadd.f32 %v1452, %v1908
  %v2165 = vadd.f32 %v1453, %v1909
  %v2166 = vadd.f32 %v1454, %v1910
  %v2167 = vadd.f32 %v1455, %v1911
  %v2168 = vadd.f32 %v1456, %v1912
  %v2169 = vadd.f32 %v1457, %v1913
  %v2170 = vadd.f32 %v1458, %v1914
  %v2171 = vadd.f32 %v1459, %v1915
  %v2172 = vadd.f32 %v1460, %v1916
  %v2173 = vadd.f32 %v1461, %v1917
  %v2174 = vadd.f32 %v1462, %v1918
  %v2175 = vadd.f32 %v1463, %v1919
  %v2176 = vadd.f32 %v1464, %v1920
  %v2177 = vadd.f32 %v1465, %v1921
  %v2178 = vadd.f32 %v1466, %v1922
  %v2179 = vadd.f32 %v1467, %v1923
  %v2180 = vadd.f32 %v1468, %v1924
  %v2181 = vadd.f32 %v1469, %v1925
  %v2182 = vadd.f32 %v1470, %v1926
  %v2183 = vadd.f32 %v1471, %v1927
  %v2184 = vadd.f32 %v1472, %v1928
  %v2185 = vadd.f32 %v1473, %v1929
  %v2186 = vadd.f32 %v1474, %v1930
  %v2187 = vadd.f32 %v1475, %v1931
  %v2188 = vadd.f32 %v1476, %v1932
  %v2189 = vadd.f32 %v1477, %v1933
  %v2190 = vadd.f32 %v1478, %v1934
  %v2191 = vadd.f32 %v1479, %v1935
  %v2192 = vadd.f32 %v1480, %v1936
  %v2193 = vadd.f32 %v1481, %v1937
  %v2194 = vadd.f32 %v1482, %v1938
  %v2195 = vadd.f32 %v1483, %v1939
  %v2196 = vadd.f32 %v1484, %v1940
  %v2197 = vadd.f32 %v1485, %v1941
  %v2198 = vadd.f32 %v1486, %v1942
  %v2199 = vadd.f32 %v1487, %v1943
  %v2200 = vadd.f32 %v1488, %v1944
  %v2201 = vadd.f32 %v1489, %v1945
  %v2202 = vadd.f32 %v1490, %v1946
  %v2203 = vadd.f32 %v1491, %v1947
  %v2204 = vadd.f32 %v1492, %v1948
  %v2205 = vadd.f32 %v1493, %v1949
  %v2206 = vadd.f32 %v1494, %v1950
  %v2207 = vadd.f32 %v1495, %v1951
  %v2208 = vadd.f32 %v1496, %v1952
  %v2209 = vadd.f32 %v1497, %v1953
  %v2210 = vadd.f32 %v1498, %v1954
  %v2211 = vadd.f32 %v1499, %v1955
  %v2212 = vadd.f32 %v1500, %v1956
  %v2213 = vadd.f32 %v1501, %v1957
  %v2214 = vadd.f32 %v1502, %v1958
  %v2215 = vadd.f32 %v1503, %v1959
  %v2216 = vadd.f32 %v1504, %v1960
  %v2217 = vadd.f32 %v1505, %v1961
  %v2218 = vadd.f32 %v1506, %v1962
  %v2219 = vadd.f32 %v1507, %v1963
  %v2220 = vadd.f32 %v1508, %v1964
  %v2221 = vadd.f32 %v1509, %v1965
  %v2222 = vadd.f32 %v1510, %v1966
  %v2223 = vadd.f32 %v1511, %v1967
  %v2224 = vadd.f32 %v1512, %v1968
  %v2225 = vadd.f32 %v1513, %v1969
  %v2226 = vadd.f32 %v1514, %v1970
  %v2227 = vadd.f32 %v1515, %v1971
  %v2228 = vadd.f32 %v1516, %v1972
  %v2229 = vadd.f32 %v1517, %v1973
  %v2230 = vadd.f32 %v1518, %v1974
  %v2231 = vadd.f32 %v1519, %v1975
  %v2232 = vadd.f32 %v1520, %v1976
  %v2233 = vadd.f32 %v1521, %v1977
  %v2234 = vadd.f32 %v1522, %v1978
  %v2235 = vadd.f32 %v1523, %v1979
  %v2236 = vadd.f32 %v1524, %v1980
  %v2237 = vadd.f32 %v1525, %v1981
  %v2238 = vadd.f32 %v1526, %v1982
  %v2239 = vadd.f32 %v1527, %v1983
  %v2240 = vadd.f32 %v1528, %v1984
  %v2241 = vadd.f32 %v1529, %v1985
  %v2242 = vadd.f32 %v1530, %v1986
  %v2243 = vadd.f32 %v1531, %v1987
  %v2244 = vadd.f32 %v1532, %v1988
  %v2245 = vadd.f32 %v1533, %v1989
  %v2246 = vadd.f32 %v1534, %v1990
  %v2247 = vadd.f32 %v1535, %v1991
  %v2248 = vadd.f32 %v1536, %v1992
  %v2249 = vadd.f32 %v1537, %v1993
  %v2250 = vadd.f32 %v1538, %v1994
  %v2251 = vadd.f32 %v1539, %v1995
  %v2252 = vadd.f32 %v1540, %v1996
  %v2253 = vadd.f32 %v1541, %v1997
  %v2254 = vadd.f32 %v1542, %v1998
  %v2255 = vadd.f32 %v1543, %v1999
  %v2256 = vadd.f32 %v1544, %v2000
  %v2257 = vadd.f32 %v1545, %v2001
  %v2258 = vadd.f32 %v1546, %v2002
  %v2259 = vadd.f32 %v1547, %v2003
  %v2260 = vadd.f32 %v1548, %v2004
  %v2261 = vadd.f32 %v1549, %v2005
  %v2262 = vadd.f32 %v1550, %v2006
  %v2263 = vadd.f32 %v1551, %v2007
  %v2264 = vadd.f32 %v1552, %v2008
  %v2265 = vadd.f32 %v1553, %v2009
  %v2266 = vadd.f32 %v1554, %v2010
  %v2267 = vadd.f32 %v1555, %v2011
  %v2268 = vadd.f32 %v1556, %v2012
  %v2269 = vadd.f32 %v1557, %v2013
  %v2270 = vadd.f32 %v1558, %v2014
  %v2271 = vadd.f32 %v1559, %v2015
  %v2272 = vadd.f32 %v1560, %v2016
  %v2273 = vadd.f32 %v1561, %v2017
  %v2274 = vadd.f32 %v1562, %v2018
  %v2275 = vadd.f32 %v1563, %v2019
  %v2276 = vadd.f32 %v1564, %v2020
  %v2277 = vadd.f32 %v1565, %v2021
  %v2278 = vadd.f32 %v1566, %v2022
  %v2279 = vadd.f32 %v1567, %v2023
  %v2280 = vadd.f32 %v1568, %v2024
  %v2281 = vadd.f32 %v1569, %v2025
  %v2282 = vadd.f32 %v1570, %v2026
  %v2283 = vadd.f32 %v1571, %v2027
  %v2284 = vadd.f32 %v1572, %v2028
  %v2285 = vadd.f32 %v1573, %v2029
  %v2286 = vadd.f32 %v1574, %v2030
  %v2287 = vadd.f32 %v1575, %v2031
  %v2288 = vadd.f32 %v1576, %v2032
  %v2289 = vadd.f32 %v1577, %v2033
  %v2290 = vadd.f32 %v1578, %v2034
  %v2291 = vadd.f32 %v1579, %v2035
  %v2292 = vadd.f32 %v1580, %v2036
  %v2293 = vadd.f32 %v1581, %v2037
  %v2294 = vadd.f32 %v1582, %v2038
  %v2295 = vadd.f32 %v1583, %v2039
  %v2296 = vadd.f32 %v1584, %v2040
  %v2297 = vadd.f32 %v1585, %v2041
  %v2298 = vadd.f32 %v1586, %v2042
  %v2299 = vadd.f32 %v1587, %v2043
  %v2300 = vadd.f32 %v1588, %v2044
  %v2301 = vadd.f32 %v1589, %v2045
  %v2302 = vadd.f32 %v1590, %v2046
  %v2303 = vadd.f32 %v1591, %v2047
  %v2304 = vadd.f32 %v1592, %v2048
  %v2305 = vadd.f32 %v1593, %v2049
  %v2306 = vadd.f32 %v1594, %v2050
  %v2307 = vadd.f32 %v1595, %v2051
  %v2308 = vadd.f32 %v1596, %v2052
  %v2309 = vadd.f32 %v1597, %v2053
  %v2310 = vadd.f32 %v1598, %v2054
  %v2311 = vadd.f32 %v1599, %v2055
  %v2312 = vadd.f32 %v1600, %v2056
  %v2313 = vadd.f32 %v1601, %v2057
  %v2314 = vadd.f32 %v1602, %v2058
  %v2315 = vadd.f32 %v1603, %v2059
  %v2316 = vadd.f32 %v1604, %v2060
  %v2317 = vadd.f32 %v1605, %v2061
  %v2318 = vadd.f32 %v1606, %v2062
  %v2319 = vadd.f32 %v1607, %v2063
  %v2320 = vadd.f32 %v1608, %v2064
  %v2321 = vadd.f32 %v1609, %v2065
  %v2322 = vadd.f32 %v1610, %v2066
  %v2323 = vadd.f32 %v1611, %v2067
  %v2324 = vadd.f32 %v1612, %v2068
  %v2325 = vadd.f32 %v1613, %v2069
  %v2326 = vadd.f32 %v1614, %v2070
  %v2327 = vadd.f32 %v1615, %v2071
  %v2328 = vadd.f32 %v1616, %v2072
  %v2329 = vadd.f32 %v1617, %v2073
  %v2330 = vadd.f32 %v1618, %v2074
  %v2331 = vadd.f32 %v1619, %v2075
  %v2332 = vadd.f32 %v1620, %v2076
  %v2333 = vadd.f32 %v1621, %v2077
  %v2334 = vadd.f32 %v1622, %v2078
  %v2335 = vadd.f32 %v1623, %v2079
  %v2336 = vadd.f32 %v1624, %v2080
  %v2337 = vadd.f32 %v1625, %v2081
  %v2338 = vadd.f32 %v1626, %v2082
  %v2339 = vadd.f32 %v1627, %v2083
  %v2340 = vadd.f32 %v1628, %v2084
  %v2341 = vadd.f32 %v1629, %v2085
  %v2342 = vadd.f32 %v1630, %v2086
  %v2343 = vadd.f32 %v1631, %v2087
  %v2344 = vadd.f32 %v1632, %v2088
  %v2345 = vadd.f32 %v1633, %v2089
  %v2346 = vadd.f32 %v1634, %v2090
  %v2347 = vadd.f32 %v1635, %v2091
  %v2348 = vadd.f32 %v1636, %v2092
  %v2349 = vadd.f32 %v1637, %v2093
  %v2350 = vadd.f32 %v1638, %v2094
  %v2351 = vadd.f32 %v1639, %v2095
  %v2352 = vadd.f32 %v1640, %v2096
  %v2353 = vadd.f32 %v1641, %v2097
  %v2354 = vadd.f32 %v1642, %v2098
  %v2355 = vadd.f32 %v1643, %v2099
  %v2356 = vadd.f32 %v1644, %v2100
  %v2357 = vadd.f32 %v1645, %v2101
  %v2358 = vadd.f32 %v1646, %v2102
  %v2359 = vadd.f32 %v1647, %v2103
  %v2360 = vadd.f32 %v1648, %v2104
  %v2361 = vadd.f32 %v1649, %v2105
  %v2362 = vadd.f32 %v1650, %v2106
  %v2363 = vadd.f32 %v1651, %v2107
  %v2364 = vadd.f32 %v1652, %v2108
  %v2365 = vadd.f32 %v1653, %v2109
  %v2366 = vadd.f32 %v1654, %v2110
  %v2367 = vadd.f32 %v1655, %v2111
  %v2368 = vadd.f32 %v1656, %v2112
  %v2369 = vadd.f32 %v1657, %v2113
  %v2370 = vadd.f32 %v1658, %v2114
  %v2371 = vadd.f32 %v1659, %v2115
  %v2372 = vadd.f32 %v1660, %v2116
  %v2373 = vadd.f32 %v1661, %v2117
  %v2374 = vadd.f32 %v1662, %v2118
  %v2375 = vadd.f32 %v1663, %v2119
  %v2376 = vadd.f32 %v1664, %v2120
  %v2377 = vadd.f32 %v1665, %v2121
  %v2378 = vadd.f32 %v1666, %v2122
  %v2379 = vadd.f32 %v1667, %v2123
  %v2380 = vadd.f32 %v1668, %v2124
  %v2381 = vadd.f32 %v1669, %v2125
  %v2382 = vadd.f32 %v1670, %v2126
  %v2383 = vadd.f32 %v1671, %v2127
  %v2384 = vadd.f32 %v1672, %v2128
  %v2385 = vadd.f32 %v1673, %v2129
  %v2386 = vadd.f32 %v1674, %v2130
  %v2387 = vadd.f32 %v1675, %v2131
  %v2388 = vadd.f32 %v1676, %v2132
  %v2389 = vadd.f32 %v1677, %v2133
  %v2390 = vadd.f32 %v1678, %v2134
  %v2391 = vadd.f32 %v1679, %v2135
  %v2392 = vadd.f32 %v1680, %v2136
  %v2393 = vadd.f32 %v1681, %v2137
  %v2394 = vadd.f32 %v1682, %v2138
  %v2395 = vadd.f32 %v1683, %v2139
  %v2396 = vadd.f32 %v1684, %v2140
  %v2397 = vadd.f32 %v1685, %v2141
  %v2398 = vadd.f32 %v1686, %v2142
  %v2399 = vadd.f32 %v1687, %v2143
  %v2400 = vadd.f32 %v1688, %v2144
  %v2401 = vadd.f32 %v1689, %v2145
  %v2402 = vadd.f32 %v1690, %v2146
  %v2403 = vadd.f32 %v1691, %v2147
  %v2404 = vadd.f32 %v1692, %v2148
  %v2405 = vadd.f32 %v1693, %v2149
  %v2406 = vadd.f32 %v1694, %v2150
  %v2407 = vadd.f32 %v1695, %v2151
  %v2408 = vadd.f32 %v1696, %v2152
  %v2409 = vadd.f32 %v1697, %v2153
  %v2410 = vadd.f32 %v1698, %v2154
  %v2411 = vadd.f32 %v1699, %v2155
  %v2412 = vadd.f32 %v1700, %v2156
  %v2413 = vadd.f32 %v1701, %v2157
  %v2414 = vadd.f32 %v1702, %v2158
  %v2415 = vadd.f32 %v1703, %v2159
  %v2416 = vadd.f32 %v1704, %v2160
  %v2417 = vadd.f32 %v1705, %v2161
  %v2418 = vadd.f32 %v1706, %v2162
  %v2419 = vadd.f32 %v1707, %v2163
  %v2420 = vmax.f32 %v2164, 0.0
  %v2421 = vmax.f32 %v2165, 0.0
  %v2422 = vmax.f32 %v2166, 0.0
  %v2423 = vmax.f32 %v2167, 0.0
  %v2424 = vmax.f32 %v2168, 0.0
  %v2425 = vmax.f32 %v2169, 0.0
  %v2426 = vmax.f32 %v2170, 0.0
  %v2427 = vmax.f32 %v2171, 0.0
  %v2428 = vmax.f32 %v2172, 0.0
  %v2429 = vmax.f32 %v2173, 0.0
  %v2430 = vmax.f32 %v2174, 0.0
  %v2431 = vmax.f32 %v2175, 0.0
  %v2432 = vmax.f32 %v2176, 0.0
  %v2433 = vmax.f32 %v2177, 0.0
  %v2434 = vmax.f32 %v2178, 0.0
  %v2435 = vmax.f32 %v2179, 0.0
  %v2436 = vmax.f32 %v2180, 0.0
  %v2437 = vmax.f32 %v2181, 0.0
  %v2438 = vmax.f32 %v2182, 0.0
  %v2439 = vmax.f32 %v2183, 0.0
  %v2440 = vmax.f32 %v2184, 0.0
  %v2441 = vmax.f32 %v2185, 0.0
  %v2442 = vmax.f32 %v2186, 0.0
  %v2443 = vmax.f32 %v2187, 0.0
  %v2444 = vmax.f32 %v2188, 0.0
  %v2445 = vmax.f32 %v2189, 0.0
  %v2446 = vmax.f32 %v2190, 0.0
  %v2447 = vmax.f32 %v2191, 0.0
  %v2448 = vmax.f32 %v2192, 0.0
  %v2449 = vmax.f32 %v2193, 0.0
  %v2450 = vmax.f32 %v2194, 0.0
  %v2451 = vmax.f32 %v2195, 0.0
  %v2452 = vmax.f32 %v2196, 0.0
  %v2453 = vmax.f32 %v2197, 0.0
  %v2454 = vmax.f32 %v2198, 0.0
  %v2455 = vmax.f32 %v2199, 0.0
  %v2456 = vmax.f32 %v2200, 0.0
  %v2457 = vmax.f32 %v2201, 0.0
  %v2458 = vmax.f32 %v2202, 0.0
  %v2459 = vmax.f32 %v2203, 0.0
  %v2460 = vmax.f32 %v2204, 0.0
  %v2461 = vmax.f32 %v2205, 0.0
  %v2462 = vmax.f32 %v2206, 0.0
  %v2463 = vmax.f32 %v2207, 0.0
  %v2464 = vmax.f32 %v2208, 0.0
  %v2465 = vmax.f32 %v2209, 0.0
  %v2466 = vmax.f32 %v2210, 0.0
  %v2467 = vmax.f32 %v2211, 0.0
  %v2468 = vmax.f32 %v2212, 0.0
  %v2469 = vmax.f32 %v2213, 0.0
  %v2470 = vmax.f32 %v2214, 0.0
  %v2471 = vmax.f32 %v2215, 0.0
  %v2472 = vmax.f32 %v2216, 0.0
  %v2473 = vmax.f32 %v2217, 0.0
  %v2474 = vmax.f32 %v2218, 0.0
  %v2475 = vmax.f32 %v2219, 0.0
  %v2476 = vmax.f32 %v2220, 0.0
  %v2477 = vmax.f32 %v2221, 0.0
  %v2478 = vmax.f32 %v2222, 0.0
  %v2479 = vmax.f32 %v2223, 0.0
  %v2480 = vmax.f32 %v2224, 0.0
  %v2481 = vmax.f32 %v2225, 0.0
  %v2482 = vmax.f32 %v2226, 0.0
  %v2483 = vmax.f32 %v2227, 0.0
  %v2484 = vmax.f32 %v2228, 0.0
  %v2485 = vmax.f32 %v2229, 0.0
  %v2486 = vmax.f32 %v2230, 0.0
  %v2487 = vmax.f32 %v2231, 0.0
  %v2488 = vmax.f32 %v2232, 0.0
  %v2489 = vmax.f32 %v2233, 0.0
  %v2490 = vmax.f32 %v2234, 0.0
  %v2491 = vmax.f32 %v2235, 0.0
  %v2492 = vmax.f32 %v2236, 0.0
  %v2493 = vmax.f32 %v2237, 0.0
  %v2494 = vmax.f32 %v2238, 0.0
  %v2495 = vmax.f32 %v2239, 0.0
  %v2496 = vmax.f32 %v2240, 0.0
  %v2497 = vmax.f32 %v2241, 0.0
  %v2498 = vmax.f32 %v2242, 0.0
  %v2499 = vmax.f32 %v2243, 0.0
  %v2500 = vmax.f32 %v2244, 0.0
  %v2501 = vmax.f32 %v2245, 0.0
  %v2502 = vmax.f32 %v2246, 0.0
  %v2503 = vmax.f32 %v2247, 0.0
  %v2504 = vmax.f32 %v2248, 0.0
  %v2505 = vmax.f32 %v2249, 0.0
  %v2506 = vmax.f32 %v2250, 0.0
  %v2507 = vmax.f32 %v2251, 0.0
  %v2508 = vmax.f32 %v2252, 0.0
  %v2509 = vmax.f32 %v2253, 0.0
  %v2510 = vmax.f32 %v2254, 0.0
  %v2511 = vmax.f32 %v2255, 0.0
  %v2512 = vmax.f32 %v2256, 0.0
  %v2513 = vmax.f32 %v2257, 0.0
  %v2514 = vmax.f32 %v2258, 0.0
  %v2515 = vmax.f32 %v2259, 0.0
  %v2516 = vmax.f32 %v2260, 0.0
  %v2517 = vmax.f32 %v2261, 0.0
  %v2518 = vmax.f32 %v2262, 0.0
  %v2519 = vmax.f32 %v2263, 0.0
  %v2520 = vmax.f32 %v2264, 0.0
  %v2521 = vmax.f32 %v2265, 0.0
  %v2522 = vmax.f32 %v2266, 0.0
  %v2523 = vmax.f32 %v2267, 0.0
  %v2524 = vmax.f32 %v2268, 0.0
  %v2525 = vmax.f32 %v2269, 0.0
  %v2526 = vmax.f32 %v2270, 0.0
  %v2527 = vmax.f32 %v2271, 0.0
  %v2528 = vmax.f32 %v2272, 0.0
  %v2529 = vmax.f32 %v2273, 0.0
  %v2530 = vmax.f32 %v2274, 0.0
  %v2531 = vmax.f32 %v2275, 0.0
  %v2532 = vmax.f32 %v2276, 0.0
  %v2533 = vmax.f32 %v2277, 0.0
  %v2534 = vmax.f32 %v2278, 0.0
  %v2535 = vmax.f32 %v2279, 0.0
  %v2536 = vmax.f32 %v2280, 0.0
  %v2537 = vmax.f32 %v2281, 0.0
  %v2538 = vmax.f32 %v2282, 0.0
  %v2539 = vmax.f32 %v2283, 0.0
  %v2540 = vmax.f32 %v2284, 0.0
  %v2541 = vmax.f32 %v2285, 0.0
  %v2542 = vmax.f32 %v2286, 0.0
  %v2543 = vmax.f32 %v2287, 0.0
  %v2544 = vmax.f32 %v2288, 0.0
  %v2545 = vmax.f32 %v2289, 0.0
  %v2546 = vmax.f32 %v2290, 0.0
  %v2547 = vmax.f32 %v2291, 0.0
  %v2548 = vmax.f32 %v2292, 0.0
  %v2549 = vmax.f32 %v2293, 0.0
  %v2550 = vmax.f32 %v2294, 0.0
  %v2551 = vmax.f32 %v2295, 0.0
  %v2552 = vmax.f32 %v2296, 0.0
  %v2553 = vmax.f32 %v2297, 0.0
  %v2554 = vmax.f32 %v2298, 0.0
  %v2555 = vmax.f32 %v2299, 0.0
  %v2556 = vmax.f32 %v2300, 0.0
  %v2557 = vmax.f32 %v2301, 0.0
  %v2558 = vmax.f32 %v2302, 0.0
  %v2559 = vmax.f32 %v2303, 0.0
  %v2560 = vmax.f32 %v2304, 0.0
  %v2561 = vmax.f32 %v2305, 0.0
  %v2562 = vmax.f32 %v2306, 0.0
  %v2563 = vmax.f32 %v2307, 0.0
  %v2564 = vmax.f32 %v2308, 0.0
  %v2565 = vmax.f32 %v2309, 0.0
  %v2566 = vmax.f32 %v2310, 0.0
  %v2567 = vmax.f32 %v2311, 0.0
  %v2568 = vmax.f32 %v2312, 0.0
  %v2569 = vmax.f32 %v2313, 0.0
  %v2570 = vmax.f32 %v2314, 0.0
  %v2571 = vmax.f32 %v2315, 0.0
  %v2572 = vmax.f32 %v2316, 0.0
  %v2573 = vmax.f32 %v2317, 0.0
  %v2574 = vmax.f32 %v2318, 0.0
  %v2575 = vmax.f32 %v2319, 0.0
  %v2576 = vmax.f32 %v2320, 0.0
  %v2577 = vmax.f32 %v2321, 0.0
  %v2578 = vmax.f32 %v2322, 0.0
  %v2579 = vmax.f32 %v2323, 0.0
  %v2580 = vmax.f32 %v2324, 0.0
  %v2581 = vmax.f32 %v2325, 0.0
  %v2582 = vmax.f32 %v2326, 0.0
  %v2583 = vmax.f32 %v2327, 0.0
  %v2584 = vmax.f32 %v2328, 0.0
  %v2585 = vmax.f32 %v2329, 0.0
  %v2586 = vmax.f32 %v2330, 0.0
  %v2587 = vmax.f32 %v2331, 0.0
  %v2588 = vmax.f32 %v2332, 0.0
  %v2589 = vmax.f32 %v2333, 0.0
  %v2590 = vmax.f32 %v2334, 0.0
  %v2591 = vmax.f32 %v2335, 0.0
  %v2592 = vmax.f32 %v2336, 0.0
  %v2593 = vmax.f32 %v2337, 0.0
  %v2594 = vmax.f32 %v2338, 0.0
  %v2595 = vmax.f32 %v2339, 0.0
  %v2596 = vmax.f32 %v2340, 0.0
  %v2597 = vmax.f32 %v2341, 0.0
  %v2598 = vmax.f32 %v2342, 0.0
  %v2599 = vmax.f32 %v2343, 0.0
  %v2600 = vmax.f32 %v2344, 0.0
  %v2601 = vmax.f32 %v2345, 0.0
  %v2602 = vmax.f32 %v2346, 0.0
  %v2603 = vmax.f32 %v2347, 0.0
  %v2604 = vmax.f32 %v2348, 0.0
  %v2605 = vmax.f32 %v2349, 0.0
  %v2606 = vmax.f32 %v2350, 0.0
  %v2607 = vmax.f32 %v2351, 0.0
  %v2608 = vmax.f32 %v2352, 0.0
  %v2609 = vmax.f32 %v2353, 0.0
  %v2610 = vmax.f32 %v2354, 0.0
  %v2611 = vmax.f32 %v2355, 0.0
  %v2612 = vmax.f32 %v2356, 0.0
  %v2613 = vmax.f32 %v2357, 0.0
  %v2614 = vmax.f32 %v2358, 0.0
  %v2615 = vmax.f32 %v2359, 0.0
  %v2616 = vmax.f32 %v2360, 0.0
  %v2617 = vmax.f32 %v2361, 0.0
  %v2618 = vmax.f32 %v2362, 0.0
  %v2619 = vmax.f32 %v2363, 0.0
  %v2620 = vmax.f32 %v2364, 0.0
  %v2621 = vmax.f32 %v2365, 0.0
  %v2622 = vmax.f32 %v2366, 0.0
  %v2623 = vmax.f32 %v2367, 0.0
  %v2624 = vmax.f32 %v2368, 0.0
  %v2625 = vmax.f32 %v2369, 0.0
  %v2626 = vmax.f32 %v2370, 0.0
  %v2627 = vmax.f32 %v2371, 0.0
  %v2628 = vmax.f32 %v2372, 0.0
  %v2629 = vmax.f32 %v2373, 0.0
  %v2630 = vmax.f32 %v2374, 0.0
  %v2631 = vmax.f32 %v2375, 0.0
  %v2632 = vmax.f32 %v2376, 0.0
  %v2633 = vmax.f32 %v2377, 0.0
  %v2634 = vmax.f32 %v2378, 0.0
  %v2635 = vmax.f32 %v2379, 0.0
  %v2636 = vmax.f32 %v2380, 0.0
  %v2637 = vmax.f32 %v2381, 0.0
  %v2638 = vmax.f32 %v2382, 0.0
  %v2639 = vmax.f32 %v2383, 0.0
  %v2640 = vmax.f32 %v2384, 0.0
  %v2641 = vmax.f32 %v2385, 0.0
  %v2642 = vmax.f32 %v2386, 0.0
  %v2643 = vmax.f32 %v2387, 0.0
  %v2644 = vmax.f32 %v2388, 0.0
  %v2645 = vmax.f32 %v2389, 0.0
  %v2646 = vmax.f32 %v2390, 0.0
  %v2647 = vmax.f32 %v2391, 0.0
  %v2648 = vmax.f32 %v2392, 0.0
  %v2649 = vmax.f32 %v2393, 0.0
  %v2650 = vmax.f32 %v2394, 0.0
  %v2651 = vmax.f32 %v2395, 0.0
  %v2652 = vmax.f32 %v2396, 0.0
  %v2653 = vmax.f32 %v2397, 0.0
  %v2654 = vmax.f32 %v2398, 0.0
  %v2655 = vmax.f32 %v2399, 0.0
  %v2656 = vmax.f32 %v2400, 0.0
  %v2657 = vmax.f32 %v2401, 0.0
  %v2658 = vmax.f32 %v2402, 0.0
  %v2659 = vmax.f32 %v2403, 0.0
  %v2660 = vmax.f32 %v2404, 0.0
  %v2661 = vmax.f32 %v2405, 0.0
  %v2662 = vmax.f32 %v2406, 0.0
  %v2663 = vmax.f32 %v2407, 0.0
  %v2664 = vmax.f32 %v2408, 0.0
  %v2665 = vmax.f32 %v2409, 0.0
  %v2666 = vmax.f32 %v2410, 0.0
  %v2667 = vmax.f32 %v2411, 0.0
  %v2668 = vmax.f32 %v2412, 0.0
  %v2669 = vmax.f32 %v2413, 0.0
  %v2670 = vmax.f32 %v2414, 0.0
  %v2671 = vmax.f32 %v2415, 0.0
  %v2672 = vmax.f32 %v2416, 0.0
  %v2673 = vmax.f32 %v2417, 0.0
  %v2674 = vmax.f32 %v2418, 0.0
  %v2675 = vmax.f32 %v2419, 0.0
  %v2676 = vld [vmem:[%s3] sm:$0xff]
  %v2677 = vld [vmem:[%s4] sm:$0xf]
  %2679 = vset.pattern.permute.xlu0 0
  %2680 = vperm.xlu0 %2679, %v2677
  %v2681 = vpop.permute.xlu0 %2680
  %v2684 = vcombine.high %v2676, %v2676
  %2686 = vmatprep.subr.mxu0 %v2421
  %2687 = vmatpush1.msra.mxu0 %v2420
  %2688 = vmatprep.subr.mxu0 %v2429
  %2689 = vmatpush1.msra.mxu0 %v2428
  %2690 = vmatprep.subr.mxu0 %v2437
  %2691 = vmatpush1.msra.mxu0 %v2436
  %2692 = vmatprep.subr.mxu0 %v2445
  %2693 = vmatpush1.msra.mxu0 %v2444
  %2694 = vmatprep.subr.mxu0 %v2453
  %2695 = vmatpush1.msra.mxu0 %v2452
  %2696 = vmatprep.subr.mxu0 %v2461
  %2697 = vmatpush1.msra.mxu0 %v2460
  %2698 = vmatprep.subr.mxu0 %v2469
  %2699 = vmatpush1.msra.mxu0 %v2468
  %2700 = vmatprep.subr.mxu0 %v2477
  %2701 = vmatpush1.msra.mxu0 %v2476
  %2702 = vmatprep.subr.mxu0 %v2485
  %2703 = vmatpush1.msra.mxu0 %v2484
  %2704 = vmatprep.subr.mxu0 %v2493
  %2705 = vmatpush1.msra.mxu0 %v2492
  %2706 = vmatprep.subr.mxu0 %v2501
  %2707 = vmatpush1.msra.mxu0 %v2500
  %2708 = vmatprep.subr.mxu0 %v2509
  %2709 = vmatpush1.msra.mxu0 %v2508
  %2710 = vmatprep.subr.mxu0 %v2517
  %2711 = vmatpush1.msra.mxu0 %v2516
  %2712 = vmatprep.subr.mxu0 %v2525
  %2713 = vmatpush1.msra.mxu0 %v2524
  %2714 = vmatprep.subr.mxu0 %v2533
  %2715 = vmatpush1.msra.mxu0 %v2532
  %2716 = vmatprep.subr.mxu0 %v2541
  %2717 = vmatpush1.msra.mxu0 %v2540
  %2718 = vmatprep.subr.mxu0 %v2549
  %2719 = vmatpush1.msra.mxu0 %v2548
  %2720 = vmatprep.subr.mxu0 %v2557
  %2721 = vmatpush1.msra.mxu0 %v2556
  %2722 = vmatprep.subr.mxu0 %v2565
  %2723 = vmatpush1.msra.mxu0 %v2564
  %2724 = vmatprep.subr.mxu0 %v2573
  %2725 = vmatpush1.msra.mxu0 %v2572
  %2726 = vmatprep.subr.mxu0 %v2581
  %2727 = vmatpush1.msra.mxu0 %v2580
  %2728 = vmatprep.subr.mxu0 %v2589
  %2729 = vmatpush1.msra.mxu0 %v2588
  %2730 = vmatprep.subr.mxu0 %v2597
  %2731 = vmatpush1.msra.mxu0 %v2596
  %2732 = vmatprep.subr.mxu0 %v2605
  %2733 = vmatpush1.msra.mxu0 %v2604
  %2734 = vmatprep.subr.mxu0 %v2613
  %2735 = vmatpush1.msra.mxu0 %v2612
  %2736 = vmatprep.subr.mxu0 %v2621
  %2737 = vmatpush1.msra.mxu0 %v2620
  %2738 = vmatprep.subr.mxu0 %v2629
  %2739 = vmatpush1.msra.mxu0 %v2628
  %2740 = vmatprep.subr.mxu0 %v2637
  %2741 = vmatpush1.msra.mxu0 %v2636
  %2742 = vmatprep.subr.mxu0 %v2645
  %2743 = vmatpush1.msra.mxu0 %v2644
  %2744 = vmatprep.subr.mxu0 %v2653
  %2745 = vmatpush1.msra.mxu0 %v2652
  %2746 = vmatprep.subr.mxu0 %v2661
  %2747 = vmatpush1.msra.mxu0 %v2660
  %2748 = vmatprep.subr.mxu0 %v2669
  %2749 = vmatpush1.msra.mxu0 %v2668
  %2750 = vmatprep.mubr.f32.mxu0 %v2684
  %2751 = vmatmul.mubr.f32.gmra.mrb[0].mxu0 %v2676
  %v2752 = vpop.f32.mrb[0].mxu0
  %v2753 = vadd.f32 %v2681, %v2752
  %v2754 = vpop.f32.mrb[0].mxu0
  %v2755 = vadd.f32 %v2681, %v2754
  %2756 = vdwg.mxu0
  %2757 = vmatprep.subr.mxu0 %v2423
  %2758 = vmatpush1.msra.mxu0 %v2422
  %2759 = vmatprep.subr.mxu0 %v2431
  %2760 = vmatpush1.msra.mxu0 %v2430
  %2761 = vmatprep.subr.mxu0 %v2439
  %2762 = vmatpush1.msra.mxu0 %v2438
  %2763 = vmatprep.subr.mxu0 %v2447
  %2764 = vmatpush1.msra.mxu0 %v2446
  %2765 = vmatprep.subr.mxu0 %v2455
  %2766 = vmatpush1.msra.mxu0 %v2454
  %2767 = vmatprep.subr.mxu0 %v2463
  %2768 = vmatpush1.msra.mxu0 %v2462
  %2769 = vmatprep.subr.mxu0 %v2471
  %2770 = vmatpush1.msra.mxu0 %v2470
  %2771 = vmatprep.subr.mxu0 %v2479
  %2772 = vmatpush1.msra.mxu0 %v2478
  %2773 = vmatprep.subr.mxu0 %v2487
  %2774 = vmatpush1.msra.mxu0 %v2486
  %2775 = vmatprep.subr.mxu0 %v2495
  %2776 = vmatpush1.msra.mxu0 %v2494
  %2777 = vmatprep.subr.mxu0 %v2503
  %2778 = vmatpush1.msra.mxu0 %v2502
  %2779 = vmatprep.subr.mxu0 %v2511
  %2780 = vmatpush1.msra.mxu0 %v2510
  %2781 = vmatprep.subr.mxu0 %v2519
  %2782 = vmatpush1.msra.mxu0 %v2518
  %2783 = vmatprep.subr.mxu0 %v2527
  %2784 = vmatpush1.msra.mxu0 %v2526
  %2785 = vmatprep.subr.mxu0 %v2535
  %2786 = vmatpush1.msra.mxu0 %v2534
  %2787 = vmatprep.subr.mxu0 %v2543
  %2788 = vmatpush1.msra.mxu0 %v2542
  %2789 = vmatprep.subr.mxu0 %v2551
  %2790 = vmatpush1.msra.mxu0 %v2550
  %2791 = vmatprep.subr.mxu0 %v2559
  %2792 = vmatpush1.msra.mxu0 %v2558
  %2793 = vmatprep.subr.mxu0 %v2567
  %2794 = vmatpush1.msra.mxu0 %v2566
  %2795 = vmatprep.subr.mxu0 %v2575
  %2796 = vmatpush1.msra.mxu0 %v2574
  %2797 = vmatprep.subr.mxu0 %v2583
  %2798 = vmatpush1.msra.mxu0 %v2582
  %2799 = vmatprep.subr.mxu0 %v2591
  %2800 = vmatpush1.msra.mxu0 %v2590
  %2801 = vmatprep.subr.mxu0 %v2599
  %2802 = vmatpush1.msra.mxu0 %v2598
  %2803 = vmatprep.subr.mxu0 %v2607
  %2804 = vmatpush1.msra.mxu0 %v2606
  %2805 = vmatprep.subr.mxu0 %v2615
  %2806 = vmatpush1.msra.mxu0 %v2614
  %2807 = vmatprep.subr.mxu0 %v2623
  %2808 = vmatpush1.msra.mxu0 %v2622
  %2809 = vmatprep.subr.mxu0 %v2631
  %2810 = vmatpush1.msra.mxu0 %v2630
  %2811 = vmatprep.subr.mxu0 %v2639
  %2812 = vmatpush1.msra.mxu0 %v2638
  %2813 = vmatprep.subr.mxu0 %v2647
  %2814 = vmatpush1.msra.mxu0 %v2646
  %2815 = vmatprep.subr.mxu0 %v2655
  %2816 = vmatpush1.msra.mxu0 %v2654
  %2817 = vmatprep.subr.mxu0 %v2663
  %2818 = vmatpush1.msra.mxu0 %v2662
  %2819 = vmatprep.subr.mxu0 %v2671
  %2820 = vmatpush1.msra.mxu0 %v2670
  %2821 = vmatprep.mubr.f32.mxu0 %v2684
  %2822 = vmatmul.mubr.f32.gmra.mrb[0].mxu0 %v2676
  %v2823 = vpop.f32.mrb[0].mxu0
  %v2824 = vadd.f32 %v2681, %v2823
  %v2825 = vpop.f32.mrb[0].mxu0
  %v2826 = vadd.f32 %v2681, %v2825
  %2827 = vdwg.mxu0
  %2828 = vmatprep.subr.mxu0 %v2425
  %2829 = vmatpush1.msra.mxu0 %v2424
  %2830 = vmatprep.subr.mxu0 %v2433
  %2831 = vmatpush1.msra.mxu0 %v2432
  %2832 = vmatprep.subr.mxu0 %v2441
  %2833 = vmatpush1.msra.mxu0 %v2440
  %2834 = vmatprep.subr.mxu0 %v2449
  %2835 = vmatpush1.msra.mxu0 %v2448
  %2836 = vmatprep.subr.mxu0 %v2457
  %2837 = vmatpush1.msra.mxu0 %v2456
  %2838 = vmatprep.subr.mxu0 %v2465
  %2839 = vmatpush1.msra.mxu0 %v2464
  %2840 = vmatprep.subr.mxu0 %v2473
  %2841 = vmatpush1.msra.mxu0 %v2472
  %2842 = vmatprep.subr.mxu0 %v2481
  %2843 = vmatpush1.msra.mxu0 %v2480
  %2844 = vmatprep.subr.mxu0 %v2489
  %2845 = vmatpush1.msra.mxu0 %v2488
  %2846 = vmatprep.subr.mxu0 %v2497
  %2847 = vmatpush1.msra.mxu0 %v2496
  %2848 = vmatprep.subr.mxu0 %v2505
  %2849 = vmatpush1.msra.mxu0 %v2504
  %2850 = vmatprep.subr.mxu0 %v2513
  %2851 = vmatpush1.msra.mxu0 %v2512
  %2852 = vmatprep.subr.mxu0 %v2521
  %2853 = vmatpush1.msra.mxu0 %v2520
  %2854 = vmatprep.subr.mxu0 %v2529
  %2855 = vmatpush1.msra.mxu0 %v2528
  %2856 = vmatprep.subr.mxu0 %v2537
  %2857 = vmatpush1.msra.mxu0 %v2536
  %2858 = vmatprep.subr.mxu0 %v2545
  %2859 = vmatpush1.msra.mxu0 %v2544
  %2860 = vmatprep.subr.mxu0 %v2553
  %2861 = vmatpush1.msra.mxu0 %v2552
  %2862 = vmatprep.subr.mxu0 %v2561
  %2863 = vmatpush1.msra.mxu0 %v2560
  %2864 = vmatprep.subr.mxu0 %v2569
  %2865 = vmatpush1.msra.mxu0 %v2568
  %2866 = vmatprep.subr.mxu0 %v2577
  %2867 = vmatpush1.msra.mxu0 %v2576
  %2868 = vmatprep.subr.mxu0 %v2585
  %2869 = vmatpush1.msra.mxu0 %v2584
  %2870 = vmatprep.subr.mxu0 %v2593
  %2871 = vmatpush1.msra.mxu0 %v2592
  %2872 = vmatprep.subr.mxu0 %v2601
  %2873 = vmatpush1.msra.mxu0 %v2600
  %2874 = vmatprep.subr.mxu0 %v2609
  %2875 = vmatpush1.msra.mxu0 %v2608
  %2876 = vmatprep.subr.mxu0 %v2617
  %2877 = vmatpush1.msra.mxu0 %v2616
  %2878 = vmatprep.subr.mxu0 %v2625
  %2879 = vmatpush1.msra.mxu0 %v2624
  %2880 = vmatprep.subr.mxu0 %v2633
  %2881 = vmatpush1.msra.mxu0 %v2632
  %2882 = vmatprep.subr.mxu0 %v2641
  %2883 = vmatpush1.msra.mxu0 %v2640
  %2884 = vmatprep.subr.mxu0 %v2649
  %2885 = vmatpush1.msra.mxu0 %v2648
  %2886 = vmatprep.subr.mxu0 %v2657
  %2887 = vmatpush1.msra.mxu0 %v2656
  %2888 = vmatprep.subr.mxu0 %v2665
  %2889 = vmatpush1.msra.mxu0 %v2664
  %2890 = vmatprep.subr.mxu0 %v2673
  %2891 = vmatpush1.msra.mxu0 %v2672
  %2892 = vmatprep.mubr.f32.mxu0 %v2684
  %2893 = vmatmul.mubr.f32.gmra.mrb[0].mxu0 %v2676
  %v2894 = vpop.f32.mrb[0].mxu0
  %v2895 = vadd.f32 %v2681, %v2894
  %v2896 = vpop.f32.mrb[0].mxu0
  %v2897 = vadd.f32 %v2681, %v2896
  %2898 = vdwg.mxu0
  %2899 = vmatprep.subr.mxu0 %v2427
  %2900 = vmatpush1.msra.mxu0 %v2426
  %2901 = vmatprep.subr.mxu0 %v2435
  %2902 = vmatpush1.msra.mxu0 %v2434
  %2903 = vmatprep.subr.mxu0 %v2443
  %2904 = vmatpush1.msra.mxu0 %v2442
  %2905 = vmatprep.subr.mxu0 %v2451
  %2906 = vmatpush1.msra.mxu0 %v2450
  %2907 = vmatprep.subr.mxu0 %v2459
  %2908 = vmatpush1.msra.mxu0 %v2458
  %2909 = vmatprep.subr.mxu0 %v2467
  %2910 = vmatpush1.msra.mxu0 %v2466
  %2911 = vmatprep.subr.mxu0 %v2475
  %2912 = vmatpush1.msra.mxu0 %v2474
  %2913 = vmatprep.subr.mxu0 %v2483
  %2914 = vmatpush1.msra.mxu0 %v2482
  %2915 = vmatprep.subr.mxu0 %v2491
  %2916 = vmatpush1.msra.mxu0 %v2490
  %2917 = vmatprep.subr.mxu0 %v2499
  %2918 = vmatpush1.msra.mxu0 %v2498
  %2919 = vmatprep.subr.mxu0 %v2507
  %2920 = vmatpush1.msra.mxu0 %v2506
  %2921 = vmatprep.subr.mxu0 %v2515
  %2922 = vmatpush1.msra.mxu0 %v2514
  %2923 = vmatprep.subr.mxu0 %v2523
  %2924 = vmatpush1.msra.mxu0 %v2522
  %2925 = vmatprep.subr.mxu0 %v2531
  %2926 = vmatpush1.msra.mxu0 %v2530
  %2927 = vmatprep.subr.mxu0 %v2539
  %2928 = vmatpush1.msra.mxu0 %v2538
  %2929 = vmatprep.subr.mxu0 %v2547
  %2930 = vmatpush1.msra.mxu0 %v2546
  %2931 = vmatprep.subr.mxu0 %v2555
  %2932 = vmatpush1.msra.mxu0 %v2554
  %2933 = vmatprep.subr.mxu0 %v2563
  %2934 = vmatpush1.msra.mxu0 %v2562
  %2935 = vmatprep.subr.mxu0 %v2571
  %2936 = vmatpush1.msra.mxu0 %v2570
  %2937 = vmatprep.subr.mxu0 %v2579
  %2938 = vmatpush1.msra.mxu0 %v2578
  %2939 = vmatprep.subr.mxu0 %v2587
  %2940 = vmatpush1.msra.mxu0 %v2586
  %2941 = vmatprep.subr.mxu0 %v2595
  %2942 = vmatpush1.msra.mxu0 %v2594
  %2943 = vmatprep.subr.mxu0 %v2603
  %2944 = vmatpush1.msra.mxu0 %v2602
  %2945 = vmatprep.subr.mxu0 %v2611
  %2946 = vmatpush1.msra.mxu0 %v2610
  %2947 = vmatprep.subr.mxu0 %v2619
  %2948 = vmatpush1.msra.mxu0 %v2618
  %2949 = vmatprep.subr.mxu0 %v2627
  %2950 = vmatpush1.msra.mxu0 %v2626
  %2951 = vmatprep.subr.mxu0 %v2635
  %2952 = vmatpush1.msra.mxu0 %v2634
  %2953 = vmatprep.subr.mxu0 %v2643
  %2954 = vmatpush1.msra.mxu0 %v2642
  %2955 = vmatprep.subr.mxu0 %v2651
  %2956 = vmatpush1.msra.mxu0 %v2650
  %2957 = vmatprep.subr.mxu0 %v2659
  %2958 = vmatpush1.msra.mxu0 %v2658
  %2959 = vmatprep.subr.mxu0 %v2667
  %2960 = vmatpush1.msra.mxu0 %v2666
  %2961 = vmatprep.subr.mxu0 %v2675
  %2962 = vmatpush1.msra.mxu0 %v2674
  %2963 = vmatprep.mubr.f32.mxu0 %v2684
  %2964 = vmatmul.mubr.f32.gmra.mrb[0].mxu0 %v2676
  %v2965 = vpop.f32.mrb[0].mxu0
  %v2966 = vadd.f32 %v2681, %v2965
  %v2967 = vpop.f32.mrb[0].mxu0
  %v2968 = vadd.f32 %v2681, %v2967
  %2969 = vdwg.mxu0
  %v2978 = vcombine.low %v2753, %v2755
  %v2979 = vcombine.low %v2824, %v2826
  %v2980 = vcombine.low %v2895, %v2897
  %v2981 = vcombine.low %v2966, %v2968
  %2986 = vst [vmem:[%s5] sm:$0xff] %v2978
  %2987 = vst [vmem:[%s5 + $0x8] sm:$0xff] %v2979
  %2988 = vst [vmem:[%s5 + $0x10] sm:$0xff] %v2980
  %2989 = vst [vmem:[%s5 + $0x18] sm:$0xff] %v2981
  // Predicated region
  $region22: #{forward_pallas.4} parent=0 // pred_check
    _
  $region23: #{forward_pallas.4} parent=0 // pred_check_branch
    %2991 = sbr.rel (0) target = $region25
  $region24: #{forward_pallas.4} parent=0 // pred_region
    _
  $region25: #{forward_pallas.4} parent=0 // pred_fallthru
    _
  // Predicated region
  $region26: #{forward_pallas.4} parent=0 // pred_check
    _
  $region27: #{forward_pallas.4} parent=0 // pred_check_branch
    %2993 = sbr.rel (0) target = $region29
  $region28: #{forward_pallas.4} parent=0 // pred_region
    _
  $region29: #{forward_pallas.4} parent=0 // pred_fallthru
    _

// kernel: forward_pallas.3
$region0: #{forward_pallas.3}
  #allocation0 [shape = 'u32[]', space=smem, size = 0x4, offset = 0x4, fixed_abs, tag = 'smem constant byte address 0x4 - core index']
  #allocation1 [shape = 'u32[144,128]{1,0:T(1,128)}', space=vmem, size = 0x12000, scoped, tag = 'internal scratch']
  #allocation2 [shape = 'f32[8,422]{1,0:T(8,128)}', space=vmem, size = 0x4000, scoped, tag = 'scratch operand']
  #allocation3 [shape = 'f32[8,422]{1,0:T(8,128)}', space=vmem, size = 0x4000, scoped, tag = 'scratch operand']
  #allocation4 [shape = 'f32[8,422]{1,0:T(8,128)}', space=vmem, size = 0x4000, scoped, tag = 'scratch operand']
  %s0 = inlined_call_operand.vmem [shape: f32[2,8,422], index: 0, kind: input, shape index: {}]
  %s1 = inlined_call_operand.vmem [shape: f32[1,384], index: 1, kind: input, shape index: {}]
  %s2 = inlined_call_operand.vmem [shape: f32[6,8,72], index: 2, kind: input, shape index: {}]
  %s3 = inlined_call_operand.vmem [shape: f32[6,8,1], index: 3, kind: input, shape index: {}]
  %s4 = inlined_call_operand.vmem [shape: f32[32,72], index: 4, kind: input, shape index: {}]
  %s5 = inlined_call_operand.vmem [shape: f32[32,1], index: 5, kind: input, shape index: {}]
  %s6 = inlined_call_operand.vmem [shape: f32[2,32,384], index: 6, kind: output, shape index: {}]
  %s7 = sld [smem:[#allocation0]]
  $region57: #{forward_pallas.3} parent=0
    _
  %s9 = ssub.s32 1, %s7
  %s10 = scalar_select 0, %s9, %s7
  loop: start=0, step=1, limit=4
  $region2: #{forward_pallas.3} parent=0 // loop_pre_header
    _
  $region3: #{forward_pallas.3} parent=0 // loop_header
    %s12 = sphi 0, %s16
    %p13 = scmp.ge.s32.totalorder %s12, 4
    %s22 = sphi 0, %s24
    %s25 = sphi 0, %s22
    %s26 = sphi 0, %s25
    %s42 = sphi 0, %s26
    %s46 = sphi 0, %s46
    %s48 = sphi 0, %s46
    %s49 = sphi 0, %s48
    %s63 = sphi 0, %s49
    %s67 = sphi 0, %s67
    %s69 = sphi 0, %s67
    %s70 = sphi 0, %s69
    %s84 = sphi 0, %s70
    %s88 = sphi 0, %s88
    %s90 = sphi 0, %s88
    %s91 = sphi 0, %s90
    %s105 = sphi 0, %s91
    %s109 = sphi 0, %s109
    %s111 = sphi 0, %s109
    %s112 = sphi 0, %s111
    %s126 = sphi 0, %s112
    %s130 = sphi 0, %s130
    %s132 = sphi 0, %s130
    %s133 = sphi 0, %s132
    %s147 = sphi 0, %s133
    %s153 = sphi 0, %s155
    %s156 = sphi 0, %s153
    %s157 = sphi 0, %s156
    %s173 = sphi 0, %s157
  $region4: #{forward_pallas.3} parent=0 // loop_header_branch
    %15 = sbr.rel (%p13) target = $region8
  $region5: #{forward_pallas.3} parent=0 // loop_body
    %s17 = ssub.s32 %s12, 1
    %s18 = ssub.s32 %s12, 2
    %s19 = sadd.s32 %s12, 1
    %s20 = ssub.s32 %s12, %s19
    %p21 = scmp.eq.s32.totalorder %s20, 0
    %s23 = sadd.s32 %s22, 1
    %s24 = scalar_select %p21, %s22, %s23
    %p27 = pneg %p21
    %p28 = scmp.eq.s32.totalorder %s12, 1
    %p29 = por %p27, %p28
    %p30 = scmp.ne.s32.totalorder %s22, %s25
    %p31 = scmp.eq.s32.totalorder %s12, 0
    %p32 = por %p30, %p31
    %p33 = scmp.ne.s32.totalorder %s22, %s25
    %p34 = scmp.eq.s32.totalorder %s17, 1
    %p35 = por %p33, %p34
    %p36 = scmp.ne.s32.totalorder %s25, %s26
    %p37 = scmp.eq.s32.totalorder %s17, 0
    %p38 = por %p36, %p37
    %p39 = scmp.ne.s32.totalorder %s25, %s26
    %p40 = scmp.eq.s32.totalorder %s18, 1
    %p41 = por %p39, %p40
    %p43 = scmp.ne.s32.totalorder %s26, %s42
    %p44 = scmp.eq.s32.totalorder %s18, 0
    %p45 = por %p43, %p44
    %s47 = sadd.s32 %s46, 1
    %p50 = scmp.eq.s32.totalorder %s12, 1
    %p51 = scmp.ne.s32.totalorder %s46, %s48
    %p52 = scmp.eq.s32.totalorder %s12, 0
    %p53 = por %p51, %p52
    %p54 = scmp.ne.s32.totalorder %s46, %s48
    %p55 = scmp.eq.s32.totalorder %s17, 1
    %p56 = por %p54, %p55
    %p57 = scmp.ne.s32.totalorder %s48, %s49
    %p58 = scmp.eq.s32.totalorder %s17, 0
    %p59 = por %p57, %p58
    %p60 = scmp.ne.s32.totalorder %s48, %s49
    %p61 = scmp.eq.s32.totalorder %s18, 1
    %p62 = por %p60, %p61
    %p64 = scmp.ne.s32.totalorder %s49, %s63
    %p65 = scmp.eq.s32.totalorder %s18, 0
    %p66 = por %p64, %p65
    %s68 = sadd.s32 %s67, 1
    %p71 = scmp.eq.s32.totalorder %s12, 1
    %p72 = scmp.ne.s32.totalorder %s67, %s69
    %p73 = scmp.eq.s32.totalorder %s12, 0
    %p74 = por %p72, %p73
    %p75 = scmp.ne.s32.totalorder %s67, %s69
    %p76 = scmp.eq.s32.totalorder %s17, 1
    %p77 = por %p75, %p76
    %p78 = scmp.ne.s32.totalorder %s69, %s70
    %p79 = scmp.eq.s32.totalorder %s17, 0
    %p80 = por %p78, %p79
    %p81 = scmp.ne.s32.totalorder %s69, %s70
    %p82 = scmp.eq.s32.totalorder %s18, 1
    %p83 = por %p81, %p82
    %p85 = scmp.ne.s32.totalorder %s70, %s84
    %p86 = scmp.eq.s32.totalorder %s18, 0
    %p87 = por %p85, %p86
    %s89 = sadd.s32 %s88, 1
    %p92 = scmp.eq.s32.totalorder %s12, 1
    %p93 = scmp.ne.s32.totalorder %s88, %s90
    %p94 = scmp.eq.s32.totalorder %s12, 0
    %p95 = por %p93, %p94
    %p96 = scmp.ne.s32.totalorder %s88, %s90
    %p97 = scmp.eq.s32.totalorder %s17, 1
    %p98 = por %p96, %p97
    %p99 = scmp.ne.s32.totalorder %s90, %s91
    %p100 = scmp.eq.s32.totalorder %s17, 0
    %p101 = por %p99, %p100
    %p102 = scmp.ne.s32.totalorder %s90, %s91
    %p103 = scmp.eq.s32.totalorder %s18, 1
    %p104 = por %p102, %p103
    %p106 = scmp.ne.s32.totalorder %s91, %s105
    %p107 = scmp.eq.s32.totalorder %s18, 0
    %p108 = por %p106, %p107
    %s110 = sadd.s32 %s109, 1
    %p113 = scmp.eq.s32.totalorder %s12, 1
    %p114 = scmp.ne.s32.totalorder %s109, %s111
    %p115 = scmp.eq.s32.totalorder %s12, 0
    %p116 = por %p114, %p115
    %p117 = scmp.ne.s32.totalorder %s109, %s111
    %p118 = scmp.eq.s32.totalorder %s17, 1
    %p119 = por %p117, %p118
    %p120 = scmp.ne.s32.totalorder %s111, %s112
    %p121 = scmp.eq.s32.totalorder %s17, 0
    %p122 = por %p120, %p121
    %p123 = scmp.ne.s32.totalorder %s111, %s112
    %p124 = scmp.eq.s32.totalorder %s18, 1
    %p125 = por %p123, %p124
    %p127 = scmp.ne.s32.totalorder %s112, %s126
    %p128 = scmp.eq.s32.totalorder %s18, 0
    %p129 = por %p127, %p128
    %s131 = sadd.s32 %s130, 1
    %p134 = scmp.eq.s32.totalorder %s12, 1
    %p135 = scmp.ne.s32.totalorder %s130, %s132
    %p136 = scmp.eq.s32.totalorder %s12, 0
    %p137 = por %p135, %p136
    %p138 = scmp.ne.s32.totalorder %s130, %s132
    %p139 = scmp.eq.s32.totalorder %s17, 1
    %p140 = por %p138, %p139
    %p141 = scmp.ne.s32.totalorder %s132, %s133
    %p142 = scmp.eq.s32.totalorder %s17, 0
    %p143 = por %p141, %p142
    %p144 = scmp.ne.s32.totalorder %s132, %s133
    %p145 = scmp.eq.s32.totalorder %s18, 1
    %p146 = por %p144, %p145
    %p148 = scmp.ne.s32.totalorder %s133, %s147
    %p149 = scmp.eq.s32.totalorder %s18, 0
    %p150 = por %p148, %p149
    %s151 = ssub.s32 %s12, %s19
    %p152 = scmp.eq.s32.totalorder %s151, 0
    %s154 = sadd.s32 %s153, 1
    %s155 = scalar_select %p152, %s153, %s154
    %p158 = pneg %p152
    %p159 = scmp.eq.s32.totalorder %s12, 1
    %p160 = por %p158, %p159
    %p161 = scmp.ne.s32.totalorder %s153, %s156
    %p162 = scmp.eq.s32.totalorder %s12, 0
    %p163 = por %p161, %p162
    %p164 = scmp.ne.s32.totalorder %s153, %s156
    %p165 = scmp.eq.s32.totalorder %s17, 1
    %p166 = por %p164, %p165
    %p167 = scmp.ne.s32.totalorder %s156, %s157
    %p168 = scmp.eq.s32.totalorder %s17, 0
    %p169 = por %p167, %p168
    %p170 = scmp.ne.s32.totalorder %s156, %s157
    %p171 = scmp.eq.s32.totalorder %s18, 1
    %p172 = por %p170, %p171
    %p174 = scmp.ne.s32.totalorder %s157, %s173
    %p175 = scmp.eq.s32.totalorder %s18, 0
    %p176 = por %p174, %p175
    %p177 = scmp.le.s32.totalorder 1, %s12
    %p178 = scmp.lt.s32.totalorder %s12, 3
    %p179 = pnand %p177, %p178
    %p180 = pneg %p179
    // Predicated region
    $region9: #{forward_pallas.3} parent=5 // pred_check
      _
    $region10: #{forward_pallas.3} parent=5 // pred_check_branch
      %182 = sbr.rel (%p179) target = $region12
    $region11: #{forward_pallas.3} parent=5 // pred_region
      %s183 = ssub.s32 %s12, 1
      // Predicated region
      $region13: #{forward_pallas.3} parent=11 // pred_check
        %p184 = pneg %p59
      $region14: #{forward_pallas.3} parent=11 // pred_check_branch
        %186 = sbr.rel (%p184) target = $region16
      $region15: #{forward_pallas.3} parent=11 // pred_region
        _
      $region16: #{forward_pallas.3} parent=11 // pred_fallthru
        _
      // Predicated region
      $region17: #{forward_pallas.3} parent=11 // pred_check
        %p187 = pneg %p80
      $region18: #{forward_pallas.3} parent=11 // pred_check_branch
        %189 = sbr.rel (%p187) target = $region20
      $region19: #{forward_pallas.3} parent=11 // pred_region
        _
      $region20: #{forward_pallas.3} parent=11 // pred_fallthru
        _
      // Predicated region
      $region21: #{forward_pallas.3} parent=11 // pred_check
        %p190 = pneg %p101
      $region22: #{forward_pallas.3} parent=11 // pred_check_branch
        %192 = sbr.rel (%p190) target = $region24
      $region23: #{forward_pallas.3} parent=11 // pred_region
        _
      $region24: #{forward_pallas.3} parent=11 // pred_fallthru
        _
      // Predicated region
      $region25: #{forward_pallas.3} parent=11 // pred_check
        %p193 = pneg %p122
      $region26: #{forward_pallas.3} parent=11 // pred_check_branch
        %195 = sbr.rel (%p193) target = $region28
      $region27: #{forward_pallas.3} parent=11 // pred_region
        _
      $region28: #{forward_pallas.3} parent=11 // pred_fallthru
        _
      // Predicated region
      $region29: #{forward_pallas.3} parent=11 // pred_check
        %p196 = pneg %p143
      $region30: #{forward_pallas.3} parent=11 // pred_check_branch
        %198 = sbr.rel (%p196) target = $region32
      $region31: #{forward_pallas.3} parent=11 // pred_region
        _
      $region32: #{forward_pallas.3} parent=11 // pred_fallthru
        _
    $region12: #{forward_pallas.3} parent=5 // pred_fallthru
      _
    %p199 = scmp.lt.s32.totalorder %s12, 2
    // Predicated region
    $region33: #{forward_pallas.3} parent=5 // pred_check
      %p200 = pneg %p199
    $region34: #{forward_pallas.3} parent=5 // pred_check_branch
      %202 = sbr.rel (%p200) target = $region36
    $region35: #{forward_pallas.3} parent=5 // pred_region
      // Predicated region
      $region37: #{forward_pallas.3} parent=35 // pred_check
        %p203 = pneg %p32
      $region38: #{forward_pallas.3} parent=35 // pred_check_branch
        %205 = sbr.rel (%p203) target = $region40
      $region39: #{forward_pallas.3} parent=35 // pred_region
        %p206 = scmp.lt.s32.totalorder %s12, 1
        %s207 = scalar_select %p206, %s12, 1
        %s208 = smul.addr %s207, 4
        %s209 = smul.addr %s208, 8
        %s210 = scalar_lea.vmem %s0, %s209
      $region40: #{forward_pallas.3} parent=35 // pred_fallthru
        _
    $region36: #{forward_pallas.3} parent=5 // pred_fallthru
      _
    %p211 = scmp.le.s32.totalorder 1, %s12
    %p212 = scmp.lt.s32.totalorder %s12, 3
    %p213 = pnand %p211, %p212
    %p214 = pneg %p213
    // Predicated region
    $region41: #{forward_pallas.3} parent=5 // pred_check
      _
    $region42: #{forward_pallas.3} parent=5 // pred_check_branch
      %216 = sbr.rel (%p213) target = $region44
    $region43: #{forward_pallas.3} parent=5 // pred_region
      %s217 = ssub.s32 %s12, 1
      %p218 = scmp.lt.s32.totalorder %s17, 1
      %s219 = scalar_select %p218, %s17, 1
      %s220 = smul.addr %s219, 4
      %s221 = smul.addr %s220, 8
      %s222 = scalar_lea.vmem %s0, %s221
      %p223 = pneg %p38
      %p224 = pneg %p35
      %p225 = pneg %p59
      %p226 = pneg %p56
      %p227 = pneg %p80
      %p228 = pneg %p77
      %p229 = pneg %p101
      %p230 = pneg %p98
      %p231 = pneg %p122
      %p232 = pneg %p119
      %p233 = pneg %p143
      %p234 = pneg %p140
      %p235 = pneg %p169
      %p236 = pneg %p166
      %p237 = scmp.lt.s32.totalorder %s17, 1
      %s238 = scalar_select %p237, %s17, 1
      %s239 = smul.addr %s238, 12
      %s240 = smul.addr %s239, 8
      %s241 = scalar_lea.vmem %s6, %s240
      %p242 = scmp.lt.s32.totalorder %s17, 1
      %s243 = scalar_select %p242, %s17, 1
      %s244 = smul.addr %s243, 4
      %s245 = smul.addr %s244, 8
      %s246 = scalar_lea.vmem %s0, %s245
      %p247 = scmp.lt.s32.totalorder %s17, 1
      %s248 = scalar_select %p247, %s17, 1
      %s249 = smul.addr %s248, 12
      %s250 = smul.addr %s249, 8
      %s251 = scalar_lea.vmem %s6, %s250
      %v252 = vld [vmem:[%s1] sm:$0x7]
      %253 = vst [vmem:[#allocation2] sm:$0xff] 0.0
      %254 = vst [vmem:[#allocation2 + $0x8] sm:$0xff] 0.0
      %255 = vst [vmem:[#allocation2 + $0x10] sm:$0xff] 0.0
      %vm256 = vcmask 310272
      %257 = vst.msk [vmem:[#allocation2 + $0x18] sm:$0xff] %vm256, 0.0
      %258 = vst [vmem:[#allocation3] sm:$0xff] 0.0
      %259 = vst [vmem:[#allocation3 + $0x8] sm:$0xff] 0.0
      %260 = vst [vmem:[#allocation3 + $0x10] sm:$0xff] 0.0
      %261 = vst.msk [vmem:[#allocation3 + $0x18] sm:$0xff] %vm256, 0.0
      %262 = vst [vmem:[#allocation4] sm:$0xff] 0.0
      %263 = vst [vmem:[#allocation4 + $0x8] sm:$0xff] 0.0
      %264 = vst [vmem:[#allocation4 + $0x10] sm:$0xff] 0.0
      %265 = vst.msk [vmem:[#allocation4 + $0x18] sm:$0xff] %vm256, 0.0
      %v266 = vld [vmem:[%s246] sm:$0xff]
      %v267 = vld [vmem:[%s246 + $0x8] sm:$0xff]
      %v268 = vld [vmem:[%s246 + $0x10] sm:$0xff]
      %v269 = vld [vmem:[%s246 + $0x18] sm:$0xff]
      %v270 = vld [vmem:[%s2] sm:$0xff]
      %v271 = vld [vmem:[%s3] sm:$0xff]
      %276 = vrot.lane.b32.xlu0 %v266, 127
      %v277 = vpop.permute.xlu0 %276
      %278 = vrot.lane.b32.xlu0 %v267, 127
      %v279 = vpop.permute.xlu0 %278
      %280 = vrot.lane.b32.xlu0 %v268, 127
      %v281 = vpop.permute.xlu0 %280
      %282 = vrot.lane.b32.xlu0 %v269, 127
      %v283 = vpop.permute.xlu0 %282
      %vm284 = vcmask 1039360
      %v285 = vsel %vm284, %v277, %v279
      %v286 = vsel %vm284, %v279, %v281
      %v287 = vsel %vm284, %v281, %v283
      %291 = vrot.lane.b32.xlu0 %v266, 126
      %v292 = vpop.permute.xlu0 %291
      %293 = vrot.lane.b32.xlu0 %v267, 126
      %v294 = vpop.permute.xlu0 %293
      %295 = vrot.lane.b32.xlu0 %v268, 126
      %v296 = vpop.permute.xlu0 %295
      %297 = vrot.lane.b32.xlu0 %v269, 126
      %v298 = vpop.permute.xlu0 %297
      %vm299 = vcmask 1031168
      %v300 = vsel %vm299, %v292, %v294
      %v301 = vsel %vm299, %v294, %v296
      %v302 = vsel %vm299, %v296, %v298
      %306 = vrot.lane.b32.xlu0 %v266, 110
      %v307 = vpop.permute.xlu0 %306
      %308 = vrot.lane.b32.xlu0 %v267, 110
      %v309 = vpop.permute.xlu0 %308
      %310 = vrot.lane.b32.xlu0 %v268, 110
      %v311 = vpop.permute.xlu0 %310
      %312 = vrot.lane.b32.xlu0 %v269, 110
      %v313 = vpop.permute.xlu0 %312
      %vm314 = vcmask 900096
      %v315 = vsel %vm314, %v307, %v309
      %v316 = vsel %vm314, %v309, %v311
      %v317 = vsel %vm314, %v311, %v313
      %321 = vrot.lane.b32.xlu0 %v266, 109
      %v322 = vpop.permute.xlu0 %321
      %323 = vrot.lane.b32.xlu0 %v267, 109
      %v324 = vpop.permute.xlu0 %323
      %325 = vrot.lane.b32.xlu0 %v268, 109
      %v326 = vpop.permute.xlu0 %325
      %327 = vrot.lane.b32.xlu0 %v269, 109
      %v328 = vpop.permute.xlu0 %327
      %vm329 = vcmask 891904
      %v330 = vsel %vm329, %v322, %v324
      %v331 = vsel %vm329, %v324, %v326
      %v332 = vsel %vm329, %v326, %v328
      %336 = vrot.lane.b32.xlu0 %v266, 108
      %v337 = vpop.permute.xlu0 %336
      %338 = vrot.lane.b32.xlu0 %v267, 108
      %v339 = vpop.permute.xlu0 %338
      %340 = vrot.lane.b32.xlu0 %v268, 108
      %v341 = vpop.permute.xlu0 %340
      %342 = vrot.lane.b32.xlu0 %v269, 108
      %v343 = vpop.permute.xlu0 %342
      %vm344 = vcmask 883712
      %v345 = vsel %vm344, %v337, %v339
      %v346 = vsel %vm344, %v339, %v341
      %v347 = vsel %vm344, %v341, %v343
      %351 = vrot.lane.b32.xlu0 %v266, 92
      %v352 = vpop.permute.xlu0 %351
      %353 = vrot.lane.b32.xlu0 %v267, 92
      %v354 = vpop.permute.xlu0 %353
      %355 = vrot.lane.b32.xlu0 %v268, 92
      %v356 = vpop.permute.xlu0 %355
      %357 = vrot.lane.b32.xlu0 %v269, 92
      %v358 = vpop.permute.xlu0 %357
      %vm359 = vcmask 752640
      %v360 = vsel %vm359, %v352, %v354
      %v361 = vsel %vm359, %v354, %v356
      %v362 = vsel %vm359, %v356, %v358
      %366 = vrot.lane.b32.xlu0 %v266, 91
      %v367 = vpop.permute.xlu0 %366
      %368 = vrot.lane.b32.xlu0 %v267, 91
      %v369 = vpop.permute.xlu0 %368
      %370 = vrot.lane.b32.xlu0 %v268, 91
      %v371 = vpop.permute.xlu0 %370
      %372 = vrot.lane.b32.xlu0 %v269, 91
      %v373 = vpop.permute.xlu0 %372
      %vm374 = vcmask 744448
      %v375 = vsel %vm374, %v367, %v369
      %v376 = vsel %vm374, %v369, %v371
      %v377 = vsel %vm374, %v371, %v373
      %381 = vrot.lane.b32.xlu0 %v266, 90
      %v382 = vpop.permute.xlu0 %381
      %383 = vrot.lane.b32.xlu0 %v267, 90
      %v384 = vpop.permute.xlu0 %383
      %385 = vrot.lane.b32.xlu0 %v268, 90
      %v386 = vpop.permute.xlu0 %385
      %387 = vrot.lane.b32.xlu0 %v269, 90
      %v388 = vpop.permute.xlu0 %387
      %vm389 = vcmask 736256
      %v390 = vsel %vm389, %v382, %v384
      %v391 = vsel %vm389, %v384, %v386
      %v392 = vsel %vm389, %v386, %v388
      %397 = vset.pattern.permute.xlu0 0
      %398 = vperm.xlu0 %397, %v271
      %v399 = vpop.permute.xlu0 %398
      %vm401 = vcmask 588800
      %v403 = vsel %vm401, %v270, 0
      %405 = vmatprep.subr.mxu0 %v267
      %406 = vmatpush1.msra.mxu0 %v266
      %407 = vmatprep.subr.mxu0 %v286
      %408 = vmatpush1.msra.mxu0 %v285
      %409 = vmatprep.subr.mxu0 %v301
      %410 = vmatpush1.msra.mxu0 %v300
      %411 = vmatprep.subr.mxu0 %v316
      %412 = vmatpush1.msra.mxu0 %v315
      %413 = vmatprep.subr.mxu0 %v331
      %414 = vmatpush1.msra.mxu0 %v330
      %415 = vmatprep.subr.mxu0 %v346
      %416 = vmatpush1.msra.mxu0 %v345
      %417 = vmatprep.subr.mxu0 %v361
      %418 = vmatpush1.msra.mxu0 %v360
      %419 = vmatprep.subr.mxu0 %v376
      %420 = vmatpush1.msra.mxu0 %v375
      %421 = vmatprep.subr.mxu0 %v391
      %422 = vmatpush1.msra.mxu0 %v390
      %423 = vmatprep.subr.mxu0 0.0
      %424 = vmatpush1.msra.mxu0 0.0
      %425 = vmatprep.subr.mxu0 0.0
      %426 = vmatpush1.msra.mxu0 0.0
      %427 = vmatprep.subr.mxu0 0.0
      %428 = vmatpush1.msra.mxu0 0.0
      %429 = vmatprep.subr.mxu0 0.0
      %430 = vmatpush1.msra.mxu0 0.0
      %431 = vmatprep.subr.mxu0 0.0
      %432 = vmatpush1.msra.mxu0 0.0
      %433 = vmatprep.subr.mxu0 0.0
      %434 = vmatpush1.msra.mxu0 0.0
      %435 = vmatprep.subr.mxu0 0.0
      %436 = vmatpush1.msra.mxu0 0.0
      %437 = vmatprep.subr.mxu0 0.0
      %438 = vmatpush1.msra.mxu0 0.0
      %439 = vmatprep.subr.mxu0 0.0
      %440 = vmatpush1.msra.mxu0 0.0
      %441 = vmatprep.subr.mxu0 0.0
      %442 = vmatpush1.msra.mxu0 0.0
      %443 = vmatprep.subr.mxu0 0.0
      %444 = vmatpush1.msra.mxu0 0.0
      %445 = vmatprep.subr.mxu0 0.0
      %446 = vmatpush1.msra.mxu0 0.0
      %447 = vmatprep.subr.mxu0 0.0
      %448 = vmatpush1.msra.mxu0 0.0
      %449 = vmatprep.subr.mxu0 0.0
      %450 = vmatpush1.msra.mxu0 0.0
      %451 = vmatprep.subr.mxu0 0.0
      %452 = vmatpush1.msra.mxu0 0.0
      %453 = vmatprep.subr.mxu0 0.0
      %454 = vmatpush1.msra.mxu0 0.0
      %455 = vmatprep.subr.mxu0 0.0
      %456 = vmatpush1.msra.mxu0 0.0
      %457 = vmatprep.subr.mxu0 0.0
      %458 = vmatpush1.msra.mxu0 0.0
      %459 = vmatprep.subr.mxu0 0.0
      %460 = vmatpush1.msra.mxu0 0.0
      %461 = vmatprep.subr.mxu0 0.0
      %462 = vmatpush1.msra.mxu0 0.0
      %463 = vmatprep.subr.mxu0 0.0
      %464 = vmatpush1.msra.mxu0 0.0
      %465 = vmatprep.subr.mxu0 0.0
      %466 = vmatpush1.msra.mxu0 0.0
      %467 = vmatprep.subr.mxu0 0.0
      %468 = vmatpush1.msra.mxu0 0.0
      %469 = vmatprep.mubr.f32.mxu0 0.0
      %470 = vmatmul.mubr.f32.gmra.mrb[0].mxu0 %v403
      %v471 = vpop.f32.mrb[0].mxu0
      %v472 = vadd.f32 %v399, %v471
      %v473 = vpop.f32.mrb[0].mxu0
      %v474 = vadd.f32 %v399, %v473
      %475 = vdwg.mxu0
      %476 = vmatprep.subr.mxu0 0.0
      %477 = vmatpush1.msra.mxu0 %v268
      %478 = vmatprep.subr.mxu0 0.0
      %479 = vmatpush1.msra.mxu0 %v287
      %480 = vmatprep.subr.mxu0 0.0
      %481 = vmatpush1.msra.mxu0 %v302
      %482 = vmatprep.subr.mxu0 0.0
      %483 = vmatpush1.msra.mxu0 %v317
      %484 = vmatprep.subr.mxu0 0.0
      %485 = vmatpush1.msra.mxu0 %v332
      %486 = vmatprep.subr.mxu0 0.0
      %487 = vmatpush1.msra.mxu0 %v347
      %488 = vmatprep.subr.mxu0 0.0
      %489 = vmatpush1.msra.mxu0 %v362
      %490 = vmatprep.subr.mxu0 0.0
      %491 = vmatpush1.msra.mxu0 %v377
      %492 = vmatprep.subr.mxu0 0.0
      %493 = vmatpush1.msra.mxu0 %v392
      %494 = vmatprep.subr.mxu0 0.0
      %495 = vmatpush1.msra.mxu0 0.0
      %496 = vmatprep.subr.mxu0 0.0
      %497 = vmatpush1.msra.mxu0 0.0
      %498 = vmatprep.subr.mxu0 0.0
      %499 = vmatpush1.msra.mxu0 0.0
      %500 = vmatprep.subr.mxu0 0.0
      %501 = vmatpush1.msra.mxu0 0.0
      %502 = vmatprep.subr.mxu0 0.0
      %503 = vmatpush1.msra.mxu0 0.0
      %504 = vmatprep.subr.mxu0 0.0
      %505 = vmatpush1.msra.mxu0 0.0
      %506 = vmatprep.subr.mxu0 0.0
      %507 = vmatpush1.msra.mxu0 0.0
      %508 = vmatprep.subr.mxu0 0.0
      %509 = vmatpush1.msra.mxu0 0.0
      %510 = vmatprep.subr.mxu0 0.0
      %511 = vmatpush1.msra.mxu0 0.0
      %512 = vmatprep.subr.mxu0 0.0
      %513 = vmatpush1.msra.mxu0 0.0
      %514 = vmatprep.subr.mxu0 0.0
      %515 = vmatpush1.msra.mxu0 0.0
      %516 = vmatprep.subr.mxu0 0.0
      %517 = vmatpush1.msra.mxu0 0.0
      %518 = vmatprep.subr.mxu0 0.0
      %519 = vmatpush1.msra.mxu0 0.0
      %520 = vmatprep.subr.mxu0 0.0
      %521 = vmatpush1.msra.mxu0 0.0
      %522 = vmatprep.subr.mxu0 0.0
      %523 = vmatpush1.msra.mxu0 0.0
      %524 = vmatprep.subr.mxu0 0.0
      %525 = vmatpush1.msra.mxu0 0.0
      %526 = vmatprep.subr.mxu0 0.0
      %527 = vmatpush1.msra.mxu0 0.0
      %528 = vmatprep.subr.mxu0 0.0
      %529 = vmatpush1.msra.mxu0 0.0
      %530 = vmatprep.subr.mxu0 0.0
      %531 = vmatpush1.msra.mxu0 0.0
      %532 = vmatprep.subr.mxu0 0.0
      %533 = vmatpush1.msra.mxu0 0.0
      %534 = vmatprep.subr.mxu0 0.0
      %535 = vmatpush1.msra.mxu0 0.0
      %536 = vmatprep.subr.mxu0 0.0
      %537 = vmatpush1.msra.mxu0 0.0
      %538 = vmatprep.subr.mxu0 0.0
      %539 = vmatpush1.msra.mxu0 0.0
      %540 = vmatprep.mubr.f32.mxu0 0.0
      %541 = vmatmul.mubr.f32.gmra.mrb[0].mxu0 %v403
      %v542 = vpop.f32.mrb[0].mxu0
      %v543 = vadd.f32 %v399, %v542
      %v544 = vpop.f32.mrb[0].mxu0
      %545 = vdwg.mxu0
      %v547 = vlaneseq
      %v548 = vshrl.u32 %v547, 7
      %v549 = vsub.s32 0, %v548
      %v550 = vrot.slane %v252, %v549
      %v551 = vlaneseq
      %v552 = vshrl.u32 %v551, 7
      %v553 = vsub.s32 1, %v552
      %v554 = vrot.slane %v252, %v553
      %v555 = vlaneseq
      %v556 = vshrl.u32 %v555, 7
      %v557 = vsub.s32 2, %v556
      %v558 = vrot.slane %v252, %v557
      %v562 = vmul.f32 %v472, %v550
      %v563 = vmul.f32 %v474, %v554
      %v564 = vmul.f32 %v543, %v558
      %568 = vrot.lane.b32.xlu0 %v562, 19
      %v569 = vpop.permute.xlu0 %568
      %570 = vrot.lane.b32.xlu0 %v563, 19
      %v571 = vpop.permute.xlu0 %570
      %572 = vrot.lane.b32.xlu0 %v564, 19
      %v573 = vpop.permute.xlu0 %572
      %vm574 = vcmask 154624
      %v575 = vsel %vm574, %v569, %v571
      %v576 = vsel %vm574, %v571, %v573
      %vm581 = vcmask 1047704
      %582 = vst.msk [vmem:[#allocation2] sm:$0xff] %vm581, %v569
      %583 = vst [vmem:[#allocation2 + $0x8] sm:$0xff] %v575
      %584 = vst [vmem:[#allocation2 + $0x10] sm:$0xff] %v576
      %585 = vst.msk [vmem:[#allocation2 + $0x18] sm:$0xff] %vm574, %v573
      %586 = vst.msk [vmem:[#allocation3] sm:$0xff] %vm581, %v569
      %587 = vst [vmem:[#allocation3 + $0x8] sm:$0xff] %v575
      %588 = vst [vmem:[#allocation3 + $0x10] sm:$0xff] %v576
      %589 = vst.msk [vmem:[#allocation3 + $0x18] sm:$0xff] %vm574, %v573
      %s590 = scalar_lea.vmem %s2, 8
      %v591 = vld [vmem:[%s590] sm:$0xff]
      %s592 = scalar_lea.vmem %s3, 8
      %v593 = vld [vmem:[%s592] sm:$0xff]
      %v594 = vld [vmem:[#allocation3] sm:$0xff]
      %v595 = vld [vmem:[#allocation3 + $0x8] sm:$0xff]
      %v596 = vld [vmem:[#allocation3 + $0x10] sm:$0xff]
      %v597 = vld [vmem:[#allocation3 + $0x18] sm:$0xff]
      %602 = vrot.lane.b32.xlu0 %v594, 127
      %v603 = vpop.permute.xlu0 %602
      %604 = vrot.lane.b32.xlu0 %v595, 127
      %v605 = vpop.permute.xlu0 %604
      %606 = vrot.lane.b32.xlu0 %v596, 127
      %v607 = vpop.permute.xlu0 %606
      %608 = vrot.lane.b32.xlu0 %v597, 127
      %v609 = vpop.permute.xlu0 %608
      %v610 = vsel %vm284, %v603, %v605
      %v611 = vsel %vm284, %v605, %v607
      %v612 = vsel %vm284, %v607, %v609
      %616 = vrot.lane.b32.xlu0 %v594, 126
      %v617 = vpop.permute.xlu0 %616
      %618 = vrot.lane.b32.xlu0 %v595, 126
      %v619 = vpop.permute.xlu0 %618
      %620 = vrot.lane.b32.xlu0 %v596, 126
      %v621 = vpop.permute.xlu0 %620
      %622 = vrot.lane.b32.xlu0 %v597, 126
      %v623 = vpop.permute.xlu0 %622
      %v624 = vsel %vm299, %v617, %v619
      %v625 = vsel %vm299, %v619, %v621
      %v626 = vsel %vm299, %v621, %v623
      %630 = vrot.lane.b32.xlu0 %v594, 110
      %v631 = vpop.permute.xlu0 %630
      %632 = vrot.lane.b32.xlu0 %v595, 110
      %v633 = vpop.permute.xlu0 %632
      %634 = vrot.lane.b32.xlu0 %v596, 110
      %v635 = vpop.permute.xlu0 %634
      %636 = vrot.lane.b32.xlu0 %v597, 110
      %v637 = vpop.permute.xlu0 %636
      %v638 = vsel %vm314, %v631, %v633
      %v639 = vsel %vm314, %v633, %v635
      %v640 = vsel %vm314, %v635, %v637
      %644 = vrot.lane.b32.xlu0 %v594, 109
      %v645 = vpop.permute.xlu0 %644
      %646 = vrot.lane.b32.xlu0 %v595, 109
      %v647 = vpop.permute.xlu0 %646
      %648 = vrot.lane.b32.xlu0 %v596, 109
      %v649 = vpop.permute.xlu0 %648
      %650 = vrot.lane.b32.xlu0 %v597, 109
      %v651 = vpop.permute.xlu0 %650
      %v652 = vsel %vm329, %v645, %v647
      %v653 = vsel %vm329, %v647, %v649
      %v654 = vsel %vm329, %v649, %v651
      %658 = vrot.lane.b32.xlu0 %v594, 108
      %v659 = vpop.permute.xlu0 %658
      %660 = vrot.lane.b32.xlu0 %v595, 108
      %v661 = vpop.permute.xlu0 %660
      %662 = vrot.lane.b32.xlu0 %v596, 108
      %v663 = vpop.permute.xlu0 %662
      %664 = vrot.lane.b32.xlu0 %v597, 108
      %v665 = vpop.permute.xlu0 %664
      %v666 = vsel %vm344, %v659, %v661
      %v667 = vsel %vm344, %v661, %v663
      %v668 = vsel %vm344, %v663, %v665
      %672 = vrot.lane.b32.xlu0 %v594, 92
      %v673 = vpop.permute.xlu0 %672
      %674 = vrot.lane.b32.xlu0 %v595, 92
      %v675 = vpop.permute.xlu0 %674
      %676 = vrot.lane.b32.xlu0 %v596, 92
      %v677 = vpop.permute.xlu0 %676
      %678 = vrot.lane.b32.xlu0 %v597, 92
      %v679 = vpop.permute.xlu0 %678
      %v680 = vsel %vm359, %v673, %v675
      %v681 = vsel %vm359, %v675, %v677
      %v682 = vsel %vm359, %v677, %v679
      %686 = vrot.lane.b32.xlu0 %v594, 91
      %v687 = vpop.permute.xlu0 %686
      %688 = vrot.lane.b32.xlu0 %v595, 91
      %v689 = vpop.permute.xlu0 %688
      %690 = vrot.lane.b32.xlu0 %v596, 91
      %v691 = vpop.permute.xlu0 %690
      %692 = vrot.lane.b32.xlu0 %v597, 91
      %v693 = vpop.permute.xlu0 %692
      %v694 = vsel %vm374, %v687, %v689
      %v695 = vsel %vm374, %v689, %v691
      %v696 = vsel %vm374, %v691, %v693
      %700 = vrot.lane.b32.xlu0 %v594, 90
      %v701 = vpop.permute.xlu0 %700
      %702 = vrot.lane.b32.xlu0 %v595, 90
      %v703 = vpop.permute.xlu0 %702
      %704 = vrot.lane.b32.xlu0 %v596, 90
      %v705 = vpop.permute.xlu0 %704
      %706 = vrot.lane.b32.xlu0 %v597, 90
      %v707 = vpop.permute.xlu0 %706
      %v708 = vsel %vm389, %v701, %v703
      %v709 = vsel %vm389, %v703, %v705
      %v710 = vsel %vm389, %v705, %v707
      %715 = vset.pattern.permute.xlu0 0
      %716 = vperm.xlu0 %715, %v593
      %v717 = vpop.permute.xlu0 %716
      %v720 = vsel %vm401, %v591, 0
      %722 = vmatprep.subr.mxu0 %v595
      %723 = vmatpush1.msra.mxu0 %v594
      %724 = vmatprep.subr.mxu0 %v611
      %725 = vmatpush1.msra.mxu0 %v610
      %726 = vmatprep.subr.mxu0 %v625
      %727 = vmatpush1.msra.mxu0 %v624
      %728 = vmatprep.subr.mxu0 %v639
      %729 = vmatpush1.msra.mxu0 %v638
      %730 = vmatprep.subr.mxu0 %v653
      %731 = vmatpush1.msra.mxu0 %v652
      %732 = vmatprep.subr.mxu0 %v667
      %733 = vmatpush1.msra.mxu0 %v666
      %734 = vmatprep.subr.mxu0 %v681
      %735 = vmatpush1.msra.mxu0 %v680
      %736 = vmatprep.subr.mxu0 %v695
      %737 = vmatpush1.msra.mxu0 %v694
      %738 = vmatprep.subr.mxu0 %v709
      %739 = vmatpush1.msra.mxu0 %v708
      %740 = vmatprep.subr.mxu0 0.0
      %741 = vmatpush1.msra.mxu0 0.0
      %742 = vmatprep.subr.mxu0 0.0
      %743 = vmatpush1.msra.mxu0 0.0
      %744 = vmatprep.subr.mxu0 0.0
      %745 = vmatpush1.msra.mxu0 0.0
      %746 = vmatprep.subr.mxu0 0.0
      %747 = vmatpush1.msra.mxu0 0.0
      %748 = vmatprep.subr.mxu0 0.0
      %749 = vmatpush1.msra.mxu0 0.0
      %750 = vmatprep.subr.mxu0 0.0
      %751 = vmatpush1.msra.mxu0 0.0
      %752 = vmatprep.subr.mxu0 0.0
      %753 = vmatpush1.msra.mxu0 0.0
      %754 = vmatprep.subr.mxu0 0.0
      %755 = vmatpush1.msra.mxu0 0.0
      %756 = vmatprep.subr.mxu0 0.0
      %757 = vmatpush1.msra.mxu0 0.0
      %758 = vmatprep.subr.mxu0 0.0
      %759 = vmatpush1.msra.mxu0 0.0
      %760 = vmatprep.subr.mxu0 0.0
      %761 = vmatpush1.msra.mxu0 0.0
      %762 = vmatprep.subr.mxu0 0.0
      %763 = vmatpush1.msra.mxu0 0.0
      %764 = vmatprep.subr.mxu0 0.0
      %765 = vmatpush1.msra.mxu0 0.0
      %766 = vmatprep.subr.mxu0 0.0
      %767 = vmatpush1.msra.mxu0 0.0
      %768 = vmatprep.subr.mxu0 0.0
      %769 = vmatpush1.msra.mxu0 0.0
      %770 = vmatprep.subr.mxu0 0.0
      %771 = vmatpush1.msra.mxu0 0.0
      %772 = vmatprep.subr.mxu0 0.0
      %773 = vmatpush1.msra.mxu0 0.0
      %774 = vmatprep.subr.mxu0 0.0
      %775 = vmatpush1.msra.mxu0 0.0
      %776 = vmatprep.subr.mxu0 0.0
      %777 = vmatpush1.msra.mxu0 0.0
      %778 = vmatprep.subr.mxu0 0.0
      %779 = vmatpush1.msra.mxu0 0.0
      %780 = vmatprep.subr.mxu0 0.0
      %781 = vmatpush1.msra.mxu0 0.0
      %782 = vmatprep.subr.mxu0 0.0
      %783 = vmatpush1.msra.mxu0 0.0
      %784 = vmatprep.subr.mxu0 0.0
      %785 = vmatpush1.msra.mxu0 0.0
      %786 = vmatprep.mubr.f32.mxu0 0.0
      %787 = vmatmul.mubr.f32.gmra.mrb[0].mxu0 %v720
      %v788 = vpop.f32.mrb[0].mxu0
      %v789 = vadd.f32 %v717, %v788
      %v790 = vpop.f32.mrb[0].mxu0
      %v791 = vadd.f32 %v717, %v790
      %792 = vdwg.mxu0
      %793 = vmatprep.subr.mxu0 0.0
      %794 = vmatpush1.msra.mxu0 %v596
      %795 = vmatprep.subr.mxu0 0.0
      %796 = vmatpush1.msra.mxu0 %v612
      %797 = vmatprep.subr.mxu0 0.0
      %798 = vmatpush1.msra.mxu0 %v626
      %799 = vmatprep.subr.mxu0 0.0
      %800 = vmatpush1.msra.mxu0 %v640
      %801 = vmatprep.subr.mxu0 0.0
      %802 = vmatpush1.msra.mxu0 %v654
      %803 = vmatprep.subr.mxu0 0.0
      %804 = vmatpush1.msra.mxu0 %v668
      %805 = vmatprep.subr.mxu0 0.0
      %806 = vmatpush1.msra.mxu0 %v682
      %807 = vmatprep.subr.mxu0 0.0
      %808 = vmatpush1.msra.mxu0 %v696
      %809 = vmatprep.subr.mxu0 0.0
      %810 = vmatpush1.msra.mxu0 %v710
      %811 = vmatprep.subr.mxu0 0.0
      %812 = vmatpush1.msra.mxu0 0.0
      %813 = vmatprep.subr.mxu0 0.0
      %814 = vmatpush1.msra.mxu0 0.0
      %815 = vmatprep.subr.mxu0 0.0
      %816 = vmatpush1.msra.mxu0 0.0
      %817 = vmatprep.subr.mxu0 0.0
      %818 = vmatpush1.msra.mxu0 0.0
      %819 = vmatprep.subr.mxu0 0.0
      %820 = vmatpush1.msra.mxu0 0.0
      %821 = vmatprep.subr.mxu0 0.0
      %822 = vmatpush1.msra.mxu0 0.0
      %823 = vmatprep.subr.mxu0 0.0
      %824 = vmatpush1.msra.mxu0 0.0
      %825 = vmatprep.subr.mxu0 0.0
      %826 = vmatpush1.msra.mxu0 0.0
      %827 = vmatprep.subr.mxu0 0.0
      %828 = vmatpush1.msra.mxu0 0.0
      %829 = vmatprep.subr.mxu0 0.0
      %830 = vmatpush1.msra.mxu0 0.0
      %831 = vmatprep.subr.mxu0 0.0
      %832 = vmatpush1.msra.mxu0 0.0
      %833 = vmatprep.subr.mxu0 0.0
      %834 = vmatpush1.msra.mxu0 0.0
      %835 = vmatprep.subr.mxu0 0.0
      %836 = vmatpush1.msra.mxu0 0.0
      %837 = vmatprep.subr.mxu0 0.0
      %838 = vmatpush1.msra.mxu0 0.0
      %839 = vmatprep.subr.mxu0 0.0
      %840 = vmatpush1.msra.mxu0 0.0
      %841 = vmatprep.subr.mxu0 0.0
      %842 = vmatpush1.msra.mxu0 0.0
      %843 = vmatprep.subr.mxu0 0.0
      %844 = vmatpush1.msra.mxu0 0.0
      %845 = vmatprep.subr.mxu0 0.0
      %846 = vmatpush1.msra.mxu0 0.0
      %847 = vmatprep.subr.mxu0 0.0
      %848 = vmatpush1.msra.mxu0 0.0
      %849 = vmatprep.subr.mxu0 0.0
      %850 = vmatpush1.msra.mxu0 0.0
      %851 = vmatprep.subr.mxu0 0.0
      %852 = vmatpush1.msra.mxu0 0.0
      %853 = vmatprep.subr.mxu0 0.0
      %854 = vmatpush1.msra.mxu0 0.0
      %855 = vmatprep.subr.mxu0 0.0
      %856 = vmatpush1.msra.mxu0 0.0
      %857 = vmatprep.mubr.f32.mxu0 0.0
      %858 = vmatmul.mubr.f32.gmra.mrb[0].mxu0 %v720
      %v859 = vpop.f32.mrb[0].mxu0
      %v860 = vadd.f32 %v717, %v859
      %v861 = vpop.f32.mrb[0].mxu0
      %862 = vdwg.mxu0
      %v863 = vmax.f32 %v789, 0.0
      %v864 = vmax.f32 %v791, 0.0
      %v865 = vmax.f32 %v860, 0.0
      %v866 = vmul.f32 %v863, %v550
      %v867 = vmul.f32 %v864, %v554
      %v868 = vmul.f32 %v865, %v558
      %872 = vrot.lane.b32.xlu0 %v866, 19
      %v873 = vpop.permute.xlu0 %872
      %874 = vrot.lane.b32.xlu0 %v867, 19
      %v875 = vpop.permute.xlu0 %874
      %876 = vrot.lane.b32.xlu0 %v868, 19
      %v877 = vpop.permute.xlu0 %876
      %v878 = vsel %vm574, %v873, %v875
      %v879 = vsel %vm574, %v875, %v877
      %884 = vst.msk [vmem:[#allocation4] sm:$0xff] %vm581, %v873
      %885 = vst [vmem:[#allocation4 + $0x8] sm:$0xff] %v878
      %886 = vst [vmem:[#allocation4 + $0x10] sm:$0xff] %v879
      %887 = vst.msk [vmem:[#allocation4 + $0x18] sm:$0xff] %vm574, %v877
      %s888 = scalar_lea.vmem %s2, 16
      %v889 = vld [vmem:[%s888] sm:$0xff]
      %s890 = scalar_lea.vmem %s3, 16
      %v891 = vld [vmem:[%s890] sm:$0xff]
      %v892 = vld [vmem:[#allocation4] sm:$0xff]
      %v893 = vld [vmem:[#allocation4 + $0x8] sm:$0xff]
      %v894 = vld [vmem:[#allocation4 + $0x10] sm:$0xff]
      %v895 = vld [vmem:[#allocation4 + $0x18] sm:$0xff]
      %900 = vrot.lane.b32.xlu0 %v892, 127
      %v901 = vpop.permute.xlu0 %900
      %902 = vrot.lane.b32.xlu0 %v893, 127
      %v903 = vpop.permute.xlu0 %902
      %904 = vrot.lane.b32.xlu0 %v894, 127
      %v905 = vpop.permute.xlu0 %904
      %906 = vrot.lane.b32.xlu0 %v895, 127
      %v907 = vpop.permute.xlu0 %906
      %v908 = vsel %vm284, %v901, %v903
      %v909 = vsel %vm284, %v903, %v905
      %v910 = vsel %vm284, %v905, %v907
      %914 = vrot.lane.b32.xlu0 %v892, 126
      %v915 = vpop.permute.xlu0 %914
      %916 = vrot.lane.b32.xlu0 %v893, 126
      %v917 = vpop.permute.xlu0 %916
      %918 = vrot.lane.b32.xlu0 %v894, 126
      %v919 = vpop.permute.xlu0 %918
      %920 = vrot.lane.b32.xlu0 %v895, 126
      %v921 = vpop.permute.xlu0 %920
      %v922 = vsel %vm299, %v915, %v917
      %v923 = vsel %vm299, %v917, %v919
      %v924 = vsel %vm299, %v919, %v921
      %928 = vrot.lane.b32.xlu0 %v892, 110
      %v929 = vpop.permute.xlu0 %928
      %930 = vrot.lane.b32.xlu0 %v893, 110
      %v931 = vpop.permute.xlu0 %930
      %932 = vrot.lane.b32.xlu0 %v894, 110
      %v933 = vpop.permute.xlu0 %932
      %934 = vrot.lane.b32.xlu0 %v895, 110
      %v935 = vpop.permute.xlu0 %934
      %v936 = vsel %vm314, %v929, %v931
      %v937 = vsel %vm314, %v931, %v933
      %v938 = vsel %vm314, %v933, %v935
      %942 = vrot.lane.b32.xlu0 %v892, 109
      %v943 = vpop.permute.xlu0 %942
      %944 = vrot.lane.b32.xlu0 %v893, 109
      %v945 = vpop.permute.xlu0 %944
      %946 = vrot.lane.b32.xlu0 %v894, 109
      %v947 = vpop.permute.xlu0 %946
      %948 = vrot.lane.b32.xlu0 %v895, 109
      %v949 = vpop.permute.xlu0 %948
      %v950 = vsel %vm329, %v943, %v945
      %v951 = vsel %vm329, %v945, %v947
      %v952 = vsel %vm329, %v947, %v949
      %956 = vrot.lane.b32.xlu0 %v892, 108
      %v957 = vpop.permute.xlu0 %956
      %958 = vrot.lane.b32.xlu0 %v893, 108
      %v959 = vpop.permute.xlu0 %958
      %960 = vrot.lane.b32.xlu0 %v894, 108
      %v961 = vpop.permute.xlu0 %960
      %962 = vrot.lane.b32.xlu0 %v895, 108
      %v963 = vpop.permute.xlu0 %962
      %v964 = vsel %vm344, %v957, %v959
      %v965 = vsel %vm344, %v959, %v961
      %v966 = vsel %vm344, %v961, %v963
      %970 = vrot.lane.b32.xlu0 %v892, 92
      %v971 = vpop.permute.xlu0 %970
      %972 = vrot.lane.b32.xlu0 %v893, 92
      %v973 = vpop.permute.xlu0 %972
      %974 = vrot.lane.b32.xlu0 %v894, 92
      %v975 = vpop.permute.xlu0 %974
      %976 = vrot.lane.b32.xlu0 %v895, 92
      %v977 = vpop.permute.xlu0 %976
      %v978 = vsel %vm359, %v971, %v973
      %v979 = vsel %vm359, %v973, %v975
      %v980 = vsel %vm359, %v975, %v977
      %984 = vrot.lane.b32.xlu0 %v892, 91
      %v985 = vpop.permute.xlu0 %984
      %986 = vrot.lane.b32.xlu0 %v893, 91
      %v987 = vpop.permute.xlu0 %986
      %988 = vrot.lane.b32.xlu0 %v894, 91
      %v989 = vpop.permute.xlu0 %988
      %990 = vrot.lane.b32.xlu0 %v895, 91
      %v991 = vpop.permute.xlu0 %990
      %v992 = vsel %vm374, %v985, %v987
      %v993 = vsel %vm374, %v987, %v989
      %v994 = vsel %vm374, %v989, %v991
      %998 = vrot.lane.b32.xlu0 %v892, 90
      %v999 = vpop.permute.xlu0 %998
      %1000 = vrot.lane.b32.xlu0 %v893, 90
      %v1001 = vpop.permute.xlu0 %1000
      %1002 = vrot.lane.b32.xlu0 %v894, 90
      %v1003 = vpop.permute.xlu0 %1002
      %1004 = vrot.lane.b32.xlu0 %v895, 90
      %v1005 = vpop.permute.xlu0 %1004
      %v1006 = vsel %vm389, %v999, %v1001
      %v1007 = vsel %vm389, %v1001, %v1003
      %v1008 = vsel %vm389, %v1003, %v1005
      %1013 = vset.pattern.permute.xlu0 0
      %1014 = vperm.xlu0 %1013, %v891
      %v1015 = vpop.permute.xlu0 %1014
      %v1018 = vsel %vm401, %v889, 0
      %1020 = vmatprep.subr.mxu0 %v893
      %1021 = vmatpush1.msra.mxu0 %v892
      %1022 = vmatprep.subr.mxu0 %v909
      %1023 = vmatpush1.msra.mxu0 %v908
      %1024 = vmatprep.subr.mxu0 %v923
      %1025 = vmatpush1.msra.mxu0 %v922
      %1026 = vmatprep.subr.mxu0 %v937
      %1027 = vmatpush1.msra.mxu0 %v936
      %1028 = vmatprep.subr.mxu0 %v951
      %1029 = vmatpush1.msra.mxu0 %v950
      %1030 = vmatprep.subr.mxu0 %v965
      %1031 = vmatpush1.msra.mxu0 %v964
      %1032 = vmatprep.subr.mxu0 %v979
      %1033 = vmatpush1.msra.mxu0 %v978
      %1034 = vmatprep.subr.mxu0 %v993
      %1035 = vmatpush1.msra.mxu0 %v992
      %1036 = vmatprep.subr.mxu0 %v1007
      %1037 = vmatpush1.msra.mxu0 %v1006
      %1038 = vmatprep.subr.mxu0 0.0
      %1039 = vmatpush1.msra.mxu0 0.0
      %1040 = vmatprep.subr.mxu0 0.0
      %1041 = vmatpush1.msra.mxu0 0.0
      %1042 = vmatprep.subr.mxu0 0.0
      %1043 = vmatpush1.msra.mxu0 0.0
      %1044 = vmatprep.subr.mxu0 0.0
      %1045 = vmatpush1.msra.mxu0 0.0
      %1046 = vmatprep.subr.mxu0 0.0
      %1047 = vmatpush1.msra.mxu0 0.0
      %1048 = vmatprep.subr.mxu0 0.0
      %1049 = vmatpush1.msra.mxu0 0.0
      %1050 = vmatprep.subr.mxu0 0.0
      %1051 = vmatpush1.msra.mxu0 0.0
      %1052 = vmatprep.subr.mxu0 0.0
      %1053 = vmatpush1.msra.mxu0 0.0
      %1054 = vmatprep.subr.mxu0 0.0
      %1055 = vmatpush1.msra.mxu0 0.0
      %1056 = vmatprep.subr.mxu0 0.0
      %1057 = vmatpush1.msra.mxu0 0.0
      %1058 = vmatprep.subr.mxu0 0.0
      %1059 = vmatpush1.msra.mxu0 0.0
      %1060 = vmatprep.subr.mxu0 0.0
      %1061 = vmatpush1.msra.mxu0 0.0
      %1062 = vmatprep.subr.mxu0 0.0
      %1063 = vmatpush1.msra.mxu0 0.0
      %1064 = vmatprep.subr.mxu0 0.0
      %1065 = vmatpush1.msra.mxu0 0.0
      %1066 = vmatprep.subr.mxu0 0.0
      %1067 = vmatpush1.msra.mxu0 0.0
      %1068 = vmatprep.subr.mxu0 0.0
      %1069 = vmatpush1.msra.mxu0 0.0
      %1070 = vmatprep.subr.mxu0 0.0
      %1071 = vmatpush1.msra.mxu0 0.0
      %1072 = vmatprep.subr.mxu0 0.0
      %1073 = vmatpush1.msra.mxu0 0.0
      %1074 = vmatprep.subr.mxu0 0.0
      %1075 = vmatpush1.msra.mxu0 0.0
      %1076 = vmatprep.subr.mxu0 0.0
      %1077 = vmatpush1.msra.mxu0 0.0
      %1078 = vmatprep.subr.mxu0 0.0
      %1079 = vmatpush1.msra.mxu0 0.0
      %1080 = vmatprep.subr.mxu0 0.0
      %1081 = vmatpush1.msra.mxu0 0.0
      %1082 = vmatprep.subr.mxu0 0.0
      %1083 = vmatpush1.msra.mxu0 0.0
      %1084 = vmatprep.mubr.f32.mxu0 0.0
      %1085 = vmatmul.mubr.f32.gmra.mrb[0].mxu0 %v1018
      %v1086 = vpop.f32.mrb[0].mxu0
      %v1087 = vadd.f32 %v1015, %v1086
      %v1088 = vpop.f32.mrb[0].mxu0
      %v1089 = vadd.f32 %v1015, %v1088
      %1090 = vdwg.mxu0
      %1091 = vmatprep.subr.mxu0 0.0
      %1092 = vmatpush1.msra.mxu0 %v894
      %1093 = vmatprep.subr.mxu0 0.0
      %1094 = vmatpush1.msra.mxu0 %v910
      %1095 = vmatprep.subr.mxu0 0.0
      %1096 = vmatpush1.msra.mxu0 %v924
      %1097 = vmatprep.subr.mxu0 0.0
      %1098 = vmatpush1.msra.mxu0 %v938
      %1099 = vmatprep.subr.mxu0 0.0
      %1100 = vmatpush1.msra.mxu0 %v952
      %1101 = vmatprep.subr.mxu0 0.0
      %1102 = vmatpush1.msra.mxu0 %v966
      %1103 = vmatprep.subr.mxu0 0.0
      %1104 = vmatpush1.msra.mxu0 %v980
      %1105 = vmatprep.subr.mxu0 0.0
      %1106 = vmatpush1.msra.mxu0 %v994
      %1107 = vmatprep.subr.mxu0 0.0
      %1108 = vmatpush1.msra.mxu0 %v1008
      %1109 = vmatprep.subr.mxu0 0.0
      %1110 = vmatpush1.msra.mxu0 0.0
      %1111 = vmatprep.subr.mxu0 0.0
      %1112 = vmatpush1.msra.mxu0 0.0
      %1113 = vmatprep.subr.mxu0 0.0
      %1114 = vmatpush1.msra.mxu0 0.0
      %1115 = vmatprep.subr.mxu0 0.0
      %1116 = vmatpush1.msra.mxu0 0.0
      %1117 = vmatprep.subr.mxu0 0.0
      %1118 = vmatpush1.msra.mxu0 0.0
      %1119 = vmatprep.subr.mxu0 0.0
      %1120 = vmatpush1.msra.mxu0 0.0
      %1121 = vmatprep.subr.mxu0 0.0
      %1122 = vmatpush1.msra.mxu0 0.0
      %1123 = vmatprep.subr.mxu0 0.0
      %1124 = vmatpush1.msra.mxu0 0.0
      %1125 = vmatprep.subr.mxu0 0.0
      %1126 = vmatpush1.msra.mxu0 0.0
      %1127 = vmatprep.subr.mxu0 0.0
      %1128 = vmatpush1.msra.mxu0 0.0
      %1129 = vmatprep.subr.mxu0 0.0
      %1130 = vmatpush1.msra.mxu0 0.0
      %1131 = vmatprep.subr.mxu0 0.0
      %1132 = vmatpush1.msra.mxu0 0.0
      %1133 = vmatprep.subr.mxu0 0.0
      %1134 = vmatpush1.msra.mxu0 0.0
      %1135 = vmatprep.subr.mxu0 0.0
      %1136 = vmatpush1.msra.mxu0 0.0
      %1137 = vmatprep.subr.mxu0 0.0
      %1138 = vmatpush1.msra.mxu0 0.0
      %1139 = vmatprep.subr.mxu0 0.0
      %1140 = vmatpush1.msra.mxu0 0.0
      %1141 = vmatprep.subr.mxu0 0.0
      %1142 = vmatpush1.msra.mxu0 0.0
      %1143 = vmatprep.subr.mxu0 0.0
      %1144 = vmatpush1.msra.mxu0 0.0
      %1145 = vmatprep.subr.mxu0 0.0
      %1146 = vmatpush1.msra.mxu0 0.0
      %1147 = vmatprep.subr.mxu0 0.0
      %1148 = vmatpush1.msra.mxu0 0.0
      %1149 = vmatprep.subr.mxu0 0.0
      %1150 = vmatpush1.msra.mxu0 0.0
      %1151 = vmatprep.subr.mxu0 0.0
      %1152 = vmatpush1.msra.mxu0 0.0
      %1153 = vmatprep.subr.mxu0 0.0
      %1154 = vmatpush1.msra.mxu0 0.0
      %1155 = vmatprep.mubr.f32.mxu0 0.0
      %1156 = vmatmul.mubr.f32.gmra.mrb[0].mxu0 %v1018
      %v1157 = vpop.f32.mrb[0].mxu0
      %v1158 = vadd.f32 %v1015, %v1157
      %v1159 = vpop.f32.mrb[0].mxu0
      %1160 = vdwg.mxu0
      %v1161 = vmul.f32 %v1087, %v550
      %v1162 = vmul.f32 %v1089, %v554
      %v1163 = vmul.f32 %v1158, %v558
      %v1164 = vld [vmem:[#allocation3] sm:$0xff]
      %v1165 = vld [vmem:[#allocation3 + $0x8] sm:$0xff]
      %v1166 = vld [vmem:[#allocation3 + $0x10] sm:$0xff]
      %v1167 = vld [vmem:[#allocation3 + $0x18] sm:$0xff]
      %v1168 = vmul.f32 %v1161, 0.1
      %v1169 = vmul.f32 %v1162, 0.1
      %v1170 = vmul.f32 %v1163, 0.1
      %1174 = vrot.lane.b32.xlu0 %v1168, 19
      %v1175 = vpop.permute.xlu0 %1174
      %1176 = vrot.lane.b32.xlu0 %v1169, 19
      %v1177 = vpop.permute.xlu0 %1176
      %1178 = vrot.lane.b32.xlu0 %v1170, 19
      %v1179 = vpop.permute.xlu0 %1178
      %v1180 = vsel %vm574, %v1175, %v1177
      %v1181 = vsel %vm574, %v1177, %v1179
      %v1186 = vadd.f32 %v1164, %v1175
      %v1187 = vadd.f32 %v1165, %v1180
      %v1188 = vadd.f32 %v1166, %v1181
      %v1189 = vadd.f32 %v1167, %v1179
      %1190 = vst.msk [vmem:[#allocation3] sm:$0xff] %vm581, %v1186
      %1191 = vst [vmem:[#allocation3 + $0x8] sm:$0xff] %v1187
      %1192 = vst [vmem:[#allocation3 + $0x10] sm:$0xff] %v1188
      %1193 = vst.msk [vmem:[#allocation3 + $0x18] sm:$0xff] %vm574, %v1189
      %s1194 = scalar_lea.vmem %s2, 24
      %v1195 = vld [vmem:[%s1194] sm:$0xff]
      %s1196 = scalar_lea.vmem %s3, 24
      %v1197 = vld [vmem:[%s1196] sm:$0xff]
      %v1198 = vld [vmem:[#allocation3] sm:$0xff]
      %v1199 = vld [vmem:[#allocation3 + $0x8] sm:$0xff]
      %v1200 = vld [vmem:[#allocation3 + $0x10] sm:$0xff]
      %v1201 = vld [vmem:[#allocation3 + $0x18] sm:$0xff]
      %1206 = vrot.lane.b32.xlu0 %v1198, 127
      %v1207 = vpop.permute.xlu0 %1206
      %1208 = vrot.lane.b32.xlu0 %v1199, 127
      %v1209 = vpop.permute.xlu0 %1208
      %1210 = vrot.lane.b32.xlu0 %v1200, 127
      %v1211 = vpop.permute.xlu0 %1210
      %1212 = vrot.lane.b32.xlu0 %v1201, 127
      %v1213 = vpop.permute.xlu0 %1212
      %v1214 = vsel %vm284, %v1207, %v1209
      %v1215 = vsel %vm284, %v1209, %v1211
      %v1216 = vsel %vm284, %v1211, %v1213
      %1220 = vrot.lane.b32.xlu0 %v1198, 126
      %v1221 = vpop.permute.xlu0 %1220
      %1222 = vrot.lane.b32.xlu0 %v1199, 126
      %v1223 = vpop.permute.xlu0 %1222
      %1224 = vrot.lane.b32.xlu0 %v1200, 126
      %v1225 = vpop.permute.xlu0 %1224
      %1226 = vrot.lane.b32.xlu0 %v1201, 126
      %v1227 = vpop.permute.xlu0 %1226
      %v1228 = vsel %vm299, %v1221, %v1223
      %v1229 = vsel %vm299, %v1223, %v1225
      %v1230 = vsel %vm299, %v1225, %v1227
      %1234 = vrot.lane.b32.xlu0 %v1198, 110
      %v1235 = vpop.permute.xlu0 %1234
      %1236 = vrot.lane.b32.xlu0 %v1199, 110
      %v1237 = vpop.permute.xlu0 %1236
      %1238 = vrot.lane.b32.xlu0 %v1200, 110
      %v1239 = vpop.permute.xlu0 %1238
      %1240 = vrot.lane.b32.xlu0 %v1201, 110
      %v1241 = vpop.permute.xlu0 %1240
      %v1242 = vsel %vm314, %v1235, %v1237
      %v1243 = vsel %vm314, %v1237, %v1239
      %v1244 = vsel %vm314, %v1239, %v1241
      %1248 = vrot.lane.b32.xlu0 %v1198, 109
      %v1249 = vpop.permute.xlu0 %1248
      %1250 = vrot.lane.b32.xlu0 %v1199, 109
      %v1251 = vpop.permute.xlu0 %1250
      %1252 = vrot.lane.b32.xlu0 %v1200, 109
      %v1253 = vpop.permute.xlu0 %1252
      %1254 = vrot.lane.b32.xlu0 %v1201, 109
      %v1255 = vpop.permute.xlu0 %1254
      %v1256 = vsel %vm329, %v1249, %v1251
      %v1257 = vsel %vm329, %v1251, %v1253
      %v1258 = vsel %vm329, %v1253, %v1255
      %1262 = vrot.lane.b32.xlu0 %v1198, 108
      %v1263 = vpop.permute.xlu0 %1262
      %1264 = vrot.lane.b32.xlu0 %v1199, 108
      %v1265 = vpop.permute.xlu0 %1264
      %1266 = vrot.lane.b32.xlu0 %v1200, 108
      %v1267 = vpop.permute.xlu0 %1266
      %1268 = vrot.lane.b32.xlu0 %v1201, 108
      %v1269 = vpop.permute.xlu0 %1268
      %v1270 = vsel %vm344, %v1263, %v1265
      %v1271 = vsel %vm344, %v1265, %v1267
      %v1272 = vsel %vm344, %v1267, %v1269
      %1276 = vrot.lane.b32.xlu0 %v1198, 92
      %v1277 = vpop.permute.xlu0 %1276
      %1278 = vrot.lane.b32.xlu0 %v1199, 92
      %v1279 = vpop.permute.xlu0 %1278
      %1280 = vrot.lane.b32.xlu0 %v1200, 92
      %v1281 = vpop.permute.xlu0 %1280
      %1282 = vrot.lane.b32.xlu0 %v1201, 92
      %v1283 = vpop.permute.xlu0 %1282
      %v1284 = vsel %vm359, %v1277, %v1279
      %v1285 = vsel %vm359, %v1279, %v1281
      %v1286 = vsel %vm359, %v1281, %v1283
      %1290 = vrot.lane.b32.xlu0 %v1198, 91
      %v1291 = vpop.permute.xlu0 %1290
      %1292 = vrot.lane.b32.xlu0 %v1199, 91
      %v1293 = vpop.permute.xlu0 %1292
      %1294 = vrot.lane.b32.xlu0 %v1200, 91
      %v1295 = vpop.permute.xlu0 %1294
      %1296 = vrot.lane.b32.xlu0 %v1201, 91
      %v1297 = vpop.permute.xlu0 %1296
      %v1298 = vsel %vm374, %v1291, %v1293
      %v1299 = vsel %vm374, %v1293, %v1295
      %v1300 = vsel %vm374, %v1295, %v1297
      %1304 = vrot.lane.b32.xlu0 %v1198, 90
      %v1305 = vpop.permute.xlu0 %1304
      %1306 = vrot.lane.b32.xlu0 %v1199, 90
      %v1307 = vpop.permute.xlu0 %1306
      %1308 = vrot.lane.b32.xlu0 %v1200, 90
      %v1309 = vpop.permute.xlu0 %1308
      %1310 = vrot.lane.b32.xlu0 %v1201, 90
      %v1311 = vpop.permute.xlu0 %1310
      %v1312 = vsel %vm389, %v1305, %v1307
      %v1313 = vsel %vm389, %v1307, %v1309
      %v1314 = vsel %vm389, %v1309, %v1311
      %1319 = vset.pattern.permute.xlu0 0
      %1320 = vperm.xlu0 %1319, %v1197
      %v1321 = vpop.permute.xlu0 %1320
      %v1324 = vsel %vm401, %v1195, 0
      %1326 = vmatprep.subr.mxu0 %v1199
      %1327 = vmatpush1.msra.mxu0 %v1198
      %1328 = vmatprep.subr.mxu0 %v1215
      %1329 = vmatpush1.msra.mxu0 %v1214
      %1330 = vmatprep.subr.mxu0 %v1229
      %1331 = vmatpush1.msra.mxu0 %v1228
      %1332 = vmatprep.subr.mxu0 %v1243
      %1333 = vmatpush1.msra.mxu0 %v1242
      %1334 = vmatprep.subr.mxu0 %v1257
      %1335 = vmatpush1.msra.mxu0 %v1256
      %1336 = vmatprep.subr.mxu0 %v1271
      %1337 = vmatpush1.msra.mxu0 %v1270
      %1338 = vmatprep.subr.mxu0 %v1285
      %1339 = vmatpush1.msra.mxu0 %v1284
      %1340 = vmatprep.subr.mxu0 %v1299
      %1341 = vmatpush1.msra.mxu0 %v1298
      %1342 = vmatprep.subr.mxu0 %v1313
      %1343 = vmatpush1.msra.mxu0 %v1312
      %1344 = vmatprep.subr.mxu0 0.0
      %1345 = vmatpush1.msra.mxu0 0.0
      %1346 = vmatprep.subr.mxu0 0.0
      %1347 = vmatpush1.msra.mxu0 0.0
      %1348 = vmatprep.subr.mxu0 0.0
      %1349 = vmatpush1.msra.mxu0 0.0
      %1350 = vmatprep.subr.mxu0 0.0
      %1351 = vmatpush1.msra.mxu0 0.0
      %1352 = vmatprep.subr.mxu0 0.0
      %1353 = vmatpush1.msra.mxu0 0.0
      %1354 = vmatprep.subr.mxu0 0.0
      %1355 = vmatpush1.msra.mxu0 0.0
      %1356 = vmatprep.subr.mxu0 0.0
      %1357 = vmatpush1.msra.mxu0 0.0
      %1358 = vmatprep.subr.mxu0 0.0
      %1359 = vmatpush1.msra.mxu0 0.0
      %1360 = vmatprep.subr.mxu0 0.0
      %1361 = vmatpush1.msra.mxu0 0.0
      %1362 = vmatprep.subr.mxu0 0.0
      %1363 = vmatpush1.msra.mxu0 0.0
      %1364 = vmatprep.subr.mxu0 0.0
      %1365 = vmatpush1.msra.mxu0 0.0
      %1366 = vmatprep.subr.mxu0 0.0
      %1367 = vmatpush1.msra.mxu0 0.0
      %1368 = vmatprep.subr.mxu0 0.0
      %1369 = vmatpush1.msra.mxu0 0.0
      %1370 = vmatprep.subr.mxu0 0.0
      %1371 = vmatpush1.msra.mxu0 0.0
      %1372 = vmatprep.subr.mxu0 0.0
      %1373 = vmatpush1.msra.mxu0 0.0
      %1374 = vmatprep.subr.mxu0 0.0
      %1375 = vmatpush1.msra.mxu0 0.0
      %1376 = vmatprep.subr.mxu0 0.0
      %1377 = vmatpush1.msra.mxu0 0.0
      %1378 = vmatprep.subr.mxu0 0.0
      %1379 = vmatpush1.msra.mxu0 0.0
      %1380 = vmatprep.subr.mxu0 0.0
      %1381 = vmatpush1.msra.mxu0 0.0
      %1382 = vmatprep.subr.mxu0 0.0
      %1383 = vmatpush1.msra.mxu0 0.0
      %1384 = vmatprep.subr.mxu0 0.0
      %1385 = vmatpush1.msra.mxu0 0.0
      %1386 = vmatprep.subr.mxu0 0.0
      %1387 = vmatpush1.msra.mxu0 0.0
      %1388 = vmatprep.subr.mxu0 0.0
      %1389 = vmatpush1.msra.mxu0 0.0
      %1390 = vmatprep.mubr.f32.mxu0 0.0
      %1391 = vmatmul.mubr.f32.gmra.mrb[0].mxu0 %v1324
      %v1392 = vpop.f32.mrb[0].mxu0
      %v1393 = vadd.f32 %v1321, %v1392
      %v1394 = vpop.f32.mrb[0].mxu0
      %v1395 = vadd.f32 %v1321, %v1394
      %1396 = vdwg.mxu0
      %1397 = vmatprep.subr.mxu0 0.0
      %1398 = vmatpush1.msra.mxu0 %v1200
      %1399 = vmatprep.subr.mxu0 0.0
      %1400 = vmatpush1.msra.mxu0 %v1216
      %1401 = vmatprep.subr.mxu0 0.0
      %1402 = vmatpush1.msra.mxu0 %v1230
      %1403 = vmatprep.subr.mxu0 0.0
      %1404 = vmatpush1.msra.mxu0 %v1244
      %1405 = vmatprep.subr.mxu0 0.0
      %1406 = vmatpush1.msra.mxu0 %v1258
      %1407 = vmatprep.subr.mxu0 0.0
      %1408 = vmatpush1.msra.mxu0 %v1272
      %1409 = vmatprep.subr.mxu0 0.0
      %1410 = vmatpush1.msra.mxu0 %v1286
      %1411 = vmatprep.subr.mxu0 0.0
      %1412 = vmatpush1.msra.mxu0 %v1300
      %1413 = vmatprep.subr.mxu0 0.0
      %1414 = vmatpush1.msra.mxu0 %v1314
      %1415 = vmatprep.subr.mxu0 0.0
      %1416 = vmatpush1.msra.mxu0 0.0
      %1417 = vmatprep.subr.mxu0 0.0
      %1418 = vmatpush1.msra.mxu0 0.0
      %1419 = vmatprep.subr.mxu0 0.0
      %1420 = vmatpush1.msra.mxu0 0.0
      %1421 = vmatprep.subr.mxu0 0.0
      %1422 = vmatpush1.msra.mxu0 0.0
      %1423 = vmatprep.subr.mxu0 0.0
      %1424 = vmatpush1.msra.mxu0 0.0
      %1425 = vmatprep.subr.mxu0 0.0
      %1426 = vmatpush1.msra.mxu0 0.0
      %1427 = vmatprep.subr.mxu0 0.0
      %1428 = vmatpush1.msra.mxu0 0.0
      %1429 = vmatprep.subr.mxu0 0.0
      %1430 = vmatpush1.msra.mxu0 0.0
      %1431 = vmatprep.subr.mxu0 0.0
      %1432 = vmatpush1.msra.mxu0 0.0
      %1433 = vmatprep.subr.mxu0 0.0
      %1434 = vmatpush1.msra.mxu0 0.0
      %1435 = vmatprep.subr.mxu0 0.0
      %1436 = vmatpush1.msra.mxu0 0.0
      %1437 = vmatprep.subr.mxu0 0.0
      %1438 = vmatpush1.msra.mxu0 0.0
      %1439 = vmatprep.subr.mxu0 0.0
      %1440 = vmatpush1.msra.mxu0 0.0
      %1441 = vmatprep.subr.mxu0 0.0
      %1442 = vmatpush1.msra.mxu0 0.0
      %1443 = vmatprep.subr.mxu0 0.0
      %1444 = vmatpush1.msra.mxu0 0.0
      %1445 = vmatprep.subr.mxu0 0.0
      %1446 = vmatpush1.msra.mxu0 0.0
      %1447 = vmatprep.subr.mxu0 0.0
      %1448 = vmatpush1.msra.mxu0 0.0
      %1449 = vmatprep.subr.mxu0 0.0
      %1450 = vmatpush1.msra.mxu0 0.0
      %1451 = vmatprep.subr.mxu0 0.0
      %1452 = vmatpush1.msra.mxu0 0.0
      %1453 = vmatprep.subr.mxu0 0.0
      %1454 = vmatpush1.msra.mxu0 0.0
      %1455 = vmatprep.subr.mxu0 0.0
      %1456 = vmatpush1.msra.mxu0 0.0
      %1457 = vmatprep.subr.mxu0 0.0
      %1458 = vmatpush1.msra.mxu0 0.0
      %1459 = vmatprep.subr.mxu0 0.0
      %1460 = vmatpush1.msra.mxu0 0.0
      %1461 = vmatprep.mubr.f32.mxu0 0.0
      %1462 = vmatmul.mubr.f32.gmra.mrb[0].mxu0 %v1324
      %v1463 = vpop.f32.mrb[0].mxu0
      %v1464 = vadd.f32 %v1321, %v1463
      %v1465 = vpop.f32.mrb[0].mxu0
      %1466 = vdwg.mxu0
      %v1467 = vmax.f32 %v1393, 0.0
      %v1468 = vmax.f32 %v1395, 0.0
      %v1469 = vmax.f32 %v1464, 0.0
      %v1470 = vmul.f32 %v1467, %v550
      %v1471 = vmul.f32 %v1468, %v554
      %v1472 = vmul.f32 %v1469, %v558
      %1476 = vrot.lane.b32.xlu0 %v1470, 19
      %v1477 = vpop.permute.xlu0 %1476
      %1478 = vrot.lane.b32.xlu0 %v1471, 19
      %v1479 = vpop.permute.xlu0 %1478
      %1480 = vrot.lane.b32.xlu0 %v1472, 19
      %v1481 = vpop.permute.xlu0 %1480
      %v1482 = vsel %vm574, %v1477, %v1479
      %v1483 = vsel %vm574, %v1479, %v1481
      %1488 = vst.msk [vmem:[#allocation4] sm:$0xff] %vm581, %v1477
      %1489 = vst [vmem:[#allocation4 + $0x8] sm:$0xff] %v1482
      %1490 = vst [vmem:[#allocation4 + $0x10] sm:$0xff] %v1483
      %1491 = vst.msk [vmem:[#allocation4 + $0x18] sm:$0xff] %vm574, %v1481
      %s1492 = scalar_lea.vmem %s2, 32
      %v1493 = vld [vmem:[%s1492] sm:$0xff]
      %s1494 = scalar_lea.vmem %s3, 32
      %v1495 = vld [vmem:[%s1494] sm:$0xff]
      %v1496 = vld [vmem:[#allocation4] sm:$0xff]
      %v1497 = vld [vmem:[#allocation4 + $0x8] sm:$0xff]
      %v1498 = vld [vmem:[#allocation4 + $0x10] sm:$0xff]
      %v1499 = vld [vmem:[#allocation4 + $0x18] sm:$0xff]
      %1504 = vrot.lane.b32.xlu0 %v1496, 127
      %v1505 = vpop.permute.xlu0 %1504
      %1506 = vrot.lane.b32.xlu0 %v1497, 127
      %v1507 = vpop.permute.xlu0 %1506
      %1508 = vrot.lane.b32.xlu0 %v1498, 127
      %v1509 = vpop.permute.xlu0 %1508
      %1510 = vrot.lane.b32.xlu0 %v1499, 127
      %v1511 = vpop.permute.xlu0 %1510
      %v1512 = vsel %vm284, %v1505, %v1507
      %v1513 = vsel %vm284, %v1507, %v1509
      %v1514 = vsel %vm284, %v1509, %v1511
      %1518 = vrot.lane.b32.xlu0 %v1496, 126
      %v1519 = vpop.permute.xlu0 %1518
      %1520 = vrot.lane.b32.xlu0 %v1497, 126
      %v1521 = vpop.permute.xlu0 %1520
      %1522 = vrot.lane.b32.xlu0 %v1498, 126
      %v1523 = vpop.permute.xlu0 %1522
      %1524 = vrot.lane.b32.xlu0 %v1499, 126
      %v1525 = vpop.permute.xlu0 %1524
      %v1526 = vsel %vm299, %v1519, %v1521
      %v1527 = vsel %vm299, %v1521, %v1523
      %v1528 = vsel %vm299, %v1523, %v1525
      %1532 = vrot.lane.b32.xlu0 %v1496, 110
      %v1533 = vpop.permute.xlu0 %1532
      %1534 = vrot.lane.b32.xlu0 %v1497, 110
      %v1535 = vpop.permute.xlu0 %1534
      %1536 = vrot.lane.b32.xlu0 %v1498, 110
      %v1537 = vpop.permute.xlu0 %1536
      %1538 = vrot.lane.b32.xlu0 %v1499, 110
      %v1539 = vpop.permute.xlu0 %1538
      %v1540 = vsel %vm314, %v1533, %v1535
      %v1541 = vsel %vm314, %v1535, %v1537
      %v1542 = vsel %vm314, %v1537, %v1539
      %1546 = vrot.lane.b32.xlu0 %v1496, 109
      %v1547 = vpop.permute.xlu0 %1546
      %1548 = vrot.lane.b32.xlu0 %v1497, 109
      %v1549 = vpop.permute.xlu0 %1548
      %1550 = vrot.lane.b32.xlu0 %v1498, 109
      %v1551 = vpop.permute.xlu0 %1550
      %1552 = vrot.lane.b32.xlu0 %v1499, 109
      %v1553 = vpop.permute.xlu0 %1552
      %v1554 = vsel %vm329, %v1547, %v1549
      %v1555 = vsel %vm329, %v1549, %v1551
      %v1556 = vsel %vm329, %v1551, %v1553
      %1560 = vrot.lane.b32.xlu0 %v1496, 108
      %v1561 = vpop.permute.xlu0 %1560
      %1562 = vrot.lane.b32.xlu0 %v1497, 108
      %v1563 = vpop.permute.xlu0 %1562
      %1564 = vrot.lane.b32.xlu0 %v1498, 108
      %v1565 = vpop.permute.xlu0 %1564
      %1566 = vrot.lane.b32.xlu0 %v1499, 108
      %v1567 = vpop.permute.xlu0 %1566
      %v1568 = vsel %vm344, %v1561, %v1563
      %v1569 = vsel %vm344, %v1563, %v1565
      %v1570 = vsel %vm344, %v1565, %v1567
      %1574 = vrot.lane.b32.xlu0 %v1496, 92
      %v1575 = vpop.permute.xlu0 %1574
      %1576 = vrot.lane.b32.xlu0 %v1497, 92
      %v1577 = vpop.permute.xlu0 %1576
      %1578 = vrot.lane.b32.xlu0 %v1498, 92
      %v1579 = vpop.permute.xlu0 %1578
      %1580 = vrot.lane.b32.xlu0 %v1499, 92
      %v1581 = vpop.permute.xlu0 %1580
      %v1582 = vsel %vm359, %v1575, %v1577
      %v1583 = vsel %vm359, %v1577, %v1579
      %v1584 = vsel %vm359, %v1579, %v1581
      %1588 = vrot.lane.b32.xlu0 %v1496, 91
      %v1589 = vpop.permute.xlu0 %1588
      %1590 = vrot.lane.b32.xlu0 %v1497, 91
      %v1591 = vpop.permute.xlu0 %1590
      %1592 = vrot.lane.b32.xlu0 %v1498, 91
      %v1593 = vpop.permute.xlu0 %1592
      %1594 = vrot.lane.b32.xlu0 %v1499, 91
      %v1595 = vpop.permute.xlu0 %1594
      %v1596 = vsel %vm374, %v1589, %v1591
      %v1597 = vsel %vm374, %v1591, %v1593
      %v1598 = vsel %vm374, %v1593, %v1595
      %1602 = vrot.lane.b32.xlu0 %v1496, 90
      %v1603 = vpop.permute.xlu0 %1602
      %1604 = vrot.lane.b32.xlu0 %v1497, 90
      %v1605 = vpop.permute.xlu0 %1604
      %1606 = vrot.lane.b32.xlu0 %v1498, 90
      %v1607 = vpop.permute.xlu0 %1606
      %1608 = vrot.lane.b32.xlu0 %v1499, 90
      %v1609 = vpop.permute.xlu0 %1608
      %v1610 = vsel %vm389, %v1603, %v1605
      %v1611 = vsel %vm389, %v1605, %v1607
      %v1612 = vsel %vm389, %v1607, %v1609
      %1617 = vset.pattern.permute.xlu0 0
      %1618 = vperm.xlu0 %1617, %v1495
      %v1619 = vpop.permute.xlu0 %1618
      %v1622 = vsel %vm401, %v1493, 0
      %1624 = vmatprep.subr.mxu0 %v1497
      %1625 = vmatpush1.msra.mxu0 %v1496
      %1626 = vmatprep.subr.mxu0 %v1513
      %1627 = vmatpush1.msra.mxu0 %v1512
      %1628 = vmatprep.subr.mxu0 %v1527
      %1629 = vmatpush1.msra.mxu0 %v1526
      %1630 = vmatprep.subr.mxu0 %v1541
      %1631 = vmatpush1.msra.mxu0 %v1540
      %1632 = vmatprep.subr.mxu0 %v1555
      %1633 = vmatpush1.msra.mxu0 %v1554
      %1634 = vmatprep.subr.mxu0 %v1569
      %1635 = vmatpush1.msra.mxu0 %v1568
      %1636 = vmatprep.subr.mxu0 %v1583
      %1637 = vmatpush1.msra.mxu0 %v1582
      %1638 = vmatprep.subr.mxu0 %v1597
      %1639 = vmatpush1.msra.mxu0 %v1596
      %1640 = vmatprep.subr.mxu0 %v1611
      %1641 = vmatpush1.msra.mxu0 %v1610
      %1642 = vmatprep.subr.mxu0 0.0
      %1643 = vmatpush1.msra.mxu0 0.0
      %1644 = vmatprep.subr.mxu0 0.0
      %1645 = vmatpush1.msra.mxu0 0.0
      %1646 = vmatprep.subr.mxu0 0.0
      %1647 = vmatpush1.msra.mxu0 0.0
      %1648 = vmatprep.subr.mxu0 0.0
      %1649 = vmatpush1.msra.mxu0 0.0
      %1650 = vmatprep.subr.mxu0 0.0
      %1651 = vmatpush1.msra.mxu0 0.0
      %1652 = vmatprep.subr.mxu0 0.0
      %1653 = vmatpush1.msra.mxu0 0.0
      %1654 = vmatprep.subr.mxu0 0.0
      %1655 = vmatpush1.msra.mxu0 0.0
      %1656 = vmatprep.subr.mxu0 0.0
      %1657 = vmatpush1.msra.mxu0 0.0
      %1658 = vmatprep.subr.mxu0 0.0
      %1659 = vmatpush1.msra.mxu0 0.0
      %1660 = vmatprep.subr.mxu0 0.0
      %1661 = vmatpush1.msra.mxu0 0.0
      %1662 = vmatprep.subr.mxu0 0.0
      %1663 = vmatpush1.msra.mxu0 0.0
      %1664 = vmatprep.subr.mxu0 0.0
      %1665 = vmatpush1.msra.mxu0 0.0
      %1666 = vmatprep.subr.mxu0 0.0
      %1667 = vmatpush1.msra.mxu0 0.0
      %1668 = vmatprep.subr.mxu0 0.0
      %1669 = vmatpush1.msra.mxu0 0.0
      %1670 = vmatprep.subr.mxu0 0.0
      %1671 = vmatpush1.msra.mxu0 0.0
      %1672 = vmatprep.subr.mxu0 0.0
      %1673 = vmatpush1.msra.mxu0 0.0
      %1674 = vmatprep.subr.mxu0 0.0
      %1675 = vmatpush1.msra.mxu0 0.0
      %1676 = vmatprep.subr.mxu0 0.0
      %1677 = vmatpush1.msra.mxu0 0.0
      %1678 = vmatprep.subr.mxu0 0.0
      %1679 = vmatpush1.msra.mxu0 0.0
      %1680 = vmatprep.subr.mxu0 0.0
      %1681 = vmatpush1.msra.mxu0 0.0
      %1682 = vmatprep.subr.mxu0 0.0
      %1683 = vmatpush1.msra.mxu0 0.0
      %1684 = vmatprep.subr.mxu0 0.0
      %1685 = vmatpush1.msra.mxu0 0.0
      %1686 = vmatprep.subr.mxu0 0.0
      %1687 = vmatpush1.msra.mxu0 0.0
      %1688 = vmatprep.mubr.f32.mxu0 0.0
      %1689 = vmatmul.mubr.f32.gmra.mrb[0].mxu0 %v1622
      %v1690 = vpop.f32.mrb[0].mxu0
      %v1691 = vadd.f32 %v1619, %v1690
      %v1692 = vpop.f32.mrb[0].mxu0
      %v1693 = vadd.f32 %v1619, %v1692
      %1694 = vdwg.mxu0
      %1695 = vmatprep.subr.mxu0 0.0
      %1696 = vmatpush1.msra.mxu0 %v1498
      %1697 = vmatprep.subr.mxu0 0.0
      %1698 = vmatpush1.msra.mxu0 %v1514
      %1699 = vmatprep.subr.mxu0 0.0
      %1700 = vmatpush1.msra.mxu0 %v1528
      %1701 = vmatprep.subr.mxu0 0.0
      %1702 = vmatpush1.msra.mxu0 %v1542
      %1703 = vmatprep.subr.mxu0 0.0
      %1704 = vmatpush1.msra.mxu0 %v1556
      %1705 = vmatprep.subr.mxu0 0.0
      %1706 = vmatpush1.msra.mxu0 %v1570
      %1707 = vmatprep.subr.mxu0 0.0
      %1708 = vmatpush1.msra.mxu0 %v1584
      %1709 = vmatprep.subr.mxu0 0.0
      %1710 = vmatpush1.msra.mxu0 %v1598
      %1711 = vmatprep.subr.mxu0 0.0
      %1712 = vmatpush1.msra.mxu0 %v1612
      %1713 = vmatprep.subr.mxu0 0.0
      %1714 = vmatpush1.msra.mxu0 0.0
      %1715 = vmatprep.subr.mxu0 0.0
      %1716 = vmatpush1.msra.mxu0 0.0
      %1717 = vmatprep.subr.mxu0 0.0
      %1718 = vmatpush1.msra.mxu0 0.0
      %1719 = vmatprep.subr.mxu0 0.0
      %1720 = vmatpush1.msra.mxu0 0.0
      %1721 = vmatprep.subr.mxu0 0.0
      %1722 = vmatpush1.msra.mxu0 0.0
      %1723 = vmatprep.subr.mxu0 0.0
      %1724 = vmatpush1.msra.mxu0 0.0
      %1725 = vmatprep.subr.mxu0 0.0
      %1726 = vmatpush1.msra.mxu0 0.0
      %1727 = vmatprep.subr.mxu0 0.0
      %1728 = vmatpush1.msra.mxu0 0.0
      %1729 = vmatprep.subr.mxu0 0.0
      %1730 = vmatpush1.msra.mxu0 0.0
      %1731 = vmatprep.subr.mxu0 0.0
      %1732 = vmatpush1.msra.mxu0 0.0
      %1733 = vmatprep.subr.mxu0 0.0
      %1734 = vmatpush1.msra.mxu0 0.0
      %1735 = vmatprep.subr.mxu0 0.0
      %1736 = vmatpush1.msra.mxu0 0.0
      %1737 = vmatprep.subr.mxu0 0.0
      %1738 = vmatpush1.msra.mxu0 0.0
      %1739 = vmatprep.subr.mxu0 0.0
      %1740 = vmatpush1.msra.mxu0 0.0
      %1741 = vmatprep.subr.mxu0 0.0
      %1742 = vmatpush1.msra.mxu0 0.0
      %1743 = vmatprep.subr.mxu0 0.0
      %1744 = vmatpush1.msra.mxu0 0.0
      %1745 = vmatprep.subr.mxu0 0.0
      %1746 = vmatpush1.msra.mxu0 0.0
      %1747 = vmatprep.subr.mxu0 0.0
      %1748 = vmatpush1.msra.mxu0 0.0
      %1749 = vmatprep.subr.mxu0 0.0
      %1750 = vmatpush1.msra.mxu0 0.0
      %1751 = vmatprep.subr.mxu0 0.0
      %1752 = vmatpush1.msra.mxu0 0.0
      %1753 = vmatprep.subr.mxu0 0.0
      %1754 = vmatpush1.msra.mxu0 0.0
      %1755 = vmatprep.subr.mxu0 0.0
      %1756 = vmatpush1.msra.mxu0 0.0
      %1757 = vmatprep.subr.mxu0 0.0
      %1758 = vmatpush1.msra.mxu0 0.0
      %1759 = vmatprep.mubr.f32.mxu0 0.0
      %1760 = vmatmul.mubr.f32.gmra.mrb[0].mxu0 %v1622
      %v1761 = vpop.f32.mrb[0].mxu0
      %v1762 = vadd.f32 %v1619, %v1761
      %v1763 = vpop.f32.mrb[0].mxu0
      %1764 = vdwg.mxu0
      %v1765 = vmul.f32 %v1691, %v550
      %v1766 = vmul.f32 %v1693, %v554
      %v1767 = vmul.f32 %v1762, %v558
      %v1768 = vld [vmem:[#allocation3] sm:$0xff]
      %v1769 = vld [vmem:[#allocation3 + $0x8] sm:$0xff]
      %v1770 = vld [vmem:[#allocation3 + $0x10] sm:$0xff]
      %v1771 = vld [vmem:[#allocation3 + $0x18] sm:$0xff]
      %v1772 = vmul.f32 %v1765, 0.1
      %v1773 = vmul.f32 %v1766, 0.1
      %v1774 = vmul.f32 %v1767, 0.1
      %1778 = vrot.lane.b32.xlu0 %v1772, 19
      %v1779 = vpop.permute.xlu0 %1778
      %1780 = vrot.lane.b32.xlu0 %v1773, 19
      %v1781 = vpop.permute.xlu0 %1780
      %1782 = vrot.lane.b32.xlu0 %v1774, 19
      %v1783 = vpop.permute.xlu0 %1782
      %v1784 = vsel %vm574, %v1779, %v1781
      %v1785 = vsel %vm574, %v1781, %v1783
      %v1790 = vadd.f32 %v1768, %v1779
      %v1791 = vadd.f32 %v1769, %v1784
      %v1792 = vadd.f32 %v1770, %v1785
      %v1793 = vadd.f32 %v1771, %v1783
      %1794 = vst.msk [vmem:[#allocation3] sm:$0xff] %vm581, %v1790
      %1795 = vst [vmem:[#allocation3 + $0x8] sm:$0xff] %v1791
      %1796 = vst [vmem:[#allocation3 + $0x10] sm:$0xff] %v1792
      %1797 = vst.msk [vmem:[#allocation3 + $0x18] sm:$0xff] %vm574, %v1793
      %s1798 = scalar_lea.vmem %s2, 40
      %v1799 = vld [vmem:[%s1798] sm:$0xff]
      %s1800 = scalar_lea.vmem %s3, 40
      %v1801 = vld [vmem:[%s1800] sm:$0xff]
      %v1802 = vld [vmem:[#allocation3] sm:$0xff]
      %v1803 = vld [vmem:[#allocation3 + $0x8] sm:$0xff]
      %v1804 = vld [vmem:[#allocation3 + $0x10] sm:$0xff]
      %v1805 = vld [vmem:[#allocation3 + $0x18] sm:$0xff]
      %1810 = vrot.lane.b32.xlu0 %v1802, 127
      %v1811 = vpop.permute.xlu0 %1810
      %1812 = vrot.lane.b32.xlu0 %v1803, 127
      %v1813 = vpop.permute.xlu0 %1812
      %1814 = vrot.lane.b32.xlu0 %v1804, 127
      %v1815 = vpop.permute.xlu0 %1814
      %1816 = vrot.lane.b32.xlu0 %v1805, 127
      %v1817 = vpop.permute.xlu0 %1816
      %v1818 = vsel %vm284, %v1811, %v1813
      %v1819 = vsel %vm284, %v1813, %v1815
      %v1820 = vsel %vm284, %v1815, %v1817
      %1824 = vrot.lane.b32.xlu0 %v1802, 126
      %v1825 = vpop.permute.xlu0 %1824
      %1826 = vrot.lane.b32.xlu0 %v1803, 126
      %v1827 = vpop.permute.xlu0 %1826
      %1828 = vrot.lane.b32.xlu0 %v1804, 126
      %v1829 = vpop.permute.xlu0 %1828
      %1830 = vrot.lane.b32.xlu0 %v1805, 126
      %v1831 = vpop.permute.xlu0 %1830
      %v1832 = vsel %vm299, %v1825, %v1827
      %v1833 = vsel %vm299, %v1827, %v1829
      %v1834 = vsel %vm299, %v1829, %v1831
      %1838 = vrot.lane.b32.xlu0 %v1802, 110
      %v1839 = vpop.permute.xlu0 %1838
      %1840 = vrot.lane.b32.xlu0 %v1803, 110
      %v1841 = vpop.permute.xlu0 %1840
      %1842 = vrot.lane.b32.xlu0 %v1804, 110
      %v1843 = vpop.permute.xlu0 %1842
      %1844 = vrot.lane.b32.xlu0 %v1805, 110
      %v1845 = vpop.permute.xlu0 %1844
      %v1846 = vsel %vm314, %v1839, %v1841
      %v1847 = vsel %vm314, %v1841, %v1843
      %v1848 = vsel %vm314, %v1843, %v1845
      %1852 = vrot.lane.b32.xlu0 %v1802, 109
      %v1853 = vpop.permute.xlu0 %1852
      %1854 = vrot.lane.b32.xlu0 %v1803, 109
      %v1855 = vpop.permute.xlu0 %1854
      %1856 = vrot.lane.b32.xlu0 %v1804, 109
      %v1857 = vpop.permute.xlu0 %1856
      %1858 = vrot.lane.b32.xlu0 %v1805, 109
      %v1859 = vpop.permute.xlu0 %1858
      %v1860 = vsel %vm329, %v1853, %v1855
      %v1861 = vsel %vm329, %v1855, %v1857
      %v1862 = vsel %vm329, %v1857, %v1859
      %1866 = vrot.lane.b32.xlu0 %v1802, 108
      %v1867 = vpop.permute.xlu0 %1866
      %1868 = vrot.lane.b32.xlu0 %v1803, 108
      %v1869 = vpop.permute.xlu0 %1868
      %1870 = vrot.lane.b32.xlu0 %v1804, 108
      %v1871 = vpop.permute.xlu0 %1870
      %1872 = vrot.lane.b32.xlu0 %v1805, 108
      %v1873 = vpop.permute.xlu0 %1872
      %v1874 = vsel %vm344, %v1867, %v1869
      %v1875 = vsel %vm344, %v1869, %v1871
      %v1876 = vsel %vm344, %v1871, %v1873
      %1880 = vrot.lane.b32.xlu0 %v1802, 92
      %v1881 = vpop.permute.xlu0 %1880
      %1882 = vrot.lane.b32.xlu0 %v1803, 92
      %v1883 = vpop.permute.xlu0 %1882
      %1884 = vrot.lane.b32.xlu0 %v1804, 92
      %v1885 = vpop.permute.xlu0 %1884
      %1886 = vrot.lane.b32.xlu0 %v1805, 92
      %v1887 = vpop.permute.xlu0 %1886
      %v1888 = vsel %vm359, %v1881, %v1883
      %v1889 = vsel %vm359, %v1883, %v1885
      %v1890 = vsel %vm359, %v1885, %v1887
      %1894 = vrot.lane.b32.xlu0 %v1802, 91
      %v1895 = vpop.permute.xlu0 %1894
      %1896 = vrot.lane.b32.xlu0 %v1803, 91
      %v1897 = vpop.permute.xlu0 %1896
      %1898 = vrot.lane.b32.xlu0 %v1804, 91
      %v1899 = vpop.permute.xlu0 %1898
      %1900 = vrot.lane.b32.xlu0 %v1805, 91
      %v1901 = vpop.permute.xlu0 %1900
      %v1902 = vsel %vm374, %v1895, %v1897
      %v1903 = vsel %vm374, %v1897, %v1899
      %v1904 = vsel %vm374, %v1899, %v1901
      %1908 = vrot.lane.b32.xlu0 %v1802, 90
      %v1909 = vpop.permute.xlu0 %1908
      %1910 = vrot.lane.b32.xlu0 %v1803, 90
      %v1911 = vpop.permute.xlu0 %1910
      %1912 = vrot.lane.b32.xlu0 %v1804, 90
      %v1913 = vpop.permute.xlu0 %1912
      %1914 = vrot.lane.b32.xlu0 %v1805, 90
      %v1915 = vpop.permute.xlu0 %1914
      %v1916 = vsel %vm389, %v1909, %v1911
      %v1917 = vsel %vm389, %v1911, %v1913
      %v1918 = vsel %vm389, %v1913, %v1915
      %1923 = vset.pattern.permute.xlu0 0
      %1924 = vperm.xlu0 %1923, %v1801
      %v1925 = vpop.permute.xlu0 %1924
      %v1928 = vsel %vm401, %v1799, 0
      %1930 = vmatprep.subr.mxu0 %v1803
      %1931 = vmatpush1.msra.mxu0 %v1802
      %1932 = vmatprep.subr.mxu0 %v1819
      %1933 = vmatpush1.msra.mxu0 %v1818
      %1934 = vmatprep.subr.mxu0 %v1833
      %1935 = vmatpush1.msra.mxu0 %v1832
      %1936 = vmatprep.subr.mxu0 %v1847
      %1937 = vmatpush1.msra.mxu0 %v1846
      %1938 = vmatprep.subr.mxu0 %v1861
      %1939 = vmatpush1.msra.mxu0 %v1860
      %1940 = vmatprep.subr.mxu0 %v1875
      %1941 = vmatpush1.msra.mxu0 %v1874
      %1942 = vmatprep.subr.mxu0 %v1889
      %1943 = vmatpush1.msra.mxu0 %v1888
      %1944 = vmatprep.subr.mxu0 %v1903
      %1945 = vmatpush1.msra.mxu0 %v1902
      %1946 = vmatprep.subr.mxu0 %v1917
      %1947 = vmatpush1.msra.mxu0 %v1916
      %1948 = vmatprep.subr.mxu0 0.0
      %1949 = vmatpush1.msra.mxu0 0.0
      %1950 = vmatprep.subr.mxu0 0.0
      %1951 = vmatpush1.msra.mxu0 0.0
      %1952 = vmatprep.subr.mxu0 0.0
      %1953 = vmatpush1.msra.mxu0 0.0
      %1954 = vmatprep.subr.mxu0 0.0
      %1955 = vmatpush1.msra.mxu0 0.0
      %1956 = vmatprep.subr.mxu0 0.0
      %1957 = vmatpush1.msra.mxu0 0.0
      %1958 = vmatprep.subr.mxu0 0.0
      %1959 = vmatpush1.msra.mxu0 0.0
      %1960 = vmatprep.subr.mxu0 0.0
      %1961 = vmatpush1.msra.mxu0 0.0
      %1962 = vmatprep.subr.mxu0 0.0
      %1963 = vmatpush1.msra.mxu0 0.0
      %1964 = vmatprep.subr.mxu0 0.0
      %1965 = vmatpush1.msra.mxu0 0.0
      %1966 = vmatprep.subr.mxu0 0.0
      %1967 = vmatpush1.msra.mxu0 0.0
      %1968 = vmatprep.subr.mxu0 0.0
      %1969 = vmatpush1.msra.mxu0 0.0
      %1970 = vmatprep.subr.mxu0 0.0
      %1971 = vmatpush1.msra.mxu0 0.0
      %1972 = vmatprep.subr.mxu0 0.0
      %1973 = vmatpush1.msra.mxu0 0.0
      %1974 = vmatprep.subr.mxu0 0.0
      %1975 = vmatpush1.msra.mxu0 0.0
      %1976 = vmatprep.subr.mxu0 0.0
      %1977 = vmatpush1.msra.mxu0 0.0
      %1978 = vmatprep.subr.mxu0 0.0
      %1979 = vmatpush1.msra.mxu0 0.0
      %1980 = vmatprep.subr.mxu0 0.0
      %1981 = vmatpush1.msra.mxu0 0.0
      %1982 = vmatprep.subr.mxu0 0.0
      %1983 = vmatpush1.msra.mxu0 0.0
      %1984 = vmatprep.subr.mxu0 0.0
      %1985 = vmatpush1.msra.mxu0 0.0
      %1986 = vmatprep.subr.mxu0 0.0
      %1987 = vmatpush1.msra.mxu0 0.0
      %1988 = vmatprep.subr.mxu0 0.0
      %1989 = vmatpush1.msra.mxu0 0.0
      %1990 = vmatprep.subr.mxu0 0.0
      %1991 = vmatpush1.msra.mxu0 0.0
      %1992 = vmatprep.subr.mxu0 0.0
      %1993 = vmatpush1.msra.mxu0 0.0
      %1994 = vmatprep.mubr.f32.mxu0 0.0
      %1995 = vmatmul.mubr.f32.gmra.mrb[0].mxu0 %v1928
      %v1996 = vpop.f32.mrb[0].mxu0
      %v1997 = vadd.f32 %v1925, %v1996
      %v1998 = vpop.f32.mrb[0].mxu0
      %v1999 = vadd.f32 %v1925, %v1998
      %2000 = vdwg.mxu0
      %2001 = vmatprep.subr.mxu0 0.0
      %2002 = vmatpush1.msra.mxu0 %v1804
      %2003 = vmatprep.subr.mxu0 0.0
      %2004 = vmatpush1.msra.mxu0 %v1820
      %2005 = vmatprep.subr.mxu0 0.0
      %2006 = vmatpush1.msra.mxu0 %v1834
      %2007 = vmatprep.subr.mxu0 0.0
      %2008 = vmatpush1.msra.mxu0 %v1848
      %2009 = vmatprep.subr.mxu0 0.0
      %2010 = vmatpush1.msra.mxu0 %v1862
      %2011 = vmatprep.subr.mxu0 0.0
      %2012 = vmatpush1.msra.mxu0 %v1876
      %2013 = vmatprep.subr.mxu0 0.0
      %2014 = vmatpush1.msra.mxu0 %v1890
      %2015 = vmatprep.subr.mxu0 0.0
      %2016 = vmatpush1.msra.mxu0 %v1904
      %2017 = vmatprep.subr.mxu0 0.0
      %2018 = vmatpush1.msra.mxu0 %v1918
      %2019 = vmatprep.subr.mxu0 0.0
      %2020 = vmatpush1.msra.mxu0 0.0
      %2021 = vmatprep.subr.mxu0 0.0
      %2022 = vmatpush1.msra.mxu0 0.0
      %2023 = vmatprep.subr.mxu0 0.0
      %2024 = vmatpush1.msra.mxu0 0.0
      %2025 = vmatprep.subr.mxu0 0.0
      %2026 = vmatpush1.msra.mxu0 0.0
      %2027 = vmatprep.subr.mxu0 0.0
      %2028 = vmatpush1.msra.mxu0 0.0
      %2029 = vmatprep.subr.mxu0 0.0
      %2030 = vmatpush1.msra.mxu0 0.0
      %2031 = vmatprep.subr.mxu0 0.0
      %2032 = vmatpush1.msra.mxu0 0.0
      %2033 = vmatprep.subr.mxu0 0.0
      %2034 = vmatpush1.msra.mxu0 0.0
      %2035 = vmatprep.subr.mxu0 0.0
      %2036 = vmatpush1.msra.mxu0 0.0
      %2037 = vmatprep.subr.mxu0 0.0
      %2038 = vmatpush1.msra.mxu0 0.0
      %2039 = vmatprep.subr.mxu0 0.0
      %2040 = vmatpush1.msra.mxu0 0.0
      %2041 = vmatprep.subr.mxu0 0.0
      %2042 = vmatpush1.msra.mxu0 0.0
      %2043 = vmatprep.subr.mxu0 0.0
      %2044 = vmatpush1.msra.mxu0 0.0
      %2045 = vmatprep.subr.mxu0 0.0
      %2046 = vmatpush1.msra.mxu0 0.0
      %2047 = vmatprep.subr.mxu0 0.0
      %2048 = vmatpush1.msra.mxu0 0.0
      %2049 = vmatprep.subr.mxu0 0.0
      %2050 = vmatpush1.msra.mxu0 0.0
      %2051 = vmatprep.subr.mxu0 0.0
      %2052 = vmatpush1.msra.mxu0 0.0
      %2053 = vmatprep.subr.mxu0 0.0
      %2054 = vmatpush1.msra.mxu0 0.0
      %2055 = vmatprep.subr.mxu0 0.0
      %2056 = vmatpush1.msra.mxu0 0.0
      %2057 = vmatprep.subr.mxu0 0.0
      %2058 = vmatpush1.msra.mxu0 0.0
      %2059 = vmatprep.subr.mxu0 0.0
      %2060 = vmatpush1.msra.mxu0 0.0
      %2061 = vmatprep.subr.mxu0 0.0
      %2062 = vmatpush1.msra.mxu0 0.0
      %2063 = vmatprep.subr.mxu0 0.0
      %2064 = vmatpush1.msra.mxu0 0.0
      %2065 = vmatprep.mubr.f32.mxu0 0.0
      %2066 = vmatmul.mubr.f32.gmra.mrb[0].mxu0 %v1928
      %v2067 = vpop.f32.mrb[0].mxu0
      %v2068 = vadd.f32 %v1925, %v2067
      %v2069 = vpop.f32.mrb[0].mxu0
      %2070 = vdwg.mxu0
      %v2071 = vmul.f32 %v1997, %v550
      %v2072 = vmul.f32 %v1999, %v554
      %v2073 = vmul.f32 %v2068, %v558
      %v2074 = vld [vmem:[#allocation2] sm:$0xff]
      %v2075 = vld [vmem:[#allocation2 + $0x8] sm:$0xff]
      %v2076 = vld [vmem:[#allocation2 + $0x10] sm:$0xff]
      %v2077 = vld [vmem:[#allocation2 + $0x18] sm:$0xff]
      %2081 = vrot.lane.b32.xlu0 %v2071, 19
      %v2082 = vpop.permute.xlu0 %2081
      %2083 = vrot.lane.b32.xlu0 %v2072, 19
      %v2084 = vpop.permute.xlu0 %2083
      %2085 = vrot.lane.b32.xlu0 %v2073, 19
      %v2086 = vpop.permute.xlu0 %2085
      %v2087 = vsel %vm574, %v2082, %v2084
      %v2088 = vsel %vm574, %v2084, %v2086
      %v2093 = vadd.f32 %v2074, %v2082
      %v2094 = vadd.f32 %v2075, %v2087
      %v2095 = vadd.f32 %v2076, %v2088
      %v2096 = vadd.f32 %v2077, %v2086
      %2097 = vst.msk [vmem:[#allocation3] sm:$0xff] %vm581, %v2093
      %2098 = vst [vmem:[#allocation3 + $0x8] sm:$0xff] %v2094
      %2099 = vst [vmem:[#allocation3 + $0x10] sm:$0xff] %v2095
      %2100 = vst.msk [vmem:[#allocation3 + $0x18] sm:$0xff] %vm574, %v2096
      %v2101 = vld [vmem:[%s4] sm:$0xff]
      %v2102 = vld [vmem:[%s4 + $0x8] sm:$0xff]
      %v2103 = vld [vmem:[%s4 + $0x10] sm:$0xff]
      %v2104 = vld [vmem:[%s4 + $0x18] sm:$0xff]
      %v2105 = vld [vmem:[%s5] sm:$0xff]
      %v2106 = vld [vmem:[%s5 + $0x8] sm:$0xff]
      %v2107 = vld [vmem:[%s5 + $0x10] sm:$0xff]
      %v2108 = vld [vmem:[%s5 + $0x18] sm:$0xff]
      %v2109 = vld [vmem:[#allocation3] sm:$0xff]
      %v2110 = vld [vmem:[#allocation3 + $0x8] sm:$0xff]
      %v2111 = vld [vmem:[#allocation3 + $0x10] sm:$0xff]
      %v2112 = vld [vmem:[#allocation3 + $0x18] sm:$0xff]
      %2117 = vrot.lane.b32.xlu0 %v2109, 127
      %v2118 = vpop.permute.xlu0 %2117
      %2119 = vrot.lane.b32.xlu0 %v2110, 127
      %v2120 = vpop.permute.xlu0 %2119
      %2121 = vrot.lane.b32.xlu0 %v2111, 127
      %v2122 = vpop.permute.xlu0 %2121
      %2123 = vrot.lane.b32.xlu0 %v2112, 127
      %v2124 = vpop.permute.xlu0 %2123
      %v2125 = vsel %vm284, %v2118, %v2120
      %v2126 = vsel %vm284, %v2120, %v2122
      %v2127 = vsel %vm284, %v2122, %v2124
      %2131 = vrot.lane.b32.xlu0 %v2109, 126
      %v2132 = vpop.permute.xlu0 %2131
      %2133 = vrot.lane.b32.xlu0 %v2110, 126
      %v2134 = vpop.permute.xlu0 %2133
      %2135 = vrot.lane.b32.xlu0 %v2111, 126
      %v2136 = vpop.permute.xlu0 %2135
      %2137 = vrot.lane.b32.xlu0 %v2112, 126
      %v2138 = vpop.permute.xlu0 %2137
      %v2139 = vsel %vm299, %v2132, %v2134
      %v2140 = vsel %vm299, %v2134, %v2136
      %v2141 = vsel %vm299, %v2136, %v2138
      %2145 = vrot.lane.b32.xlu0 %v2109, 110
      %v2146 = vpop.permute.xlu0 %2145
      %2147 = vrot.lane.b32.xlu0 %v2110, 110
      %v2148 = vpop.permute.xlu0 %2147
      %2149 = vrot.lane.b32.xlu0 %v2111, 110
      %v2150 = vpop.permute.xlu0 %2149
      %2151 = vrot.lane.b32.xlu0 %v2112, 110
      %v2152 = vpop.permute.xlu0 %2151
      %v2153 = vsel %vm314, %v2146, %v2148
      %v2154 = vsel %vm314, %v2148, %v2150
      %v2155 = vsel %vm314, %v2150, %v2152
      %2159 = vrot.lane.b32.xlu0 %v2109, 109
      %v2160 = vpop.permute.xlu0 %2159
      %2161 = vrot.lane.b32.xlu0 %v2110, 109
      %v2162 = vpop.permute.xlu0 %2161
      %2163 = vrot.lane.b32.xlu0 %v2111, 109
      %v2164 = vpop.permute.xlu0 %2163
      %2165 = vrot.lane.b32.xlu0 %v2112, 109
      %v2166 = vpop.permute.xlu0 %2165
      %v2167 = vsel %vm329, %v2160, %v2162
      %v2168 = vsel %vm329, %v2162, %v2164
      %v2169 = vsel %vm329, %v2164, %v2166
      %2173 = vrot.lane.b32.xlu0 %v2109, 108
      %v2174 = vpop.permute.xlu0 %2173
      %2175 = vrot.lane.b32.xlu0 %v2110, 108
      %v2176 = vpop.permute.xlu0 %2175
      %2177 = vrot.lane.b32.xlu0 %v2111, 108
      %v2178 = vpop.permute.xlu0 %2177
      %2179 = vrot.lane.b32.xlu0 %v2112, 108
      %v2180 = vpop.permute.xlu0 %2179
      %v2181 = vsel %vm344, %v2174, %v2176
      %v2182 = vsel %vm344, %v2176, %v2178
      %v2183 = vsel %vm344, %v2178, %v2180
      %2187 = vrot.lane.b32.xlu0 %v2109, 92
      %v2188 = vpop.permute.xlu0 %2187
      %2189 = vrot.lane.b32.xlu0 %v2110, 92
      %v2190 = vpop.permute.xlu0 %2189
      %2191 = vrot.lane.b32.xlu0 %v2111, 92
      %v2192 = vpop.permute.xlu0 %2191
      %2193 = vrot.lane.b32.xlu0 %v2112, 92
      %v2194 = vpop.permute.xlu0 %2193
      %v2195 = vsel %vm359, %v2188, %v2190
      %v2196 = vsel %vm359, %v2190, %v2192
      %v2197 = vsel %vm359, %v2192, %v2194
      %2201 = vrot.lane.b32.xlu0 %v2109, 91
      %v2202 = vpop.permute.xlu0 %2201
      %2203 = vrot.lane.b32.xlu0 %v2110, 91
      %v2204 = vpop.permute.xlu0 %2203
      %2205 = vrot.lane.b32.xlu0 %v2111, 91
      %v2206 = vpop.permute.xlu0 %2205
      %2207 = vrot.lane.b32.xlu0 %v2112, 91
      %v2208 = vpop.permute.xlu0 %2207
      %v2209 = vsel %vm374, %v2202, %v2204
      %v2210 = vsel %vm374, %v2204, %v2206
      %v2211 = vsel %vm374, %v2206, %v2208
      %2215 = vrot.lane.b32.xlu0 %v2109, 90
      %v2216 = vpop.permute.xlu0 %2215
      %2217 = vrot.lane.b32.xlu0 %v2110, 90
      %v2218 = vpop.permute.xlu0 %2217
      %2219 = vrot.lane.b32.xlu0 %v2111, 90
      %v2220 = vpop.permute.xlu0 %2219
      %2221 = vrot.lane.b32.xlu0 %v2112, 90
      %v2222 = vpop.permute.xlu0 %2221
      %v2223 = vsel %vm389, %v2216, %v2218
      %v2224 = vsel %vm389, %v2218, %v2220
      %v2225 = vsel %vm389, %v2220, %v2222
      %2230 = vset.pattern.permute.xlu0 0
      %2231 = vperm.xlu0 %2230, %v2105
      %v2232 = vpop.permute.xlu0 %2231
      %2235 = vset.pattern.permute.xlu0 0
      %2236 = vperm.xlu0 %2235, %v2106
      %v2237 = vpop.permute.xlu0 %2236
      %2240 = vset.pattern.permute.xlu0 0
      %2241 = vperm.xlu0 %2240, %v2107
      %v2242 = vpop.permute.xlu0 %2241
      %2245 = vset.pattern.permute.xlu0 0
      %2246 = vperm.xlu0 %2245, %v2108
      %v2247 = vpop.permute.xlu0 %2246
      %v2250 = vsel %vm401, %v2101, 0
      %v2253 = vsel %vm401, %v2102, 0
      %v2256 = vsel %vm401, %v2103, 0
      %v2259 = vsel %vm401, %v2104, 0
      %2261 = vmatprep.subr.mxu0 %v2110
      %2262 = vmatpush1.msra.mxu0 %v2109
      %2263 = vmatprep.subr.mxu0 %v2126
      %2264 = vmatpush1.msra.mxu0 %v2125
      %2265 = vmatprep.subr.mxu0 %v2140
      %2266 = vmatpush1.msra.mxu0 %v2139
      %2267 = vmatprep.subr.mxu0 %v2154
      %2268 = vmatpush1.msra.mxu0 %v2153
      %2269 = vmatprep.subr.mxu0 %v2168
      %2270 = vmatpush1.msra.mxu0 %v2167
      %2271 = vmatprep.subr.mxu0 %v2182
      %2272 = vmatpush1.msra.mxu0 %v2181
      %2273 = vmatprep.subr.mxu0 %v2196
      %2274 = vmatpush1.msra.mxu0 %v2195
      %2275 = vmatprep.subr.mxu0 %v2210
      %2276 = vmatpush1.msra.mxu0 %v2209
      %2277 = vmatprep.subr.mxu0 %v2224
      %2278 = vmatpush1.msra.mxu0 %v2223
      %2279 = vmatprep.subr.mxu0 0.0
      %2280 = vmatpush1.msra.mxu0 0.0
      %2281 = vmatprep.subr.mxu0 0.0
      %2282 = vmatpush1.msra.mxu0 0.0
      %2283 = vmatprep.subr.mxu0 0.0
      %2284 = vmatpush1.msra.mxu0 0.0
      %2285 = vmatprep.subr.mxu0 0.0
      %2286 = vmatpush1.msra.mxu0 0.0
      %2287 = vmatprep.subr.mxu0 0.0
      %2288 = vmatpush1.msra.mxu0 0.0
      %2289 = vmatprep.subr.mxu0 0.0
      %2290 = vmatpush1.msra.mxu0 0.0
      %2291 = vmatprep.subr.mxu0 0.0
      %2292 = vmatpush1.msra.mxu0 0.0
      %2293 = vmatprep.subr.mxu0 0.0
      %2294 = vmatpush1.msra.mxu0 0.0
      %2295 = vmatprep.subr.mxu0 0.0
      %2296 = vmatpush1.msra.mxu0 0.0
      %2297 = vmatprep.subr.mxu0 0.0
      %2298 = vmatpush1.msra.mxu0 0.0
      %2299 = vmatprep.subr.mxu0 0.0
      %2300 = vmatpush1.msra.mxu0 0.0
      %2301 = vmatprep.subr.mxu0 0.0
      %2302 = vmatpush1.msra.mxu0 0.0
      %2303 = vmatprep.subr.mxu0 0.0
      %2304 = vmatpush1.msra.mxu0 0.0
      %2305 = vmatprep.subr.mxu0 0.0
      %2306 = vmatpush1.msra.mxu0 0.0
      %2307 = vmatprep.subr.mxu0 0.0
      %2308 = vmatpush1.msra.mxu0 0.0
      %2309 = vmatprep.subr.mxu0 0.0
      %2310 = vmatpush1.msra.mxu0 0.0
      %2311 = vmatprep.subr.mxu0 0.0
      %2312 = vmatpush1.msra.mxu0 0.0
      %2313 = vmatprep.subr.mxu0 0.0
      %2314 = vmatpush1.msra.mxu0 0.0
      %2315 = vmatprep.subr.mxu0 0.0
      %2316 = vmatpush1.msra.mxu0 0.0
      %2317 = vmatprep.subr.mxu0 0.0
      %2318 = vmatpush1.msra.mxu0 0.0
      %2319 = vmatprep.subr.mxu0 0.0
      %2320 = vmatpush1.msra.mxu0 0.0
      %2321 = vmatprep.subr.mxu0 0.0
      %2322 = vmatpush1.msra.mxu0 0.0
      %2323 = vmatprep.subr.mxu0 0.0
      %2324 = vmatpush1.msra.mxu0 0.0
      %2325 = vmatprep.mubr.f32.mxu0 0.0
      %2326 = vmatmul.mubr.f32.gmra.mrb[0].mxu0 %v2250
      %v2327 = vpop.f32.mrb[0].mxu0
      %v2328 = vadd.f32 %v2232, %v2327
      %v2329 = vpop.f32.mrb[0].mxu0
      %v2330 = vadd.f32 %v2232, %v2329
      %2331 = vmatprep.mubr.f32.mxu0 0.0
      %2332 = vmatmul.mubr.f32.gmra.mrb[0].mxu0 %v2253
      %v2333 = vpop.f32.mrb[0].mxu0
      %v2334 = vadd.f32 %v2237, %v2333
      %v2335 = vpop.f32.mrb[0].mxu0
      %v2336 = vadd.f32 %v2237, %v2335
      %2337 = vmatprep.mubr.f32.mxu0 0.0
      %2338 = vmatmul.mubr.f32.gmra.mrb[0].mxu0 %v2256
      %v2339 = vpop.f32.mrb[0].mxu0
      %v2340 = vadd.f32 %v2242, %v2339
      %v2341 = vpop.f32.mrb[0].mxu0
      %v2342 = vadd.f32 %v2242, %v2341
      %2343 = vmatprep.mubr.f32.mxu0 0.0
      %2344 = vmatmul.mubr.f32.gmra.mrb[0].mxu0 %v2259
      %v2345 = vpop.f32.mrb[0].mxu0
      %v2346 = vadd.f32 %v2247, %v2345
      %v2347 = vpop.f32.mrb[0].mxu0
      %v2348 = vadd.f32 %v2247, %v2347
      %2349 = vdwg.mxu0
      %2350 = vmatprep.subr.mxu0 0.0
      %2351 = vmatpush1.msra.mxu0 %v2111
      %2352 = vmatprep.subr.mxu0 0.0
      %2353 = vmatpush1.msra.mxu0 %v2127
      %2354 = vmatprep.subr.mxu0 0.0
      %2355 = vmatpush1.msra.mxu0 %v2141
      %2356 = vmatprep.subr.mxu0 0.0
      %2357 = vmatpush1.msra.mxu0 %v2155
      %2358 = vmatprep.subr.mxu0 0.0
      %2359 = vmatpush1.msra.mxu0 %v2169
      %2360 = vmatprep.subr.mxu0 0.0
      %2361 = vmatpush1.msra.mxu0 %v2183
      %2362 = vmatprep.subr.mxu0 0.0
      %2363 = vmatpush1.msra.mxu0 %v2197
      %2364 = vmatprep.subr.mxu0 0.0
      %2365 = vmatpush1.msra.mxu0 %v2211
      %2366 = vmatprep.subr.mxu0 0.0
      %2367 = vmatpush1.msra.mxu0 %v2225
      %2368 = vmatprep.subr.mxu0 0.0
      %2369 = vmatpush1.msra.mxu0 0.0
      %2370 = vmatprep.subr.mxu0 0.0
      %2371 = vmatpush1.msra.mxu0 0.0
      %2372 = vmatprep.subr.mxu0 0.0
      %2373 = vmatpush1.msra.mxu0 0.0
      %2374 = vmatprep.subr.mxu0 0.0
      %2375 = vmatpush1.msra.mxu0 0.0
      %2376 = vmatprep.subr.mxu0 0.0
      %2377 = vmatpush1.msra.mxu0 0.0
      %2378 = vmatprep.subr.mxu0 0.0
      %2379 = vmatpush1.msra.mxu0 0.0
      %2380 = vmatprep.subr.mxu0 0.0
      %2381 = vmatpush1.msra.mxu0 0.0
      %2382 = vmatprep.subr.mxu0 0.0
      %2383 = vmatpush1.msra.mxu0 0.0
      %2384 = vmatprep.subr.mxu0 0.0
      %2385 = vmatpush1.msra.mxu0 0.0
      %2386 = vmatprep.subr.mxu0 0.0
      %2387 = vmatpush1.msra.mxu0 0.0
      %2388 = vmatprep.subr.mxu0 0.0
      %2389 = vmatpush1.msra.mxu0 0.0
      %2390 = vmatprep.subr.mxu0 0.0
      %2391 = vmatpush1.msra.mxu0 0.0
      %2392 = vmatprep.subr.mxu0 0.0
      %2393 = vmatpush1.msra.mxu0 0.0
      %2394 = vmatprep.subr.mxu0 0.0
      %2395 = vmatpush1.msra.mxu0 0.0
      %2396 = vmatprep.subr.mxu0 0.0
      %2397 = vmatpush1.msra.mxu0 0.0
      %2398 = vmatprep.subr.mxu0 0.0
      %2399 = vmatpush1.msra.mxu0 0.0
      %2400 = vmatprep.subr.mxu0 0.0
      %2401 = vmatpush1.msra.mxu0 0.0
      %2402 = vmatprep.subr.mxu0 0.0
      %2403 = vmatpush1.msra.mxu0 0.0
      %2404 = vmatprep.subr.mxu0 0.0
      %2405 = vmatpush1.msra.mxu0 0.0
      %2406 = vmatprep.subr.mxu0 0.0
      %2407 = vmatpush1.msra.mxu0 0.0
      %2408 = vmatprep.subr.mxu0 0.0
      %2409 = vmatpush1.msra.mxu0 0.0
      %2410 = vmatprep.subr.mxu0 0.0
      %2411 = vmatpush1.msra.mxu0 0.0
      %2412 = vmatprep.subr.mxu0 0.0
      %2413 = vmatpush1.msra.mxu0 0.0
      %2414 = vmatprep.mubr.f32.mxu0 0.0
      %2415 = vmatmul.mubr.f32.gmra.mrb[0].mxu0 %v2250
      %v2416 = vpop.f32.mrb[0].mxu0
      %v2417 = vadd.f32 %v2232, %v2416
      %v2418 = vpop.f32.mrb[0].mxu0
      %2419 = vmatprep.mubr.f32.mxu0 0.0
      %2420 = vmatmul.mubr.f32.gmra.mrb[0].mxu0 %v2253
      %v2421 = vpop.f32.mrb[0].mxu0
      %v2422 = vadd.f32 %v2237, %v2421
      %v2423 = vpop.f32.mrb[0].mxu0
      %2424 = vmatprep.mubr.f32.mxu0 0.0
      %2425 = vmatmul.mubr.f32.gmra.mrb[0].mxu0 %v2256
      %v2426 = vpop.f32.mrb[0].mxu0
      %v2427 = vadd.f32 %v2242, %v2426
      %v2428 = vpop.f32.mrb[0].mxu0
      %2429 = vmatprep.mubr.f32.mxu0 0.0
      %2430 = vmatmul.mubr.f32.gmra.mrb[0].mxu0 %v2259
      %v2431 = vpop.f32.mrb[0].mxu0
      %v2432 = vadd.f32 %v2247, %v2431
      %v2433 = vpop.f32.mrb[0].mxu0
      %2434 = vdwg.mxu0
      %v2435 = vmul.f32 %v2328, %v550
      %v2436 = vmul.f32 %v2330, %v554
      %v2437 = vmul.f32 %v2417, %v558
      %v2438 = vmul.f32 %v2334, %v550
      %v2439 = vmul.f32 %v2336, %v554
      %v2440 = vmul.f32 %v2422, %v558
      %v2441 = vmul.f32 %v2340, %v550
      %v2442 = vmul.f32 %v2342, %v554
      %v2443 = vmul.f32 %v2427, %v558
      %v2444 = vmul.f32 %v2346, %v550
      %v2445 = vmul.f32 %v2348, %v554
      %v2446 = vmul.f32 %v2432, %v558
      %2447 = vst [vmem:[%s251] sm:$0xff] %v2435
      %2448 = vst [vmem:[%s251 + $0x8] sm:$0xff] %v2436
      %2449 = vst [vmem:[%s251 + $0x10] sm:$0xff] %v2437
      %2450 = vst [vmem:[%s251 + $0x18] sm:$0xff] %v2438
      %2451 = vst [vmem:[%s251 + $0x20] sm:$0xff] %v2439
      %2452 = vst [vmem:[%s251 + $0x28] sm:$0xff] %v2440
      %2453 = vst [vmem:[%s251 + $0x30] sm:$0xff] %v2441
      %2454 = vst [vmem:[%s251 + $0x38] sm:$0xff] %v2442
      %2455 = vst [vmem:[%s251 + $0x40] sm:$0xff] %v2443
      %2456 = vst [vmem:[%s251 + $0x48] sm:$0xff] %v2444
      %2457 = vst [vmem:[%s251 + $0x50] sm:$0xff] %v2445
      %2458 = vst [vmem:[%s251 + $0x58] sm:$0xff] %v2446
      %p2459 = scmp.lt.s32.totalorder %s17, 1
      %s2460 = scalar_select %p2459, %s17, 1
      %s2461 = smul.addr %s2460, 12
      %s2462 = smul.addr %s2461, 8
      %s2463 = scalar_lea.vmem %s6, %s2462
      // Predicated region
      $region45: #{forward_pallas.3} parent=43 // pred_check
        %p2464 = pneg %p166
      $region46: #{forward_pallas.3} parent=43 // pred_check_branch
        %2466 = sbr.rel (%p2464) target = $region48
      $region47: #{forward_pallas.3} parent=43 // pred_region
        _
      $region48: #{forward_pallas.3} parent=43 // pred_fallthru
        _
    $region44: #{forward_pallas.3} parent=5 // pred_fallthru
      _
    %p2467 = scmp.le.s32.totalorder 2, %s12
    // Predicated region
    $region49: #{forward_pallas.3} parent=5 // pred_check
      %p2468 = pneg %p2467
    $region50: #{forward_pallas.3} parent=5 // pred_check_branch
      %2470 = sbr.rel (%p2468) target = $region52
    $region51: #{forward_pallas.3} parent=5 // pred_region
      %s2471 = ssub.s32 %s12, 2
      // Predicated region
      $region53: #{forward_pallas.3} parent=51 // pred_check
        %p2472 = pneg %p172
      $region54: #{forward_pallas.3} parent=51 // pred_check_branch
        %2474 = sbr.rel (%p2472) target = $region56
      $region55: #{forward_pallas.3} parent=51 // pred_region
        %p2475 = scmp.lt.s32.totalorder %s18, 1
        %s2476 = scalar_select %p2475, %s18, 1
        %s2477 = smul.addr %s2476, 12
        %s2478 = smul.addr %s2477, 8
        %s2479 = scalar_lea.vmem %s6, %s2478
      $region56: #{forward_pallas.3} parent=51 // pred_fallthru
        _
    $region52: #{forward_pallas.3} parent=5 // pred_fallthru
      _
  $region6: #{forward_pallas.3} parent=0 // loop_footer
    %s16 = sadd.s32 1, %s12
  $region7: #{forward_pallas.3} parent=0 // loop_footer_branch
    %11 = sbr.rel target = $region3
  $region8: #{forward_pallas.3} parent=0 // loop_exit
    _

// kernel: forward_pallas.5
$region0: #{forward_pallas.5}
  #allocation0 [shape = 'u32[]', space=smem, size = 0x4, offset = 0x4, fixed_abs, tag = 'smem constant byte address 0x4 - core index']
  #allocation1 [shape = 'u32[144,128]{1,0:T(1,128)}', space=vmem, size = 0x12000, scoped, tag = 'internal scratch']
  #allocation2 [shape = 'f32[4,8,422]{2,1,0:T(8,128)}', space=vmem, size = 0x10000, scoped, tag = 'scratch operand']
  %s0 = inlined_call_operand.vmem [shape: f32[2,32,384], index: 0, kind: input, shape index: {}]
  %s1 = inlined_call_operand.vmem [shape: f32[4,4,384], index: 1, kind: input, shape index: {}]
  %s2 = inlined_call_operand.vmem [shape: f32[3,72], index: 2, kind: input, shape index: {}]
  %s3 = inlined_call_operand.vmem [shape: f32[3,1], index: 3, kind: input, shape index: {}]
  %s4 = inlined_call_operand.vmem [shape: f32[2,4,3,384], index: 4, kind: output, shape index: {}]
  %s5 = sld [smem:[#allocation0]]
  $region49: #{forward_pallas.5} parent=0
    _
  %s7 = ssub.s32 1, %s5
  %s8 = scalar_select 0, %s7, %s5
  loop: start=0, step=1, limit=4
  $region2: #{forward_pallas.5} parent=0 // loop_pre_header
    _
  $region3: #{forward_pallas.5} parent=0 // loop_header
    %s10 = sphi 0, %s14
    %p11 = scmp.ge.s32.totalorder %s10, 4
    %s20 = sphi 0, %s22
    %s23 = sphi 0, %s20
    %s24 = sphi 0, %s23
    %s40 = sphi 0, %s24
    %s44 = sphi 0, %s44
    %s46 = sphi 0, %s44
    %s47 = sphi 0, %s46
    %s61 = sphi 0, %s47
    %s65 = sphi 0, %s65
    %s67 = sphi 0, %s65
    %s68 = sphi 0, %s67
    %s82 = sphi 0, %s68
    %s86 = sphi 0, %s86
    %s88 = sphi 0, %s86
    %s89 = sphi 0, %s88
    %s103 = sphi 0, %s89
    %s109 = sphi 0, %s111
    %s112 = sphi 0, %s109
    %s113 = sphi 0, %s112
    %s129 = sphi 0, %s113
  $region4: #{forward_pallas.5} parent=0 // loop_header_branch
    %13 = sbr.rel (%p11) target = $region8
  $region5: #{forward_pallas.5} parent=0 // loop_body
    %s15 = ssub.s32 %s10, 1
    %s16 = ssub.s32 %s10, 2
    %s17 = sadd.s32 %s10, 1
    %s18 = ssub.s32 %s10, %s17
    %p19 = scmp.eq.s32.totalorder %s18, 0
    %s21 = sadd.s32 %s20, 1
    %s22 = scalar_select %p19, %s20, %s21
    %p25 = pneg %p19
    %p26 = scmp.eq.s32.totalorder %s10, 1
    %p27 = por %p25, %p26
    %p28 = scmp.ne.s32.totalorder %s20, %s23
    %p29 = scmp.eq.s32.totalorder %s10, 0
    %p30 = por %p28, %p29
    %p31 = scmp.ne.s32.totalorder %s20, %s23
    %p32 = scmp.eq.s32.totalorder %s15, 1
    %p33 = por %p31, %p32
    %p34 = scmp.ne.s32.totalorder %s23, %s24
    %p35 = scmp.eq.s32.totalorder %s15, 0
    %p36 = por %p34, %p35
    %p37 = scmp.ne.s32.totalorder %s23, %s24
    %p38 = scmp.eq.s32.totalorder %s16, 1
    %p39 = por %p37, %p38
    %p41 = scmp.ne.s32.totalorder %s24, %s40
    %p42 = scmp.eq.s32.totalorder %s16, 0
    %p43 = por %p41, %p42
    %s45 = sadd.s32 %s44, 1
    %p48 = scmp.eq.s32.totalorder %s10, 1
    %p49 = scmp.ne.s32.totalorder %s44, %s46
    %p50 = scmp.eq.s32.totalorder %s10, 0
    %p51 = por %p49, %p50
    %p52 = scmp.ne.s32.totalorder %s44, %s46
    %p53 = scmp.eq.s32.totalorder %s15, 1
    %p54 = por %p52, %p53
    %p55 = scmp.ne.s32.totalorder %s46, %s47
    %p56 = scmp.eq.s32.totalorder %s15, 0
    %p57 = por %p55, %p56
    %p58 = scmp.ne.s32.totalorder %s46, %s47
    %p59 = scmp.eq.s32.totalorder %s16, 1
    %p60 = por %p58, %p59
    %p62 = scmp.ne.s32.totalorder %s47, %s61
    %p63 = scmp.eq.s32.totalorder %s16, 0
    %p64 = por %p62, %p63
    %s66 = sadd.s32 %s65, 1
    %p69 = scmp.eq.s32.totalorder %s10, 1
    %p70 = scmp.ne.s32.totalorder %s65, %s67
    %p71 = scmp.eq.s32.totalorder %s10, 0
    %p72 = por %p70, %p71
    %p73 = scmp.ne.s32.totalorder %s65, %s67
    %p74 = scmp.eq.s32.totalorder %s15, 1
    %p75 = por %p73, %p74
    %p76 = scmp.ne.s32.totalorder %s67, %s68
    %p77 = scmp.eq.s32.totalorder %s15, 0
    %p78 = por %p76, %p77
    %p79 = scmp.ne.s32.totalorder %s67, %s68
    %p80 = scmp.eq.s32.totalorder %s16, 1
    %p81 = por %p79, %p80
    %p83 = scmp.ne.s32.totalorder %s68, %s82
    %p84 = scmp.eq.s32.totalorder %s16, 0
    %p85 = por %p83, %p84
    %s87 = sadd.s32 %s86, 1
    %p90 = scmp.eq.s32.totalorder %s10, 1
    %p91 = scmp.ne.s32.totalorder %s86, %s88
    %p92 = scmp.eq.s32.totalorder %s10, 0
    %p93 = por %p91, %p92
    %p94 = scmp.ne.s32.totalorder %s86, %s88
    %p95 = scmp.eq.s32.totalorder %s15, 1
    %p96 = por %p94, %p95
    %p97 = scmp.ne.s32.totalorder %s88, %s89
    %p98 = scmp.eq.s32.totalorder %s15, 0
    %p99 = por %p97, %p98
    %p100 = scmp.ne.s32.totalorder %s88, %s89
    %p101 = scmp.eq.s32.totalorder %s16, 1
    %p102 = por %p100, %p101
    %p104 = scmp.ne.s32.totalorder %s89, %s103
    %p105 = scmp.eq.s32.totalorder %s16, 0
    %p106 = por %p104, %p105
    %s107 = ssub.s32 %s10, %s17
    %p108 = scmp.eq.s32.totalorder %s107, 0
    %s110 = sadd.s32 %s109, 1
    %s111 = scalar_select %p108, %s109, %s110
    %p114 = pneg %p108
    %p115 = scmp.eq.s32.totalorder %s10, 1
    %p116 = por %p114, %p115
    %p117 = scmp.ne.s32.totalorder %s109, %s112
    %p118 = scmp.eq.s32.totalorder %s10, 0
    %p119 = por %p117, %p118
    %p120 = scmp.ne.s32.totalorder %s109, %s112
    %p121 = scmp.eq.s32.totalorder %s15, 1
    %p122 = por %p120, %p121
    %p123 = scmp.ne.s32.totalorder %s112, %s113
    %p124 = scmp.eq.s32.totalorder %s15, 0
    %p125 = por %p123, %p124
    %p126 = scmp.ne.s32.totalorder %s112, %s113
    %p127 = scmp.eq.s32.totalorder %s16, 1
    %p128 = por %p126, %p127
    %p130 = scmp.ne.s32.totalorder %s113, %s129
    %p131 = scmp.eq.s32.totalorder %s16, 0
    %p132 = por %p130, %p131
    %p133 = scmp.le.s32.totalorder 1, %s10
    %p134 = scmp.lt.s32.totalorder %s10, 3
    %p135 = pnand %p133, %p134
    %p136 = pneg %p135
    // Predicated region
    $region9: #{forward_pallas.5} parent=5 // pred_check
      _
    $region10: #{forward_pallas.5} parent=5 // pred_check_branch
      %138 = sbr.rel (%p135) target = $region12
    $region11: #{forward_pallas.5} parent=5 // pred_region
      %s139 = ssub.s32 %s10, 1
      // Predicated region
      $region13: #{forward_pallas.5} parent=11 // pred_check
        %p140 = pneg %p57
      $region14: #{forward_pallas.5} parent=11 // pred_check_branch
        %142 = sbr.rel (%p140) target = $region16
      $region15: #{forward_pallas.5} parent=11 // pred_region
        _
      $region16: #{forward_pallas.5} parent=11 // pred_fallthru
        _
      // Predicated region
      $region17: #{forward_pallas.5} parent=11 // pred_check
        %p143 = pneg %p78
      $region18: #{forward_pallas.5} parent=11 // pred_check_branch
        %145 = sbr.rel (%p143) target = $region20
      $region19: #{forward_pallas.5} parent=11 // pred_region
        _
      $region20: #{forward_pallas.5} parent=11 // pred_fallthru
        _
      // Predicated region
      $region21: #{forward_pallas.5} parent=11 // pred_check
        %p146 = pneg %p99
      $region22: #{forward_pallas.5} parent=11 // pred_check_branch
        %148 = sbr.rel (%p146) target = $region24
      $region23: #{forward_pallas.5} parent=11 // pred_region
        _
      $region24: #{forward_pallas.5} parent=11 // pred_fallthru
        _
    $region12: #{forward_pallas.5} parent=5 // pred_fallthru
      _
    %p149 = scmp.lt.s32.totalorder %s10, 2
    // Predicated region
    $region25: #{forward_pallas.5} parent=5 // pred_check
      %p150 = pneg %p149
    $region26: #{forward_pallas.5} parent=5 // pred_check_branch
      %152 = sbr.rel (%p150) target = $region28
    $region27: #{forward_pallas.5} parent=5 // pred_region
      // Predicated region
      $region29: #{forward_pallas.5} parent=27 // pred_check
        %p153 = pneg %p30
      $region30: #{forward_pallas.5} parent=27 // pred_check_branch
        %155 = sbr.rel (%p153) target = $region32
      $region31: #{forward_pallas.5} parent=27 // pred_region
        %p156 = scmp.lt.s32.totalorder %s10, 1
        %s157 = scalar_select %p156, %s10, 1
        %s158 = smul.addr %s157, 12
        %s159 = smul.addr %s158, 8
        %s160 = scalar_lea.vmem %s0, %s159
      $region32: #{forward_pallas.5} parent=27 // pred_fallthru
        _
    $region28: #{forward_pallas.5} parent=5 // pred_fallthru
      _
    %p161 = scmp.le.s32.totalorder 1, %s10
    %p162 = scmp.lt.s32.totalorder %s10, 3
    %p163 = pnand %p161, %p162
    %p164 = pneg %p163
    // Predicated region
    $region33: #{forward_pallas.5} parent=5 // pred_check
      _
    $region34: #{forward_pallas.5} parent=5 // pred_check_branch
      %166 = sbr.rel (%p163) target = $region36
    $region35: #{forward_pallas.5} parent=5 // pred_region
      %s167 = ssub.s32 %s10, 1
      %p168 = scmp.lt.s32.totalorder %s15, 1
      %s169 = scalar_select %p168, %s15, 1
      %s170 = smul.addr %s169, 12
      %s171 = smul.addr %s170, 8
      %s172 = scalar_lea.vmem %s0, %s171
      %p173 = pneg %p36
      %p174 = pneg %p33
      %p175 = pneg %p57
      %p176 = pneg %p54
      %p177 = pneg %p78
      %p178 = pneg %p75
      %p179 = pneg %p99
      %p180 = pneg %p96
      %p181 = pneg %p125
      %p182 = pneg %p122
      %p183 = scmp.lt.s32.totalorder %s15, 1
      %s184 = scalar_select %p183, %s15, 1
      %s185 = smul.addr %s184, 12
      %s186 = smul.addr %s185, 4
      %s187 = scalar_lea.vmem %s4, %s186
      %p188 = scmp.lt.s32.totalorder %s15, 1
      %s189 = scalar_select %p188, %s15, 1
      %s190 = smul.addr %s189, 12
      %s191 = smul.addr %s190, 8
      %s192 = scalar_lea.vmem %s0, %s191
      %p193 = scmp.lt.s32.totalorder %s15, 1
      %s194 = scalar_select %p193, %s15, 1
      %s195 = smul.addr %s194, 12
      %s196 = smul.addr %s195, 4
      %s197 = scalar_lea.vmem %s4, %s196
      %198 = vst [vmem:[#allocation2] sm:$0xff] 0.0
      %199 = vst [vmem:[#allocation2 + $0x8] sm:$0xff] 0.0
      %200 = vst [vmem:[#allocation2 + $0x10] sm:$0xff] 0.0
      %vm201 = vcmask 310272
      %202 = vst.msk [vmem:[#allocation2 + $0x18] sm:$0xff] %vm201, 0.0
      %203 = vst [vmem:[#allocation2 + $0x20] sm:$0xff] 0.0
      %204 = vst [vmem:[#allocation2 + $0x28] sm:$0xff] 0.0
      %205 = vst [vmem:[#allocation2 + $0x30] sm:$0xff] 0.0
      %206 = vst.msk [vmem:[#allocation2 + $0x38] sm:$0xff] %vm201, 0.0
      %207 = vst [vmem:[#allocation2 + $0x40] sm:$0xff] 0.0
      %208 = vst [vmem:[#allocation2 + $0x48] sm:$0xff] 0.0
      %209 = vst [vmem:[#allocation2 + $0x50] sm:$0xff] 0.0
      %210 = vst.msk [vmem:[#allocation2 + $0x58] sm:$0xff] %vm201, 0.0
      %211 = vst [vmem:[#allocation2 + $0x60] sm:$0xff] 0.0
      %212 = vst [vmem:[#allocation2 + $0x68] sm:$0xff] 0.0
      %213 = vst [vmem:[#allocation2 + $0x70] sm:$0xff] 0.0
      %214 = vst.msk [vmem:[#allocation2 + $0x78] sm:$0xff] %vm201, 0.0
      %v215 = vld [vmem:[%s192] sm:$0xff]
      %v216 = vld [vmem:[%s192 + $0x8] sm:$0xff]
      %v217 = vld [vmem:[%s192 + $0x10] sm:$0xff]
      %v218 = vld [vmem:[%s192 + $0x18] sm:$0xff]
      %v219 = vld [vmem:[%s192 + $0x20] sm:$0xff]
      %v220 = vld [vmem:[%s192 + $0x28] sm:$0xff]
      %v221 = vld [vmem:[%s192 + $0x30] sm:$0xff]
      %v222 = vld [vmem:[%s192 + $0x38] sm:$0xff]
      %v223 = vld [vmem:[%s192 + $0x40] sm:$0xff]
      %v224 = vld [vmem:[%s192 + $0x48] sm:$0xff]
      %v225 = vld [vmem:[%s192 + $0x50] sm:$0xff]
      %v226 = vld [vmem:[%s192 + $0x58] sm:$0xff]
      %v239 = vcombine.low %v215, %v216
      %v240 = vcombine.high %v215, %v216
      %v241 = vcombine.high %v217, %v217
      %v242 = vcombine.low %v218, %v219
      %v243 = vcombine.high %v218, %v219
      %v244 = vcombine.high %v220, %v220
      %v245 = vcombine.low %v221, %v222
      %v246 = vcombine.high %v221, %v222
      %v247 = vcombine.high %v223, %v223
      %v248 = vcombine.low %v224, %v225
      %v249 = vcombine.high %v224, %v225
      %v250 = vcombine.high %v226, %v226
      %v263 = vld [vmem:[%s1] sm:$0xff]
      %v264 = vld [vmem:[%s1 + $0x8] sm:$0xf]
      %v265 = vld [vmem:[%s1 + $0xc] sm:$0xff]
      %v266 = vld [vmem:[%s1 + $0x14] sm:$0xf]
      %v267 = vld [vmem:[%s1 + $0x18] sm:$0xff]
      %v268 = vld [vmem:[%s1 + $0x20] sm:$0xf]
      %v269 = vld [vmem:[%s1 + $0x24] sm:$0xff]
      %v270 = vld [vmem:[%s1 + $0x2c] sm:$0xf]
      %v271 = vld [vmem:[%s2] sm:$0x7]
      %v272 = vld [vmem:[%s3] sm:$0x7]
      %v275 = vlaneseq
      %v276 = vshrl.u32 %v275, 7
      %v277 = vsub.s32 0, %v276
      %v278 = vrot.slane %v263, %v277
      %v279 = vlaneseq
      %v280 = vshrl.u32 %v279, 7
      %v281 = vsub.s32 4, %v280
      %v282 = vrot.slane %v263, %v281
      %v283 = vlaneseq
      %v284 = vshrl.u32 %v283, 7
      %v285 = vsub.s32 0, %v284
      %v286 = vrot.slane %v264, %v285
      %v290 = vlaneseq
      %v291 = vshrl.u32 %v290, 7
      %v292 = vsub.s32 0, %v291
      %v293 = vrot.slane %v278, %v292
      %v294 = vlaneseq
      %v295 = vshrl.u32 %v294, 7
      %v296 = vsub.s32 0, %v295
      %v297 = vrot.slane %v282, %v296
      %v298 = vlaneseq
      %v299 = vshrl.u32 %v298, 7
      %v300 = vsub.s32 0, %v299
      %v301 = vrot.slane %v286, %v300
      %v305 = vcombine.low %v293, %v297
      %v306 = vcombine.high %v293, %v297
      %v307 = vcombine.high %v301, %v301
      %v308 = vrot.slane %v305, 1
      %v309 = vrot.slane %v301, 1
      %v310 = vrot.slane %v305, 2
      %v311 = vrot.slane %v301, 2
      %v312 = vrot.slane %v305, 3
      %v313 = vrot.slane %v301, 3
      %v314 = vrot.slane %v306, 1
      %v315 = vrot.slane %v307, 1
      %v316 = vrot.slane %v306, 2
      %v317 = vrot.slane %v307, 2
      %v318 = vrot.slane %v306, 3
      %v319 = vrot.slane %v307, 3
      %v336 = vmul.f32 %v239, %v305
      %v337 = vmul.f32 %v217, %v301
      %v338 = vmul.f32 %v240, %v308
      %v339 = vmul.f32 %v241, %v309
      %v340 = vmul.f32 %v242, %v310
      %v341 = vmul.f32 %v220, %v311
      %v342 = vmul.f32 %v243, %v312
      %v343 = vmul.f32 %v244, %v313
      %v344 = vmul.f32 %v245, %v306
      %v345 = vmul.f32 %v223, %v307
      %v346 = vmul.f32 %v246, %v314
      %v347 = vmul.f32 %v247, %v315
      %v348 = vmul.f32 %v248, %v316
      %v349 = vmul.f32 %v226, %v317
      %v350 = vmul.f32 %v249, %v318
      %v351 = vmul.f32 %v250, %v319
      %v352 = vlaneseq
      %v353 = vshrl.u32 %v352, 7
      %v354 = vsub.s32 1, %v353
      %v355 = vrot.slane %v263, %v354
      %v356 = vlaneseq
      %v357 = vshrl.u32 %v356, 7
      %v358 = vsub.s32 5, %v357
      %v359 = vrot.slane %v263, %v358
      %v360 = vlaneseq
      %v361 = vshrl.u32 %v360, 7
      %v362 = vsub.s32 1, %v361
      %v363 = vrot.slane %v264, %v362
      %v367 = vlaneseq
      %v368 = vshrl.u32 %v367, 7
      %v369 = vsub.s32 1, %v368
      %v370 = vrot.slane %v355, %v369
      %v371 = vlaneseq
      %v372 = vshrl.u32 %v371, 7
      %v373 = vsub.s32 1, %v372
      %v374 = vrot.slane %v359, %v373
      %v375 = vlaneseq
      %v376 = vshrl.u32 %v375, 7
      %v377 = vsub.s32 1, %v376
      %v378 = vrot.slane %v363, %v377
      %v382 = vcombine.low %v370, %v374
      %v383 = vcombine.high %v370, %v374
      %v384 = vcombine.high %v378, %v378
      %v385 = vrot.slane %v382, 7
      %v386 = vrot.slane %v378, 7
      %v387 = vrot.slane %v382, 1
      %v388 = vrot.slane %v378, 1
      %v389 = vrot.slane %v382, 2
      %v390 = vrot.slane %v378, 2
      %v391 = vrot.slane %v383, 7
      %v392 = vrot.slane %v384, 7
      %v393 = vrot.slane %v383, 1
      %v394 = vrot.slane %v384, 1
      %v395 = vrot.slane %v383, 2
      %v396 = vrot.slane %v384, 2
      %v413 = vmul.f32 %v239, %v385
      %v414 = vmul.f32 %v217, %v386
      %v415 = vmul.f32 %v240, %v382
      %v416 = vmul.f32 %v241, %v378
      %v417 = vmul.f32 %v242, %v387
      %v418 = vmul.f32 %v220, %v388
      %v419 = vmul.f32 %v243, %v389
      %v420 = vmul.f32 %v244, %v390
      %v421 = vmul.f32 %v245, %v391
      %v422 = vmul.f32 %v223, %v392
      %v423 = vmul.f32 %v246, %v383
      %v424 = vmul.f32 %v247, %v384
      %v425 = vmul.f32 %v248, %v393
      %v426 = vmul.f32 %v226, %v394
      %v427 = vmul.f32 %v249, %v395
      %v428 = vmul.f32 %v250, %v396
      %v445 = vrot.slane %v413, 5
      %v446 = vrot.slane %v445, 4
      %v447 = vrot.slane %v414, 5
      %v448 = vrot.slane %v447, 4
      %v449 = vrot.slane %v415, 5
      %v450 = vrot.slane %v449, 4
      %v451 = vrot.slane %v416, 5
      %v452 = vrot.slane %v451, 4
      %v453 = vrot.slane %v417, 5
      %v454 = vrot.slane %v453, 4
      %v455 = vrot.slane %v418, 5
      %v456 = vrot.slane %v455, 4
      %v457 = vrot.slane %v419, 5
      %v458 = vrot.slane %v457, 4
      %v459 = vrot.slane %v420, 5
      %v460 = vrot.slane %v459, 4
      %v461 = vrot.slane %v421, 5
      %v462 = vrot.slane %v461, 4
      %v463 = vrot.slane %v422, 5
      %v464 = vrot.slane %v463, 4
      %v465 = vrot.slane %v423, 5
      %v466 = vrot.slane %v465, 4
      %v467 = vrot.slane %v424, 5
      %v468 = vrot.slane %v467, 4
      %v469 = vrot.slane %v425, 5
      %v470 = vrot.slane %v469, 4
      %v471 = vrot.slane %v426, 5
      %v472 = vrot.slane %v471, 4
      %v473 = vrot.slane %v427, 5
      %v474 = vrot.slane %v473, 4
      %v475 = vrot.slane %v428, 5
      %v476 = vrot.slane %v475, 4
      %v493 = vadd.f32 %v336, %v446
      %v494 = vadd.f32 %v337, %v448
      %v495 = vadd.f32 %v338, %v450
      %v496 = vadd.f32 %v339, %v452
      %v497 = vadd.f32 %v340, %v454
      %v498 = vadd.f32 %v341, %v456
      %v499 = vadd.f32 %v342, %v458
      %v500 = vadd.f32 %v343, %v460
      %v501 = vadd.f32 %v344, %v462
      %v502 = vadd.f32 %v345, %v464
      %v503 = vadd.f32 %v346, %v466
      %v504 = vadd.f32 %v347, %v468
      %v505 = vadd.f32 %v348, %v470
      %v506 = vadd.f32 %v349, %v472
      %v507 = vadd.f32 %v350, %v474
      %v508 = vadd.f32 %v351, %v476
      %v509 = vlaneseq
      %v510 = vshrl.u32 %v509, 7
      %v511 = vsub.s32 2, %v510
      %v512 = vrot.slane %v263, %v511
      %v513 = vlaneseq
      %v514 = vshrl.u32 %v513, 7
      %v515 = vsub.s32 6, %v514
      %v516 = vrot.slane %v263, %v515
      %v517 = vlaneseq
      %v518 = vshrl.u32 %v517, 7
      %v519 = vsub.s32 2, %v518
      %v520 = vrot.slane %v264, %v519
      %v524 = vlaneseq
      %v525 = vshrl.u32 %v524, 7
      %v526 = vsub.s32 2, %v525
      %v527 = vrot.slane %v512, %v526
      %v528 = vlaneseq
      %v529 = vshrl.u32 %v528, 7
      %v530 = vsub.s32 2, %v529
      %v531 = vrot.slane %v516, %v530
      %v532 = vlaneseq
      %v533 = vshrl.u32 %v532, 7
      %v534 = vsub.s32 2, %v533
      %v535 = vrot.slane %v520, %v534
      %v539 = vcombine.low %v527, %v531
      %v540 = vcombine.high %v527, %v531
      %v541 = vcombine.high %v535, %v535
      %v542 = vrot.slane %v539, 6
      %v543 = vrot.slane %v535, 6
      %v544 = vrot.slane %v539, 7
      %v545 = vrot.slane %v535, 7
      %v546 = vrot.slane %v539, 1
      %v547 = vrot.slane %v535, 1
      %v548 = vrot.slane %v540, 6
      %v549 = vrot.slane %v541, 6
      %v550 = vrot.slane %v540, 7
      %v551 = vrot.slane %v541, 7
      %v552 = vrot.slane %v540, 1
      %v553 = vrot.slane %v541, 1
      %v570 = vmul.f32 %v239, %v542
      %v571 = vmul.f32 %v217, %v543
      %v572 = vmul.f32 %v240, %v544
      %v573 = vmul.f32 %v241, %v545
      %v574 = vmul.f32 %v242, %v539
      %v575 = vmul.f32 %v220, %v535
      %v576 = vmul.f32 %v243, %v546
      %v577 = vmul.f32 %v244, %v547
      %v578 = vmul.f32 %v245, %v548
      %v579 = vmul.f32 %v223, %v549
      %v580 = vmul.f32 %v246, %v550
      %v581 = vmul.f32 %v247, %v551
      %v582 = vmul.f32 %v248, %v540
      %v583 = vmul.f32 %v226, %v541
      %v584 = vmul.f32 %v249, %v552
      %v585 = vmul.f32 %v250, %v553
      %v602 = vrot.slane %v570, 6
      %v603 = vrot.slane %v602, 4
      %v604 = vrot.slane %v571, 6
      %v605 = vrot.slane %v604, 4
      %v606 = vrot.slane %v572, 6
      %v607 = vrot.slane %v606, 4
      %v608 = vrot.slane %v573, 6
      %v609 = vrot.slane %v608, 4
      %v610 = vrot.slane %v574, 6
      %v611 = vrot.slane %v610, 4
      %v612 = vrot.slane %v575, 6
      %v613 = vrot.slane %v612, 4
      %v614 = vrot.slane %v576, 6
      %v615 = vrot.slane %v614, 4
      %v616 = vrot.slane %v577, 6
      %v617 = vrot.slane %v616, 4
      %v618 = vrot.slane %v578, 6
      %v619 = vrot.slane %v618, 4
      %v620 = vrot.slane %v579, 6
      %v621 = vrot.slane %v620, 4
      %v622 = vrot.slane %v580, 6
      %v623 = vrot.slane %v622, 4
      %v624 = vrot.slane %v581, 6
      %v625 = vrot.slane %v624, 4
      %v626 = vrot.slane %v582, 6
      %v627 = vrot.slane %v626, 4
      %v628 = vrot.slane %v583, 6
      %v629 = vrot.slane %v628, 4
      %v630 = vrot.slane %v584, 6
      %v631 = vrot.slane %v630, 4
      %v632 = vrot.slane %v585, 6
      %v633 = vrot.slane %v632, 4
      %v650 = vadd.f32 %v493, %v603
      %v651 = vadd.f32 %v494, %v605
      %v652 = vadd.f32 %v495, %v607
      %v653 = vadd.f32 %v496, %v609
      %v654 = vadd.f32 %v497, %v611
      %v655 = vadd.f32 %v498, %v613
      %v656 = vadd.f32 %v499, %v615
      %v657 = vadd.f32 %v500, %v617
      %v658 = vadd.f32 %v501, %v619
      %v659 = vadd.f32 %v502, %v621
      %v660 = vadd.f32 %v503, %v623
      %v661 = vadd.f32 %v504, %v625
      %v662 = vadd.f32 %v505, %v627
      %v663 = vadd.f32 %v506, %v629
      %v664 = vadd.f32 %v507, %v631
      %v665 = vadd.f32 %v508, %v633
      %v666 = vlaneseq
      %v667 = vshrl.u32 %v666, 7
      %v668 = vsub.s32 3, %v667
      %v669 = vrot.slane %v263, %v668
      %v670 = vlaneseq
      %v671 = vshrl.u32 %v670, 7
      %v672 = vsub.s32 7, %v671
      %v673 = vrot.slane %v263, %v672
      %v674 = vlaneseq
      %v675 = vshrl.u32 %v674, 7
      %v676 = vsub.s32 3, %v675
      %v677 = vrot.slane %v264, %v676
      %v681 = vlaneseq
      %v682 = vshrl.u32 %v681, 7
      %v683 = vsub.s32 3, %v682
      %v684 = vrot.slane %v669, %v683
      %v685 = vlaneseq
      %v686 = vshrl.u32 %v685, 7
      %v687 = vsub.s32 3, %v686
      %v688 = vrot.slane %v673, %v687
      %v689 = vlaneseq
      %v690 = vshrl.u32 %v689, 7
      %v691 = vsub.s32 3, %v690
      %v692 = vrot.slane %v677, %v691
      %v696 = vcombine.low %v684, %v688
      %v697 = vcombine.high %v684, %v688
      %v698 = vcombine.high %v692, %v692
      %v699 = vrot.slane %v696, 5
      %v700 = vrot.slane %v692, 5
      %v701 = vrot.slane %v696, 6
      %v702 = vrot.slane %v692, 6
      %v703 = vrot.slane %v696, 7
      %v704 = vrot.slane %v692, 7
      %v705 = vrot.slane %v697, 5
      %v706 = vrot.slane %v698, 5
      %v707 = vrot.slane %v697, 6
      %v708 = vrot.slane %v698, 6
      %v709 = vrot.slane %v697, 7
      %v710 = vrot.slane %v698, 7
      %v727 = vmul.f32 %v239, %v699
      %v728 = vmul.f32 %v217, %v700
      %v729 = vmul.f32 %v240, %v701
      %v730 = vmul.f32 %v241, %v702
      %v731 = vmul.f32 %v242, %v703
      %v732 = vmul.f32 %v220, %v704
      %v733 = vmul.f32 %v243, %v696
      %v734 = vmul.f32 %v244, %v692
      %v735 = vmul.f32 %v245, %v705
      %v736 = vmul.f32 %v223, %v706
      %v737 = vmul.f32 %v246, %v707
      %v738 = vmul.f32 %v247, %v708
      %v739 = vmul.f32 %v248, %v709
      %v740 = vmul.f32 %v226, %v710
      %v741 = vmul.f32 %v249, %v697
      %v742 = vmul.f32 %v250, %v698
      %v759 = vrot.slane %v727, 7
      %v760 = vrot.slane %v759, 4
      %v761 = vrot.slane %v728, 7
      %v762 = vrot.slane %v761, 4
      %v763 = vrot.slane %v729, 7
      %v764 = vrot.slane %v763, 4
      %v765 = vrot.slane %v730, 7
      %v766 = vrot.slane %v765, 4
      %v767 = vrot.slane %v731, 7
      %v768 = vrot.slane %v767, 4
      %v769 = vrot.slane %v732, 7
      %v770 = vrot.slane %v769, 4
      %v771 = vrot.slane %v733, 7
      %v772 = vrot.slane %v771, 4
      %v773 = vrot.slane %v734, 7
      %v774 = vrot.slane %v773, 4
      %v775 = vrot.slane %v735, 7
      %v776 = vrot.slane %v775, 4
      %v777 = vrot.slane %v736, 7
      %v778 = vrot.slane %v777, 4
      %v779 = vrot.slane %v737, 7
      %v780 = vrot.slane %v779, 4
      %v781 = vrot.slane %v738, 7
      %v782 = vrot.slane %v781, 4
      %v783 = vrot.slane %v739, 7
      %v784 = vrot.slane %v783, 4
      %v785 = vrot.slane %v740, 7
      %v786 = vrot.slane %v785, 4
      %v787 = vrot.slane %v741, 7
      %v788 = vrot.slane %v787, 4
      %v789 = vrot.slane %v742, 7
      %v790 = vrot.slane %v789, 4
      %v807 = vadd.f32 %v650, %v760
      %v808 = vadd.f32 %v651, %v762
      %v809 = vadd.f32 %v652, %v764
      %v810 = vadd.f32 %v653, %v766
      %v811 = vadd.f32 %v654, %v768
      %v812 = vadd.f32 %v655, %v770
      %v813 = vadd.f32 %v656, %v772
      %v814 = vadd.f32 %v657, %v774
      %v815 = vadd.f32 %v658, %v776
      %v816 = vadd.f32 %v659, %v778
      %v817 = vadd.f32 %v660, %v780
      %v818 = vadd.f32 %v661, %v782
      %v819 = vadd.f32 %v662, %v784
      %v820 = vadd.f32 %v663, %v786
      %v821 = vadd.f32 %v664, %v788
      %v822 = vadd.f32 %v665, %v790
      %v839 = vlaneseq
      %v840 = vshrl.u32 %v839, 7
      %v841 = vsub.s32 0, %v840
      %v842 = vrot.slane %v807, %v841
      %v843 = vlaneseq
      %v844 = vshrl.u32 %v843, 7
      %v845 = vsub.s32 4, %v844
      %v846 = vrot.slane %v807, %v845
      %v847 = vlaneseq
      %v848 = vshrl.u32 %v847, 7
      %v849 = vsub.s32 0, %v848
      %v850 = vrot.slane %v808, %v849
      %v851 = vlaneseq
      %v852 = vshrl.u32 %v851, 7
      %v853 = vsub.s32 0, %v852
      %v854 = vrot.slane %v809, %v853
      %v855 = vlaneseq
      %v856 = vshrl.u32 %v855, 7
      %v857 = vsub.s32 4, %v856
      %v858 = vrot.slane %v809, %v857
      %v859 = vlaneseq
      %v860 = vshrl.u32 %v859, 7
      %v861 = vsub.s32 0, %v860
      %v862 = vrot.slane %v810, %v861
      %v863 = vlaneseq
      %v864 = vshrl.u32 %v863, 7
      %v865 = vsub.s32 0, %v864
      %v866 = vrot.slane %v811, %v865
      %v867 = vlaneseq
      %v868 = vshrl.u32 %v867, 7
      %v869 = vsub.s32 4, %v868
      %v870 = vrot.slane %v811, %v869
      %v871 = vlaneseq
      %v872 = vshrl.u32 %v871, 7
      %v873 = vsub.s32 0, %v872
      %v874 = vrot.slane %v812, %v873
      %v875 = vlaneseq
      %v876 = vshrl.u32 %v875, 7
      %v877 = vsub.s32 0, %v876
      %v878 = vrot.slane %v813, %v877
      %v879 = vlaneseq
      %v880 = vshrl.u32 %v879, 7
      %v881 = vsub.s32 4, %v880
      %v882 = vrot.slane %v813, %v881
      %v883 = vlaneseq
      %v884 = vshrl.u32 %v883, 7
      %v885 = vsub.s32 0, %v884
      %v886 = vrot.slane %v814, %v885
      %v887 = vlaneseq
      %v888 = vshrl.u32 %v887, 7
      %v889 = vsub.s32 0, %v888
      %v890 = vrot.slane %v815, %v889
      %v891 = vlaneseq
      %v892 = vshrl.u32 %v891, 7
      %v893 = vsub.s32 4, %v892
      %v894 = vrot.slane %v815, %v893
      %v895 = vlaneseq
      %v896 = vshrl.u32 %v895, 7
      %v897 = vsub.s32 0, %v896
      %v898 = vrot.slane %v816, %v897
      %v899 = vlaneseq
      %v900 = vshrl.u32 %v899, 7
      %v901 = vsub.s32 0, %v900
      %v902 = vrot.slane %v817, %v901
      %v903 = vlaneseq
      %v904 = vshrl.u32 %v903, 7
      %v905 = vsub.s32 4, %v904
      %v906 = vrot.slane %v817, %v905
      %v907 = vlaneseq
      %v908 = vshrl.u32 %v907, 7
      %v909 = vsub.s32 0, %v908
      %v910 = vrot.slane %v818, %v909
      %v911 = vlaneseq
      %v912 = vshrl.u32 %v911, 7
      %v913 = vsub.s32 0, %v912
      %v914 = vrot.slane %v819, %v913
      %v915 = vlaneseq
      %v916 = vshrl.u32 %v915, 7
      %v917 = vsub.s32 4, %v916
      %v918 = vrot.slane %v819, %v917
      %v919 = vlaneseq
      %v920 = vshrl.u32 %v919, 7
      %v921 = vsub.s32 0, %v920
      %v922 = vrot.slane %v820, %v921
      %v923 = vlaneseq
      %v924 = vshrl.u32 %v923, 7
      %v925 = vsub.s32 0, %v924
      %v926 = vrot.slane %v821, %v925
      %v927 = vlaneseq
      %v928 = vshrl.u32 %v927, 7
      %v929 = vsub.s32 4, %v928
      %v930 = vrot.slane %v821, %v929
      %v931 = vlaneseq
      %v932 = vshrl.u32 %v931, 7
      %v933 = vsub.s32 0, %v932
      %v934 = vrot.slane %v822, %v933
      %vm935 = vcmask 1041409
      %v936 = vsel %vm935, %v854, %v842
      %vm937 = vcmask 1042434
      %v938 = vsel %vm937, %v866, %v936
      %vm939 = vcmask 1043459
      %v940 = vsel %vm939, %v878, %v938
      %vm941 = vcmask 1044484
      %v942 = vsel %vm941, %v890, %v940
      %vm943 = vcmask 1045509
      %v944 = vsel %vm943, %v902, %v942
      %vm945 = vcmask 1046534
      %v946 = vsel %vm945, %v914, %v944
      %vm947 = vcmask 1047559
      %v948 = vsel %vm947, %v926, %v946
      %v949 = vsel %vm935, %v858, %v846
      %v950 = vsel %vm937, %v870, %v949
      %v951 = vsel %vm939, %v882, %v950
      %v952 = vsel %vm941, %v894, %v951
      %v953 = vsel %vm943, %v906, %v952
      %v954 = vsel %vm945, %v918, %v953
      %v955 = vsel %vm947, %v930, %v954
      %v956 = vsel %vm935, %v862, %v850
      %v957 = vsel %vm937, %v874, %v956
      %v958 = vsel %vm939, %v886, %v957
      %v959 = vsel %vm941, %v898, %v958
      %v960 = vsel %vm943, %v910, %v959
      %v961 = vsel %vm945, %v922, %v960
      %v962 = vsel %vm947, %v934, %v961
      %963 = vrot.lane.b32.xlu0 %v948, 19
      %v964 = vpop.permute.xlu0 %963
      %965 = vrot.lane.b32.xlu0 %v955, 19
      %v966 = vpop.permute.xlu0 %965
      %967 = vrot.lane.b32.xlu0 %v962, 19
      %v968 = vpop.permute.xlu0 %967
      %vm969 = vcmask 154624
      %v970 = vsel %vm969, %v964, %v966
      %v971 = vsel %vm969, %v966, %v968
      %vm976 = vcmask 1047704
      %977 = vst.msk [vmem:[#allocation2] sm:$0xff] %vm976, %v964
      %978 = vst [vmem:[#allocation2 + $0x8] sm:$0xff] %v970
      %979 = vst [vmem:[#allocation2 + $0x10] sm:$0xff] %v971
      %980 = vst.msk [vmem:[#allocation2 + $0x18] sm:$0xff] %vm969, %v968
      %v983 = vlaneseq
      %v984 = vshrl.u32 %v983, 7
      %v985 = vsub.s32 0, %v984
      %v986 = vrot.slane %v265, %v985
      %v987 = vlaneseq
      %v988 = vshrl.u32 %v987, 7
      %v989 = vsub.s32 4, %v988
      %v990 = vrot.slane %v265, %v989
      %v991 = vlaneseq
      %v992 = vshrl.u32 %v991, 7
      %v993 = vsub.s32 0, %v992
      %v994 = vrot.slane %v266, %v993
      %v998 = vlaneseq
      %v999 = vshrl.u32 %v998, 7
      %v1000 = vsub.s32 0, %v999
      %v1001 = vrot.slane %v986, %v1000
      %v1002 = vlaneseq
      %v1003 = vshrl.u32 %v1002, 7
      %v1004 = vsub.s32 0, %v1003
      %v1005 = vrot.slane %v990, %v1004
      %v1006 = vlaneseq
      %v1007 = vshrl.u32 %v1006, 7
      %v1008 = vsub.s32 0, %v1007
      %v1009 = vrot.slane %v994, %v1008
      %v1013 = vcombine.low %v1001, %v1005
      %v1014 = vcombine.high %v1001, %v1005
      %v1015 = vcombine.high %v1009, %v1009
      %v1016 = vrot.slane %v1013, 1
      %v1017 = vrot.slane %v1009, 1
      %v1018 = vrot.slane %v1013, 2
      %v1019 = vrot.slane %v1009, 2
      %v1020 = vrot.slane %v1013, 3
      %v1021 = vrot.slane %v1009, 3
      %v1022 = vrot.slane %v1014, 1
      %v1023 = vrot.slane %v1015, 1
      %v1024 = vrot.slane %v1014, 2
      %v1025 = vrot.slane %v1015, 2
      %v1026 = vrot.slane %v1014, 3
      %v1027 = vrot.slane %v1015, 3
      %v1044 = vmul.f32 %v239, %v1013
      %v1045 = vmul.f32 %v217, %v1009
      %v1046 = vmul.f32 %v240, %v1016
      %v1047 = vmul.f32 %v241, %v1017
      %v1048 = vmul.f32 %v242, %v1018
      %v1049 = vmul.f32 %v220, %v1019
      %v1050 = vmul.f32 %v243, %v1020
      %v1051 = vmul.f32 %v244, %v1021
      %v1052 = vmul.f32 %v245, %v1014
      %v1053 = vmul.f32 %v223, %v1015
      %v1054 = vmul.f32 %v246, %v1022
      %v1055 = vmul.f32 %v247, %v1023
      %v1056 = vmul.f32 %v248, %v1024
      %v1057 = vmul.f32 %v226, %v1025
      %v1058 = vmul.f32 %v249, %v1026
      %v1059 = vmul.f32 %v250, %v1027
      %v1060 = vlaneseq
      %v1061 = vshrl.u32 %v1060, 7
      %v1062 = vsub.s32 1, %v1061
      %v1063 = vrot.slane %v265, %v1062
      %v1064 = vlaneseq
      %v1065 = vshrl.u32 %v1064, 7
      %v1066 = vsub.s32 5, %v1065
      %v1067 = vrot.slane %v265, %v1066
      %v1068 = vlaneseq
      %v1069 = vshrl.u32 %v1068, 7
      %v1070 = vsub.s32 1, %v1069
      %v1071 = vrot.slane %v266, %v1070
      %v1075 = vlaneseq
      %v1076 = vshrl.u32 %v1075, 7
      %v1077 = vsub.s32 1, %v1076
      %v1078 = vrot.slane %v1063, %v1077
      %v1079 = vlaneseq
      %v1080 = vshrl.u32 %v1079, 7
      %v1081 = vsub.s32 1, %v1080
      %v1082 = vrot.slane %v1067, %v1081
      %v1083 = vlaneseq
      %v1084 = vshrl.u32 %v1083, 7
      %v1085 = vsub.s32 1, %v1084
      %v1086 = vrot.slane %v1071, %v1085
      %v1090 = vcombine.low %v1078, %v1082
      %v1091 = vcombine.high %v1078, %v1082
      %v1092 = vcombine.high %v1086, %v1086
      %v1093 = vrot.slane %v1090, 7
      %v1094 = vrot.slane %v1086, 7
      %v1095 = vrot.slane %v1090, 1
      %v1096 = vrot.slane %v1086, 1
      %v1097 = vrot.slane %v1090, 2
      %v1098 = vrot.slane %v1086, 2
      %v1099 = vrot.slane %v1091, 7
      %v1100 = vrot.slane %v1092, 7
      %v1101 = vrot.slane %v1091, 1
      %v1102 = vrot.slane %v1092, 1
      %v1103 = vrot.slane %v1091, 2
      %v1104 = vrot.slane %v1092, 2
      %v1121 = vmul.f32 %v239, %v1093
      %v1122 = vmul.f32 %v217, %v1094
      %v1123 = vmul.f32 %v240, %v1090
      %v1124 = vmul.f32 %v241, %v1086
      %v1125 = vmul.f32 %v242, %v1095
      %v1126 = vmul.f32 %v220, %v1096
      %v1127 = vmul.f32 %v243, %v1097
      %v1128 = vmul.f32 %v244, %v1098
      %v1129 = vmul.f32 %v245, %v1099
      %v1130 = vmul.f32 %v223, %v1100
      %v1131 = vmul.f32 %v246, %v1091
      %v1132 = vmul.f32 %v247, %v1092
      %v1133 = vmul.f32 %v248, %v1101
      %v1134 = vmul.f32 %v226, %v1102
      %v1135 = vmul.f32 %v249, %v1103
      %v1136 = vmul.f32 %v250, %v1104
      %v1153 = vrot.slane %v1121, 5
      %v1154 = vrot.slane %v1153, 4
      %v1155 = vrot.slane %v1122, 5
      %v1156 = vrot.slane %v1155, 4
      %v1157 = vrot.slane %v1123, 5
      %v1158 = vrot.slane %v1157, 4
      %v1159 = vrot.slane %v1124, 5
      %v1160 = vrot.slane %v1159, 4
      %v1161 = vrot.slane %v1125, 5
      %v1162 = vrot.slane %v1161, 4
      %v1163 = vrot.slane %v1126, 5
      %v1164 = vrot.slane %v1163, 4
      %v1165 = vrot.slane %v1127, 5
      %v1166 = vrot.slane %v1165, 4
      %v1167 = vrot.slane %v1128, 5
      %v1168 = vrot.slane %v1167, 4
      %v1169 = vrot.slane %v1129, 5
      %v1170 = vrot.slane %v1169, 4
      %v1171 = vrot.slane %v1130, 5
      %v1172 = vrot.slane %v1171, 4
      %v1173 = vrot.slane %v1131, 5
      %v1174 = vrot.slane %v1173, 4
      %v1175 = vrot.slane %v1132, 5
      %v1176 = vrot.slane %v1175, 4
      %v1177 = vrot.slane %v1133, 5
      %v1178 = vrot.slane %v1177, 4
      %v1179 = vrot.slane %v1134, 5
      %v1180 = vrot.slane %v1179, 4
      %v1181 = vrot.slane %v1135, 5
      %v1182 = vrot.slane %v1181, 4
      %v1183 = vrot.slane %v1136, 5
      %v1184 = vrot.slane %v1183, 4
      %v1201 = vadd.f32 %v1044, %v1154
      %v1202 = vadd.f32 %v1045, %v1156
      %v1203 = vadd.f32 %v1046, %v1158
      %v1204 = vadd.f32 %v1047, %v1160
      %v1205 = vadd.f32 %v1048, %v1162
      %v1206 = vadd.f32 %v1049, %v1164
      %v1207 = vadd.f32 %v1050, %v1166
      %v1208 = vadd.f32 %v1051, %v1168
      %v1209 = vadd.f32 %v1052, %v1170
      %v1210 = vadd.f32 %v1053, %v1172
      %v1211 = vadd.f32 %v1054, %v1174
      %v1212 = vadd.f32 %v1055, %v1176
      %v1213 = vadd.f32 %v1056, %v1178
      %v1214 = vadd.f32 %v1057, %v1180
      %v1215 = vadd.f32 %v1058, %v1182
      %v1216 = vadd.f32 %v1059, %v1184
      %v1217 = vlaneseq
      %v1218 = vshrl.u32 %v1217, 7
      %v1219 = vsub.s32 2, %v1218
      %v1220 = vrot.slane %v265, %v1219
      %v1221 = vlaneseq
      %v1222 = vshrl.u32 %v1221, 7
      %v1223 = vsub.s32 6, %v1222
      %v1224 = vrot.slane %v265, %v1223
      %v1225 = vlaneseq
      %v1226 = vshrl.u32 %v1225, 7
      %v1227 = vsub.s32 2, %v1226
      %v1228 = vrot.slane %v266, %v1227
      %v1232 = vlaneseq
      %v1233 = vshrl.u32 %v1232, 7
      %v1234 = vsub.s32 2, %v1233
      %v1235 = vrot.slane %v1220, %v1234
      %v1236 = vlaneseq
      %v1237 = vshrl.u32 %v1236, 7
      %v1238 = vsub.s32 2, %v1237
      %v1239 = vrot.slane %v1224, %v1238
      %v1240 = vlaneseq
      %v1241 = vshrl.u32 %v1240, 7
      %v1242 = vsub.s32 2, %v1241
      %v1243 = vrot.slane %v1228, %v1242
      %v1247 = vcombine.low %v1235, %v1239
      %v1248 = vcombine.high %v1235, %v1239
      %v1249 = vcombine.high %v1243, %v1243
      %v1250 = vrot.slane %v1247, 6
      %v1251 = vrot.slane %v1243, 6
      %v1252 = vrot.slane %v1247, 7
      %v1253 = vrot.slane %v1243, 7
      %v1254 = vrot.slane %v1247, 1
      %v1255 = vrot.slane %v1243, 1
      %v1256 = vrot.slane %v1248, 6
      %v1257 = vrot.slane %v1249, 6
      %v1258 = vrot.slane %v1248, 7
      %v1259 = vrot.slane %v1249, 7
      %v1260 = vrot.slane %v1248, 1
      %v1261 = vrot.slane %v1249, 1
      %v1278 = vmul.f32 %v239, %v1250
      %v1279 = vmul.f32 %v217, %v1251
      %v1280 = vmul.f32 %v240, %v1252
      %v1281 = vmul.f32 %v241, %v1253
      %v1282 = vmul.f32 %v242, %v1247
      %v1283 = vmul.f32 %v220, %v1243
      %v1284 = vmul.f32 %v243, %v1254
      %v1285 = vmul.f32 %v244, %v1255
      %v1286 = vmul.f32 %v245, %v1256
      %v1287 = vmul.f32 %v223, %v1257
      %v1288 = vmul.f32 %v246, %v1258
      %v1289 = vmul.f32 %v247, %v1259
      %v1290 = vmul.f32 %v248, %v1248
      %v1291 = vmul.f32 %v226, %v1249
      %v1292 = vmul.f32 %v249, %v1260
      %v1293 = vmul.f32 %v250, %v1261
      %v1310 = vrot.slane %v1278, 6
      %v1311 = vrot.slane %v1310, 4
      %v1312 = vrot.slane %v1279, 6
      %v1313 = vrot.slane %v1312, 4
      %v1314 = vrot.slane %v1280, 6
      %v1315 = vrot.slane %v1314, 4
      %v1316 = vrot.slane %v1281, 6
      %v1317 = vrot.slane %v1316, 4
      %v1318 = vrot.slane %v1282, 6
      %v1319 = vrot.slane %v1318, 4
      %v1320 = vrot.slane %v1283, 6
      %v1321 = vrot.slane %v1320, 4
      %v1322 = vrot.slane %v1284, 6
      %v1323 = vrot.slane %v1322, 4
      %v1324 = vrot.slane %v1285, 6
      %v1325 = vrot.slane %v1324, 4
      %v1326 = vrot.slane %v1286, 6
      %v1327 = vrot.slane %v1326, 4
      %v1328 = vrot.slane %v1287, 6
      %v1329 = vrot.slane %v1328, 4
      %v1330 = vrot.slane %v1288, 6
      %v1331 = vrot.slane %v1330, 4
      %v1332 = vrot.slane %v1289, 6
      %v1333 = vrot.slane %v1332, 4
      %v1334 = vrot.slane %v1290, 6
      %v1335 = vrot.slane %v1334, 4
      %v1336 = vrot.slane %v1291, 6
      %v1337 = vrot.slane %v1336, 4
      %v1338 = vrot.slane %v1292, 6
      %v1339 = vrot.slane %v1338, 4
      %v1340 = vrot.slane %v1293, 6
      %v1341 = vrot.slane %v1340, 4
      %v1358 = vadd.f32 %v1201, %v1311
      %v1359 = vadd.f32 %v1202, %v1313
      %v1360 = vadd.f32 %v1203, %v1315
      %v1361 = vadd.f32 %v1204, %v1317
      %v1362 = vadd.f32 %v1205, %v1319
      %v1363 = vadd.f32 %v1206, %v1321
      %v1364 = vadd.f32 %v1207, %v1323
      %v1365 = vadd.f32 %v1208, %v1325
      %v1366 = vadd.f32 %v1209, %v1327
      %v1367 = vadd.f32 %v1210, %v1329
      %v1368 = vadd.f32 %v1211, %v1331
      %v1369 = vadd.f32 %v1212, %v1333
      %v1370 = vadd.f32 %v1213, %v1335
      %v1371 = vadd.f32 %v1214, %v1337
      %v1372 = vadd.f32 %v1215, %v1339
      %v1373 = vadd.f32 %v1216, %v1341
      %v1374 = vlaneseq
      %v1375 = vshrl.u32 %v1374, 7
      %v1376 = vsub.s32 3, %v1375
      %v1377 = vrot.slane %v265, %v1376
      %v1378 = vlaneseq
      %v1379 = vshrl.u32 %v1378, 7
      %v1380 = vsub.s32 7, %v1379
      %v1381 = vrot.slane %v265, %v1380
      %v1382 = vlaneseq
      %v1383 = vshrl.u32 %v1382, 7
      %v1384 = vsub.s32 3, %v1383
      %v1385 = vrot.slane %v266, %v1384
      %v1389 = vlaneseq
      %v1390 = vshrl.u32 %v1389, 7
      %v1391 = vsub.s32 3, %v1390
      %v1392 = vrot.slane %v1377, %v1391
      %v1393 = vlaneseq
      %v1394 = vshrl.u32 %v1393, 7
      %v1395 = vsub.s32 3, %v1394
      %v1396 = vrot.slane %v1381, %v1395
      %v1397 = vlaneseq
      %v1398 = vshrl.u32 %v1397, 7
      %v1399 = vsub.s32 3, %v1398
      %v1400 = vrot.slane %v1385, %v1399
      %v1404 = vcombine.low %v1392, %v1396
      %v1405 = vcombine.high %v1392, %v1396
      %v1406 = vcombine.high %v1400, %v1400
      %v1407 = vrot.slane %v1404, 5
      %v1408 = vrot.slane %v1400, 5
      %v1409 = vrot.slane %v1404, 6
      %v1410 = vrot.slane %v1400, 6
      %v1411 = vrot.slane %v1404, 7
      %v1412 = vrot.slane %v1400, 7
      %v1413 = vrot.slane %v1405, 5
      %v1414 = vrot.slane %v1406, 5
      %v1415 = vrot.slane %v1405, 6
      %v1416 = vrot.slane %v1406, 6
      %v1417 = vrot.slane %v1405, 7
      %v1418 = vrot.slane %v1406, 7
      %v1435 = vmul.f32 %v239, %v1407
      %v1436 = vmul.f32 %v217, %v1408
      %v1437 = vmul.f32 %v240, %v1409
      %v1438 = vmul.f32 %v241, %v1410
      %v1439 = vmul.f32 %v242, %v1411
      %v1440 = vmul.f32 %v220, %v1412
      %v1441 = vmul.f32 %v243, %v1404
      %v1442 = vmul.f32 %v244, %v1400
      %v1443 = vmul.f32 %v245, %v1413
      %v1444 = vmul.f32 %v223, %v1414
      %v1445 = vmul.f32 %v246, %v1415
      %v1446 = vmul.f32 %v247, %v1416
      %v1447 = vmul.f32 %v248, %v1417
      %v1448 = vmul.f32 %v226, %v1418
      %v1449 = vmul.f32 %v249, %v1405
      %v1450 = vmul.f32 %v250, %v1406
      %v1467 = vrot.slane %v1435, 7
      %v1468 = vrot.slane %v1467, 4
      %v1469 = vrot.slane %v1436, 7
      %v1470 = vrot.slane %v1469, 4
      %v1471 = vrot.slane %v1437, 7
      %v1472 = vrot.slane %v1471, 4
      %v1473 = vrot.slane %v1438, 7
      %v1474 = vrot.slane %v1473, 4
      %v1475 = vrot.slane %v1439, 7
      %v1476 = vrot.slane %v1475, 4
      %v1477 = vrot.slane %v1440, 7
      %v1478 = vrot.slane %v1477, 4
      %v1479 = vrot.slane %v1441, 7
      %v1480 = vrot.slane %v1479, 4
      %v1481 = vrot.slane %v1442, 7
      %v1482 = vrot.slane %v1481, 4
      %v1483 = vrot.slane %v1443, 7
      %v1484 = vrot.slane %v1483, 4
      %v1485 = vrot.slane %v1444, 7
      %v1486 = vrot.slane %v1485, 4
      %v1487 = vrot.slane %v1445, 7
      %v1488 = vrot.slane %v1487, 4
      %v1489 = vrot.slane %v1446, 7
      %v1490 = vrot.slane %v1489, 4
      %v1491 = vrot.slane %v1447, 7
      %v1492 = vrot.slane %v1491, 4
      %v1493 = vrot.slane %v1448, 7
      %v1494 = vrot.slane %v1493, 4
      %v1495 = vrot.slane %v1449, 7
      %v1496 = vrot.slane %v1495, 4
      %v1497 = vrot.slane %v1450, 7
      %v1498 = vrot.slane %v1497, 4
      %v1515 = vadd.f32 %v1358, %v1468
      %v1516 = vadd.f32 %v1359, %v1470
      %v1517 = vadd.f32 %v1360, %v1472
      %v1518 = vadd.f32 %v1361, %v1474
      %v1519 = vadd.f32 %v1362, %v1476
      %v1520 = vadd.f32 %v1363, %v1478
      %v1521 = vadd.f32 %v1364, %v1480
      %v1522 = vadd.f32 %v1365, %v1482
      %v1523 = vadd.f32 %v1366, %v1484
      %v1524 = vadd.f32 %v1367, %v1486
      %v1525 = vadd.f32 %v1368, %v1488
      %v1526 = vadd.f32 %v1369, %v1490
      %v1527 = vadd.f32 %v1370, %v1492
      %v1528 = vadd.f32 %v1371, %v1494
      %v1529 = vadd.f32 %v1372, %v1496
      %v1530 = vadd.f32 %v1373, %v1498
      %v1547 = vlaneseq
      %v1548 = vshrl.u32 %v1547, 7
      %v1549 = vsub.s32 0, %v1548
      %v1550 = vrot.slane %v1515, %v1549
      %v1551 = vlaneseq
      %v1552 = vshrl.u32 %v1551, 7
      %v1553 = vsub.s32 4, %v1552
      %v1554 = vrot.slane %v1515, %v1553
      %v1555 = vlaneseq
      %v1556 = vshrl.u32 %v1555, 7
      %v1557 = vsub.s32 0, %v1556
      %v1558 = vrot.slane %v1516, %v1557
      %v1559 = vlaneseq
      %v1560 = vshrl.u32 %v1559, 7
      %v1561 = vsub.s32 0, %v1560
      %v1562 = vrot.slane %v1517, %v1561
      %v1563 = vlaneseq
      %v1564 = vshrl.u32 %v1563, 7
      %v1565 = vsub.s32 4, %v1564
      %v1566 = vrot.slane %v1517, %v1565
      %v1567 = vlaneseq
      %v1568 = vshrl.u32 %v1567, 7
      %v1569 = vsub.s32 0, %v1568
      %v1570 = vrot.slane %v1518, %v1569
      %v1571 = vlaneseq
      %v1572 = vshrl.u32 %v1571, 7
      %v1573 = vsub.s32 0, %v1572
      %v1574 = vrot.slane %v1519, %v1573
      %v1575 = vlaneseq
      %v1576 = vshrl.u32 %v1575, 7
      %v1577 = vsub.s32 4, %v1576
      %v1578 = vrot.slane %v1519, %v1577
      %v1579 = vlaneseq
      %v1580 = vshrl.u32 %v1579, 7
      %v1581 = vsub.s32 0, %v1580
      %v1582 = vrot.slane %v1520, %v1581
      %v1583 = vlaneseq
      %v1584 = vshrl.u32 %v1583, 7
      %v1585 = vsub.s32 0, %v1584
      %v1586 = vrot.slane %v1521, %v1585
      %v1587 = vlaneseq
      %v1588 = vshrl.u32 %v1587, 7
      %v1589 = vsub.s32 4, %v1588
      %v1590 = vrot.slane %v1521, %v1589
      %v1591 = vlaneseq
      %v1592 = vshrl.u32 %v1591, 7
      %v1593 = vsub.s32 0, %v1592
      %v1594 = vrot.slane %v1522, %v1593
      %v1595 = vlaneseq
      %v1596 = vshrl.u32 %v1595, 7
      %v1597 = vsub.s32 0, %v1596
      %v1598 = vrot.slane %v1523, %v1597
      %v1599 = vlaneseq
      %v1600 = vshrl.u32 %v1599, 7
      %v1601 = vsub.s32 4, %v1600
      %v1602 = vrot.slane %v1523, %v1601
      %v1603 = vlaneseq
      %v1604 = vshrl.u32 %v1603, 7
      %v1605 = vsub.s32 0, %v1604
      %v1606 = vrot.slane %v1524, %v1605
      %v1607 = vlaneseq
      %v1608 = vshrl.u32 %v1607, 7
      %v1609 = vsub.s32 0, %v1608
      %v1610 = vrot.slane %v1525, %v1609
      %v1611 = vlaneseq
      %v1612 = vshrl.u32 %v1611, 7
      %v1613 = vsub.s32 4, %v1612
      %v1614 = vrot.slane %v1525, %v1613
      %v1615 = vlaneseq
      %v1616 = vshrl.u32 %v1615, 7
      %v1617 = vsub.s32 0, %v1616
      %v1618 = vrot.slane %v1526, %v1617
      %v1619 = vlaneseq
      %v1620 = vshrl.u32 %v1619, 7
      %v1621 = vsub.s32 0, %v1620
      %v1622 = vrot.slane %v1527, %v1621
      %v1623 = vlaneseq
      %v1624 = vshrl.u32 %v1623, 7
      %v1625 = vsub.s32 4, %v1624
      %v1626 = vrot.slane %v1527, %v1625
      %v1627 = vlaneseq
      %v1628 = vshrl.u32 %v1627, 7
      %v1629 = vsub.s32 0, %v1628
      %v1630 = vrot.slane %v1528, %v1629
      %v1631 = vlaneseq
      %v1632 = vshrl.u32 %v1631, 7
      %v1633 = vsub.s32 0, %v1632
      %v1634 = vrot.slane %v1529, %v1633
      %v1635 = vlaneseq
      %v1636 = vshrl.u32 %v1635, 7
      %v1637 = vsub.s32 4, %v1636
      %v1638 = vrot.slane %v1529, %v1637
      %v1639 = vlaneseq
      %v1640 = vshrl.u32 %v1639, 7
      %v1641 = vsub.s32 0, %v1640
      %v1642 = vrot.slane %v1530, %v1641
      %v1643 = vsel %vm935, %v1562, %v1550
      %v1644 = vsel %vm937, %v1574, %v1643
      %v1645 = vsel %vm939, %v1586, %v1644
      %v1646 = vsel %vm941, %v1598, %v1645
      %v1647 = vsel %vm943, %v1610, %v1646
      %v1648 = vsel %vm945, %v1622, %v1647
      %v1649 = vsel %vm947, %v1634, %v1648
      %v1650 = vsel %vm935, %v1566, %v1554
      %v1651 = vsel %vm937, %v1578, %v1650
      %v1652 = vsel %vm939, %v1590, %v1651
      %v1653 = vsel %vm941, %v1602, %v1652
      %v1654 = vsel %vm943, %v1614, %v1653
      %v1655 = vsel %vm945, %v1626, %v1654
      %v1656 = vsel %vm947, %v1638, %v1655
      %v1657 = vsel %vm935, %v1570, %v1558
      %v1658 = vsel %vm937, %v1582, %v1657
      %v1659 = vsel %vm939, %v1594, %v1658
      %v1660 = vsel %vm941, %v1606, %v1659
      %v1661 = vsel %vm943, %v1618, %v1660
      %v1662 = vsel %vm945, %v1630, %v1661
      %v1663 = vsel %vm947, %v1642, %v1662
      %1664 = vrot.lane.b32.xlu0 %v1649, 19
      %v1665 = vpop.permute.xlu0 %1664
      %1666 = vrot.lane.b32.xlu0 %v1656, 19
      %v1667 = vpop.permute.xlu0 %1666
      %1668 = vrot.lane.b32.xlu0 %v1663, 19
      %v1669 = vpop.permute.xlu0 %1668
      %v1670 = vsel %vm969, %v1665, %v1667
      %v1671 = vsel %vm969, %v1667, %v1669
      %s1676 = scalar_lea.vmem [#allocation2], 32
      %1677 = vst.msk [vmem:[%s1676] sm:$0xff] %vm976, %v1665
      %1678 = vst [vmem:[%s1676 + $0x8] sm:$0xff] %v1670
      %1679 = vst [vmem:[%s1676 + $0x10] sm:$0xff] %v1671
      %1680 = vst.msk [vmem:[%s1676 + $0x18] sm:$0xff] %vm969, %v1669
      %v1683 = vlaneseq
      %v1684 = vshrl.u32 %v1683, 7
      %v1685 = vsub.s32 0, %v1684
      %v1686 = vrot.slane %v267, %v1685
      %v1687 = vlaneseq
      %v1688 = vshrl.u32 %v1687, 7
      %v1689 = vsub.s32 4, %v1688
      %v1690 = vrot.slane %v267, %v1689
      %v1691 = vlaneseq
      %v1692 = vshrl.u32 %v1691, 7
      %v1693 = vsub.s32 0, %v1692
      %v1694 = vrot.slane %v268, %v1693
      %v1698 = vlaneseq
      %v1699 = vshrl.u32 %v1698, 7
      %v1700 = vsub.s32 0, %v1699
      %v1701 = vrot.slane %v1686, %v1700
      %v1702 = vlaneseq
      %v1703 = vshrl.u32 %v1702, 7
      %v1704 = vsub.s32 0, %v1703
      %v1705 = vrot.slane %v1690, %v1704
      %v1706 = vlaneseq
      %v1707 = vshrl.u32 %v1706, 7
      %v1708 = vsub.s32 0, %v1707
      %v1709 = vrot.slane %v1694, %v1708
      %v1713 = vcombine.low %v1701, %v1705
      %v1714 = vcombine.high %v1701, %v1705
      %v1715 = vcombine.high %v1709, %v1709
      %v1716 = vrot.slane %v1713, 1
      %v1717 = vrot.slane %v1709, 1
      %v1718 = vrot.slane %v1713, 2
      %v1719 = vrot.slane %v1709, 2
      %v1720 = vrot.slane %v1713, 3
      %v1721 = vrot.slane %v1709, 3
      %v1722 = vrot.slane %v1714, 1
      %v1723 = vrot.slane %v1715, 1
      %v1724 = vrot.slane %v1714, 2
      %v1725 = vrot.slane %v1715, 2
      %v1726 = vrot.slane %v1714, 3
      %v1727 = vrot.slane %v1715, 3
      %v1744 = vmul.f32 %v239, %v1713
      %v1745 = vmul.f32 %v217, %v1709
      %v1746 = vmul.f32 %v240, %v1716
      %v1747 = vmul.f32 %v241, %v1717
      %v1748 = vmul.f32 %v242, %v1718
      %v1749 = vmul.f32 %v220, %v1719
      %v1750 = vmul.f32 %v243, %v1720
      %v1751 = vmul.f32 %v244, %v1721
      %v1752 = vmul.f32 %v245, %v1714
      %v1753 = vmul.f32 %v223, %v1715
      %v1754 = vmul.f32 %v246, %v1722
      %v1755 = vmul.f32 %v247, %v1723
      %v1756 = vmul.f32 %v248, %v1724
      %v1757 = vmul.f32 %v226, %v1725
      %v1758 = vmul.f32 %v249, %v1726
      %v1759 = vmul.f32 %v250, %v1727
      %v1760 = vlaneseq
      %v1761 = vshrl.u32 %v1760, 7
      %v1762 = vsub.s32 1, %v1761
      %v1763 = vrot.slane %v267, %v1762
      %v1764 = vlaneseq
      %v1765 = vshrl.u32 %v1764, 7
      %v1766 = vsub.s32 5, %v1765
      %v1767 = vrot.slane %v267, %v1766
      %v1768 = vlaneseq
      %v1769 = vshrl.u32 %v1768, 7
      %v1770 = vsub.s32 1, %v1769
      %v1771 = vrot.slane %v268, %v1770
      %v1775 = vlaneseq
      %v1776 = vshrl.u32 %v1775, 7
      %v1777 = vsub.s32 1, %v1776
      %v1778 = vrot.slane %v1763, %v1777
      %v1779 = vlaneseq
      %v1780 = vshrl.u32 %v1779, 7
      %v1781 = vsub.s32 1, %v1780
      %v1782 = vrot.slane %v1767, %v1781
      %v1783 = vlaneseq
      %v1784 = vshrl.u32 %v1783, 7
      %v1785 = vsub.s32 1, %v1784
      %v1786 = vrot.slane %v1771, %v1785
      %v1790 = vcombine.low %v1778, %v1782
      %v1791 = vcombine.high %v1778, %v1782
      %v1792 = vcombine.high %v1786, %v1786
      %v1793 = vrot.slane %v1790, 7
      %v1794 = vrot.slane %v1786, 7
      %v1795 = vrot.slane %v1790, 1
      %v1796 = vrot.slane %v1786, 1
      %v1797 = vrot.slane %v1790, 2
      %v1798 = vrot.slane %v1786, 2
      %v1799 = vrot.slane %v1791, 7
      %v1800 = vrot.slane %v1792, 7
      %v1801 = vrot.slane %v1791, 1
      %v1802 = vrot.slane %v1792, 1
      %v1803 = vrot.slane %v1791, 2
      %v1804 = vrot.slane %v1792, 2
      %v1821 = vmul.f32 %v239, %v1793
      %v1822 = vmul.f32 %v217, %v1794
      %v1823 = vmul.f32 %v240, %v1790
      %v1824 = vmul.f32 %v241, %v1786
      %v1825 = vmul.f32 %v242, %v1795
      %v1826 = vmul.f32 %v220, %v1796
      %v1827 = vmul.f32 %v243, %v1797
      %v1828 = vmul.f32 %v244, %v1798
      %v1829 = vmul.f32 %v245, %v1799
      %v1830 = vmul.f32 %v223, %v1800
      %v1831 = vmul.f32 %v246, %v1791
      %v1832 = vmul.f32 %v247, %v1792
      %v1833 = vmul.f32 %v248, %v1801
      %v1834 = vmul.f32 %v226, %v1802
      %v1835 = vmul.f32 %v249, %v1803
      %v1836 = vmul.f32 %v250, %v1804
      %v1853 = vrot.slane %v1821, 5
      %v1854 = vrot.slane %v1853, 4
      %v1855 = vrot.slane %v1822, 5
      %v1856 = vrot.slane %v1855, 4
      %v1857 = vrot.slane %v1823, 5
      %v1858 = vrot.slane %v1857, 4
      %v1859 = vrot.slane %v1824, 5
      %v1860 = vrot.slane %v1859, 4
      %v1861 = vrot.slane %v1825, 5
      %v1862 = vrot.slane %v1861, 4
      %v1863 = vrot.slane %v1826, 5
      %v1864 = vrot.slane %v1863, 4
      %v1865 = vrot.slane %v1827, 5
      %v1866 = vrot.slane %v1865, 4
      %v1867 = vrot.slane %v1828, 5
      %v1868 = vrot.slane %v1867, 4
      %v1869 = vrot.slane %v1829, 5
      %v1870 = vrot.slane %v1869, 4
      %v1871 = vrot.slane %v1830, 5
      %v1872 = vrot.slane %v1871, 4
      %v1873 = vrot.slane %v1831, 5
      %v1874 = vrot.slane %v1873, 4
      %v1875 = vrot.slane %v1832, 5
      %v1876 = vrot.slane %v1875, 4
      %v1877 = vrot.slane %v1833, 5
      %v1878 = vrot.slane %v1877, 4
      %v1879 = vrot.slane %v1834, 5
      %v1880 = vrot.slane %v1879, 4
      %v1881 = vrot.slane %v1835, 5
      %v1882 = vrot.slane %v1881, 4
      %v1883 = vrot.slane %v1836, 5
      %v1884 = vrot.slane %v1883, 4
      %v1901 = vadd.f32 %v1744, %v1854
      %v1902 = vadd.f32 %v1745, %v1856
      %v1903 = vadd.f32 %v1746, %v1858
      %v1904 = vadd.f32 %v1747, %v1860
      %v1905 = vadd.f32 %v1748, %v1862
      %v1906 = vadd.f32 %v1749, %v1864
      %v1907 = vadd.f32 %v1750, %v1866
      %v1908 = vadd.f32 %v1751, %v1868
      %v1909 = vadd.f32 %v1752, %v1870
      %v1910 = vadd.f32 %v1753, %v1872
      %v1911 = vadd.f32 %v1754, %v1874
      %v1912 = vadd.f32 %v1755, %v1876
      %v1913 = vadd.f32 %v1756, %v1878
      %v1914 = vadd.f32 %v1757, %v1880
      %v1915 = vadd.f32 %v1758, %v1882
      %v1916 = vadd.f32 %v1759, %v1884
      %v1917 = vlaneseq
      %v1918 = vshrl.u32 %v1917, 7
      %v1919 = vsub.s32 2, %v1918
      %v1920 = vrot.slane %v267, %v1919
      %v1921 = vlaneseq
      %v1922 = vshrl.u32 %v1921, 7
      %v1923 = vsub.s32 6, %v1922
      %v1924 = vrot.slane %v267, %v1923
      %v1925 = vlaneseq
      %v1926 = vshrl.u32 %v1925, 7
      %v1927 = vsub.s32 2, %v1926
      %v1928 = vrot.slane %v268, %v1927
      %v1932 = vlaneseq
      %v1933 = vshrl.u32 %v1932, 7
      %v1934 = vsub.s32 2, %v1933
      %v1935 = vrot.slane %v1920, %v1934
      %v1936 = vlaneseq
      %v1937 = vshrl.u32 %v1936, 7
      %v1938 = vsub.s32 2, %v1937
      %v1939 = vrot.slane %v1924, %v1938
      %v1940 = vlaneseq
      %v1941 = vshrl.u32 %v1940, 7
      %v1942 = vsub.s32 2, %v1941
      %v1943 = vrot.slane %v1928, %v1942
      %v1947 = vcombine.low %v1935, %v1939
      %v1948 = vcombine.high %v1935, %v1939
      %v1949 = vcombine.high %v1943, %v1943
      %v1950 = vrot.slane %v1947, 6
      %v1951 = vrot.slane %v1943, 6
      %v1952 = vrot.slane %v1947, 7
      %v1953 = vrot.slane %v1943, 7
      %v1954 = vrot.slane %v1947, 1
      %v1955 = vrot.slane %v1943, 1
      %v1956 = vrot.slane %v1948, 6
      %v1957 = vrot.slane %v1949, 6
      %v1958 = vrot.slane %v1948, 7
      %v1959 = vrot.slane %v1949, 7
      %v1960 = vrot.slane %v1948, 1
      %v1961 = vrot.slane %v1949, 1
      %v1978 = vmul.f32 %v239, %v1950
      %v1979 = vmul.f32 %v217, %v1951
      %v1980 = vmul.f32 %v240, %v1952
      %v1981 = vmul.f32 %v241, %v1953
      %v1982 = vmul.f32 %v242, %v1947
      %v1983 = vmul.f32 %v220, %v1943
      %v1984 = vmul.f32 %v243, %v1954
      %v1985 = vmul.f32 %v244, %v1955
      %v1986 = vmul.f32 %v245, %v1956
      %v1987 = vmul.f32 %v223, %v1957
      %v1988 = vmul.f32 %v246, %v1958
      %v1989 = vmul.f32 %v247, %v1959
      %v1990 = vmul.f32 %v248, %v1948
      %v1991 = vmul.f32 %v226, %v1949
      %v1992 = vmul.f32 %v249, %v1960
      %v1993 = vmul.f32 %v250, %v1961
      %v2010 = vrot.slane %v1978, 6
      %v2011 = vrot.slane %v2010, 4
      %v2012 = vrot.slane %v1979, 6
      %v2013 = vrot.slane %v2012, 4
      %v2014 = vrot.slane %v1980, 6
      %v2015 = vrot.slane %v2014, 4
      %v2016 = vrot.slane %v1981, 6
      %v2017 = vrot.slane %v2016, 4
      %v2018 = vrot.slane %v1982, 6
      %v2019 = vrot.slane %v2018, 4
      %v2020 = vrot.slane %v1983, 6
      %v2021 = vrot.slane %v2020, 4
      %v2022 = vrot.slane %v1984, 6
      %v2023 = vrot.slane %v2022, 4
      %v2024 = vrot.slane %v1985, 6
      %v2025 = vrot.slane %v2024, 4
      %v2026 = vrot.slane %v1986, 6
      %v2027 = vrot.slane %v2026, 4
      %v2028 = vrot.slane %v1987, 6
      %v2029 = vrot.slane %v2028, 4
      %v2030 = vrot.slane %v1988, 6
      %v2031 = vrot.slane %v2030, 4
      %v2032 = vrot.slane %v1989, 6
      %v2033 = vrot.slane %v2032, 4
      %v2034 = vrot.slane %v1990, 6
      %v2035 = vrot.slane %v2034, 4
      %v2036 = vrot.slane %v1991, 6
      %v2037 = vrot.slane %v2036, 4
      %v2038 = vrot.slane %v1992, 6
      %v2039 = vrot.slane %v2038, 4
      %v2040 = vrot.slane %v1993, 6
      %v2041 = vrot.slane %v2040, 4
      %v2058 = vadd.f32 %v1901, %v2011
      %v2059 = vadd.f32 %v1902, %v2013
      %v2060 = vadd.f32 %v1903, %v2015
      %v2061 = vadd.f32 %v1904, %v2017
      %v2062 = vadd.f32 %v1905, %v2019
      %v2063 = vadd.f32 %v1906, %v2021
      %v2064 = vadd.f32 %v1907, %v2023
      %v2065 = vadd.f32 %v1908, %v2025
      %v2066 = vadd.f32 %v1909, %v2027
      %v2067 = vadd.f32 %v1910, %v2029
      %v2068 = vadd.f32 %v1911, %v2031
      %v2069 = vadd.f32 %v1912, %v2033
      %v2070 = vadd.f32 %v1913, %v2035
      %v2071 = vadd.f32 %v1914, %v2037
      %v2072 = vadd.f32 %v1915, %v2039
      %v2073 = vadd.f32 %v1916, %v2041
      %v2074 = vlaneseq
      %v2075 = vshrl.u32 %v2074, 7
      %v2076 = vsub.s32 3, %v2075
      %v2077 = vrot.slane %v267, %v2076
      %v2078 = vlaneseq
      %v2079 = vshrl.u32 %v2078, 7
      %v2080 = vsub.s32 7, %v2079
      %v2081 = vrot.slane %v267, %v2080
      %v2082 = vlaneseq
      %v2083 = vshrl.u32 %v2082, 7
      %v2084 = vsub.s32 3, %v2083
      %v2085 = vrot.slane %v268, %v2084
      %v2089 = vlaneseq
      %v2090 = vshrl.u32 %v2089, 7
      %v2091 = vsub.s32 3, %v2090
      %v2092 = vrot.slane %v2077, %v2091
      %v2093 = vlaneseq
      %v2094 = vshrl.u32 %v2093, 7
      %v2095 = vsub.s32 3, %v2094
      %v2096 = vrot.slane %v2081, %v2095
      %v2097 = vlaneseq
      %v2098 = vshrl.u32 %v2097, 7
      %v2099 = vsub.s32 3, %v2098
      %v2100 = vrot.slane %v2085, %v2099
      %v2104 = vcombine.low %v2092, %v2096
      %v2105 = vcombine.high %v2092, %v2096
      %v2106 = vcombine.high %v2100, %v2100
      %v2107 = vrot.slane %v2104, 5
      %v2108 = vrot.slane %v2100, 5
      %v2109 = vrot.slane %v2104, 6
      %v2110 = vrot.slane %v2100, 6
      %v2111 = vrot.slane %v2104, 7
      %v2112 = vrot.slane %v2100, 7
      %v2113 = vrot.slane %v2105, 5
      %v2114 = vrot.slane %v2106, 5
      %v2115 = vrot.slane %v2105, 6
      %v2116 = vrot.slane %v2106, 6
      %v2117 = vrot.slane %v2105, 7
      %v2118 = vrot.slane %v2106, 7
      %v2135 = vmul.f32 %v239, %v2107
      %v2136 = vmul.f32 %v217, %v2108
      %v2137 = vmul.f32 %v240, %v2109
      %v2138 = vmul.f32 %v241, %v2110
      %v2139 = vmul.f32 %v242, %v2111
      %v2140 = vmul.f32 %v220, %v2112
      %v2141 = vmul.f32 %v243, %v2104
      %v2142 = vmul.f32 %v244, %v2100
      %v2143 = vmul.f32 %v245, %v2113
      %v2144 = vmul.f32 %v223, %v2114
      %v2145 = vmul.f32 %v246, %v2115
      %v2146 = vmul.f32 %v247, %v2116
      %v2147 = vmul.f32 %v248, %v2117
      %v2148 = vmul.f32 %v226, %v2118
      %v2149 = vmul.f32 %v249, %v2105
      %v2150 = vmul.f32 %v250, %v2106
      %v2167 = vrot.slane %v2135, 7
      %v2168 = vrot.slane %v2167, 4
      %v2169 = vrot.slane %v2136, 7
      %v2170 = vrot.slane %v2169, 4
      %v2171 = vrot.slane %v2137, 7
      %v2172 = vrot.slane %v2171, 4
      %v2173 = vrot.slane %v2138, 7
      %v2174 = vrot.slane %v2173, 4
      %v2175 = vrot.slane %v2139, 7
      %v2176 = vrot.slane %v2175, 4
      %v2177 = vrot.slane %v2140, 7
      %v2178 = vrot.slane %v2177, 4
      %v2179 = vrot.slane %v2141, 7
      %v2180 = vrot.slane %v2179, 4
      %v2181 = vrot.slane %v2142, 7
      %v2182 = vrot.slane %v2181, 4
      %v2183 = vrot.slane %v2143, 7
      %v2184 = vrot.slane %v2183, 4
      %v2185 = vrot.slane %v2144, 7
      %v2186 = vrot.slane %v2185, 4
      %v2187 = vrot.slane %v2145, 7
      %v2188 = vrot.slane %v2187, 4
      %v2189 = vrot.slane %v2146, 7
      %v2190 = vrot.slane %v2189, 4
      %v2191 = vrot.slane %v2147, 7
      %v2192 = vrot.slane %v2191, 4
      %v2193 = vrot.slane %v2148, 7
      %v2194 = vrot.slane %v2193, 4
      %v2195 = vrot.slane %v2149, 7
      %v2196 = vrot.slane %v2195, 4
      %v2197 = vrot.slane %v2150, 7
      %v2198 = vrot.slane %v2197, 4
      %v2215 = vadd.f32 %v2058, %v2168
      %v2216 = vadd.f32 %v2059, %v2170
      %v2217 = vadd.f32 %v2060, %v2172
      %v2218 = vadd.f32 %v2061, %v2174
      %v2219 = vadd.f32 %v2062, %v2176
      %v2220 = vadd.f32 %v2063, %v2178
      %v2221 = vadd.f32 %v2064, %v2180
      %v2222 = vadd.f32 %v2065, %v2182
      %v2223 = vadd.f32 %v2066, %v2184
      %v2224 = vadd.f32 %v2067, %v2186
      %v2225 = vadd.f32 %v2068, %v2188
      %v2226 = vadd.f32 %v2069, %v2190
      %v2227 = vadd.f32 %v2070, %v2192
      %v2228 = vadd.f32 %v2071, %v2194
      %v2229 = vadd.f32 %v2072, %v2196
      %v2230 = vadd.f32 %v2073, %v2198
      %v2247 = vlaneseq
      %v2248 = vshrl.u32 %v2247, 7
      %v2249 = vsub.s32 0, %v2248
      %v2250 = vrot.slane %v2215, %v2249
      %v2251 = vlaneseq
      %v2252 = vshrl.u32 %v2251, 7
      %v2253 = vsub.s32 4, %v2252
      %v2254 = vrot.slane %v2215, %v2253
      %v2255 = vlaneseq
      %v2256 = vshrl.u32 %v2255, 7
      %v2257 = vsub.s32 0, %v2256
      %v2258 = vrot.slane %v2216, %v2257
      %v2259 = vlaneseq
      %v2260 = vshrl.u32 %v2259, 7
      %v2261 = vsub.s32 0, %v2260
      %v2262 = vrot.slane %v2217, %v2261
      %v2263 = vlaneseq
      %v2264 = vshrl.u32 %v2263, 7
      %v2265 = vsub.s32 4, %v2264
      %v2266 = vrot.slane %v2217, %v2265
      %v2267 = vlaneseq
      %v2268 = vshrl.u32 %v2267, 7
      %v2269 = vsub.s32 0, %v2268
      %v2270 = vrot.slane %v2218, %v2269
      %v2271 = vlaneseq
      %v2272 = vshrl.u32 %v2271, 7
      %v2273 = vsub.s32 0, %v2272
      %v2274 = vrot.slane %v2219, %v2273
      %v2275 = vlaneseq
      %v2276 = vshrl.u32 %v2275, 7
      %v2277 = vsub.s32 4, %v2276
      %v2278 = vrot.slane %v2219, %v2277
      %v2279 = vlaneseq
      %v2280 = vshrl.u32 %v2279, 7
      %v2281 = vsub.s32 0, %v2280
      %v2282 = vrot.slane %v2220, %v2281
      %v2283 = vlaneseq
      %v2284 = vshrl.u32 %v2283, 7
      %v2285 = vsub.s32 0, %v2284
      %v2286 = vrot.slane %v2221, %v2285
      %v2287 = vlaneseq
      %v2288 = vshrl.u32 %v2287, 7
      %v2289 = vsub.s32 4, %v2288
      %v2290 = vrot.slane %v2221, %v2289
      %v2291 = vlaneseq
      %v2292 = vshrl.u32 %v2291, 7
      %v2293 = vsub.s32 0, %v2292
      %v2294 = vrot.slane %v2222, %v2293
      %v2295 = vlaneseq
      %v2296 = vshrl.u32 %v2295, 7
      %v2297 = vsub.s32 0, %v2296
      %v2298 = vrot.slane %v2223, %v2297
      %v2299 = vlaneseq
      %v2300 = vshrl.u32 %v2299, 7
      %v2301 = vsub.s32 4, %v2300
      %v2302 = vrot.slane %v2223, %v2301
      %v2303 = vlaneseq
      %v2304 = vshrl.u32 %v2303, 7
      %v2305 = vsub.s32 0, %v2304
      %v2306 = vrot.slane %v2224, %v2305
      %v2307 = vlaneseq
      %v2308 = vshrl.u32 %v2307, 7
      %v2309 = vsub.s32 0, %v2308
      %v2310 = vrot.slane %v2225, %v2309
      %v2311 = vlaneseq
      %v2312 = vshrl.u32 %v2311, 7
      %v2313 = vsub.s32 4, %v2312
      %v2314 = vrot.slane %v2225, %v2313
      %v2315 = vlaneseq
      %v2316 = vshrl.u32 %v2315, 7
      %v2317 = vsub.s32 0, %v2316
      %v2318 = vrot.slane %v2226, %v2317
      %v2319 = vlaneseq
      %v2320 = vshrl.u32 %v2319, 7
      %v2321 = vsub.s32 0, %v2320
      %v2322 = vrot.slane %v2227, %v2321
      %v2323 = vlaneseq
      %v2324 = vshrl.u32 %v2323, 7
      %v2325 = vsub.s32 4, %v2324
      %v2326 = vrot.slane %v2227, %v2325
      %v2327 = vlaneseq
      %v2328 = vshrl.u32 %v2327, 7
      %v2329 = vsub.s32 0, %v2328
      %v2330 = vrot.slane %v2228, %v2329
      %v2331 = vlaneseq
      %v2332 = vshrl.u32 %v2331, 7
      %v2333 = vsub.s32 0, %v2332
      %v2334 = vrot.slane %v2229, %v2333
      %v2335 = vlaneseq
      %v2336 = vshrl.u32 %v2335, 7
      %v2337 = vsub.s32 4, %v2336
      %v2338 = vrot.slane %v2229, %v2337
      %v2339 = vlaneseq
      %v2340 = vshrl.u32 %v2339, 7
      %v2341 = vsub.s32 0, %v2340
      %v2342 = vrot.slane %v2230, %v2341
      %v2343 = vsel %vm935, %v2262, %v2250
      %v2344 = vsel %vm937, %v2274, %v2343
      %v2345 = vsel %vm939, %v2286, %v2344
      %v2346 = vsel %vm941, %v2298, %v2345
      %v2347 = vsel %vm943, %v2310, %v2346
      %v2348 = vsel %vm945, %v2322, %v2347
      %v2349 = vsel %vm947, %v2334, %v2348
      %v2350 = vsel %vm935, %v2266, %v2254
      %v2351 = vsel %vm937, %v2278, %v2350
      %v2352 = vsel %vm939, %v2290, %v2351
      %v2353 = vsel %vm941, %v2302, %v2352
      %v2354 = vsel %vm943, %v2314, %v2353
      %v2355 = vsel %vm945, %v2326, %v2354
      %v2356 = vsel %vm947, %v2338, %v2355
      %v2357 = vsel %vm935, %v2270, %v2258
      %v2358 = vsel %vm937, %v2282, %v2357
      %v2359 = vsel %vm939, %v2294, %v2358
      %v2360 = vsel %vm941, %v2306, %v2359
      %v2361 = vsel %vm943, %v2318, %v2360
      %v2362 = vsel %vm945, %v2330, %v2361
      %v2363 = vsel %vm947, %v2342, %v2362
      %2364 = vrot.lane.b32.xlu0 %v2349, 19
      %v2365 = vpop.permute.xlu0 %2364
      %2366 = vrot.lane.b32.xlu0 %v2356, 19
      %v2367 = vpop.permute.xlu0 %2366
      %2368 = vrot.lane.b32.xlu0 %v2363, 19
      %v2369 = vpop.permute.xlu0 %2368
      %v2370 = vsel %vm969, %v2365, %v2367
      %v2371 = vsel %vm969, %v2367, %v2369
      %s2376 = scalar_lea.vmem [#allocation2], 64
      %2377 = vst.msk [vmem:[%s2376] sm:$0xff] %vm976, %v2365
      %2378 = vst [vmem:[%s2376 + $0x8] sm:$0xff] %v2370
      %2379 = vst [vmem:[%s2376 + $0x10] sm:$0xff] %v2371
      %2380 = vst.msk [vmem:[%s2376 + $0x18] sm:$0xff] %vm969, %v2369
      %v2383 = vlaneseq
      %v2384 = vshrl.u32 %v2383, 7
      %v2385 = vsub.s32 0, %v2384
      %v2386 = vrot.slane %v269, %v2385
      %v2387 = vlaneseq
      %v2388 = vshrl.u32 %v2387, 7
      %v2389 = vsub.s32 4, %v2388
      %v2390 = vrot.slane %v269, %v2389
      %v2391 = vlaneseq
      %v2392 = vshrl.u32 %v2391, 7
      %v2393 = vsub.s32 0, %v2392
      %v2394 = vrot.slane %v270, %v2393
      %v2398 = vlaneseq
      %v2399 = vshrl.u32 %v2398, 7
      %v2400 = vsub.s32 0, %v2399
      %v2401 = vrot.slane %v2386, %v2400
      %v2402 = vlaneseq
      %v2403 = vshrl.u32 %v2402, 7
      %v2404 = vsub.s32 0, %v2403
      %v2405 = vrot.slane %v2390, %v2404
      %v2406 = vlaneseq
      %v2407 = vshrl.u32 %v2406, 7
      %v2408 = vsub.s32 0, %v2407
      %v2409 = vrot.slane %v2394, %v2408
      %v2413 = vcombine.low %v2401, %v2405
      %v2414 = vcombine.high %v2401, %v2405
      %v2415 = vcombine.high %v2409, %v2409
      %v2416 = vrot.slane %v2413, 1
      %v2417 = vrot.slane %v2409, 1
      %v2418 = vrot.slane %v2413, 2
      %v2419 = vrot.slane %v2409, 2
      %v2420 = vrot.slane %v2413, 3
      %v2421 = vrot.slane %v2409, 3
      %v2422 = vrot.slane %v2414, 1
      %v2423 = vrot.slane %v2415, 1
      %v2424 = vrot.slane %v2414, 2
      %v2425 = vrot.slane %v2415, 2
      %v2426 = vrot.slane %v2414, 3
      %v2427 = vrot.slane %v2415, 3
      %v2444 = vmul.f32 %v239, %v2413
      %v2445 = vmul.f32 %v217, %v2409
      %v2446 = vmul.f32 %v240, %v2416
      %v2447 = vmul.f32 %v241, %v2417
      %v2448 = vmul.f32 %v242, %v2418
      %v2449 = vmul.f32 %v220, %v2419
      %v2450 = vmul.f32 %v243, %v2420
      %v2451 = vmul.f32 %v244, %v2421
      %v2452 = vmul.f32 %v245, %v2414
      %v2453 = vmul.f32 %v223, %v2415
      %v2454 = vmul.f32 %v246, %v2422
      %v2455 = vmul.f32 %v247, %v2423
      %v2456 = vmul.f32 %v248, %v2424
      %v2457 = vmul.f32 %v226, %v2425
      %v2458 = vmul.f32 %v249, %v2426
      %v2459 = vmul.f32 %v250, %v2427
      %v2460 = vlaneseq
      %v2461 = vshrl.u32 %v2460, 7
      %v2462 = vsub.s32 1, %v2461
      %v2463 = vrot.slane %v269, %v2462
      %v2464 = vlaneseq
      %v2465 = vshrl.u32 %v2464, 7
      %v2466 = vsub.s32 5, %v2465
      %v2467 = vrot.slane %v269, %v2466
      %v2468 = vlaneseq
      %v2469 = vshrl.u32 %v2468, 7
      %v2470 = vsub.s32 1, %v2469
      %v2471 = vrot.slane %v270, %v2470
      %v2475 = vlaneseq
      %v2476 = vshrl.u32 %v2475, 7
      %v2477 = vsub.s32 1, %v2476
      %v2478 = vrot.slane %v2463, %v2477
      %v2479 = vlaneseq
      %v2480 = vshrl.u32 %v2479, 7
      %v2481 = vsub.s32 1, %v2480
      %v2482 = vrot.slane %v2467, %v2481
      %v2483 = vlaneseq
      %v2484 = vshrl.u32 %v2483, 7
      %v2485 = vsub.s32 1, %v2484
      %v2486 = vrot.slane %v2471, %v2485
      %v2490 = vcombine.low %v2478, %v2482
      %v2491 = vcombine.high %v2478, %v2482
      %v2492 = vcombine.high %v2486, %v2486
      %v2493 = vrot.slane %v2490, 7
      %v2494 = vrot.slane %v2486, 7
      %v2495 = vrot.slane %v2490, 1
      %v2496 = vrot.slane %v2486, 1
      %v2497 = vrot.slane %v2490, 2
      %v2498 = vrot.slane %v2486, 2
      %v2499 = vrot.slane %v2491, 7
      %v2500 = vrot.slane %v2492, 7
      %v2501 = vrot.slane %v2491, 1
      %v2502 = vrot.slane %v2492, 1
      %v2503 = vrot.slane %v2491, 2
      %v2504 = vrot.slane %v2492, 2
      %v2521 = vmul.f32 %v239, %v2493
      %v2522 = vmul.f32 %v217, %v2494
      %v2523 = vmul.f32 %v240, %v2490
      %v2524 = vmul.f32 %v241, %v2486
      %v2525 = vmul.f32 %v242, %v2495
      %v2526 = vmul.f32 %v220, %v2496
      %v2527 = vmul.f32 %v243, %v2497
      %v2528 = vmul.f32 %v244, %v2498
      %v2529 = vmul.f32 %v245, %v2499
      %v2530 = vmul.f32 %v223, %v2500
      %v2531 = vmul.f32 %v246, %v2491
      %v2532 = vmul.f32 %v247, %v2492
      %v2533 = vmul.f32 %v248, %v2501
      %v2534 = vmul.f32 %v226, %v2502
      %v2535 = vmul.f32 %v249, %v2503
      %v2536 = vmul.f32 %v250, %v2504
      %v2553 = vrot.slane %v2521, 5
      %v2554 = vrot.slane %v2553, 4
      %v2555 = vrot.slane %v2522, 5
      %v2556 = vrot.slane %v2555, 4
      %v2557 = vrot.slane %v2523, 5
      %v2558 = vrot.slane %v2557, 4
      %v2559 = vrot.slane %v2524, 5
      %v2560 = vrot.slane %v2559, 4
      %v2561 = vrot.slane %v2525, 5
      %v2562 = vrot.slane %v2561, 4
      %v2563 = vrot.slane %v2526, 5
      %v2564 = vrot.slane %v2563, 4
      %v2565 = vrot.slane %v2527, 5
      %v2566 = vrot.slane %v2565, 4
      %v2567 = vrot.slane %v2528, 5
      %v2568 = vrot.slane %v2567, 4
      %v2569 = vrot.slane %v2529, 5
      %v2570 = vrot.slane %v2569, 4
      %v2571 = vrot.slane %v2530, 5
      %v2572 = vrot.slane %v2571, 4
      %v2573 = vrot.slane %v2531, 5
      %v2574 = vrot.slane %v2573, 4
      %v2575 = vrot.slane %v2532, 5
      %v2576 = vrot.slane %v2575, 4
      %v2577 = vrot.slane %v2533, 5
      %v2578 = vrot.slane %v2577, 4
      %v2579 = vrot.slane %v2534, 5
      %v2580 = vrot.slane %v2579, 4
      %v2581 = vrot.slane %v2535, 5
      %v2582 = vrot.slane %v2581, 4
      %v2583 = vrot.slane %v2536, 5
      %v2584 = vrot.slane %v2583, 4
      %v2601 = vadd.f32 %v2444, %v2554
      %v2602 = vadd.f32 %v2445, %v2556
      %v2603 = vadd.f32 %v2446, %v2558
      %v2604 = vadd.f32 %v2447, %v2560
      %v2605 = vadd.f32 %v2448, %v2562
      %v2606 = vadd.f32 %v2449, %v2564
      %v2607 = vadd.f32 %v2450, %v2566
      %v2608 = vadd.f32 %v2451, %v2568
      %v2609 = vadd.f32 %v2452, %v2570
      %v2610 = vadd.f32 %v2453, %v2572
      %v2611 = vadd.f32 %v2454, %v2574
      %v2612 = vadd.f32 %v2455, %v2576
      %v2613 = vadd.f32 %v2456, %v2578
      %v2614 = vadd.f32 %v2457, %v2580
      %v2615 = vadd.f32 %v2458, %v2582
      %v2616 = vadd.f32 %v2459, %v2584
      %v2617 = vlaneseq
      %v2618 = vshrl.u32 %v2617, 7
      %v2619 = vsub.s32 2, %v2618
      %v2620 = vrot.slane %v269, %v2619
      %v2621 = vlaneseq
      %v2622 = vshrl.u32 %v2621, 7
      %v2623 = vsub.s32 6, %v2622
      %v2624 = vrot.slane %v269, %v2623
      %v2625 = vlaneseq
      %v2626 = vshrl.u32 %v2625, 7
      %v2627 = vsub.s32 2, %v2626
      %v2628 = vrot.slane %v270, %v2627
      %v2632 = vlaneseq
      %v2633 = vshrl.u32 %v2632, 7
      %v2634 = vsub.s32 2, %v2633
      %v2635 = vrot.slane %v2620, %v2634
      %v2636 = vlaneseq
      %v2637 = vshrl.u32 %v2636, 7
      %v2638 = vsub.s32 2, %v2637
      %v2639 = vrot.slane %v2624, %v2638
      %v2640 = vlaneseq
      %v2641 = vshrl.u32 %v2640, 7
      %v2642 = vsub.s32 2, %v2641
      %v2643 = vrot.slane %v2628, %v2642
      %v2647 = vcombine.low %v2635, %v2639
      %v2648 = vcombine.high %v2635, %v2639
      %v2649 = vcombine.high %v2643, %v2643
      %v2650 = vrot.slane %v2647, 6
      %v2651 = vrot.slane %v2643, 6
      %v2652 = vrot.slane %v2647, 7
      %v2653 = vrot.slane %v2643, 7
      %v2654 = vrot.slane %v2647, 1
      %v2655 = vrot.slane %v2643, 1
      %v2656 = vrot.slane %v2648, 6
      %v2657 = vrot.slane %v2649, 6
      %v2658 = vrot.slane %v2648, 7
      %v2659 = vrot.slane %v2649, 7
      %v2660 = vrot.slane %v2648, 1
      %v2661 = vrot.slane %v2649, 1
      %v2678 = vmul.f32 %v239, %v2650
      %v2679 = vmul.f32 %v217, %v2651
      %v2680 = vmul.f32 %v240, %v2652
      %v2681 = vmul.f32 %v241, %v2653
      %v2682 = vmul.f32 %v242, %v2647
      %v2683 = vmul.f32 %v220, %v2643
      %v2684 = vmul.f32 %v243, %v2654
      %v2685 = vmul.f32 %v244, %v2655
      %v2686 = vmul.f32 %v245, %v2656
      %v2687 = vmul.f32 %v223, %v2657
      %v2688 = vmul.f32 %v246, %v2658
      %v2689 = vmul.f32 %v247, %v2659
      %v2690 = vmul.f32 %v248, %v2648
      %v2691 = vmul.f32 %v226, %v2649
      %v2692 = vmul.f32 %v249, %v2660
      %v2693 = vmul.f32 %v250, %v2661
      %v2710 = vrot.slane %v2678, 6
      %v2711 = vrot.slane %v2710, 4
      %v2712 = vrot.slane %v2679, 6
      %v2713 = vrot.slane %v2712, 4
      %v2714 = vrot.slane %v2680, 6
      %v2715 = vrot.slane %v2714, 4
      %v2716 = vrot.slane %v2681, 6
      %v2717 = vrot.slane %v2716, 4
      %v2718 = vrot.slane %v2682, 6
      %v2719 = vrot.slane %v2718, 4
      %v2720 = vrot.slane %v2683, 6
      %v2721 = vrot.slane %v2720, 4
      %v2722 = vrot.slane %v2684, 6
      %v2723 = vrot.slane %v2722, 4
      %v2724 = vrot.slane %v2685, 6
      %v2725 = vrot.slane %v2724, 4
      %v2726 = vrot.slane %v2686, 6
      %v2727 = vrot.slane %v2726, 4
      %v2728 = vrot.slane %v2687, 6
      %v2729 = vrot.slane %v2728, 4
      %v2730 = vrot.slane %v2688, 6
      %v2731 = vrot.slane %v2730, 4
      %v2732 = vrot.slane %v2689, 6
      %v2733 = vrot.slane %v2732, 4
      %v2734 = vrot.slane %v2690, 6
      %v2735 = vrot.slane %v2734, 4
      %v2736 = vrot.slane %v2691, 6
      %v2737 = vrot.slane %v2736, 4
      %v2738 = vrot.slane %v2692, 6
      %v2739 = vrot.slane %v2738, 4
      %v2740 = vrot.slane %v2693, 6
      %v2741 = vrot.slane %v2740, 4
      %v2758 = vadd.f32 %v2601, %v2711
      %v2759 = vadd.f32 %v2602, %v2713
      %v2760 = vadd.f32 %v2603, %v2715
      %v2761 = vadd.f32 %v2604, %v2717
      %v2762 = vadd.f32 %v2605, %v2719
      %v2763 = vadd.f32 %v2606, %v2721
      %v2764 = vadd.f32 %v2607, %v2723
      %v2765 = vadd.f32 %v2608, %v2725
      %v2766 = vadd.f32 %v2609, %v2727
      %v2767 = vadd.f32 %v2610, %v2729
      %v2768 = vadd.f32 %v2611, %v2731
      %v2769 = vadd.f32 %v2612, %v2733
      %v2770 = vadd.f32 %v2613, %v2735
      %v2771 = vadd.f32 %v2614, %v2737
      %v2772 = vadd.f32 %v2615, %v2739
      %v2773 = vadd.f32 %v2616, %v2741
      %v2774 = vlaneseq
      %v2775 = vshrl.u32 %v2774, 7
      %v2776 = vsub.s32 3, %v2775
      %v2777 = vrot.slane %v269, %v2776
      %v2778 = vlaneseq
      %v2779 = vshrl.u32 %v2778, 7
      %v2780 = vsub.s32 7, %v2779
      %v2781 = vrot.slane %v269, %v2780
      %v2782 = vlaneseq
      %v2783 = vshrl.u32 %v2782, 7
      %v2784 = vsub.s32 3, %v2783
      %v2785 = vrot.slane %v270, %v2784
      %v2789 = vlaneseq
      %v2790 = vshrl.u32 %v2789, 7
      %v2791 = vsub.s32 3, %v2790
      %v2792 = vrot.slane %v2777, %v2791
      %v2793 = vlaneseq
      %v2794 = vshrl.u32 %v2793, 7
      %v2795 = vsub.s32 3, %v2794
      %v2796 = vrot.slane %v2781, %v2795
      %v2797 = vlaneseq
      %v2798 = vshrl.u32 %v2797, 7
      %v2799 = vsub.s32 3, %v2798
      %v2800 = vrot.slane %v2785, %v2799
      %v2804 = vcombine.low %v2792, %v2796
      %v2805 = vcombine.high %v2792, %v2796
      %v2806 = vcombine.high %v2800, %v2800
      %v2807 = vrot.slane %v2804, 5
      %v2808 = vrot.slane %v2800, 5
      %v2809 = vrot.slane %v2804, 6
      %v2810 = vrot.slane %v2800, 6
      %v2811 = vrot.slane %v2804, 7
      %v2812 = vrot.slane %v2800, 7
      %v2813 = vrot.slane %v2805, 5
      %v2814 = vrot.slane %v2806, 5
      %v2815 = vrot.slane %v2805, 6
      %v2816 = vrot.slane %v2806, 6
      %v2817 = vrot.slane %v2805, 7
      %v2818 = vrot.slane %v2806, 7
      %v2835 = vmul.f32 %v239, %v2807
      %v2836 = vmul.f32 %v217, %v2808
      %v2837 = vmul.f32 %v240, %v2809
      %v2838 = vmul.f32 %v241, %v2810
      %v2839 = vmul.f32 %v242, %v2811
      %v2840 = vmul.f32 %v220, %v2812
      %v2841 = vmul.f32 %v243, %v2804
      %v2842 = vmul.f32 %v244, %v2800
      %v2843 = vmul.f32 %v245, %v2813
      %v2844 = vmul.f32 %v223, %v2814
      %v2845 = vmul.f32 %v246, %v2815
      %v2846 = vmul.f32 %v247, %v2816
      %v2847 = vmul.f32 %v248, %v2817
      %v2848 = vmul.f32 %v226, %v2818
      %v2849 = vmul.f32 %v249, %v2805
      %v2850 = vmul.f32 %v250, %v2806
      %v2867 = vrot.slane %v2835, 7
      %v2868 = vrot.slane %v2867, 4
      %v2869 = vrot.slane %v2836, 7
      %v2870 = vrot.slane %v2869, 4
      %v2871 = vrot.slane %v2837, 7
      %v2872 = vrot.slane %v2871, 4
      %v2873 = vrot.slane %v2838, 7
      %v2874 = vrot.slane %v2873, 4
      %v2875 = vrot.slane %v2839, 7
      %v2876 = vrot.slane %v2875, 4
      %v2877 = vrot.slane %v2840, 7
      %v2878 = vrot.slane %v2877, 4
      %v2879 = vrot.slane %v2841, 7
      %v2880 = vrot.slane %v2879, 4
      %v2881 = vrot.slane %v2842, 7
      %v2882 = vrot.slane %v2881, 4
      %v2883 = vrot.slane %v2843, 7
      %v2884 = vrot.slane %v2883, 4
      %v2885 = vrot.slane %v2844, 7
      %v2886 = vrot.slane %v2885, 4
      %v2887 = vrot.slane %v2845, 7
      %v2888 = vrot.slane %v2887, 4
      %v2889 = vrot.slane %v2846, 7
      %v2890 = vrot.slane %v2889, 4
      %v2891 = vrot.slane %v2847, 7
      %v2892 = vrot.slane %v2891, 4
      %v2893 = vrot.slane %v2848, 7
      %v2894 = vrot.slane %v2893, 4
      %v2895 = vrot.slane %v2849, 7
      %v2896 = vrot.slane %v2895, 4
      %v2897 = vrot.slane %v2850, 7
      %v2898 = vrot.slane %v2897, 4
      %v2915 = vadd.f32 %v2758, %v2868
      %v2916 = vadd.f32 %v2759, %v2870
      %v2917 = vadd.f32 %v2760, %v2872
      %v2918 = vadd.f32 %v2761, %v2874
      %v2919 = vadd.f32 %v2762, %v2876
      %v2920 = vadd.f32 %v2763, %v2878
      %v2921 = vadd.f32 %v2764, %v2880
      %v2922 = vadd.f32 %v2765, %v2882
      %v2923 = vadd.f32 %v2766, %v2884
      %v2924 = vadd.f32 %v2767, %v2886
      %v2925 = vadd.f32 %v2768, %v2888
      %v2926 = vadd.f32 %v2769, %v2890
      %v2927 = vadd.f32 %v2770, %v2892
      %v2928 = vadd.f32 %v2771, %v2894
      %v2929 = vadd.f32 %v2772, %v2896
      %v2930 = vadd.f32 %v2773, %v2898
      %v2947 = vlaneseq
      %v2948 = vshrl.u32 %v2947, 7
      %v2949 = vsub.s32 0, %v2948
      %v2950 = vrot.slane %v2915, %v2949
      %v2951 = vlaneseq
      %v2952 = vshrl.u32 %v2951, 7
      %v2953 = vsub.s32 4, %v2952
      %v2954 = vrot.slane %v2915, %v2953
      %v2955 = vlaneseq
      %v2956 = vshrl.u32 %v2955, 7
      %v2957 = vsub.s32 0, %v2956
      %v2958 = vrot.slane %v2916, %v2957
      %v2959 = vlaneseq
      %v2960 = vshrl.u32 %v2959, 7
      %v2961 = vsub.s32 0, %v2960
      %v2962 = vrot.slane %v2917, %v2961
      %v2963 = vlaneseq
      %v2964 = vshrl.u32 %v2963, 7
      %v2965 = vsub.s32 4, %v2964
      %v2966 = vrot.slane %v2917, %v2965
      %v2967 = vlaneseq
      %v2968 = vshrl.u32 %v2967, 7
      %v2969 = vsub.s32 0, %v2968
      %v2970 = vrot.slane %v2918, %v2969
      %v2971 = vlaneseq
      %v2972 = vshrl.u32 %v2971, 7
      %v2973 = vsub.s32 0, %v2972
      %v2974 = vrot.slane %v2919, %v2973
      %v2975 = vlaneseq
      %v2976 = vshrl.u32 %v2975, 7
      %v2977 = vsub.s32 4, %v2976
      %v2978 = vrot.slane %v2919, %v2977
      %v2979 = vlaneseq
      %v2980 = vshrl.u32 %v2979, 7
      %v2981 = vsub.s32 0, %v2980
      %v2982 = vrot.slane %v2920, %v2981
      %v2983 = vlaneseq
      %v2984 = vshrl.u32 %v2983, 7
      %v2985 = vsub.s32 0, %v2984
      %v2986 = vrot.slane %v2921, %v2985
      %v2987 = vlaneseq
      %v2988 = vshrl.u32 %v2987, 7
      %v2989 = vsub.s32 4, %v2988
      %v2990 = vrot.slane %v2921, %v2989
      %v2991 = vlaneseq
      %v2992 = vshrl.u32 %v2991, 7
      %v2993 = vsub.s32 0, %v2992
      %v2994 = vrot.slane %v2922, %v2993
      %v2995 = vlaneseq
      %v2996 = vshrl.u32 %v2995, 7
      %v2997 = vsub.s32 0, %v2996
      %v2998 = vrot.slane %v2923, %v2997
      %v2999 = vlaneseq
      %v3000 = vshrl.u32 %v2999, 7
      %v3001 = vsub.s32 4, %v3000
      %v3002 = vrot.slane %v2923, %v3001
      %v3003 = vlaneseq
      %v3004 = vshrl.u32 %v3003, 7
      %v3005 = vsub.s32 0, %v3004
      %v3006 = vrot.slane %v2924, %v3005
      %v3007 = vlaneseq
      %v3008 = vshrl.u32 %v3007, 7
      %v3009 = vsub.s32 0, %v3008
      %v3010 = vrot.slane %v2925, %v3009
      %v3011 = vlaneseq
      %v3012 = vshrl.u32 %v3011, 7
      %v3013 = vsub.s32 4, %v3012
      %v3014 = vrot.slane %v2925, %v3013
      %v3015 = vlaneseq
      %v3016 = vshrl.u32 %v3015, 7
      %v3017 = vsub.s32 0, %v3016
      %v3018 = vrot.slane %v2926, %v3017
      %v3019 = vlaneseq
      %v3020 = vshrl.u32 %v3019, 7
      %v3021 = vsub.s32 0, %v3020
      %v3022 = vrot.slane %v2927, %v3021
      %v3023 = vlaneseq
      %v3024 = vshrl.u32 %v3023, 7
      %v3025 = vsub.s32 4, %v3024
      %v3026 = vrot.slane %v2927, %v3025
      %v3027 = vlaneseq
      %v3028 = vshrl.u32 %v3027, 7
      %v3029 = vsub.s32 0, %v3028
      %v3030 = vrot.slane %v2928, %v3029
      %v3031 = vlaneseq
      %v3032 = vshrl.u32 %v3031, 7
      %v3033 = vsub.s32 0, %v3032
      %v3034 = vrot.slane %v2929, %v3033
      %v3035 = vlaneseq
      %v3036 = vshrl.u32 %v3035, 7
      %v3037 = vsub.s32 4, %v3036
      %v3038 = vrot.slane %v2929, %v3037
      %v3039 = vlaneseq
      %v3040 = vshrl.u32 %v3039, 7
      %v3041 = vsub.s32 0, %v3040
      %v3042 = vrot.slane %v2930, %v3041
      %v3043 = vsel %vm935, %v2962, %v2950
      %v3044 = vsel %vm937, %v2974, %v3043
      %v3045 = vsel %vm939, %v2986, %v3044
      %v3046 = vsel %vm941, %v2998, %v3045
      %v3047 = vsel %vm943, %v3010, %v3046
      %v3048 = vsel %vm945, %v3022, %v3047
      %v3049 = vsel %vm947, %v3034, %v3048
      %v3050 = vsel %vm935, %v2966, %v2954
      %v3051 = vsel %vm937, %v2978, %v3050
      %v3052 = vsel %vm939, %v2990, %v3051
      %v3053 = vsel %vm941, %v3002, %v3052
      %v3054 = vsel %vm943, %v3014, %v3053
      %v3055 = vsel %vm945, %v3026, %v3054
      %v3056 = vsel %vm947, %v3038, %v3055
      %v3057 = vsel %vm935, %v2970, %v2958
      %v3058 = vsel %vm937, %v2982, %v3057
      %v3059 = vsel %vm939, %v2994, %v3058
      %v3060 = vsel %vm941, %v3006, %v3059
      %v3061 = vsel %vm943, %v3018, %v3060
      %v3062 = vsel %vm945, %v3030, %v3061
      %v3063 = vsel %vm947, %v3042, %v3062
      %3064 = vrot.lane.b32.xlu0 %v3049, 19
      %v3065 = vpop.permute.xlu0 %3064
      %3066 = vrot.lane.b32.xlu0 %v3056, 19
      %v3067 = vpop.permute.xlu0 %3066
      %3068 = vrot.lane.b32.xlu0 %v3063, 19
      %v3069 = vpop.permute.xlu0 %3068
      %v3070 = vsel %vm969, %v3065, %v3067
      %v3071 = vsel %vm969, %v3067, %v3069
      %s3076 = scalar_lea.vmem [#allocation2], 96
      %3077 = vst.msk [vmem:[%s3076] sm:$0xff] %vm976, %v3065
      %3078 = vst [vmem:[%s3076 + $0x8] sm:$0xff] %v3070
      %3079 = vst [vmem:[%s3076 + $0x10] sm:$0xff] %v3071
      %3080 = vst.msk [vmem:[%s3076 + $0x18] sm:$0xff] %vm969, %v3069
      %v3081 = vld [vmem:[%s3076] sm:$0xff]
      %v3082 = vld [vmem:[%s3076 + $0x8] sm:$0xff]
      %v3083 = vld [vmem:[%s3076 + $0x10] sm:$0xff]
      %v3084 = vld [vmem:[%s2376] sm:$0xff]
      %v3085 = vld [vmem:[%s2376 + $0x8] sm:$0xff]
      %v3086 = vld [vmem:[%s2376 + $0x10] sm:$0xff]
      %v3087 = vld [vmem:[%s2376 + $0x18] sm:$0xff]
      %v3088 = vld [vmem:[%s3076 + $0x18] sm:$0xff]
      %v3089 = vld [vmem:[%s1676] sm:$0xff]
      %v3090 = vld [vmem:[%s1676 + $0x8] sm:$0xff]
      %v3091 = vld [vmem:[%s1676 + $0x10] sm:$0xff]
      %v3092 = vld [vmem:[%s1676 + $0x18] sm:$0xff]
      %v3093 = vld [vmem:[#allocation2] sm:$0xff]
      %v3094 = vld [vmem:[#allocation2 + $0x8] sm:$0xff]
      %v3095 = vld [vmem:[#allocation2 + $0x10] sm:$0xff]
      %v3096 = vld [vmem:[#allocation2 + $0x18] sm:$0xff]
      %3101 = vrot.lane.b32.xlu0 %v3084, 127
      %v3102 = vpop.permute.xlu0 %3101
      %3103 = vrot.lane.b32.xlu0 %v3085, 127
      %v3104 = vpop.permute.xlu0 %3103
      %3105 = vrot.lane.b32.xlu0 %v3086, 127
      %v3106 = vpop.permute.xlu0 %3105
      %3107 = vrot.lane.b32.xlu0 %v3087, 127
      %v3108 = vpop.permute.xlu0 %3107
      %vm3109 = vcmask 1039360
      %v3110 = vsel %vm3109, %v3102, %v3104
      %v3111 = vsel %vm3109, %v3104, %v3106
      %v3112 = vsel %vm3109, %v3106, %v3108
      %3120 = vrot.lane.b32.xlu0 %v3081, 127
      %v3121 = vpop.permute.xlu0 %3120
      %3122 = vrot.lane.b32.xlu0 %v3082, 127
      %v3123 = vpop.permute.xlu0 %3122
      %3124 = vrot.lane.b32.xlu0 %v3083, 127
      %v3125 = vpop.permute.xlu0 %3124
      %3126 = vrot.lane.b32.xlu0 %v3088, 127
      %v3127 = vpop.permute.xlu0 %3126
      %v3128 = vsel %vm3109, %v3121, %v3123
      %v3129 = vsel %vm3109, %v3123, %v3125
      %v3130 = vsel %vm3109, %v3125, %v3127
      %3138 = vrot.lane.b32.xlu0 %v3089, 110
      %v3139 = vpop.permute.xlu0 %3138
      %3140 = vrot.lane.b32.xlu0 %v3090, 110
      %v3141 = vpop.permute.xlu0 %3140
      %3142 = vrot.lane.b32.xlu0 %v3091, 110
      %v3143 = vpop.permute.xlu0 %3142
      %3144 = vrot.lane.b32.xlu0 %v3092, 110
      %v3145 = vpop.permute.xlu0 %3144
      %vm3146 = vcmask 900096
      %v3147 = vsel %vm3146, %v3139, %v3141
      %v3148 = vsel %vm3146, %v3141, %v3143
      %v3149 = vsel %vm3146, %v3143, %v3145
      %3157 = vrot.lane.b32.xlu0 %v3093, 109
      %v3158 = vpop.permute.xlu0 %3157
      %3159 = vrot.lane.b32.xlu0 %v3094, 109
      %v3160 = vpop.permute.xlu0 %3159
      %3161 = vrot.lane.b32.xlu0 %v3095, 109
      %v3162 = vpop.permute.xlu0 %3161
      %3163 = vrot.lane.b32.xlu0 %v3096, 109
      %v3164 = vpop.permute.xlu0 %3163
      %vm3165 = vcmask 891904
      %v3166 = vsel %vm3165, %v3158, %v3160
      %v3167 = vsel %vm3165, %v3160, %v3162
      %v3168 = vsel %vm3165, %v3162, %v3164
      %3172 = vrot.lane.b32.xlu0 %v3089, 109
      %v3173 = vpop.permute.xlu0 %3172
      %3174 = vrot.lane.b32.xlu0 %v3090, 109
      %v3175 = vpop.permute.xlu0 %3174
      %3176 = vrot.lane.b32.xlu0 %v3091, 109
      %v3177 = vpop.permute.xlu0 %3176
      %3178 = vrot.lane.b32.xlu0 %v3092, 109
      %v3179 = vpop.permute.xlu0 %3178
      %v3180 = vsel %vm3165, %v3173, %v3175
      %v3181 = vsel %vm3165, %v3175, %v3177
      %v3182 = vsel %vm3165, %v3177, %v3179
      %3186 = vrot.lane.b32.xlu0 %v3081, 110
      %v3187 = vpop.permute.xlu0 %3186
      %3188 = vrot.lane.b32.xlu0 %v3082, 110
      %v3189 = vpop.permute.xlu0 %3188
      %3190 = vrot.lane.b32.xlu0 %v3083, 110
      %v3191 = vpop.permute.xlu0 %3190
      %3192 = vrot.lane.b32.xlu0 %v3088, 110
      %v3193 = vpop.permute.xlu0 %3192
      %v3194 = vsel %vm3146, %v3187, %v3189
      %v3195 = vsel %vm3146, %v3189, %v3191
      %v3196 = vsel %vm3146, %v3191, %v3193
      %3200 = vrot.lane.b32.xlu0 %v3084, 109
      %v3201 = vpop.permute.xlu0 %3200
      %3202 = vrot.lane.b32.xlu0 %v3085, 109
      %v3203 = vpop.permute.xlu0 %3202
      %3204 = vrot.lane.b32.xlu0 %v3086, 109
      %v3205 = vpop.permute.xlu0 %3204
      %3206 = vrot.lane.b32.xlu0 %v3087, 109
      %v3207 = vpop.permute.xlu0 %3206
      %v3208 = vsel %vm3165, %v3201, %v3203
      %v3209 = vsel %vm3165, %v3203, %v3205
      %v3210 = vsel %vm3165, %v3205, %v3207
      %3214 = vrot.lane.b32.xlu0 %v3081, 109
      %v3215 = vpop.permute.xlu0 %3214
      %3216 = vrot.lane.b32.xlu0 %v3082, 109
      %v3217 = vpop.permute.xlu0 %3216
      %3218 = vrot.lane.b32.xlu0 %v3083, 109
      %v3219 = vpop.permute.xlu0 %3218
      %3220 = vrot.lane.b32.xlu0 %v3088, 109
      %v3221 = vpop.permute.xlu0 %3220
      %v3222 = vsel %vm3165, %v3215, %v3217
      %v3223 = vsel %vm3165, %v3217, %v3219
      %v3224 = vsel %vm3165, %v3219, %v3221
      %3229 = vset.pattern.permute.xlu0 0
      %3230 = vperm.xlu0 %3229, %v272
      %v3231 = vpop.permute.xlu0 %3230
      %vm3233 = vcmask 588800
      %v3235 = vsel %vm3233, %v271, 0
      %3237 = vmatprep.subr.mxu0 %v3082
      %3238 = vmatpush1.msra.mxu0 %v3081
      %3239 = vmatprep.subr.mxu0 %v3111
      %3240 = vmatpush1.msra.mxu0 %v3110
      %3241 = vmatprep.subr.mxu0 %v3129
      %3242 = vmatpush1.msra.mxu0 %v3128
      %3243 = vmatprep.subr.mxu0 %v3148
      %3244 = vmatpush1.msra.mxu0 %v3147
      %3245 = vmatprep.subr.mxu0 %v3167
      %3246 = vmatpush1.msra.mxu0 %v3166
      %3247 = vmatprep.subr.mxu0 %v3181
      %3248 = vmatpush1.msra.mxu0 %v3180
      %3249 = vmatprep.subr.mxu0 %v3195
      %3250 = vmatpush1.msra.mxu0 %v3194
      %3251 = vmatprep.subr.mxu0 %v3209
      %3252 = vmatpush1.msra.mxu0 %v3208
      %3253 = vmatprep.subr.mxu0 %v3223
      %3254 = vmatpush1.msra.mxu0 %v3222
      %3255 = vmatprep.subr.mxu0 0.0
      %3256 = vmatpush1.msra.mxu0 0.0
      %3257 = vmatprep.subr.mxu0 0.0
      %3258 = vmatpush1.msra.mxu0 0.0
      %3259 = vmatprep.subr.mxu0 0.0
      %3260 = vmatpush1.msra.mxu0 0.0
      %3261 = vmatprep.subr.mxu0 0.0
      %3262 = vmatpush1.msra.mxu0 0.0
      %3263 = vmatprep.subr.mxu0 0.0
      %3264 = vmatpush1.msra.mxu0 0.0
      %3265 = vmatprep.subr.mxu0 0.0
      %3266 = vmatpush1.msra.mxu0 0.0
      %3267 = vmatprep.subr.mxu0 0.0
      %3268 = vmatpush1.msra.mxu0 0.0
      %3269 = vmatprep.subr.mxu0 0.0
      %3270 = vmatpush1.msra.mxu0 0.0
      %3271 = vmatprep.subr.mxu0 0.0
      %3272 = vmatpush1.msra.mxu0 0.0
      %3273 = vmatprep.subr.mxu0 0.0
      %3274 = vmatpush1.msra.mxu0 0.0
      %3275 = vmatprep.subr.mxu0 0.0
      %3276 = vmatpush1.msra.mxu0 0.0
      %3277 = vmatprep.subr.mxu0 0.0
      %3278 = vmatpush1.msra.mxu0 0.0
      %3279 = vmatprep.subr.mxu0 0.0
      %3280 = vmatpush1.msra.mxu0 0.0
      %3281 = vmatprep.subr.mxu0 0.0
      %3282 = vmatpush1.msra.mxu0 0.0
      %3283 = vmatprep.subr.mxu0 0.0
      %3284 = vmatpush1.msra.mxu0 0.0
      %3285 = vmatprep.subr.mxu0 0.0
      %3286 = vmatpush1.msra.mxu0 0.0
      %3287 = vmatprep.subr.mxu0 0.0
      %3288 = vmatpush1.msra.mxu0 0.0
      %3289 = vmatprep.subr.mxu0 0.0
      %3290 = vmatpush1.msra.mxu0 0.0
      %3291 = vmatprep.subr.mxu0 0.0
      %3292 = vmatpush1.msra.mxu0 0.0
      %3293 = vmatprep.subr.mxu0 0.0
      %3294 = vmatpush1.msra.mxu0 0.0
      %3295 = vmatprep.subr.mxu0 0.0
      %3296 = vmatpush1.msra.mxu0 0.0
      %3297 = vmatprep.subr.mxu0 0.0
      %3298 = vmatpush1.msra.mxu0 0.0
      %3299 = vmatprep.subr.mxu0 0.0
      %3300 = vmatpush1.msra.mxu0 0.0
      %3301 = vmatprep.mubr.f32.mxu0 0.0
      %3302 = vmatmul.mubr.f32.gmra.mrb[0].mxu0 %v3235
      %v3303 = vpop.f32.mrb[0].mxu0
      %v3304 = vadd.f32 %v3231, %v3303
      %v3305 = vpop.f32.mrb[0].mxu0
      %v3306 = vadd.f32 %v3231, %v3305
      %3307 = vdwg.mxu0
      %3308 = vmatprep.subr.mxu0 0.0
      %3309 = vmatpush1.msra.mxu0 %v3083
      %3310 = vmatprep.subr.mxu0 0.0
      %3311 = vmatpush1.msra.mxu0 %v3112
      %3312 = vmatprep.subr.mxu0 0.0
      %3313 = vmatpush1.msra.mxu0 %v3130
      %3314 = vmatprep.subr.mxu0 0.0
      %3315 = vmatpush1.msra.mxu0 %v3149
      %3316 = vmatprep.subr.mxu0 0.0
      %3317 = vmatpush1.msra.mxu0 %v3168
      %3318 = vmatprep.subr.mxu0 0.0
      %3319 = vmatpush1.msra.mxu0 %v3182
      %3320 = vmatprep.subr.mxu0 0.0
      %3321 = vmatpush1.msra.mxu0 %v3196
      %3322 = vmatprep.subr.mxu0 0.0
      %3323 = vmatpush1.msra.mxu0 %v3210
      %3324 = vmatprep.subr.mxu0 0.0
      %3325 = vmatpush1.msra.mxu0 %v3224
      %3326 = vmatprep.subr.mxu0 0.0
      %3327 = vmatpush1.msra.mxu0 0.0
      %3328 = vmatprep.subr.mxu0 0.0
      %3329 = vmatpush1.msra.mxu0 0.0
      %3330 = vmatprep.subr.mxu0 0.0
      %3331 = vmatpush1.msra.mxu0 0.0
      %3332 = vmatprep.subr.mxu0 0.0
      %3333 = vmatpush1.msra.mxu0 0.0
      %3334 = vmatprep.subr.mxu0 0.0
      %3335 = vmatpush1.msra.mxu0 0.0
      %3336 = vmatprep.subr.mxu0 0.0
      %3337 = vmatpush1.msra.mxu0 0.0
      %3338 = vmatprep.subr.mxu0 0.0
      %3339 = vmatpush1.msra.mxu0 0.0
      %3340 = vmatprep.subr.mxu0 0.0
      %3341 = vmatpush1.msra.mxu0 0.0
      %3342 = vmatprep.subr.mxu0 0.0
      %3343 = vmatpush1.msra.mxu0 0.0
      %3344 = vmatprep.subr.mxu0 0.0
      %3345 = vmatpush1.msra.mxu0 0.0
      %3346 = vmatprep.subr.mxu0 0.0
      %3347 = vmatpush1.msra.mxu0 0.0
      %3348 = vmatprep.subr.mxu0 0.0
      %3349 = vmatpush1.msra.mxu0 0.0
      %3350 = vmatprep.subr.mxu0 0.0
      %3351 = vmatpush1.msra.mxu0 0.0
      %3352 = vmatprep.subr.mxu0 0.0
      %3353 = vmatpush1.msra.mxu0 0.0
      %3354 = vmatprep.subr.mxu0 0.0
      %3355 = vmatpush1.msra.mxu0 0.0
      %3356 = vmatprep.subr.mxu0 0.0
      %3357 = vmatpush1.msra.mxu0 0.0
      %3358 = vmatprep.subr.mxu0 0.0
      %3359 = vmatpush1.msra.mxu0 0.0
      %3360 = vmatprep.subr.mxu0 0.0
      %3361 = vmatpush1.msra.mxu0 0.0
      %3362 = vmatprep.subr.mxu0 0.0
      %3363 = vmatpush1.msra.mxu0 0.0
      %3364 = vmatprep.subr.mxu0 0.0
      %3365 = vmatpush1.msra.mxu0 0.0
      %3366 = vmatprep.subr.mxu0 0.0
      %3367 = vmatpush1.msra.mxu0 0.0
      %3368 = vmatprep.subr.mxu0 0.0
      %3369 = vmatpush1.msra.mxu0 0.0
      %3370 = vmatprep.subr.mxu0 0.0
      %3371 = vmatpush1.msra.mxu0 0.0
      %3372 = vmatprep.mubr.f32.mxu0 0.0
      %3373 = vmatmul.mubr.f32.gmra.mrb[0].mxu0 %v3235
      %v3374 = vpop.f32.mrb[0].mxu0
      %v3375 = vadd.f32 %v3231, %v3374
      %v3376 = vpop.f32.mrb[0].mxu0
      %3377 = vdwg.mxu0
      %v3380 = vcombine.low %v3304, %v3306
      %3382 = vst [vmem:[%s197] sm:$0x77] %v3380
      %3383 = vst [vmem:[%s197 + $0x8] sm:$0x7] %v3375
      %v3384 = vld [vmem:[%s2376] sm:$0xff]
      %v3385 = vld [vmem:[%s2376 + $0x8] sm:$0xff]
      %v3386 = vld [vmem:[%s2376 + $0x10] sm:$0xff]
      %v3387 = vld [vmem:[%s2376 + $0x18] sm:$0xff]
      %v3388 = vld [vmem:[%s3076] sm:$0xff]
      %v3389 = vld [vmem:[%s3076 + $0x8] sm:$0xff]
      %v3390 = vld [vmem:[%s3076 + $0x10] sm:$0xff]
      %v3391 = vld [vmem:[%s3076 + $0x18] sm:$0xff]
      %v3392 = vld [vmem:[#allocation2] sm:$0xff]
      %v3393 = vld [vmem:[#allocation2 + $0x8] sm:$0xff]
      %v3394 = vld [vmem:[#allocation2 + $0x10] sm:$0xff]
      %v3395 = vld [vmem:[#allocation2 + $0x18] sm:$0xff]
      %v3396 = vld [vmem:[%s1676] sm:$0xff]
      %v3397 = vld [vmem:[%s1676 + $0x8] sm:$0xff]
      %v3398 = vld [vmem:[%s1676 + $0x10] sm:$0xff]
      %v3399 = vld [vmem:[%s1676 + $0x18] sm:$0xff]
      %3404 = vrot.lane.b32.xlu0 %v3384, 127
      %v3405 = vpop.permute.xlu0 %3404
      %3406 = vrot.lane.b32.xlu0 %v3385, 127
      %v3407 = vpop.permute.xlu0 %3406
      %3408 = vrot.lane.b32.xlu0 %v3386, 127
      %v3409 = vpop.permute.xlu0 %3408
      %3410 = vrot.lane.b32.xlu0 %v3387, 127
      %v3411 = vpop.permute.xlu0 %3410
      %v3412 = vsel %vm3109, %v3405, %v3407
      %v3413 = vsel %vm3109, %v3407, %v3409
      %v3414 = vsel %vm3109, %v3409, %v3411
      %3419 = vrot.lane.b32.xlu0 %v3392, 110
      %v3420 = vpop.permute.xlu0 %3419
      %3421 = vrot.lane.b32.xlu0 %v3393, 110
      %v3422 = vpop.permute.xlu0 %3421
      %3423 = vrot.lane.b32.xlu0 %v3394, 110
      %v3424 = vpop.permute.xlu0 %3423
      %3425 = vrot.lane.b32.xlu0 %v3395, 110
      %v3426 = vpop.permute.xlu0 %3425
      %v3427 = vsel %vm3146, %v3420, %v3422
      %v3428 = vsel %vm3146, %v3422, %v3424
      %v3429 = vsel %vm3146, %v3424, %v3426
      %3434 = vrot.lane.b32.xlu0 %v3396, 110
      %v3435 = vpop.permute.xlu0 %3434
      %3436 = vrot.lane.b32.xlu0 %v3397, 110
      %v3437 = vpop.permute.xlu0 %3436
      %3438 = vrot.lane.b32.xlu0 %v3398, 110
      %v3439 = vpop.permute.xlu0 %3438
      %3440 = vrot.lane.b32.xlu0 %v3399, 110
      %v3441 = vpop.permute.xlu0 %3440
      %v3442 = vsel %vm3146, %v3435, %v3437
      %v3443 = vsel %vm3146, %v3437, %v3439
      %v3444 = vsel %vm3146, %v3439, %v3441
      %3445 = vrot.lane.b32.xlu0 %v3392, 109
      %v3446 = vpop.permute.xlu0 %3445
      %3447 = vrot.lane.b32.xlu0 %v3393, 109
      %v3448 = vpop.permute.xlu0 %3447
      %3449 = vrot.lane.b32.xlu0 %v3394, 109
      %v3450 = vpop.permute.xlu0 %3449
      %3451 = vrot.lane.b32.xlu0 %v3395, 109
      %v3452 = vpop.permute.xlu0 %3451
      %v3453 = vsel %vm3165, %v3446, %v3448
      %v3454 = vsel %vm3165, %v3448, %v3450
      %v3455 = vsel %vm3165, %v3450, %v3452
      %3456 = vrot.lane.b32.xlu0 %v3384, 110
      %v3457 = vpop.permute.xlu0 %3456
      %3458 = vrot.lane.b32.xlu0 %v3385, 110
      %v3459 = vpop.permute.xlu0 %3458
      %3460 = vrot.lane.b32.xlu0 %v3386, 110
      %v3461 = vpop.permute.xlu0 %3460
      %3462 = vrot.lane.b32.xlu0 %v3387, 110
      %v3463 = vpop.permute.xlu0 %3462
      %v3464 = vsel %vm3146, %v3457, %v3459
      %v3465 = vsel %vm3146, %v3459, %v3461
      %v3466 = vsel %vm3146, %v3461, %v3463
      %3471 = vrot.lane.b32.xlu0 %v3388, 110
      %v3472 = vpop.permute.xlu0 %3471
      %3473 = vrot.lane.b32.xlu0 %v3389, 110
      %v3474 = vpop.permute.xlu0 %3473
      %3475 = vrot.lane.b32.xlu0 %v3390, 110
      %v3476 = vpop.permute.xlu0 %3475
      %3477 = vrot.lane.b32.xlu0 %v3391, 110
      %v3478 = vpop.permute.xlu0 %3477
      %v3479 = vsel %vm3146, %v3472, %v3474
      %v3480 = vsel %vm3146, %v3474, %v3476
      %v3481 = vsel %vm3146, %v3476, %v3478
      %3482 = vrot.lane.b32.xlu0 %v3384, 109
      %v3483 = vpop.permute.xlu0 %3482
      %3484 = vrot.lane.b32.xlu0 %v3385, 109
      %v3485 = vpop.permute.xlu0 %3484
      %3486 = vrot.lane.b32.xlu0 %v3386, 109
      %v3487 = vpop.permute.xlu0 %3486
      %3488 = vrot.lane.b32.xlu0 %v3387, 109
      %v3489 = vpop.permute.xlu0 %3488
      %v3490 = vsel %vm3165, %v3483, %v3485
      %v3491 = vsel %vm3165, %v3485, %v3487
      %v3492 = vsel %vm3165, %v3487, %v3489
      %3493 = vrot.lane.b32.xlu0 %v3388, 127
      %v3494 = vpop.permute.xlu0 %3493
      %3495 = vrot.lane.b32.xlu0 %v3389, 127
      %v3496 = vpop.permute.xlu0 %3495
      %3497 = vrot.lane.b32.xlu0 %v3390, 127
      %v3498 = vpop.permute.xlu0 %3497
      %3499 = vrot.lane.b32.xlu0 %v3391, 127
      %v3500 = vpop.permute.xlu0 %3499
      %3501 = vrot.lane.b32.xlu0 %v3412, 127
      %v3502 = vpop.permute.xlu0 %3501
      %3503 = vrot.lane.b32.xlu0 %v3413, 127
      %v3504 = vpop.permute.xlu0 %3503
      %3505 = vrot.lane.b32.xlu0 %v3414, 127
      %v3506 = vpop.permute.xlu0 %3505
      %3507 = vrot.lane.b32.xlu0 %v3411, 127
      %v3508 = vpop.permute.xlu0 %3507
      %3509 = vrot.lane.b32.xlu0 %v3427, 127
      %v3510 = vpop.permute.xlu0 %3509
      %3511 = vrot.lane.b32.xlu0 %v3428, 127
      %v3512 = vpop.permute.xlu0 %3511
      %3513 = vrot.lane.b32.xlu0 %v3429, 127
      %v3514 = vpop.permute.xlu0 %3513
      %3515 = vrot.lane.b32.xlu0 %v3426, 127
      %v3516 = vpop.permute.xlu0 %3515
      %3517 = vrot.lane.b32.xlu0 %v3442, 127
      %v3518 = vpop.permute.xlu0 %3517
      %3519 = vrot.lane.b32.xlu0 %v3443, 127
      %v3520 = vpop.permute.xlu0 %3519
      %3521 = vrot.lane.b32.xlu0 %v3444, 127
      %v3522 = vpop.permute.xlu0 %3521
      %3523 = vrot.lane.b32.xlu0 %v3441, 127
      %v3524 = vpop.permute.xlu0 %3523
      %3525 = vrot.lane.b32.xlu0 %v3453, 127
      %v3526 = vpop.permute.xlu0 %3525
      %3527 = vrot.lane.b32.xlu0 %v3454, 127
      %v3528 = vpop.permute.xlu0 %3527
      %3529 = vrot.lane.b32.xlu0 %v3455, 127
      %v3530 = vpop.permute.xlu0 %3529
      %3531 = vrot.lane.b32.xlu0 %v3452, 127
      %v3532 = vpop.permute.xlu0 %3531
      %3533 = vrot.lane.b32.xlu0 %v3464, 127
      %v3534 = vpop.permute.xlu0 %3533
      %3535 = vrot.lane.b32.xlu0 %v3465, 127
      %v3536 = vpop.permute.xlu0 %3535
      %3537 = vrot.lane.b32.xlu0 %v3466, 127
      %v3538 = vpop.permute.xlu0 %3537
      %3539 = vrot.lane.b32.xlu0 %v3463, 127
      %v3540 = vpop.permute.xlu0 %3539
      %3541 = vrot.lane.b32.xlu0 %v3479, 127
      %v3542 = vpop.permute.xlu0 %3541
      %3543 = vrot.lane.b32.xlu0 %v3480, 127
      %v3544 = vpop.permute.xlu0 %3543
      %3545 = vrot.lane.b32.xlu0 %v3481, 127
      %v3546 = vpop.permute.xlu0 %3545
      %3547 = vrot.lane.b32.xlu0 %v3478, 127
      %v3548 = vpop.permute.xlu0 %3547
      %3549 = vrot.lane.b32.xlu0 %v3490, 127
      %v3550 = vpop.permute.xlu0 %3549
      %3551 = vrot.lane.b32.xlu0 %v3491, 127
      %v3552 = vpop.permute.xlu0 %3551
      %3553 = vrot.lane.b32.xlu0 %v3492, 127
      %v3554 = vpop.permute.xlu0 %3553
      %3555 = vrot.lane.b32.xlu0 %v3489, 127
      %v3556 = vpop.permute.xlu0 %3555
      %v3557 = vsel %vm3109, %v3494, %v3496
      %v3558 = vsel %vm3109, %v3496, %v3498
      %v3559 = vsel %vm3109, %v3498, %v3500
      %v3560 = vsel %vm3109, %v3502, %v3504
      %v3561 = vsel %vm3109, %v3504, %v3506
      %v3562 = vsel %vm3109, %v3506, %v3508
      %v3563 = vsel %vm3109, %v3510, %v3512
      %v3564 = vsel %vm3109, %v3512, %v3514
      %v3565 = vsel %vm3109, %v3514, %v3516
      %v3566 = vsel %vm3109, %v3518, %v3520
      %v3567 = vsel %vm3109, %v3520, %v3522
      %v3568 = vsel %vm3109, %v3522, %v3524
      %v3569 = vsel %vm3109, %v3526, %v3528
      %v3570 = vsel %vm3109, %v3528, %v3530
      %v3571 = vsel %vm3109, %v3530, %v3532
      %v3572 = vsel %vm3109, %v3534, %v3536
      %v3573 = vsel %vm3109, %v3536, %v3538
      %v3574 = vsel %vm3109, %v3538, %v3540
      %v3575 = vsel %vm3109, %v3542, %v3544
      %v3576 = vsel %vm3109, %v3544, %v3546
      %v3577 = vsel %vm3109, %v3546, %v3548
      %v3578 = vsel %vm3109, %v3550, %v3552
      %v3579 = vsel %vm3109, %v3552, %v3554
      %v3580 = vsel %vm3109, %v3554, %v3556
      %3608 = vmatprep.subr.mxu0 %v3413
      %3609 = vmatpush1.msra.mxu0 %v3412
      %3610 = vmatprep.subr.mxu0 %v3558
      %3611 = vmatpush1.msra.mxu0 %v3557
      %3612 = vmatprep.subr.mxu0 %v3561
      %3613 = vmatpush1.msra.mxu0 %v3560
      %3614 = vmatprep.subr.mxu0 %v3564
      %3615 = vmatpush1.msra.mxu0 %v3563
      %3616 = vmatprep.subr.mxu0 %v3567
      %3617 = vmatpush1.msra.mxu0 %v3566
      %3618 = vmatprep.subr.mxu0 %v3570
      %3619 = vmatpush1.msra.mxu0 %v3569
      %3620 = vmatprep.subr.mxu0 %v3573
      %3621 = vmatpush1.msra.mxu0 %v3572
      %3622 = vmatprep.subr.mxu0 %v3576
      %3623 = vmatpush1.msra.mxu0 %v3575
      %3624 = vmatprep.subr.mxu0 %v3579
      %3625 = vmatpush1.msra.mxu0 %v3578
      %3626 = vmatprep.subr.mxu0 0.0
      %3627 = vmatpush1.msra.mxu0 0.0
      %3628 = vmatprep.subr.mxu0 0.0
      %3629 = vmatpush1.msra.mxu0 0.0
      %3630 = vmatprep.subr.mxu0 0.0
      %3631 = vmatpush1.msra.mxu0 0.0
      %3632 = vmatprep.subr.mxu0 0.0
      %3633 = vmatpush1.msra.mxu0 0.0
      %3634 = vmatprep.subr.mxu0 0.0
      %3635 = vmatpush1.msra.mxu0 0.0
      %3636 = vmatprep.subr.mxu0 0.0
      %3637 = vmatpush1.msra.mxu0 0.0
      %3638 = vmatprep.subr.mxu0 0.0
      %3639 = vmatpush1.msra.mxu0 0.0
      %3640 = vmatprep.subr.mxu0 0.0
      %3641 = vmatpush1.msra.mxu0 0.0
      %3642 = vmatprep.subr.mxu0 0.0
      %3643 = vmatpush1.msra.mxu0 0.0
      %3644 = vmatprep.subr.mxu0 0.0
      %3645 = vmatpush1.msra.mxu0 0.0
      %3646 = vmatprep.subr.mxu0 0.0
      %3647 = vmatpush1.msra.mxu0 0.0
      %3648 = vmatprep.subr.mxu0 0.0
      %3649 = vmatpush1.msra.mxu0 0.0
      %3650 = vmatprep.subr.mxu0 0.0
      %3651 = vmatpush1.msra.mxu0 0.0
      %3652 = vmatprep.subr.mxu0 0.0
      %3653 = vmatpush1.msra.mxu0 0.0
      %3654 = vmatprep.subr.mxu0 0.0
      %3655 = vmatpush1.msra.mxu0 0.0
      %3656 = vmatprep.subr.mxu0 0.0
      %3657 = vmatpush1.msra.mxu0 0.0
      %3658 = vmatprep.subr.mxu0 0.0
      %3659 = vmatpush1.msra.mxu0 0.0
      %3660 = vmatprep.subr.mxu0 0.0
      %3661 = vmatpush1.msra.mxu0 0.0
      %3662 = vmatprep.subr.mxu0 0.0
      %3663 = vmatpush1.msra.mxu0 0.0
      %3664 = vmatprep.subr.mxu0 0.0
      %3665 = vmatpush1.msra.mxu0 0.0
      %3666 = vmatprep.subr.mxu0 0.0
      %3667 = vmatpush1.msra.mxu0 0.0
      %3668 = vmatprep.subr.mxu0 0.0
      %3669 = vmatpush1.msra.mxu0 0.0
      %3670 = vmatprep.subr.mxu0 0.0
      %3671 = vmatpush1.msra.mxu0 0.0
      %3672 = vmatprep.mubr.f32.mxu0 0.0
      %3673 = vmatmul.mubr.f32.gmra.mrb[0].mxu0 %v3235
      %v3674 = vpop.f32.mrb[0].mxu0
      %v3675 = vadd.f32 %v3231, %v3674
      %v3676 = vpop.f32.mrb[0].mxu0
      %v3677 = vadd.f32 %v3231, %v3676
      %3678 = vdwg.mxu0
      %3679 = vmatprep.subr.mxu0 0.0
      %3680 = vmatpush1.msra.mxu0 %v3414
      %3681 = vmatprep.subr.mxu0 0.0
      %3682 = vmatpush1.msra.mxu0 %v3559
      %3683 = vmatprep.subr.mxu0 0.0
      %3684 = vmatpush1.msra.mxu0 %v3562
      %3685 = vmatprep.subr.mxu0 0.0
      %3686 = vmatpush1.msra.mxu0 %v3565
      %3687 = vmatprep.subr.mxu0 0.0
      %3688 = vmatpush1.msra.mxu0 %v3568
      %3689 = vmatprep.subr.mxu0 0.0
      %3690 = vmatpush1.msra.mxu0 %v3571
      %3691 = vmatprep.subr.mxu0 0.0
      %3692 = vmatpush1.msra.mxu0 %v3574
      %3693 = vmatprep.subr.mxu0 0.0
      %3694 = vmatpush1.msra.mxu0 %v3577
      %3695 = vmatprep.subr.mxu0 0.0
      %3696 = vmatpush1.msra.mxu0 %v3580
      %3697 = vmatprep.subr.mxu0 0.0
      %3698 = vmatpush1.msra.mxu0 0.0
      %3699 = vmatprep.subr.mxu0 0.0
      %3700 = vmatpush1.msra.mxu0 0.0
      %3701 = vmatprep.subr.mxu0 0.0
      %3702 = vmatpush1.msra.mxu0 0.0
      %3703 = vmatprep.subr.mxu0 0.0
      %3704 = vmatpush1.msra.mxu0 0.0
      %3705 = vmatprep.subr.mxu0 0.0
      %3706 = vmatpush1.msra.mxu0 0.0
      %3707 = vmatprep.subr.mxu0 0.0
      %3708 = vmatpush1.msra.mxu0 0.0
      %3709 = vmatprep.subr.mxu0 0.0
      %3710 = vmatpush1.msra.mxu0 0.0
      %3711 = vmatprep.subr.mxu0 0.0
      %3712 = vmatpush1.msra.mxu0 0.0
      %3713 = vmatprep.subr.mxu0 0.0
      %3714 = vmatpush1.msra.mxu0 0.0
      %3715 = vmatprep.subr.mxu0 0.0
      %3716 = vmatpush1.msra.mxu0 0.0
      %3717 = vmatprep.subr.mxu0 0.0
      %3718 = vmatpush1.msra.mxu0 0.0
      %3719 = vmatprep.subr.mxu0 0.0
      %3720 = vmatpush1.msra.mxu0 0.0
      %3721 = vmatprep.subr.mxu0 0.0
      %3722 = vmatpush1.msra.mxu0 0.0
      %3723 = vmatprep.subr.mxu0 0.0
      %3724 = vmatpush1.msra.mxu0 0.0
      %3725 = vmatprep.subr.mxu0 0.0
      %3726 = vmatpush1.msra.mxu0 0.0
      %3727 = vmatprep.subr.mxu0 0.0
      %3728 = vmatpush1.msra.mxu0 0.0
      %3729 = vmatprep.subr.mxu0 0.0
      %3730 = vmatpush1.msra.mxu0 0.0
      %3731 = vmatprep.subr.mxu0 0.0
      %3732 = vmatpush1.msra.mxu0 0.0
      %3733 = vmatprep.subr.mxu0 0.0
      %3734 = vmatpush1.msra.mxu0 0.0
      %3735 = vmatprep.subr.mxu0 0.0
      %3736 = vmatpush1.msra.mxu0 0.0
      %3737 = vmatprep.subr.mxu0 0.0
      %3738 = vmatpush1.msra.mxu0 0.0
      %3739 = vmatprep.subr.mxu0 0.0
      %3740 = vmatpush1.msra.mxu0 0.0
      %3741 = vmatprep.subr.mxu0 0.0
      %3742 = vmatpush1.msra.mxu0 0.0
      %3743 = vmatprep.mubr.f32.mxu0 0.0
      %3744 = vmatmul.mubr.f32.gmra.mrb[0].mxu0 %v3235
      %v3745 = vpop.f32.mrb[0].mxu0
      %v3746 = vadd.f32 %v3231, %v3745
      %v3747 = vpop.f32.mrb[0].mxu0
      %3748 = vdwg.mxu0
      %v3751 = vcombine.low %v3675, %v3677
      %s3753 = scalar_lea.vmem %s197, 12
      %3754 = vst [vmem:[%s3753] sm:$0x77] %v3751
      %3755 = vst [vmem:[%s3753 + $0x8] sm:$0x7] %v3746
      %v3756 = vld [vmem:[%s1676] sm:$0xff]
      %v3757 = vld [vmem:[%s1676 + $0x8] sm:$0xff]
      %v3758 = vld [vmem:[%s1676 + $0x10] sm:$0xff]
      %v3759 = vld [vmem:[%s1676 + $0x18] sm:$0xff]
      %v3760 = vld [vmem:[#allocation2] sm:$0xff]
      %v3761 = vld [vmem:[#allocation2 + $0x8] sm:$0xff]
      %v3762 = vld [vmem:[#allocation2 + $0x10] sm:$0xff]
      %v3763 = vld [vmem:[#allocation2 + $0x18] sm:$0xff]
      %v3764 = vld [vmem:[%s3076] sm:$0xff]
      %v3765 = vld [vmem:[%s3076 + $0x8] sm:$0xff]
      %v3766 = vld [vmem:[%s3076 + $0x10] sm:$0xff]
      %v3767 = vld [vmem:[%s3076 + $0x18] sm:$0xff]
      %v3768 = vld [vmem:[%s2376] sm:$0xff]
      %v3769 = vld [vmem:[%s2376 + $0x8] sm:$0xff]
      %v3770 = vld [vmem:[%s2376 + $0x10] sm:$0xff]
      %v3771 = vld [vmem:[%s2376 + $0x18] sm:$0xff]
      %3776 = vrot.lane.b32.xlu0 %v3760, 127
      %v3777 = vpop.permute.xlu0 %3776
      %3778 = vrot.lane.b32.xlu0 %v3761, 127
      %v3779 = vpop.permute.xlu0 %3778
      %3780 = vrot.lane.b32.xlu0 %v3762, 127
      %v3781 = vpop.permute.xlu0 %3780
      %3782 = vrot.lane.b32.xlu0 %v3763, 127
      %v3783 = vpop.permute.xlu0 %3782
      %v3784 = vsel %vm3109, %v3777, %v3779
      %v3785 = vsel %vm3109, %v3779, %v3781
      %v3786 = vsel %vm3109, %v3781, %v3783
      %3791 = vrot.lane.b32.xlu0 %v3756, 127
      %v3792 = vpop.permute.xlu0 %3791
      %3793 = vrot.lane.b32.xlu0 %v3757, 127
      %v3794 = vpop.permute.xlu0 %3793
      %3795 = vrot.lane.b32.xlu0 %v3758, 127
      %v3796 = vpop.permute.xlu0 %3795
      %3797 = vrot.lane.b32.xlu0 %v3759, 127
      %v3798 = vpop.permute.xlu0 %3797
      %v3799 = vsel %vm3109, %v3792, %v3794
      %v3800 = vsel %vm3109, %v3794, %v3796
      %v3801 = vsel %vm3109, %v3796, %v3798
      %3806 = vrot.lane.b32.xlu0 %v3768, 127
      %v3807 = vpop.permute.xlu0 %3806
      %3808 = vrot.lane.b32.xlu0 %v3769, 127
      %v3809 = vpop.permute.xlu0 %3808
      %3810 = vrot.lane.b32.xlu0 %v3770, 127
      %v3811 = vpop.permute.xlu0 %3810
      %3812 = vrot.lane.b32.xlu0 %v3771, 127
      %v3813 = vpop.permute.xlu0 %3812
      %v3814 = vsel %vm3109, %v3807, %v3809
      %v3815 = vsel %vm3109, %v3809, %v3811
      %v3816 = vsel %vm3109, %v3811, %v3813
      %3821 = vrot.lane.b32.xlu0 %v3764, 127
      %v3822 = vpop.permute.xlu0 %3821
      %3823 = vrot.lane.b32.xlu0 %v3765, 127
      %v3824 = vpop.permute.xlu0 %3823
      %3825 = vrot.lane.b32.xlu0 %v3766, 127
      %v3826 = vpop.permute.xlu0 %3825
      %3827 = vrot.lane.b32.xlu0 %v3767, 127
      %v3828 = vpop.permute.xlu0 %3827
      %v3829 = vsel %vm3109, %v3822, %v3824
      %v3830 = vsel %vm3109, %v3824, %v3826
      %v3831 = vsel %vm3109, %v3826, %v3828
      %3832 = vrot.lane.b32.xlu0 %v3756, 110
      %v3833 = vpop.permute.xlu0 %3832
      %3834 = vrot.lane.b32.xlu0 %v3757, 110
      %v3835 = vpop.permute.xlu0 %3834
      %3836 = vrot.lane.b32.xlu0 %v3758, 110
      %v3837 = vpop.permute.xlu0 %3836
      %3838 = vrot.lane.b32.xlu0 %v3759, 110
      %v3839 = vpop.permute.xlu0 %3838
      %v3840 = vsel %vm3146, %v3833, %v3835
      %v3841 = vsel %vm3146, %v3835, %v3837
      %v3842 = vsel %vm3146, %v3837, %v3839
      %3843 = vrot.lane.b32.xlu0 %v3760, 109
      %v3844 = vpop.permute.xlu0 %3843
      %3845 = vrot.lane.b32.xlu0 %v3761, 109
      %v3846 = vpop.permute.xlu0 %3845
      %3847 = vrot.lane.b32.xlu0 %v3762, 109
      %v3848 = vpop.permute.xlu0 %3847
      %3849 = vrot.lane.b32.xlu0 %v3763, 109
      %v3850 = vpop.permute.xlu0 %3849
      %v3851 = vsel %vm3165, %v3844, %v3846
      %v3852 = vsel %vm3165, %v3846, %v3848
      %v3853 = vsel %vm3165, %v3848, %v3850
      %3854 = vrot.lane.b32.xlu0 %v3756, 109
      %v3855 = vpop.permute.xlu0 %3854
      %3856 = vrot.lane.b32.xlu0 %v3757, 109
      %v3857 = vpop.permute.xlu0 %3856
      %3858 = vrot.lane.b32.xlu0 %v3758, 109
      %v3859 = vpop.permute.xlu0 %3858
      %3860 = vrot.lane.b32.xlu0 %v3759, 109
      %v3861 = vpop.permute.xlu0 %3860
      %v3862 = vsel %vm3165, %v3855, %v3857
      %v3863 = vsel %vm3165, %v3857, %v3859
      %v3864 = vsel %vm3165, %v3859, %v3861
      %3865 = vrot.lane.b32.xlu0 %v3784, 110
      %v3866 = vpop.permute.xlu0 %3865
      %3867 = vrot.lane.b32.xlu0 %v3785, 110
      %v3868 = vpop.permute.xlu0 %3867
      %3869 = vrot.lane.b32.xlu0 %v3786, 110
      %v3870 = vpop.permute.xlu0 %3869
      %3871 = vrot.lane.b32.xlu0 %v3783, 110
      %v3872 = vpop.permute.xlu0 %3871
      %3873 = vrot.lane.b32.xlu0 %v3799, 110
      %v3874 = vpop.permute.xlu0 %3873
      %3875 = vrot.lane.b32.xlu0 %v3800, 110
      %v3876 = vpop.permute.xlu0 %3875
      %3877 = vrot.lane.b32.xlu0 %v3801, 110
      %v3878 = vpop.permute.xlu0 %3877
      %3879 = vrot.lane.b32.xlu0 %v3798, 110
      %v3880 = vpop.permute.xlu0 %3879
      %3881 = vrot.lane.b32.xlu0 %v3764, 110
      %v3882 = vpop.permute.xlu0 %3881
      %3883 = vrot.lane.b32.xlu0 %v3765, 110
      %v3884 = vpop.permute.xlu0 %3883
      %3885 = vrot.lane.b32.xlu0 %v3766, 110
      %v3886 = vpop.permute.xlu0 %3885
      %3887 = vrot.lane.b32.xlu0 %v3767, 110
      %v3888 = vpop.permute.xlu0 %3887
      %3889 = vrot.lane.b32.xlu0 %v3814, 110
      %v3890 = vpop.permute.xlu0 %3889
      %3891 = vrot.lane.b32.xlu0 %v3815, 110
      %v3892 = vpop.permute.xlu0 %3891
      %3893 = vrot.lane.b32.xlu0 %v3816, 110
      %v3894 = vpop.permute.xlu0 %3893
      %3895 = vrot.lane.b32.xlu0 %v3813, 110
      %v3896 = vpop.permute.xlu0 %3895
      %3897 = vrot.lane.b32.xlu0 %v3829, 110
      %v3898 = vpop.permute.xlu0 %3897
      %3899 = vrot.lane.b32.xlu0 %v3830, 110
      %v3900 = vpop.permute.xlu0 %3899
      %3901 = vrot.lane.b32.xlu0 %v3831, 110
      %v3902 = vpop.permute.xlu0 %3901
      %3903 = vrot.lane.b32.xlu0 %v3828, 110
      %v3904 = vpop.permute.xlu0 %3903
      %3905 = vrot.lane.b32.xlu0 %v3840, 110
      %v3906 = vpop.permute.xlu0 %3905
      %3907 = vrot.lane.b32.xlu0 %v3841, 110
      %v3908 = vpop.permute.xlu0 %3907
      %3909 = vrot.lane.b32.xlu0 %v3842, 110
      %v3910 = vpop.permute.xlu0 %3909
      %3911 = vrot.lane.b32.xlu0 %v3839, 110
      %v3912 = vpop.permute.xlu0 %3911
      %3913 = vrot.lane.b32.xlu0 %v3851, 110
      %v3914 = vpop.permute.xlu0 %3913
      %3915 = vrot.lane.b32.xlu0 %v3852, 110
      %v3916 = vpop.permute.xlu0 %3915
      %3917 = vrot.lane.b32.xlu0 %v3853, 110
      %v3918 = vpop.permute.xlu0 %3917
      %3919 = vrot.lane.b32.xlu0 %v3850, 110
      %v3920 = vpop.permute.xlu0 %3919
      %3921 = vrot.lane.b32.xlu0 %v3862, 110
      %v3922 = vpop.permute.xlu0 %3921
      %3923 = vrot.lane.b32.xlu0 %v3863, 110
      %v3924 = vpop.permute.xlu0 %3923
      %3925 = vrot.lane.b32.xlu0 %v3864, 110
      %v3926 = vpop.permute.xlu0 %3925
      %3927 = vrot.lane.b32.xlu0 %v3861, 110
      %v3928 = vpop.permute.xlu0 %3927
      %v3929 = vsel %vm3146, %v3866, %v3868
      %v3930 = vsel %vm3146, %v3868, %v3870
      %v3931 = vsel %vm3146, %v3870, %v3872
      %v3932 = vsel %vm3146, %v3874, %v3876
      %v3933 = vsel %vm3146, %v3876, %v3878
      %v3934 = vsel %vm3146, %v3878, %v3880
      %v3935 = vsel %vm3146, %v3882, %v3884
      %v3936 = vsel %vm3146, %v3884, %v3886
      %v3937 = vsel %vm3146, %v3886, %v3888
      %v3938 = vsel %vm3146, %v3890, %v3892
      %v3939 = vsel %vm3146, %v3892, %v3894
      %v3940 = vsel %vm3146, %v3894, %v3896
      %v3941 = vsel %vm3146, %v3898, %v3900
      %v3942 = vsel %vm3146, %v3900, %v3902
      %v3943 = vsel %vm3146, %v3902, %v3904
      %v3944 = vsel %vm3146, %v3906, %v3908
      %v3945 = vsel %vm3146, %v3908, %v3910
      %v3946 = vsel %vm3146, %v3910, %v3912
      %v3947 = vsel %vm3146, %v3914, %v3916
      %v3948 = vsel %vm3146, %v3916, %v3918
      %v3949 = vsel %vm3146, %v3918, %v3920
      %v3950 = vsel %vm3146, %v3922, %v3924
      %v3951 = vsel %vm3146, %v3924, %v3926
      %v3952 = vsel %vm3146, %v3926, %v3928
      %3980 = vmatprep.subr.mxu0 %v3841
      %3981 = vmatpush1.msra.mxu0 %v3840
      %3982 = vmatprep.subr.mxu0 %v3930
      %3983 = vmatpush1.msra.mxu0 %v3929
      %3984 = vmatprep.subr.mxu0 %v3933
      %3985 = vmatpush1.msra.mxu0 %v3932
      %3986 = vmatprep.subr.mxu0 %v3936
      %3987 = vmatpush1.msra.mxu0 %v3935
      %3988 = vmatprep.subr.mxu0 %v3939
      %3989 = vmatpush1.msra.mxu0 %v3938
      %3990 = vmatprep.subr.mxu0 %v3942
      %3991 = vmatpush1.msra.mxu0 %v3941
      %3992 = vmatprep.subr.mxu0 %v3945
      %3993 = vmatpush1.msra.mxu0 %v3944
      %3994 = vmatprep.subr.mxu0 %v3948
      %3995 = vmatpush1.msra.mxu0 %v3947
      %3996 = vmatprep.subr.mxu0 %v3951
      %3997 = vmatpush1.msra.mxu0 %v3950
      %3998 = vmatprep.subr.mxu0 0.0
      %3999 = vmatpush1.msra.mxu0 0.0
      %4000 = vmatprep.subr.mxu0 0.0
      %4001 = vmatpush1.msra.mxu0 0.0
      %4002 = vmatprep.subr.mxu0 0.0
      %4003 = vmatpush1.msra.mxu0 0.0
      %4004 = vmatprep.subr.mxu0 0.0
      %4005 = vmatpush1.msra.mxu0 0.0
      %4006 = vmatprep.subr.mxu0 0.0
      %4007 = vmatpush1.msra.mxu0 0.0
      %4008 = vmatprep.subr.mxu0 0.0
      %4009 = vmatpush1.msra.mxu0 0.0
      %4010 = vmatprep.subr.mxu0 0.0
      %4011 = vmatpush1.msra.mxu0 0.0
      %4012 = vmatprep.subr.mxu0 0.0
      %4013 = vmatpush1.msra.mxu0 0.0
      %4014 = vmatprep.subr.mxu0 0.0
      %4015 = vmatpush1.msra.mxu0 0.0
      %4016 = vmatprep.subr.mxu0 0.0
      %4017 = vmatpush1.msra.mxu0 0.0
      %4018 = vmatprep.subr.mxu0 0.0
      %4019 = vmatpush1.msra.mxu0 0.0
      %4020 = vmatprep.subr.mxu0 0.0
      %4021 = vmatpush1.msra.mxu0 0.0
      %4022 = vmatprep.subr.mxu0 0.0
      %4023 = vmatpush1.msra.mxu0 0.0
      %4024 = vmatprep.subr.mxu0 0.0
      %4025 = vmatpush1.msra.mxu0 0.0
      %4026 = vmatprep.subr.mxu0 0.0
      %4027 = vmatpush1.msra.mxu0 0.0
      %4028 = vmatprep.subr.mxu0 0.0
      %4029 = vmatpush1.msra.mxu0 0.0
      %4030 = vmatprep.subr.mxu0 0.0
      %4031 = vmatpush1.msra.mxu0 0.0
      %4032 = vmatprep.subr.mxu0 0.0
      %4033 = vmatpush1.msra.mxu0 0.0
      %4034 = vmatprep.subr.mxu0 0.0
      %4035 = vmatpush1.msra.mxu0 0.0
      %4036 = vmatprep.subr.mxu0 0.0
      %4037 = vmatpush1.msra.mxu0 0.0
      %4038 = vmatprep.subr.mxu0 0.0
      %4039 = vmatpush1.msra.mxu0 0.0
      %4040 = vmatprep.subr.mxu0 0.0
      %4041 = vmatpush1.msra.mxu0 0.0
      %4042 = vmatprep.subr.mxu0 0.0
      %4043 = vmatpush1.msra.mxu0 0.0
      %4044 = vmatprep.mubr.f32.mxu0 0.0
      %4045 = vmatmul.mubr.f32.gmra.mrb[0].mxu0 %v3235
      %v4046 = vpop.f32.mrb[0].mxu0
      %v4047 = vadd.f32 %v3231, %v4046
      %v4048 = vpop.f32.mrb[0].mxu0
      %v4049 = vadd.f32 %v3231, %v4048
      %4050 = vdwg.mxu0
      %4051 = vmatprep.subr.mxu0 0.0
      %4052 = vmatpush1.msra.mxu0 %v3842
      %4053 = vmatprep.subr.mxu0 0.0
      %4054 = vmatpush1.msra.mxu0 %v3931
      %4055 = vmatprep.subr.mxu0 0.0
      %4056 = vmatpush1.msra.mxu0 %v3934
      %4057 = vmatprep.subr.mxu0 0.0
      %4058 = vmatpush1.msra.mxu0 %v3937
      %4059 = vmatprep.subr.mxu0 0.0
      %4060 = vmatpush1.msra.mxu0 %v3940
      %4061 = vmatprep.subr.mxu0 0.0
      %4062 = vmatpush1.msra.mxu0 %v3943
      %4063 = vmatprep.subr.mxu0 0.0
      %4064 = vmatpush1.msra.mxu0 %v3946
      %4065 = vmatprep.subr.mxu0 0.0
      %4066 = vmatpush1.msra.mxu0 %v3949
      %4067 = vmatprep.subr.mxu0 0.0
      %4068 = vmatpush1.msra.mxu0 %v3952
      %4069 = vmatprep.subr.mxu0 0.0
      %4070 = vmatpush1.msra.mxu0 0.0
      %4071 = vmatprep.subr.mxu0 0.0
      %4072 = vmatpush1.msra.mxu0 0.0
      %4073 = vmatprep.subr.mxu0 0.0
      %4074 = vmatpush1.msra.mxu0 0.0
      %4075 = vmatprep.subr.mxu0 0.0
      %4076 = vmatpush1.msra.mxu0 0.0
      %4077 = vmatprep.subr.mxu0 0.0
      %4078 = vmatpush1.msra.mxu0 0.0
      %4079 = vmatprep.subr.mxu0 0.0
      %4080 = vmatpush1.msra.mxu0 0.0
      %4081 = vmatprep.subr.mxu0 0.0
      %4082 = vmatpush1.msra.mxu0 0.0
      %4083 = vmatprep.subr.mxu0 0.0
      %4084 = vmatpush1.msra.mxu0 0.0
      %4085 = vmatprep.subr.mxu0 0.0
      %4086 = vmatpush1.msra.mxu0 0.0
      %4087 = vmatprep.subr.mxu0 0.0
      %4088 = vmatpush1.msra.mxu0 0.0
      %4089 = vmatprep.subr.mxu0 0.0
      %4090 = vmatpush1.msra.mxu0 0.0
      %4091 = vmatprep.subr.mxu0 0.0
      %4092 = vmatpush1.msra.mxu0 0.0
      %4093 = vmatprep.subr.mxu0 0.0
      %4094 = vmatpush1.msra.mxu0 0.0
      %4095 = vmatprep.subr.mxu0 0.0
      %4096 = vmatpush1.msra.mxu0 0.0
      %4097 = vmatprep.subr.mxu0 0.0
      %4098 = vmatpush1.msra.mxu0 0.0
      %4099 = vmatprep.subr.mxu0 0.0
      %4100 = vmatpush1.msra.mxu0 0.0
      %4101 = vmatprep.subr.mxu0 0.0
      %4102 = vmatpush1.msra.mxu0 0.0
      %4103 = vmatprep.subr.mxu0 0.0
      %4104 = vmatpush1.msra.mxu0 0.0
      %4105 = vmatprep.subr.mxu0 0.0
      %4106 = vmatpush1.msra.mxu0 0.0
      %4107 = vmatprep.subr.mxu0 0.0
      %4108 = vmatpush1.msra.mxu0 0.0
      %4109 = vmatprep.subr.mxu0 0.0
      %4110 = vmatpush1.msra.mxu0 0.0
      %4111 = vmatprep.subr.mxu0 0.0
      %4112 = vmatpush1.msra.mxu0 0.0
      %4113 = vmatprep.subr.mxu0 0.0
      %4114 = vmatpush1.msra.mxu0 0.0
      %4115 = vmatprep.mubr.f32.mxu0 0.0
      %4116 = vmatmul.mubr.f32.gmra.mrb[0].mxu0 %v3235
      %v4117 = vpop.f32.mrb[0].mxu0
      %v4118 = vadd.f32 %v3231, %v4117
      %v4119 = vpop.f32.mrb[0].mxu0
      %4120 = vdwg.mxu0
      %v4123 = vcombine.low %v4047, %v4049
      %s4125 = scalar_lea.vmem %s197, 24
      %4126 = vst [vmem:[%s4125] sm:$0x77] %v4123
      %4127 = vst [vmem:[%s4125 + $0x8] sm:$0x7] %v4118
      %v4128 = vld [vmem:[#allocation2] sm:$0xff]
      %v4129 = vld [vmem:[#allocation2 + $0x8] sm:$0xff]
      %v4130 = vld [vmem:[#allocation2 + $0x10] sm:$0xff]
      %v4131 = vld [vmem:[#allocation2 + $0x18] sm:$0xff]
      %v4132 = vld [vmem:[%s1676] sm:$0xff]
      %v4133 = vld [vmem:[%s1676 + $0x8] sm:$0xff]
      %v4134 = vld [vmem:[%s1676 + $0x10] sm:$0xff]
      %v4135 = vld [vmem:[%s1676 + $0x18] sm:$0xff]
      %v4136 = vld [vmem:[%s2376] sm:$0xff]
      %v4137 = vld [vmem:[%s2376 + $0x8] sm:$0xff]
      %v4138 = vld [vmem:[%s2376 + $0x10] sm:$0xff]
      %v4139 = vld [vmem:[%s2376 + $0x18] sm:$0xff]
      %v4140 = vld [vmem:[%s3076] sm:$0xff]
      %v4141 = vld [vmem:[%s3076 + $0x8] sm:$0xff]
      %v4142 = vld [vmem:[%s3076 + $0x10] sm:$0xff]
      %v4143 = vld [vmem:[%s3076 + $0x18] sm:$0xff]
      %4148 = vrot.lane.b32.xlu0 %v4128, 127
      %v4149 = vpop.permute.xlu0 %4148
      %4150 = vrot.lane.b32.xlu0 %v4129, 127
      %v4151 = vpop.permute.xlu0 %4150
      %4152 = vrot.lane.b32.xlu0 %v4130, 127
      %v4153 = vpop.permute.xlu0 %4152
      %4154 = vrot.lane.b32.xlu0 %v4131, 127
      %v4155 = vpop.permute.xlu0 %4154
      %v4156 = vsel %vm3109, %v4149, %v4151
      %v4157 = vsel %vm3109, %v4151, %v4153
      %v4158 = vsel %vm3109, %v4153, %v4155
      %4163 = vrot.lane.b32.xlu0 %v4136, 127
      %v4164 = vpop.permute.xlu0 %4163
      %4165 = vrot.lane.b32.xlu0 %v4137, 127
      %v4166 = vpop.permute.xlu0 %4165
      %4167 = vrot.lane.b32.xlu0 %v4138, 127
      %v4168 = vpop.permute.xlu0 %4167
      %4169 = vrot.lane.b32.xlu0 %v4139, 127
      %v4170 = vpop.permute.xlu0 %4169
      %v4171 = vsel %vm3109, %v4164, %v4166
      %v4172 = vsel %vm3109, %v4166, %v4168
      %v4173 = vsel %vm3109, %v4168, %v4170
      %4174 = vrot.lane.b32.xlu0 %v4128, 110
      %v4175 = vpop.permute.xlu0 %4174
      %4176 = vrot.lane.b32.xlu0 %v4129, 110
      %v4177 = vpop.permute.xlu0 %4176
      %4178 = vrot.lane.b32.xlu0 %v4130, 110
      %v4179 = vpop.permute.xlu0 %4178
      %4180 = vrot.lane.b32.xlu0 %v4131, 110
      %v4181 = vpop.permute.xlu0 %4180
      %v4182 = vsel %vm3146, %v4175, %v4177
      %v4183 = vsel %vm3146, %v4177, %v4179
      %v4184 = vsel %vm3146, %v4179, %v4181
      %4189 = vrot.lane.b32.xlu0 %v4132, 110
      %v4190 = vpop.permute.xlu0 %4189
      %4191 = vrot.lane.b32.xlu0 %v4133, 110
      %v4192 = vpop.permute.xlu0 %4191
      %4193 = vrot.lane.b32.xlu0 %v4134, 110
      %v4194 = vpop.permute.xlu0 %4193
      %4195 = vrot.lane.b32.xlu0 %v4135, 110
      %v4196 = vpop.permute.xlu0 %4195
      %v4197 = vsel %vm3146, %v4190, %v4192
      %v4198 = vsel %vm3146, %v4192, %v4194
      %v4199 = vsel %vm3146, %v4194, %v4196
      %4200 = vrot.lane.b32.xlu0 %v4128, 109
      %v4201 = vpop.permute.xlu0 %4200
      %4202 = vrot.lane.b32.xlu0 %v4129, 109
      %v4203 = vpop.permute.xlu0 %4202
      %4204 = vrot.lane.b32.xlu0 %v4130, 109
      %v4205 = vpop.permute.xlu0 %4204
      %4206 = vrot.lane.b32.xlu0 %v4131, 109
      %v4207 = vpop.permute.xlu0 %4206
      %v4208 = vsel %vm3165, %v4201, %v4203
      %v4209 = vsel %vm3165, %v4203, %v4205
      %v4210 = vsel %vm3165, %v4205, %v4207
      %4215 = vrot.lane.b32.xlu0 %v4132, 109
      %v4216 = vpop.permute.xlu0 %4215
      %4217 = vrot.lane.b32.xlu0 %v4133, 109
      %v4218 = vpop.permute.xlu0 %4217
      %4219 = vrot.lane.b32.xlu0 %v4134, 109
      %v4220 = vpop.permute.xlu0 %4219
      %4221 = vrot.lane.b32.xlu0 %v4135, 109
      %v4222 = vpop.permute.xlu0 %4221
      %4223 = vrot.lane.b32.xlu0 %v4156, 109
      %v4224 = vpop.permute.xlu0 %4223
      %4225 = vrot.lane.b32.xlu0 %v4157, 109
      %v4226 = vpop.permute.xlu0 %4225
      %4227 = vrot.lane.b32.xlu0 %v4158, 109
      %v4228 = vpop.permute.xlu0 %4227
      %4229 = vrot.lane.b32.xlu0 %v4155, 109
      %v4230 = vpop.permute.xlu0 %4229
      %4231 = vrot.lane.b32.xlu0 %v4136, 109
      %v4232 = vpop.permute.xlu0 %4231
      %4233 = vrot.lane.b32.xlu0 %v4137, 109
      %v4234 = vpop.permute.xlu0 %4233
      %4235 = vrot.lane.b32.xlu0 %v4138, 109
      %v4236 = vpop.permute.xlu0 %4235
      %4237 = vrot.lane.b32.xlu0 %v4139, 109
      %v4238 = vpop.permute.xlu0 %4237
      %4239 = vrot.lane.b32.xlu0 %v4140, 109
      %v4240 = vpop.permute.xlu0 %4239
      %4241 = vrot.lane.b32.xlu0 %v4141, 109
      %v4242 = vpop.permute.xlu0 %4241
      %4243 = vrot.lane.b32.xlu0 %v4142, 109
      %v4244 = vpop.permute.xlu0 %4243
      %4245 = vrot.lane.b32.xlu0 %v4143, 109
      %v4246 = vpop.permute.xlu0 %4245
      %4247 = vrot.lane.b32.xlu0 %v4171, 109
      %v4248 = vpop.permute.xlu0 %4247
      %4249 = vrot.lane.b32.xlu0 %v4172, 109
      %v4250 = vpop.permute.xlu0 %4249
      %4251 = vrot.lane.b32.xlu0 %v4173, 109
      %v4252 = vpop.permute.xlu0 %4251
      %4253 = vrot.lane.b32.xlu0 %v4170, 109
      %v4254 = vpop.permute.xlu0 %4253
      %4255 = vrot.lane.b32.xlu0 %v4182, 109
      %v4256 = vpop.permute.xlu0 %4255
      %4257 = vrot.lane.b32.xlu0 %v4183, 109
      %v4258 = vpop.permute.xlu0 %4257
      %4259 = vrot.lane.b32.xlu0 %v4184, 109
      %v4260 = vpop.permute.xlu0 %4259
      %4261 = vrot.lane.b32.xlu0 %v4181, 109
      %v4262 = vpop.permute.xlu0 %4261
      %4263 = vrot.lane.b32.xlu0 %v4197, 109
      %v4264 = vpop.permute.xlu0 %4263
      %4265 = vrot.lane.b32.xlu0 %v4198, 109
      %v4266 = vpop.permute.xlu0 %4265
      %4267 = vrot.lane.b32.xlu0 %v4199, 109
      %v4268 = vpop.permute.xlu0 %4267
      %4269 = vrot.lane.b32.xlu0 %v4196, 109
      %v4270 = vpop.permute.xlu0 %4269
      %4271 = vrot.lane.b32.xlu0 %v4208, 109
      %v4272 = vpop.permute.xlu0 %4271
      %4273 = vrot.lane.b32.xlu0 %v4209, 109
      %v4274 = vpop.permute.xlu0 %4273
      %4275 = vrot.lane.b32.xlu0 %v4210, 109
      %v4276 = vpop.permute.xlu0 %4275
      %4277 = vrot.lane.b32.xlu0 %v4207, 109
      %v4278 = vpop.permute.xlu0 %4277
      %v4279 = vsel %vm3165, %v4216, %v4218
      %v4280 = vsel %vm3165, %v4218, %v4220
      %v4281 = vsel %vm3165, %v4220, %v4222
      %v4282 = vsel %vm3165, %v4224, %v4226
      %v4283 = vsel %vm3165, %v4226, %v4228
      %v4284 = vsel %vm3165, %v4228, %v4230
      %v4285 = vsel %vm3165, %v4232, %v4234
      %v4286 = vsel %vm3165, %v4234, %v4236
      %v4287 = vsel %vm3165, %v4236, %v4238
      %v4288 = vsel %vm3165, %v4240, %v4242
      %v4289 = vsel %vm3165, %v4242, %v4244
      %v4290 = vsel %vm3165, %v4244, %v4246
      %v4291 = vsel %vm3165, %v4248, %v4250
      %v4292 = vsel %vm3165, %v4250, %v4252
      %v4293 = vsel %vm3165, %v4252, %v4254
      %v4294 = vsel %vm3165, %v4256, %v4258
      %v4295 = vsel %vm3165, %v4258, %v4260
      %v4296 = vsel %vm3165, %v4260, %v4262
      %v4297 = vsel %vm3165, %v4264, %v4266
      %v4298 = vsel %vm3165, %v4266, %v4268
      %v4299 = vsel %vm3165, %v4268, %v4270
      %v4300 = vsel %vm3165, %v4272, %v4274
      %v4301 = vsel %vm3165, %v4274, %v4276
      %v4302 = vsel %vm3165, %v4276, %v4278
      %4330 = vmatprep.subr.mxu0 %v4209
      %4331 = vmatpush1.msra.mxu0 %v4208
      %4332 = vmatprep.subr.mxu0 %v4280
      %4333 = vmatpush1.msra.mxu0 %v4279
      %4334 = vmatprep.subr.mxu0 %v4283
      %4335 = vmatpush1.msra.mxu0 %v4282
      %4336 = vmatprep.subr.mxu0 %v4286
      %4337 = vmatpush1.msra.mxu0 %v4285
      %4338 = vmatprep.subr.mxu0 %v4289
      %4339 = vmatpush1.msra.mxu0 %v4288
      %4340 = vmatprep.subr.mxu0 %v4292
      %4341 = vmatpush1.msra.mxu0 %v4291
      %4342 = vmatprep.subr.mxu0 %v4295
      %4343 = vmatpush1.msra.mxu0 %v4294
      %4344 = vmatprep.subr.mxu0 %v4298
      %4345 = vmatpush1.msra.mxu0 %v4297
      %4346 = vmatprep.subr.mxu0 %v4301
      %4347 = vmatpush1.msra.mxu0 %v4300
      %4348 = vmatprep.subr.mxu0 0.0
      %4349 = vmatpush1.msra.mxu0 0.0
      %4350 = vmatprep.subr.mxu0 0.0
      %4351 = vmatpush1.msra.mxu0 0.0
      %4352 = vmatprep.subr.mxu0 0.0
      %4353 = vmatpush1.msra.mxu0 0.0
      %4354 = vmatprep.subr.mxu0 0.0
      %4355 = vmatpush1.msra.mxu0 0.0
      %4356 = vmatprep.subr.mxu0 0.0
      %4357 = vmatpush1.msra.mxu0 0.0
      %4358 = vmatprep.subr.mxu0 0.0
      %4359 = vmatpush1.msra.mxu0 0.0
      %4360 = vmatprep.subr.mxu0 0.0
      %4361 = vmatpush1.msra.mxu0 0.0
      %4362 = vmatprep.subr.mxu0 0.0
      %4363 = vmatpush1.msra.mxu0 0.0
      %4364 = vmatprep.subr.mxu0 0.0
      %4365 = vmatpush1.msra.mxu0 0.0
      %4366 = vmatprep.subr.mxu0 0.0
      %4367 = vmatpush1.msra.mxu0 0.0
      %4368 = vmatprep.subr.mxu0 0.0
      %4369 = vmatpush1.msra.mxu0 0.0
      %4370 = vmatprep.subr.mxu0 0.0
      %4371 = vmatpush1.msra.mxu0 0.0
      %4372 = vmatprep.subr.mxu0 0.0
      %4373 = vmatpush1.msra.mxu0 0.0
      %4374 = vmatprep.subr.mxu0 0.0
      %4375 = vmatpush1.msra.mxu0 0.0
      %4376 = vmatprep.subr.mxu0 0.0
      %4377 = vmatpush1.msra.mxu0 0.0
      %4378 = vmatprep.subr.mxu0 0.0
      %4379 = vmatpush1.msra.mxu0 0.0
      %4380 = vmatprep.subr.mxu0 0.0
      %4381 = vmatpush1.msra.mxu0 0.0
      %4382 = vmatprep.subr.mxu0 0.0
      %4383 = vmatpush1.msra.mxu0 0.0
      %4384 = vmatprep.subr.mxu0 0.0
      %4385 = vmatpush1.msra.mxu0 0.0
      %4386 = vmatprep.subr.mxu0 0.0
      %4387 = vmatpush1.msra.mxu0 0.0
      %4388 = vmatprep.subr.mxu0 0.0
      %4389 = vmatpush1.msra.mxu0 0.0
      %4390 = vmatprep.subr.mxu0 0.0
      %4391 = vmatpush1.msra.mxu0 0.0
      %4392 = vmatprep.subr.mxu0 0.0
      %4393 = vmatpush1.msra.mxu0 0.0
      %4394 = vmatprep.mubr.f32.mxu0 0.0
      %4395 = vmatmul.mubr.f32.gmra.mrb[0].mxu0 %v3235
      %v4396 = vpop.f32.mrb[0].mxu0
      %v4397 = vadd.f32 %v3231, %v4396
      %v4398 = vpop.f32.mrb[0].mxu0
      %v4399 = vadd.f32 %v3231, %v4398
      %4400 = vdwg.mxu0
      %4401 = vmatprep.subr.mxu0 0.0
      %4402 = vmatpush1.msra.mxu0 %v4210
      %4403 = vmatprep.subr.mxu0 0.0
      %4404 = vmatpush1.msra.mxu0 %v4281
      %4405 = vmatprep.subr.mxu0 0.0
      %4406 = vmatpush1.msra.mxu0 %v4284
      %4407 = vmatprep.subr.mxu0 0.0
      %4408 = vmatpush1.msra.mxu0 %v4287
      %4409 = vmatprep.subr.mxu0 0.0
      %4410 = vmatpush1.msra.mxu0 %v4290
      %4411 = vmatprep.subr.mxu0 0.0
      %4412 = vmatpush1.msra.mxu0 %v4293
      %4413 = vmatprep.subr.mxu0 0.0
      %4414 = vmatpush1.msra.mxu0 %v4296
      %4415 = vmatprep.subr.mxu0 0.0
      %4416 = vmatpush1.msra.mxu0 %v4299
      %4417 = vmatprep.subr.mxu0 0.0
      %4418 = vmatpush1.msra.mxu0 %v4302
      %4419 = vmatprep.subr.mxu0 0.0
      %4420 = vmatpush1.msra.mxu0 0.0
      %4421 = vmatprep.subr.mxu0 0.0
      %4422 = vmatpush1.msra.mxu0 0.0
      %4423 = vmatprep.subr.mxu0 0.0
      %4424 = vmatpush1.msra.mxu0 0.0
      %4425 = vmatprep.subr.mxu0 0.0
      %4426 = vmatpush1.msra.mxu0 0.0
      %4427 = vmatprep.subr.mxu0 0.0
      %4428 = vmatpush1.msra.mxu0 0.0
      %4429 = vmatprep.subr.mxu0 0.0
      %4430 = vmatpush1.msra.mxu0 0.0
      %4431 = vmatprep.subr.mxu0 0.0
      %4432 = vmatpush1.msra.mxu0 0.0
      %4433 = vmatprep.subr.mxu0 0.0
      %4434 = vmatpush1.msra.mxu0 0.0
      %4435 = vmatprep.subr.mxu0 0.0
      %4436 = vmatpush1.msra.mxu0 0.0
      %4437 = vmatprep.subr.mxu0 0.0
      %4438 = vmatpush1.msra.mxu0 0.0
      %4439 = vmatprep.subr.mxu0 0.0
      %4440 = vmatpush1.msra.mxu0 0.0
      %4441 = vmatprep.subr.mxu0 0.0
      %4442 = vmatpush1.msra.mxu0 0.0
      %4443 = vmatprep.subr.mxu0 0.0
      %4444 = vmatpush1.msra.mxu0 0.0
      %4445 = vmatprep.subr.mxu0 0.0
      %4446 = vmatpush1.msra.mxu0 0.0
      %4447 = vmatprep.subr.mxu0 0.0
      %4448 = vmatpush1.msra.mxu0 0.0
      %4449 = vmatprep.subr.mxu0 0.0
      %4450 = vmatpush1.msra.mxu0 0.0
      %4451 = vmatprep.subr.mxu0 0.0
      %4452 = vmatpush1.msra.mxu0 0.0
      %4453 = vmatprep.subr.mxu0 0.0
      %4454 = vmatpush1.msra.mxu0 0.0
      %4455 = vmatprep.subr.mxu0 0.0
      %4456 = vmatpush1.msra.mxu0 0.0
      %4457 = vmatprep.subr.mxu0 0.0
      %4458 = vmatpush1.msra.mxu0 0.0
      %4459 = vmatprep.subr.mxu0 0.0
      %4460 = vmatpush1.msra.mxu0 0.0
      %4461 = vmatprep.subr.mxu0 0.0
      %4462 = vmatpush1.msra.mxu0 0.0
      %4463 = vmatprep.subr.mxu0 0.0
      %4464 = vmatpush1.msra.mxu0 0.0
      %4465 = vmatprep.mubr.f32.mxu0 0.0
      %4466 = vmatmul.mubr.f32.gmra.mrb[0].mxu0 %v3235
      %v4467 = vpop.f32.mrb[0].mxu0
      %v4468 = vadd.f32 %v3231, %v4467
      %v4469 = vpop.f32.mrb[0].mxu0
      %4470 = vdwg.mxu0
      %v4473 = vcombine.low %v4397, %v4399
      %s4475 = scalar_lea.vmem %s197, 36
      %4476 = vst [vmem:[%s4475] sm:$0x77] %v4473
      %4477 = vst [vmem:[%s4475 + $0x8] sm:$0x7] %v4468
      %p4478 = scmp.lt.s32.totalorder %s15, 1
      %s4479 = scalar_select %p4478, %s15, 1
      %s4480 = smul.addr %s4479, 12
      %s4481 = smul.addr %s4480, 4
      %s4482 = scalar_lea.vmem %s4, %s4481
      // Predicated region
      $region37: #{forward_pallas.5} parent=35 // pred_check
        %p4483 = pneg %p122
      $region38: #{forward_pallas.5} parent=35 // pred_check_branch
        %4485 = sbr.rel (%p4483) target = $region40
      $region39: #{forward_pallas.5} parent=35 // pred_region
        _
      $region40: #{forward_pallas.5} parent=35 // pred_fallthru
        _
    $region36: #{forward_pallas.5} parent=5 // pred_fallthru
      _
    %p4486 = scmp.le.s32.totalorder 2, %s10
    // Predicated region
    $region41: #{forward_pallas.5} parent=5 // pred_check
      %p4487 = pneg %p4486
    $region42: #{forward_pallas.5} parent=5 // pred_check_branch
      %4489 = sbr.rel (%p4487) target = $region44
    $region43: #{forward_pallas.5} parent=5 // pred_region
      %s4490 = ssub.s32 %s10, 2
      // Predicated region
      $region45: #{forward_pallas.5} parent=43 // pred_check
        %p4491 = pneg %p128
      $region46: #{forward_pallas.5} parent=43 // pred_check_branch
        %4493 = sbr.rel (%p4491) target = $region48
      $region47: #{forward_pallas.5} parent=43 // pred_region
        %p4494 = scmp.lt.s32.totalorder %s16, 1
        %s4495 = scalar_select %p4494, %s16, 1
        %s4496 = smul.addr %s4495, 12
        %s4497 = smul.addr %s4496, 4
        %s4498 = scalar_lea.vmem %s4, %s4497
      $region48: #{forward_pallas.5} parent=43 // pred_fallthru
        _
    $region44: #{forward_pallas.5} parent=5 // pred_fallthru
      _
  $region6: #{forward_pallas.5} parent=0 // loop_footer
    %s14 = sadd.s32 1, %s10
  $region7: #{forward_pallas.5} parent=0 // loop_footer_branch
    %9 = sbr.rel target = $region3
  $region8: #{forward_pallas.5} parent=0 // loop_exit
    _

</llo_original>
